<compile_context>
chip_gen: v6e
topology: v6e:2x2x1
jax: 0.10.0
libtpu: 0.0.40
codegen_flags: <defaults>
</compile_context>

<pallas_src>
import jax
import jax.numpy as jnp
from jax.experimental import pallas as pl
from jax.experimental.pallas import tpu as pltpu

C = 128          # channel width everywhere
L_IN = 1536      # input signal length
L0 = L_IN // 8   # 192 : length after ConvWide (kernel 8, stride 8)
L_FLAT = 24      # 192 -> 96 -> 48 -> 24 after three MaxPool(2); 24 * 128 = 3072


# ----------------------------------------------------------------------------
# Fused kernel: ConvWide + 3x ConvMultiScale + flatten + Linear-ReLU-Linear
# One grid step == one sample (grid axis is "parallel" -> megacore on v7x).
# ----------------------------------------------------------------------------
def bearing_fm_plus_kernel(
    x_ref,                          # [1, L0, 8]  f32   sample i, wide conv already "im2col'd"
    w0_ref, s0_ref, t0_ref,         # [8, C] bf16, [1, C] f32, [1, C] f32
    w1_ref, s1_ref, t1_ref,         # [7, C, C] bf16, [1, C] f32, [1, C] f32
    w2_ref, s2_ref, t2_ref,
    w3_ref, s3_ref, t3_ref,
    wf1_ref, bf1_ref,               # [24, C, C] bf16 (flatten folded in), [1, C] f32
    wf2_ref, bf2_ref,               # [C, C] bf16 (cols >= 10 zero), [1, C] f32
    out_ref,                        # [1, 1, C] f32
    pool_ref,                       # VMEM scratch [L0, C] f32 (maxpool staging)
):
    # ---- ConvWide: stride == kernel -> plain matmul, then folded BN + ReLU -----------
    x = x_ref[0].astype(jnp.bfloat16)                                   # [192, 8]
    h = jnp.dot(x, w0_ref[...], preferred_element_type=jnp.float32)     # [192, 128]
    h = jnp.maximum(h * s0_ref[...] + t0_ref[...], 0.0)

    # ---- ConvMultiScale block: 7 shifted matmuls (k=3/5/7 branches pre-fused), -------
    # ---- folded BN + ReLU, MaxPool1d(2) via strided VMEM reads ------------------------
    def ms_block(h, w_ref, s_ref, t_ref):
        L = h.shape[0]
        zpad = jnp.zeros((3, C), jnp.float32)                           # 'same' pad for k=7
        hp = jnp.concatenate([zpad, h, zpad], axis=0)                   # [L + 6, 128]
        acc = jnp.zeros((L, C), jnp.float32)
        for k in range(7):                                              # unrolled: LLO-visible
            acc = acc + jnp.dot(hp[k:k + L, :].astype(jnp.bfloat16), w_ref[k],
                                preferred_element_type=jnp.float32)
        a = jnp.maximum(acc * s_ref[...] + t_ref[...], 0.0)             # BN + ReLU (f32)
        # MaxPool1d(kernel=2, stride=2): stage rows in VMEM, read even/odd with stride 2
        pool_ref[pl.ds(0, L), :] = a
        Lh = L // 2
        return jnp.maximum(pool_ref[pl.ds(0, Lh, stride=2), :],
                           pool_ref[pl.ds(1, Lh, stride=2), :])         # [L//2, 128]

    h = ms_block(h, w1_ref, s1_ref, t1_ref)                             # [96, 128]
    h = ms_block(h, w2_ref, s2_ref, t2_ref)                             # [48, 128]
    h = ms_block(h, w3_ref, s3_ref, t3_ref)                             # [24, 128]

    # ---- decoder: flatten(3072) @ W1 -> ReLU -> @ W2 ----------------------------------
    # The torch flatten order is folded into wf1's [l, c, j] layout, so the contraction
    # is a sum over the 24 rows of the channels-last encoder output (no in-kernel reshape).
    d = bf1_ref[...]                                                    # [1, 128] f32
    for l in range(L_FLAT):
        d = d + jnp.dot(h[l:l + 1, :].astype(jnp.bfloat16), wf1_ref[l],
                        preferred_element_type=jnp.float32)
    d = jnp.maximum(d, 0.0).astype(jnp.bfloat16)                        # [1, 128]
    o = jnp.dot(d, wf2_ref[...], preferred_element_type=jnp.float32) + bf2_ref[...]
    out_ref[0] = o                                                      # lane-dense [1, 128]


# ----------------------------------------------------------------------------
# Host-side one-time parameter folding (pure JAX glue, done once outside the kernel)
# ----------------------------------------------------------------------------
def pack_params(p, eps=1e-5):
    """Fold conv bias + eval-mode BatchNorm into scale/shift, fuse the 3/5/7 branches of
    each ConvMultiScale into one 7-tap weight, reorder FC1 for the channels-last flatten,
    pad FC2 to 128 output lanes, and cast matmul weights to bf16."""
    def bn_fold(bias, gamma, beta, mean, var):
        scale = gamma / jnp.sqrt(var + eps)
        shift = (bias - mean) * scale + beta
        return (scale.reshape(1, C).astype(jnp.float32),
                shift.reshape(1, C).astype(jnp.float32))

    out = {}
    # ConvWide: [128, 1, 8] -> [8, 128]
    out["w0"] = p["wide_w"].reshape(C, 8).T.astype(jnp.bfloat16)
    out["s0"], out["t0"] = bn_fold(p["wide_b"], *p["wide_bn"])

    # ConvMultiScale i: combine the k=3/5/7 'same'-padded branches into 7 taps
    for i in (1, 2, 3):
        w3, w5, w7 = p[f"ms{i}_w3"], p[f"ms{i}_w5"], p[f"ms{i}_w7"]     # [Cout, Cin, K]
        taps = []
        for k in range(7):
            t = jnp.transpose(w7[:, :, k])                              # [Cin, Cout]
            if 1 <= k <= 5:
                t = t + jnp.transpose(w5[:, :, k - 1])
            if 2 <= k <= 4:
                t = t + jnp.transpose(w3[:, :, k - 2])
            taps.append(t)
        out[f"w{i}"] = jnp.stack(taps, axis=0).astype(jnp.bfloat16)     # [7, 128, 128]
        bias = p[f"ms{i}_b3"] + p[f"ms{i}_b5"] + p[f"ms{i}_b7"]
        out[f"s{i}"], out[f"t{i}"] = bn_fold(bias, *p[f"ms{i}_bn"])

    # FC1: torch flattens [B, C, L] channel-major (index = c*L + l); the kernel holds the
    # encoder output channels-last [L, C], so reorder W1 [128, 3072] -> [l, c, j].
    wf1 = p["fc1_w"].reshape(C, C, L_FLAT)                              # [j, c, l]
    out["wf1"] = jnp.transpose(wf1, (2, 1, 0)).astype(jnp.bfloat16)     # [l, c, j]
    out["bf1"] = p["fc1_b"].reshape(1, C).astype(jnp.float32)

    # FC2: pad 10 -> 128 output columns so the final store is lane-dense.
    wf2 = jnp.zeros((C, C), jnp.float32).at[:, :10].set(p["fc2_w"].T)
    out["wf2"] = wf2.astype(jnp.bfloat16)
    out["bf2"] = jnp.zeros((1, C), jnp.float32).at[0, :10].set(p["fc2_b"])
    return out


# ----------------------------------------------------------------------------
# Forward pass: ONE pallas_call for the whole network
# ----------------------------------------------------------------------------
def bearing_fm_plus_forward(packed, x):
    B = x.shape[0]
    # ConvWide has stride == kernel, so its im2col is just a reshape (free, fused by XLA).
    xr = x.reshape(B, L0, 8)

    flops = B * (2 * L0 * 8 * C
                 + 2 * 7 * C * C * (L0 + L0 // 2 + L0 // 4)
                 + 2 * L_FLAT * C * C
                 + 2 * C * C)
    weight_bytes = sum(int(v.size) * int(v.dtype.itemsize) for v in packed.values())
    bytes_accessed = int(weight_bytes + xr.size * 4 + B * C * 4)

    full = lambda i: (0, 0)          # weights: constant block index -> DMA'd once, resident
    full3 = lambda i: (0, 0, 0)

    grid_spec = pltpu.PrefetchScalarGridSpec(
        num_scalar_prefetch=0,
        grid=(B,),
        in_specs=[
            pl.BlockSpec((1, L0, 8), lambda i: (i, 0, 0)),   # per-sample input
            pl.BlockSpec((8, C), full),                      # ConvWide
            pl.BlockSpec((1, C), full), pl.BlockSpec((1, C), full),
            pl.BlockSpec((7, C, C), full3),                  # ConvMultiScale 1
            pl.BlockSpec((1, C), full), pl.BlockSpec((1, C), full),
            pl.BlockSpec((7, C, C), full3),                  # ConvMultiScale 2
            pl.BlockSpec((1, C), full), pl.BlockSpec((1, C), full),
            pl.BlockSpec((7, C, C), full3),                  # ConvMultiScale 3
            pl.BlockSpec((1, C), full), pl.BlockSpec((1, C), full),
            pl.BlockSpec((L_FLAT, C, C), full3),             # FC1 (flatten folded in)
            pl.BlockSpec((1, C), full),
            pl.BlockSpec((C, C), full),                      # FC2 (padded to 128 lanes)
            pl.BlockSpec((1, C), full),
        ],
        out_specs=pl.BlockSpec((1, 1, C), lambda i: (i, 0, 0)),
        scratch_shapes=[pltpu.VMEM((L0, C), jnp.float32)],
    )

    out = pl.pallas_call(
        bearing_fm_plus_kernel,
        grid_spec=grid_spec,
        out_shape=jax.ShapeDtypeStruct((B, 1, C), jnp.float32),
        compiler_params=pltpu.CompilerParams(
            dimension_semantics=("parallel",),               # batch axis -> v7x megacore
            vmem_limit_bytes=32 * 1024 * 1024,
        ),
        cost_estimate=pl.CostEstimate(flops=flops, transcendentals=0,
                                      bytes_accessed=bytes_accessed),
    )(xr,
      packed["w0"], packed["s0"], packed["t0"],
      packed["w1"], packed["s1"], packed["t1"],
      packed["w2"], packed["s2"], packed["t2"],
      packed["w3"], packed["s3"], packed["t3"],
      packed["wf1"], packed["bf1"], packed["wf2"], packed["bf2"])

    return out[:, 0, :10]                                    # drop the lane padding


# ----------------------------------------------------------------------------
# Deterministic synthetic parameters (PyTorch-layout), then folded for the kernel
# ----------------------------------------------------------------------------
def make_params(key):
    ks = iter(jax.random.split(key, 48))

    def conv_w(co, ci, k):
        fan_in = ci * k
        return jax.random.normal(next(ks), (co, ci, k), jnp.float32) / jnp.sqrt(jnp.float32(fan_in))

    def bn(c):
        g = 1.0 + 0.1 * jax.random.normal(next(ks), (c,), jnp.float32)
        b = 0.1 * jax.random.normal(next(ks), (c,), jnp.float32)
        m = 0.1 * jax.random.normal(next(ks), (c,), jnp.float32)
        v = 1.0 + 0.1 * jax.nn.softplus(jax.random.normal(next(ks), (c,), jnp.float32))
        return (g, b, m, v)

    p = {}
    p["wide_w"] = conv_w(C, 1, 8)
    p["wide_b"] = 0.05 * jax.random.normal(next(ks), (C,), jnp.float32)
    p["wide_bn"] = bn(C)
    for i in (1, 2, 3):
        for k in (3, 5, 7):
            p[f"ms{i}_w{k}"] = conv_w(C, C, k)
            p[f"ms{i}_b{k}"] = 0.05 * jax.random.normal(next(ks), (C,), jnp.float32)
        p[f"ms{i}_bn"] = bn(C)
    p["fc1_w"] = jax.random.normal(next(ks), (C, C * L_FLAT), jnp.float32) / jnp.sqrt(jnp.float32(C * L_FLAT))
    p["fc1_b"] = 0.05 * jax.random.normal(next(ks), (C,), jnp.float32)
    p["fc2_w"] = jax.random.normal(next(ks), (10, C), jnp.float32) / jnp.sqrt(jnp.float32(C))
    p["fc2_b"] = 0.05 * jax.random.normal(next(ks), (10,), jnp.float32)
    return p


if __name__ == "__main__":
    key = jax.random.PRNGKey(0)
    pkey, xkey = jax.random.split(key)
    params = make_params(pkey)
    packed = pack_params(params)

    B = 2
    x = jax.random.normal(xkey, (B, 1, L_IN), jnp.float32)

    fwd = jax.jit(bearing_fm_plus_forward)
    logits = fwd(packed, x)
    jax.block_until_ready(logits)

    assert logits.shape == (B, 10)
    assert bool(jnp.all(jnp.isfinite(logits)))
    print("KERNEL_OK")
</pallas_src>

<mosaic_0001>
module attributes {stable_mosaic.version = 11 : i64} {
  func.func @bearing_fm_plus_kernel(%arg0: i32, %arg1: memref<1x192x8xf32, #tpu.memory_space<vmem>>, %arg2: memref<8x128xbf16, #tpu.memory_space<vmem>>, %arg3: memref<1x128xf32, #tpu.memory_space<vmem>>, %arg4: memref<1x128xf32, #tpu.memory_space<vmem>>, %arg5: memref<7x128x128xbf16, #tpu.memory_space<vmem>>, %arg6: memref<1x128xf32, #tpu.memory_space<vmem>>, %arg7: memref<1x128xf32, #tpu.memory_space<vmem>>, %arg8: memref<7x128x128xbf16, #tpu.memory_space<vmem>>, %arg9: memref<1x128xf32, #tpu.memory_space<vmem>>, %arg10: memref<1x128xf32, #tpu.memory_space<vmem>>, %arg11: memref<7x128x128xbf16, #tpu.memory_space<vmem>>, %arg12: memref<1x128xf32, #tpu.memory_space<vmem>>, %arg13: memref<1x128xf32, #tpu.memory_space<vmem>>, %arg14: memref<24x128x128xbf16, #tpu.memory_space<vmem>>, %arg15: memref<1x128xf32, #tpu.memory_space<vmem>>, %arg16: memref<128x128xbf16, #tpu.memory_space<vmem>>, %arg17: memref<1x128xf32, #tpu.memory_space<vmem>>, %arg18: memref<1x1x128xf32, #tpu.memory_space<vmem>>, %arg19: memref<192x128xf32, #tpu.memory_space<vmem>>) attributes {dimension_semantics = [#tpu.dimension_semantics<parallel>], iteration_bounds = array<i64: 2>, scalar_prefetch = 0 : i64, scratch_operands = 1 : i64, tpu.core_type = #tpu.core_type<tc>, window_params = [{transform_indices = @transform_0, window_bounds = array<i64: 1, 192, 8>}, {pipeline_mode = #tpu.pipeline_mode<synchronous>, transform_indices = @transform_1, window_bounds = array<i64: 8, 128>}, {pipeline_mode = #tpu.pipeline_mode<synchronous>, transform_indices = @transform_2, window_bounds = array<i64: 1, 128>}, {pipeline_mode = #tpu.pipeline_mode<synchronous>, transform_indices = @transform_3, window_bounds = array<i64: 1, 128>}, {pipeline_mode = #tpu.pipeline_mode<synchronous>, transform_indices = @transform_4, window_bounds = array<i64: 7, 128, 128>}, {pipeline_mode = #tpu.pipeline_mode<synchronous>, transform_indices = @transform_5, window_bounds = array<i64: 1, 128>}, {pipeline_mode = #tpu.pipeline_mode<synchronous>, transform_indices = @transform_6, window_bounds = array<i64: 1, 128>}, {pipeline_mode = #tpu.pipeline_mode<synchronous>, transform_indices = @transform_7, window_bounds = array<i64: 7, 128, 128>}, {pipeline_mode = #tpu.pipeline_mode<synchronous>, transform_indices = @transform_8, window_bounds = array<i64: 1, 128>}, {pipeline_mode = #tpu.pipeline_mode<synchronous>, transform_indices = @transform_9, window_bounds = array<i64: 1, 128>}, {pipeline_mode = #tpu.pipeline_mode<synchronous>, transform_indices = @transform_10, window_bounds = array<i64: 7, 128, 128>}, {pipeline_mode = #tpu.pipeline_mode<synchronous>, transform_indices = @transform_11, window_bounds = array<i64: 1, 128>}, {pipeline_mode = #tpu.pipeline_mode<synchronous>, transform_indices = @transform_12, window_bounds = array<i64: 1, 128>}, {pipeline_mode = #tpu.pipeline_mode<synchronous>, transform_indices = @transform_13, window_bounds = array<i64: 24, 128, 128>}, {pipeline_mode = #tpu.pipeline_mode<synchronous>, transform_indices = @transform_14, window_bounds = array<i64: 1, 128>}, {pipeline_mode = #tpu.pipeline_mode<synchronous>, transform_indices = @transform_15, window_bounds = array<i64: 128, 128>}, {pipeline_mode = #tpu.pipeline_mode<synchronous>, transform_indices = @transform_16, window_bounds = array<i64: 1, 128>}, {transform_indices = @transform_17, window_bounds = array<i64: 1, 1, 128>}]} {
    %c0 = arith.constant 0 : index
    %c0_0 = arith.constant 0 : index
    %c0_1 = arith.constant 0 : index
    %0 = vector.load %arg1[%c0, %c0_0, %c0_1] : memref<1x192x8xf32, #tpu.memory_space<vmem>>, vector<1x192x8xf32>
    %1 = vector.shape_cast %0 : vector<1x192x8xf32> to vector<192x8xf32>
    %2 = arith.truncf %1 : vector<192x8xf32> to vector<192x8xbf16>
    %c0_2 = arith.constant 0 : index
    %c0_3 = arith.constant 0 : index
    %3 = vector.load %arg2[%c0_2, %c0_3] : memref<8x128xbf16, #tpu.memory_space<vmem>>, vector<8x128xbf16>
    %cst = arith.constant dense<0.000000e+00> : vector<192x128xf32>
    %4 = tpu.matmul %2, %3, %cst {dimension_numbers = #tpu.dot_dimension_numbers<[1], [0], [0], [1], [0, 0, 1, 1], [], []>} : vector<192x8xbf16>, vector<8x128xbf16>, vector<192x128xf32> -> vector<192x128xf32>
    %c0_4 = arith.constant 0 : index
    %c0_5 = arith.constant 0 : index
    %5 = vector.load %arg3[%c0_4, %c0_5] : memref<1x128xf32, #tpu.memory_space<vmem>>, vector<1x128xf32>
    %6 = vector.broadcast %5 : vector<1x128xf32> to vector<192x128xf32>
    %7 = arith.mulf %4, %6 : vector<192x128xf32>
    %c0_6 = arith.constant 0 : index
    %c0_7 = arith.constant 0 : index
    %8 = vector.load %arg4[%c0_6, %c0_7] : memref<1x128xf32, #tpu.memory_space<vmem>>, vector<1x128xf32>
    %9 = vector.broadcast %8 : vector<1x128xf32> to vector<192x128xf32>
    %10 = arith.addf %7, %9 : vector<192x128xf32>
    %cst_8 = arith.constant 0.000000e+00 : f32
    %11 = vector.broadcast %cst_8 : f32 to vector<192x128xf32>
    %12 = arith.maximumf %10, %11 : vector<192x128xf32>
    %cst_9 = arith.constant 0.000000e+00 : f32
    %13 = vector.broadcast %cst_9 : f32 to vector<3x128xf32>
    %14 = tpu.concatenate %13, %12, %13 in 0 : vector<3x128xf32>, vector<192x128xf32>, vector<3x128xf32> -> vector<198x128xf32>
    %cst_10 = arith.constant 0.000000e+00 : f32
    %15 = vector.broadcast %cst_10 : f32 to vector<192x128xf32>
    %16 = vector.extract_strided_slice %14 {offsets = [0, 0], sizes = [192, 128], strides = [1, 1]} : vector<198x128xf32> to vector<192x128xf32>
    %17 = arith.truncf %16 : vector<192x128xf32> to vector<192x128xbf16>
    %c0_11 = arith.constant 0 : index
    %c0_12 = arith.constant 0 : index
    %c0_13 = arith.constant 0 : index
    %18 = vector.load %arg5[%c0_11, %c0_12, %c0_13] : memref<7x128x128xbf16, #tpu.memory_space<vmem>>, vector<1x128x128xbf16>
    %19 = vector.shape_cast %18 : vector<1x128x128xbf16> to vector<128x128xbf16>
    %cst_14 = arith.constant dense<0.000000e+00> : vector<192x128xf32>
    %20 = tpu.matmul %17, %19, %cst_14 {dimension_numbers = #tpu.dot_dimension_numbers<[1], [0], [0], [1], [0, 0, 1, 1], [], []>} : vector<192x128xbf16>, vector<128x128xbf16>, vector<192x128xf32> -> vector<192x128xf32>
    %21 = arith.addf %15, %20 : vector<192x128xf32>
    %22 = vector.extract_strided_slice %14 {offsets = [1, 0], sizes = [192, 128], strides = [1, 1]} : vector<198x128xf32> to vector<192x128xf32>
    %23 = arith.truncf %22 : vector<192x128xf32> to vector<192x128xbf16>
    %c1 = arith.constant 1 : index
    %c0_15 = arith.constant 0 : index
    %c0_16 = arith.constant 0 : index
    %24 = vector.load %arg5[%c1, %c0_15, %c0_16] : memref<7x128x128xbf16, #tpu.memory_space<vmem>>, vector<1x128x128xbf16>
    %25 = vector.shape_cast %24 : vector<1x128x128xbf16> to vector<128x128xbf16>
    %cst_17 = arith.constant dense<0.000000e+00> : vector<192x128xf32>
    %26 = tpu.matmul %23, %25, %cst_17 {dimension_numbers = #tpu.dot_dimension_numbers<[1], [0], [0], [1], [0, 0, 1, 1], [], []>} : vector<192x128xbf16>, vector<128x128xbf16>, vector<192x128xf32> -> vector<192x128xf32>
    %27 = arith.addf %21, %26 : vector<192x128xf32>
    %28 = vector.extract_strided_slice %14 {offsets = [2, 0], sizes = [192, 128], strides = [1, 1]} : vector<198x128xf32> to vector<192x128xf32>
    %29 = arith.truncf %28 : vector<192x128xf32> to vector<192x128xbf16>
    %c2 = arith.constant 2 : index
    %c0_18 = arith.constant 0 : index
    %c0_19 = arith.constant 0 : index
    %30 = vector.load %arg5[%c2, %c0_18, %c0_19] : memref<7x128x128xbf16, #tpu.memory_space<vmem>>, vector<1x128x128xbf16>
    %31 = vector.shape_cast %30 : vector<1x128x128xbf16> to vector<128x128xbf16>
    %cst_20 = arith.constant dense<0.000000e+00> : vector<192x128xf32>
    %32 = tpu.matmul %29, %31, %cst_20 {dimension_numbers = #tpu.dot_dimension_numbers<[1], [0], [0], [1], [0, 0, 1, 1], [], []>} : vector<192x128xbf16>, vector<128x128xbf16>, vector<192x128xf32> -> vector<192x128xf32>
    %33 = arith.addf %27, %32 : vector<192x128xf32>
    %34 = vector.extract_strided_slice %14 {offsets = [3, 0], sizes = [192, 128], strides = [1, 1]} : vector<198x128xf32> to vector<192x128xf32>
    %35 = arith.truncf %34 : vector<192x128xf32> to vector<192x128xbf16>
    %c3 = arith.constant 3 : index
    %c0_21 = arith.constant 0 : index
    %c0_22 = arith.constant 0 : index
    %36 = vector.load %arg5[%c3, %c0_21, %c0_22] : memref<7x128x128xbf16, #tpu.memory_space<vmem>>, vector<1x128x128xbf16>
    %37 = vector.shape_cast %36 : vector<1x128x128xbf16> to vector<128x128xbf16>
    %cst_23 = arith.constant dense<0.000000e+00> : vector<192x128xf32>
    %38 = tpu.matmul %35, %37, %cst_23 {dimension_numbers = #tpu.dot_dimension_numbers<[1], [0], [0], [1], [0, 0, 1, 1], [], []>} : vector<192x128xbf16>, vector<128x128xbf16>, vector<192x128xf32> -> vector<192x128xf32>
    %39 = arith.addf %33, %38 : vector<192x128xf32>
    %40 = vector.extract_strided_slice %14 {offsets = [4, 0], sizes = [192, 128], strides = [1, 1]} : vector<198x128xf32> to vector<192x128xf32>
    %41 = arith.truncf %40 : vector<192x128xf32> to vector<192x128xbf16>
    %c4 = arith.constant 4 : index
    %c0_24 = arith.constant 0 : index
    %c0_25 = arith.constant 0 : index
    %42 = vector.load %arg5[%c4, %c0_24, %c0_25] : memref<7x128x128xbf16, #tpu.memory_space<vmem>>, vector<1x128x128xbf16>
    %43 = vector.shape_cast %42 : vector<1x128x128xbf16> to vector<128x128xbf16>
    %cst_26 = arith.constant dense<0.000000e+00> : vector<192x128xf32>
    %44 = tpu.matmul %41, %43, %cst_26 {dimension_numbers = #tpu.dot_dimension_numbers<[1], [0], [0], [1], [0, 0, 1, 1], [], []>} : vector<192x128xbf16>, vector<128x128xbf16>, vector<192x128xf32> -> vector<192x128xf32>
    %45 = arith.addf %39, %44 : vector<192x128xf32>
    %46 = vector.extract_strided_slice %14 {offsets = [5, 0], sizes = [192, 128], strides = [1, 1]} : vector<198x128xf32> to vector<192x128xf32>
    %47 = arith.truncf %46 : vector<192x128xf32> to vector<192x128xbf16>
    %c5 = arith.constant 5 : index
    %c0_27 = arith.constant 0 : index
    %c0_28 = arith.constant 0 : index
    %48 = vector.load %arg5[%c5, %c0_27, %c0_28] : memref<7x128x128xbf16, #tpu.memory_space<vmem>>, vector<1x128x128xbf16>
    %49 = vector.shape_cast %48 : vector<1x128x128xbf16> to vector<128x128xbf16>
    %cst_29 = arith.constant dense<0.000000e+00> : vector<192x128xf32>
    %50 = tpu.matmul %47, %49, %cst_29 {dimension_numbers = #tpu.dot_dimension_numbers<[1], [0], [0], [1], [0, 0, 1, 1], [], []>} : vector<192x128xbf16>, vector<128x128xbf16>, vector<192x128xf32> -> vector<192x128xf32>
    %51 = arith.addf %45, %50 : vector<192x128xf32>
    %52 = vector.extract_strided_slice %14 {offsets = [6, 0], sizes = [192, 128], strides = [1, 1]} : vector<198x128xf32> to vector<192x128xf32>
    %53 = arith.truncf %52 : vector<192x128xf32> to vector<192x128xbf16>
    %c6 = arith.constant 6 : index
    %c0_30 = arith.constant 0 : index
    %c0_31 = arith.constant 0 : index
    %54 = vector.load %arg5[%c6, %c0_30, %c0_31] : memref<7x128x128xbf16, #tpu.memory_space<vmem>>, vector<1x128x128xbf16>
    %55 = vector.shape_cast %54 : vector<1x128x128xbf16> to vector<128x128xbf16>
    %cst_32 = arith.constant dense<0.000000e+00> : vector<192x128xf32>
    %56 = tpu.matmul %53, %55, %cst_32 {dimension_numbers = #tpu.dot_dimension_numbers<[1], [0], [0], [1], [0, 0, 1, 1], [], []>} : vector<192x128xbf16>, vector<128x128xbf16>, vector<192x128xf32> -> vector<192x128xf32>
    %57 = arith.addf %51, %56 : vector<192x128xf32>
    %c0_33 = arith.constant 0 : index
    %c0_34 = arith.constant 0 : index
    %58 = vector.load %arg6[%c0_33, %c0_34] : memref<1x128xf32, #tpu.memory_space<vmem>>, vector<1x128xf32>
    %59 = vector.broadcast %58 : vector<1x128xf32> to vector<192x128xf32>
    %60 = arith.mulf %57, %59 : vector<192x128xf32>
    %c0_35 = arith.constant 0 : index
    %c0_36 = arith.constant 0 : index
    %61 = vector.load %arg7[%c0_35, %c0_36] : memref<1x128xf32, #tpu.memory_space<vmem>>, vector<1x128xf32>
    %62 = vector.broadcast %61 : vector<1x128xf32> to vector<192x128xf32>
    %63 = arith.addf %60, %62 : vector<192x128xf32>
    %cst_37 = arith.constant 0.000000e+00 : f32
    %64 = vector.broadcast %cst_37 : f32 to vector<192x128xf32>
    %65 = arith.maximumf %63, %64 : vector<192x128xf32>
    %c0_38 = arith.constant 0 : index
    %c0_39 = arith.constant 0 : index
    %66 = vector.load %arg19[%c0_38, %c0_39] : memref<192x128xf32, #tpu.memory_space<vmem>>, vector<192x128xf32>
    tpu.vector_store %arg19[%c0_38, %c0_39], %65 {strides = array<i32>} : memref<192x128xf32, #tpu.memory_space<vmem>>, vector<192x128xf32>,
    %c0_40 = arith.constant 0 : index
    %c0_41 = arith.constant 0 : index
    %67 = tpu.strided_load %arg19[%c0_40, %c0_41] {strides = array<i32: 2, 1>} : memref<192x128xf32, #tpu.memory_space<vmem>>, vector<96x128xf32>
    %c1_42 = arith.constant 1 : index
    %c0_43 = arith.constant 0 : index
    %68 = tpu.strided_load %arg19[%c1_42, %c0_43] {strides = array<i32: 2, 1>} : memref<192x128xf32, #tpu.memory_space<vmem>>, vector<96x128xf32>
    %69 = arith.maximumf %67, %68 : vector<96x128xf32>
    %cst_44 = arith.constant 0.000000e+00 : f32
    %70 = vector.broadcast %cst_44 : f32 to vector<3x128xf32>
    %71 = tpu.concatenate %70, %69, %70 in 0 : vector<3x128xf32>, vector<96x128xf32>, vector<3x128xf32> -> vector<102x128xf32>
    %cst_45 = arith.constant 0.000000e+00 : f32
    %72 = vector.broadcast %cst_45 : f32 to vector<96x128xf32>
    %73 = vector.extract_strided_slice %71 {offsets = [0, 0], sizes = [96, 128], strides = [1, 1]} : vector<102x128xf32> to vector<96x128xf32>
    %74 = arith.truncf %73 : vector<96x128xf32> to vector<96x128xbf16>
    %c0_46 = arith.constant 0 : index
    %c0_47 = arith.constant 0 : index
    %c0_48 = arith.constant 0 : index
    %75 = vector.load %arg8[%c0_46, %c0_47, %c0_48] : memref<7x128x128xbf16, #tpu.memory_space<vmem>>, vector<1x128x128xbf16>
    %76 = vector.shape_cast %75 : vector<1x128x128xbf16> to vector<128x128xbf16>
    %cst_49 = arith.constant dense<0.000000e+00> : vector<96x128xf32>
    %77 = tpu.matmul %74, %76, %cst_49 {dimension_numbers = #tpu.dot_dimension_numbers<[1], [0], [0], [1], [0, 0, 1, 1], [], []>} : vector<96x128xbf16>, vector<128x128xbf16>, vector<96x128xf32> -> vector<96x128xf32>
    %78 = arith.addf %72, %77 : vector<96x128xf32>
    %79 = vector.extract_strided_slice %71 {offsets = [1, 0], sizes = [96, 128], strides = [1, 1]} : vector<102x128xf32> to vector<96x128xf32>
    %80 = arith.truncf %79 : vector<96x128xf32> to vector<96x128xbf16>
    %c1_50 = arith.constant 1 : index
    %c0_51 = arith.constant 0 : index
    %c0_52 = arith.constant 0 : index
    %81 = vector.load %arg8[%c1_50, %c0_51, %c0_52] : memref<7x128x128xbf16, #tpu.memory_space<vmem>>, vector<1x128x128xbf16>
    %82 = vector.shape_cast %81 : vector<1x128x128xbf16> to vector<128x128xbf16>
    %cst_53 = arith.constant dense<0.000000e+00> : vector<96x128xf32>
    %83 = tpu.matmul %80, %82, %cst_53 {dimension_numbers = #tpu.dot_dimension_numbers<[1], [0], [0], [1], [0, 0, 1, 1], [], []>} : vector<96x128xbf16>, vector<128x128xbf16>, vector<96x128xf32> -> vector<96x128xf32>
    %84 = arith.addf %78, %83 : vector<96x128xf32>
    %85 = vector.extract_strided_slice %71 {offsets = [2, 0], sizes = [96, 128], strides = [1, 1]} : vector<102x128xf32> to vector<96x128xf32>
    %86 = arith.truncf %85 : vector<96x128xf32> to vector<96x128xbf16>
    %c2_54 = arith.constant 2 : index
    %c0_55 = arith.constant 0 : index
    %c0_56 = arith.constant 0 : index
    %87 = vector.load %arg8[%c2_54, %c0_55, %c0_56] : memref<7x128x128xbf16, #tpu.memory_space<vmem>>, vector<1x128x128xbf16>
    %88 = vector.shape_cast %87 : vector<1x128x128xbf16> to vector<128x128xbf16>
    %cst_57 = arith.constant dense<0.000000e+00> : vector<96x128xf32>
    %89 = tpu.matmul %86, %88, %cst_57 {dimension_numbers = #tpu.dot_dimension_numbers<[1], [0], [0], [1], [0, 0, 1, 1], [], []>} : vector<96x128xbf16>, vector<128x128xbf16>, vector<96x128xf32> -> vector<96x128xf32>
    %90 = arith.addf %84, %89 : vector<96x128xf32>
    %91 = vector.extract_strided_slice %71 {offsets = [3, 0], sizes = [96, 128], strides = [1, 1]} : vector<102x128xf32> to vector<96x128xf32>
    %92 = arith.truncf %91 : vector<96x128xf32> to vector<96x128xbf16>
    %c3_58 = arith.constant 3 : index
    %c0_59 = arith.constant 0 : index
    %c0_60 = arith.constant 0 : index
    %93 = vector.load %arg8[%c3_58, %c0_59, %c0_60] : memref<7x128x128xbf16, #tpu.memory_space<vmem>>, vector<1x128x128xbf16>
    %94 = vector.shape_cast %93 : vector<1x128x128xbf16> to vector<128x128xbf16>
    %cst_61 = arith.constant dense<0.000000e+00> : vector<96x128xf32>
    %95 = tpu.matmul %92, %94, %cst_61 {dimension_numbers = #tpu.dot_dimension_numbers<[1], [0], [0], [1], [0, 0, 1, 1], [], []>} : vector<96x128xbf16>, vector<128x128xbf16>, vector<96x128xf32> -> vector<96x128xf32>
    %96 = arith.addf %90, %95 : vector<96x128xf32>
    %97 = vector.extract_strided_slice %71 {offsets = [4, 0], sizes = [96, 128], strides = [1, 1]} : vector<102x128xf32> to vector<96x128xf32>
    %98 = arith.truncf %97 : vector<96x128xf32> to vector<96x128xbf16>
    %c4_62 = arith.constant 4 : index
    %c0_63 = arith.constant 0 : index
    %c0_64 = arith.constant 0 : index
    %99 = vector.load %arg8[%c4_62, %c0_63, %c0_64] : memref<7x128x128xbf16, #tpu.memory_space<vmem>>, vector<1x128x128xbf16>
    %100 = vector.shape_cast %99 : vector<1x128x128xbf16> to vector<128x128xbf16>
    %cst_65 = arith.constant dense<0.000000e+00> : vector<96x128xf32>
    %101 = tpu.matmul %98, %100, %cst_65 {dimension_numbers = #tpu.dot_dimension_numbers<[1], [0], [0], [1], [0, 0, 1, 1], [], []>} : vector<96x128xbf16>, vector<128x128xbf16>, vector<96x128xf32> -> vector<96x128xf32>
    %102 = arith.addf %96, %101 : vector<96x128xf32>
    %103 = vector.extract_strided_slice %71 {offsets = [5, 0], sizes = [96, 128], strides = [1, 1]} : vector<102x128xf32> to vector<96x128xf32>
    %104 = arith.truncf %103 : vector<96x128xf32> to vector<96x128xbf16>
    %c5_66 = arith.constant 5 : index
    %c0_67 = arith.constant 0 : index
    %c0_68 = arith.constant 0 : index
    %105 = vector.load %arg8[%c5_66, %c0_67, %c0_68] : memref<7x128x128xbf16, #tpu.memory_space<vmem>>, vector<1x128x128xbf16>
    %106 = vector.shape_cast %105 : vector<1x128x128xbf16> to vector<128x128xbf16>
    %cst_69 = arith.constant dense<0.000000e+00> : vector<96x128xf32>
    %107 = tpu.matmul %104, %106, %cst_69 {dimension_numbers = #tpu.dot_dimension_numbers<[1], [0], [0], [1], [0, 0, 1, 1], [], []>} : vector<96x128xbf16>, vector<128x128xbf16>, vector<96x128xf32> -> vector<96x128xf32>
    %108 = arith.addf %102, %107 : vector<96x128xf32>
    %109 = vector.extract_strided_slice %71 {offsets = [6, 0], sizes = [96, 128], strides = [1, 1]} : vector<102x128xf32> to vector<96x128xf32>
    %110 = arith.truncf %109 : vector<96x128xf32> to vector<96x128xbf16>
    %c6_70 = arith.constant 6 : index
    %c0_71 = arith.constant 0 : index
    %c0_72 = arith.constant 0 : index
    %111 = vector.load %arg8[%c6_70, %c0_71, %c0_72] : memref<7x128x128xbf16, #tpu.memory_space<vmem>>, vector<1x128x128xbf16>
    %112 = vector.shape_cast %111 : vector<1x128x128xbf16> to vector<128x128xbf16>
    %cst_73 = arith.constant dense<0.000000e+00> : vector<96x128xf32>
    %113 = tpu.matmul %110, %112, %cst_73 {dimension_numbers = #tpu.dot_dimension_numbers<[1], [0], [0], [1], [0, 0, 1, 1], [], []>} : vector<96x128xbf16>, vector<128x128xbf16>, vector<96x128xf32> -> vector<96x128xf32>
    %114 = arith.addf %108, %113 : vector<96x128xf32>
    %c0_74 = arith.constant 0 : index
    %c0_75 = arith.constant 0 : index
    %115 = vector.load %arg9[%c0_74, %c0_75] : memref<1x128xf32, #tpu.memory_space<vmem>>, vector<1x128xf32>
    %116 = vector.broadcast %115 : vector<1x128xf32> to vector<96x128xf32>
    %117 = arith.mulf %114, %116 : vector<96x128xf32>
    %c0_76 = arith.constant 0 : index
    %c0_77 = arith.constant 0 : index
    %118 = vector.load %arg10[%c0_76, %c0_77] : memref<1x128xf32, #tpu.memory_space<vmem>>, vector<1x128xf32>
    %119 = vector.broadcast %118 : vector<1x128xf32> to vector<96x128xf32>
    %120 = arith.addf %117, %119 : vector<96x128xf32>
    %cst_78 = arith.constant 0.000000e+00 : f32
    %121 = vector.broadcast %cst_78 : f32 to vector<96x128xf32>
    %122 = arith.maximumf %120, %121 : vector<96x128xf32>
    %c0_79 = arith.constant 0 : index
    %c0_80 = arith.constant 0 : index
    %123 = vector.load %arg19[%c0_79, %c0_80] : memref<192x128xf32, #tpu.memory_space<vmem>>, vector<96x128xf32>
    tpu.vector_store %arg19[%c0_79, %c0_80], %122 {strides = array<i32>} : memref<192x128xf32, #tpu.memory_space<vmem>>, vector<96x128xf32>,
    %c0_81 = arith.constant 0 : index
    %c0_82 = arith.constant 0 : index
    %124 = tpu.strided_load %arg19[%c0_81, %c0_82] {strides = array<i32: 2, 1>} : memref<192x128xf32, #tpu.memory_space<vmem>>, vector<48x128xf32>
    %c1_83 = arith.constant 1 : index
    %c0_84 = arith.constant 0 : index
    %125 = tpu.strided_load %arg19[%c1_83, %c0_84] {strides = array<i32: 2, 1>} : memref<192x128xf32, #tpu.memory_space<vmem>>, vector<48x128xf32>
    %126 = arith.maximumf %124, %125 : vector<48x128xf32>
    %cst_85 = arith.constant 0.000000e+00 : f32
    %127 = vector.broadcast %cst_85 : f32 to vector<3x128xf32>
    %128 = tpu.concatenate %127, %126, %127 in 0 : vector<3x128xf32>, vector<48x128xf32>, vector<3x128xf32> -> vector<54x128xf32>
    %cst_86 = arith.constant 0.000000e+00 : f32
    %129 = vector.broadcast %cst_86 : f32 to vector<48x128xf32>
    %130 = vector.extract_strided_slice %128 {offsets = [0, 0], sizes = [48, 128], strides = [1, 1]} : vector<54x128xf32> to vector<48x128xf32>
    %131 = arith.truncf %130 : vector<48x128xf32> to vector<48x128xbf16>
    %c0_87 = arith.constant 0 : index
    %c0_88 = arith.constant 0 : index
    %c0_89 = arith.constant 0 : index
    %132 = vector.load %arg11[%c0_87, %c0_88, %c0_89] : memref<7x128x128xbf16, #tpu.memory_space<vmem>>, vector<1x128x128xbf16>
    %133 = vector.shape_cast %132 : vector<1x128x128xbf16> to vector<128x128xbf16>
    %cst_90 = arith.constant dense<0.000000e+00> : vector<48x128xf32>
    %134 = tpu.matmul %131, %133, %cst_90 {dimension_numbers = #tpu.dot_dimension_numbers<[1], [0], [0], [1], [0, 0, 1, 1], [], []>} : vector<48x128xbf16>, vector<128x128xbf16>, vector<48x128xf32> -> vector<48x128xf32>
    %135 = arith.addf %129, %134 : vector<48x128xf32>
    %136 = vector.extract_strided_slice %128 {offsets = [1, 0], sizes = [48, 128], strides = [1, 1]} : vector<54x128xf32> to vector<48x128xf32>
    %137 = arith.truncf %136 : vector<48x128xf32> to vector<48x128xbf16>
    %c1_91 = arith.constant 1 : index
    %c0_92 = arith.constant 0 : index
    %c0_93 = arith.constant 0 : index
    %138 = vector.load %arg11[%c1_91, %c0_92, %c0_93] : memref<7x128x128xbf16, #tpu.memory_space<vmem>>, vector<1x128x128xbf16>
    %139 = vector.shape_cast %138 : vector<1x128x128xbf16> to vector<128x128xbf16>
    %cst_94 = arith.constant dense<0.000000e+00> : vector<48x128xf32>
    %140 = tpu.matmul %137, %139, %cst_94 {dimension_numbers = #tpu.dot_dimension_numbers<[1], [0], [0], [1], [0, 0, 1, 1], [], []>} : vector<48x128xbf16>, vector<128x128xbf16>, vector<48x128xf32> -> vector<48x128xf32>
    %141 = arith.addf %135, %140 : vector<48x128xf32>
    %142 = vector.extract_strided_slice %128 {offsets = [2, 0], sizes = [48, 128], strides = [1, 1]} : vector<54x128xf32> to vector<48x128xf32>
    %143 = arith.truncf %142 : vector<48x128xf32> to vector<48x128xbf16>
    %c2_95 = arith.constant 2 : index
    %c0_96 = arith.constant 0 : index
    %c0_97 = arith.constant 0 : index
    %144 = vector.load %arg11[%c2_95, %c0_96, %c0_97] : memref<7x128x128xbf16, #tpu.memory_space<vmem>>, vector<1x128x128xbf16>
    %145 = vector.shape_cast %144 : vector<1x128x128xbf16> to vector<128x128xbf16>
    %cst_98 = arith.constant dense<0.000000e+00> : vector<48x128xf32>
    %146 = tpu.matmul %143, %145, %cst_98 {dimension_numbers = #tpu.dot_dimension_numbers<[1], [0], [0], [1], [0, 0, 1, 1], [], []>} : vector<48x128xbf16>, vector<128x128xbf16>, vector<48x128xf32> -> vector<48x128xf32>
    %147 = arith.addf %141, %146 : vector<48x128xf32>
    %148 = vector.extract_strided_slice %128 {offsets = [3, 0], sizes = [48, 128], strides = [1, 1]} : vector<54x128xf32> to vector<48x128xf32>
    %149 = arith.truncf %148 : vector<48x128xf32> to vector<48x128xbf16>
    %c3_99 = arith.constant 3 : index
    %c0_100 = arith.constant 0 : index
    %c0_101 = arith.constant 0 : index
    %150 = vector.load %arg11[%c3_99, %c0_100, %c0_101] : memref<7x128x128xbf16, #tpu.memory_space<vmem>>, vector<1x128x128xbf16>
    %151 = vector.shape_cast %150 : vector<1x128x128xbf16> to vector<128x128xbf16>
    %cst_102 = arith.constant dense<0.000000e+00> : vector<48x128xf32>
    %152 = tpu.matmul %149, %151, %cst_102 {dimension_numbers = #tpu.dot_dimension_numbers<[1], [0], [0], [1], [0, 0, 1, 1], [], []>} : vector<48x128xbf16>, vector<128x128xbf16>, vector<48x128xf32> -> vector<48x128xf32>
    %153 = arith.addf %147, %152 : vector<48x128xf32>
    %154 = vector.extract_strided_slice %128 {offsets = [4, 0], sizes = [48, 128], strides = [1, 1]} : vector<54x128xf32> to vector<48x128xf32>
    %155 = arith.truncf %154 : vector<48x128xf32> to vector<48x128xbf16>
    %c4_103 = arith.constant 4 : index
    %c0_104 = arith.constant 0 : index
    %c0_105 = arith.constant 0 : index
    %156 = vector.load %arg11[%c4_103, %c0_104, %c0_105] : memref<7x128x128xbf16, #tpu.memory_space<vmem>>, vector<1x128x128xbf16>
    %157 = vector.shape_cast %156 : vector<1x128x128xbf16> to vector<128x128xbf16>
    %cst_106 = arith.constant dense<0.000000e+00> : vector<48x128xf32>
    %158 = tpu.matmul %155, %157, %cst_106 {dimension_numbers = #tpu.dot_dimension_numbers<[1], [0], [0], [1], [0, 0, 1, 1], [], []>} : vector<48x128xbf16>, vector<128x128xbf16>, vector<48x128xf32> -> vector<48x128xf32>
    %159 = arith.addf %153, %158 : vector<48x128xf32>
    %160 = vector.extract_strided_slice %128 {offsets = [5, 0], sizes = [48, 128], strides = [1, 1]} : vector<54x128xf32> to vector<48x128xf32>
    %161 = arith.truncf %160 : vector<48x128xf32> to vector<48x128xbf16>
    %c5_107 = arith.constant 5 : index
    %c0_108 = arith.constant 0 : index
    %c0_109 = arith.constant 0 : index
    %162 = vector.load %arg11[%c5_107, %c0_108, %c0_109] : memref<7x128x128xbf16, #tpu.memory_space<vmem>>, vector<1x128x128xbf16>
    %163 = vector.shape_cast %162 : vector<1x128x128xbf16> to vector<128x128xbf16>
    %cst_110 = arith.constant dense<0.000000e+00> : vector<48x128xf32>
    %164 = tpu.matmul %161, %163, %cst_110 {dimension_numbers = #tpu.dot_dimension_numbers<[1], [0], [0], [1], [0, 0, 1, 1], [], []>} : vector<48x128xbf16>, vector<128x128xbf16>, vector<48x128xf32> -> vector<48x128xf32>
    %165 = arith.addf %159, %164 : vector<48x128xf32>
    %166 = vector.extract_strided_slice %128 {offsets = [6, 0], sizes = [48, 128], strides = [1, 1]} : vector<54x128xf32> to vector<48x128xf32>
    %167 = arith.truncf %166 : vector<48x128xf32> to vector<48x128xbf16>
    %c6_111 = arith.constant 6 : index
    %c0_112 = arith.constant 0 : index
    %c0_113 = arith.constant 0 : index
    %168 = vector.load %arg11[%c6_111, %c0_112, %c0_113] : memref<7x128x128xbf16, #tpu.memory_space<vmem>>, vector<1x128x128xbf16>
    %169 = vector.shape_cast %168 : vector<1x128x128xbf16> to vector<128x128xbf16>
    %cst_114 = arith.constant dense<0.000000e+00> : vector<48x128xf32>
    %170 = tpu.matmul %167, %169, %cst_114 {dimension_numbers = #tpu.dot_dimension_numbers<[1], [0], [0], [1], [0, 0, 1, 1], [], []>} : vector<48x128xbf16>, vector<128x128xbf16>, vector<48x128xf32> -> vector<48x128xf32>
    %171 = arith.addf %165, %170 : vector<48x128xf32>
    %c0_115 = arith.constant 0 : index
    %c0_116 = arith.constant 0 : index
    %172 = vector.load %arg12[%c0_115, %c0_116] : memref<1x128xf32, #tpu.memory_space<vmem>>, vector<1x128xf32>
    %173 = vector.broadcast %172 : vector<1x128xf32> to vector<48x128xf32>
    %174 = arith.mulf %171, %173 : vector<48x128xf32>
    %c0_117 = arith.constant 0 : index
    %c0_118 = arith.constant 0 : index
    %175 = vector.load %arg13[%c0_117, %c0_118] : memref<1x128xf32, #tpu.memory_space<vmem>>, vector<1x128xf32>
    %176 = vector.broadcast %175 : vector<1x128xf32> to vector<48x128xf32>
    %177 = arith.addf %174, %176 : vector<48x128xf32>
    %cst_119 = arith.constant 0.000000e+00 : f32
    %178 = vector.broadcast %cst_119 : f32 to vector<48x128xf32>
    %179 = arith.maximumf %177, %178 : vector<48x128xf32>
    %c0_120 = arith.constant 0 : index
    %c0_121 = arith.constant 0 : index
    %180 = vector.load %arg19[%c0_120, %c0_121] : memref<192x128xf32, #tpu.memory_space<vmem>>, vector<48x128xf32>
    tpu.vector_store %arg19[%c0_120, %c0_121], %179 {strides = array<i32>} : memref<192x128xf32, #tpu.memory_space<vmem>>, vector<48x128xf32>,
    %c0_122 = arith.constant 0 : index
    %c0_123 = arith.constant 0 : index
    %181 = tpu.strided_load %arg19[%c0_122, %c0_123] {strides = array<i32: 2, 1>} : memref<192x128xf32, #tpu.memory_space<vmem>>, vector<24x128xf32>
    %c1_124 = arith.constant 1 : index
    %c0_125 = arith.constant 0 : index
    %182 = tpu.strided_load %arg19[%c1_124, %c0_125] {strides = array<i32: 2, 1>} : memref<192x128xf32, #tpu.memory_space<vmem>>, vector<24x128xf32>
    %183 = arith.maximumf %181, %182 : vector<24x128xf32>
    %c0_126 = arith.constant 0 : index
    %c0_127 = arith.constant 0 : index
    %184 = vector.load %arg15[%c0_126, %c0_127] : memref<1x128xf32, #tpu.memory_space<vmem>>, vector<1x128xf32>
    %185 = vector.extract_strided_slice %183 {offsets = [0, 0], sizes = [1, 128], strides = [1, 1]} : vector<24x128xf32> to vector<1x128xf32>
    %186 = arith.truncf %185 : vector<1x128xf32> to vector<1x128xbf16>
    %c0_128 = arith.constant 0 : index
    %c0_129 = arith.constant 0 : index
    %c0_130 = arith.constant 0 : index
    %187 = vector.load %arg14[%c0_128, %c0_129, %c0_130] : memref<24x128x128xbf16, #tpu.memory_space<vmem>>, vector<1x128x128xbf16>
    %188 = vector.shape_cast %187 : vector<1x128x128xbf16> to vector<128x128xbf16>
    %cst_131 = arith.constant dense<0.000000e+00> : vector<1x128xf32>
    %189 = tpu.matmul %186, %188, %cst_131 {dimension_numbers = #tpu.dot_dimension_numbers<[1], [0], [0], [1], [0, 0, 1, 1], [], []>} : vector<1x128xbf16>, vector<128x128xbf16>, vector<1x128xf32> -> vector<1x128xf32>
    %190 = arith.addf %184, %189 : vector<1x128xf32>
    %191 = vector.extract_strided_slice %183 {offsets = [1, 0], sizes = [1, 128], strides = [1, 1]} : vector<24x128xf32> to vector<1x128xf32>
    %192 = arith.truncf %191 : vector<1x128xf32> to vector<1x128xbf16>
    %c1_132 = arith.constant 1 : index
    %c0_133 = arith.constant 0 : index
    %c0_134 = arith.constant 0 : index
    %193 = vector.load %arg14[%c1_132, %c0_133, %c0_134] : memref<24x128x128xbf16, #tpu.memory_space<vmem>>, vector<1x128x128xbf16>
    %194 = vector.shape_cast %193 : vector<1x128x128xbf16> to vector<128x128xbf16>
    %cst_135 = arith.constant dense<0.000000e+00> : vector<1x128xf32>
    %195 = tpu.matmul %192, %194, %cst_135 {dimension_numbers = #tpu.dot_dimension_numbers<[1], [0], [0], [1], [0, 0, 1, 1], [], []>} : vector<1x128xbf16>, vector<128x128xbf16>, vector<1x128xf32> -> vector<1x128xf32>
    %196 = arith.addf %190, %195 : vector<1x128xf32>
    %197 = vector.extract_strided_slice %183 {offsets = [2, 0], sizes = [1, 128], strides = [1, 1]} : vector<24x128xf32> to vector<1x128xf32>
    %198 = arith.truncf %197 : vector<1x128xf32> to vector<1x128xbf16>
    %c2_136 = arith.constant 2 : index
    %c0_137 = arith.constant 0 : index
    %c0_138 = arith.constant 0 : index
    %199 = vector.load %arg14[%c2_136, %c0_137, %c0_138] : memref<24x128x128xbf16, #tpu.memory_space<vmem>>, vector<1x128x128xbf16>
    %200 = vector.shape_cast %199 : vector<1x128x128xbf16> to vector<128x128xbf16>
    %cst_139 = arith.constant dense<0.000000e+00> : vector<1x128xf32>
    %201 = tpu.matmul %198, %200, %cst_139 {dimension_numbers = #tpu.dot_dimension_numbers<[1], [0], [0], [1], [0, 0, 1, 1], [], []>} : vector<1x128xbf16>, vector<128x128xbf16>, vector<1x128xf32> -> vector<1x128xf32>
    %202 = arith.addf %196, %201 : vector<1x128xf32>
    %203 = vector.extract_strided_slice %183 {offsets = [3, 0], sizes = [1, 128], strides = [1, 1]} : vector<24x128xf32> to vector<1x128xf32>
    %204 = arith.truncf %203 : vector<1x128xf32> to vector<1x128xbf16>
    %c3_140 = arith.constant 3 : index
    %c0_141 = arith.constant 0 : index
    %c0_142 = arith.constant 0 : index
    %205 = vector.load %arg14[%c3_140, %c0_141, %c0_142] : memref<24x128x128xbf16, #tpu.memory_space<vmem>>, vector<1x128x128xbf16>
    %206 = vector.shape_cast %205 : vector<1x128x128xbf16> to vector<128x128xbf16>
    %cst_143 = arith.constant dense<0.000000e+00> : vector<1x128xf32>
    %207 = tpu.matmul %204, %206, %cst_143 {dimension_numbers = #tpu.dot_dimension_numbers<[1], [0], [0], [1], [0, 0, 1, 1], [], []>} : vector<1x128xbf16>, vector<128x128xbf16>, vector<1x128xf32> -> vector<1x128xf32>
    %208 = arith.addf %202, %207 : vector<1x128xf32>
    %209 = vector.extract_strided_slice %183 {offsets = [4, 0], sizes = [1, 128], strides = [1, 1]} : vector<24x128xf32> to vector<1x128xf32>
    %210 = arith.truncf %209 : vector<1x128xf32> to vector<1x128xbf16>
    %c4_144 = arith.constant 4 : index
    %c0_145 = arith.constant 0 : index
    %c0_146 = arith.constant 0 : index
    %211 = vector.load %arg14[%c4_144, %c0_145, %c0_146] : memref<24x128x128xbf16, #tpu.memory_space<vmem>>, vector<1x128x128xbf16>
    %212 = vector.shape_cast %211 : vector<1x128x128xbf16> to vector<128x128xbf16>
    %cst_147 = arith.constant dense<0.000000e+00> : vector<1x128xf32>
    %213 = tpu.matmul %210, %212, %cst_147 {dimension_numbers = #tpu.dot_dimension_numbers<[1], [0], [0], [1], [0, 0, 1, 1], [], []>} : vector<1x128xbf16>, vector<128x128xbf16>, vector<1x128xf32> -> vector<1x128xf32>
    %214 = arith.addf %208, %213 : vector<1x128xf32>
    %215 = vector.extract_strided_slice %183 {offsets = [5, 0], sizes = [1, 128], strides = [1, 1]} : vector<24x128xf32> to vector<1x128xf32>
    %216 = arith.truncf %215 : vector<1x128xf32> to vector<1x128xbf16>
    %c5_148 = arith.constant 5 : index
    %c0_149 = arith.constant 0 : index
    %c0_150 = arith.constant 0 : index
    %217 = vector.load %arg14[%c5_148, %c0_149, %c0_150] : memref<24x128x128xbf16, #tpu.memory_space<vmem>>, vector<1x128x128xbf16>
    %218 = vector.shape_cast %217 : vector<1x128x128xbf16> to vector<128x128xbf16>
    %cst_151 = arith.constant dense<0.000000e+00> : vector<1x128xf32>
    %219 = tpu.matmul %216, %218, %cst_151 {dimension_numbers = #tpu.dot_dimension_numbers<[1], [0], [0], [1], [0, 0, 1, 1], [], []>} : vector<1x128xbf16>, vector<128x128xbf16>, vector<1x128xf32> -> vector<1x128xf32>
    %220 = arith.addf %214, %219 : vector<1x128xf32>
    %221 = vector.extract_strided_slice %183 {offsets = [6, 0], sizes = [1, 128], strides = [1, 1]} : vector<24x128xf32> to vector<1x128xf32>
    %222 = arith.truncf %221 : vector<1x128xf32> to vector<1x128xbf16>
    %c6_152 = arith.constant 6 : index
    %c0_153 = arith.constant 0 : index
    %c0_154 = arith.constant 0 : index
    %223 = vector.load %arg14[%c6_152, %c0_153, %c0_154] : memref<24x128x128xbf16, #tpu.memory_space<vmem>>, vector<1x128x128xbf16>
    %224 = vector.shape_cast %223 : vector<1x128x128xbf16> to vector<128x128xbf16>
    %cst_155 = arith.constant dense<0.000000e+00> : vector<1x128xf32>
    %225 = tpu.matmul %222, %224, %cst_155 {dimension_numbers = #tpu.dot_dimension_numbers<[1], [0], [0], [1], [0, 0, 1, 1], [], []>} : vector<1x128xbf16>, vector<128x128xbf16>, vector<1x128xf32> -> vector<1x128xf32>
    %226 = arith.addf %220, %225 : vector<1x128xf32>
    %227 = vector.extract_strided_slice %183 {offsets = [7, 0], sizes = [1, 128], strides = [1, 1]} : vector<24x128xf32> to vector<1x128xf32>
    %228 = arith.truncf %227 : vector<1x128xf32> to vector<1x128xbf16>
    %c7 = arith.constant 7 : index
    %c0_156 = arith.constant 0 : index
    %c0_157 = arith.constant 0 : index
    %229 = vector.load %arg14[%c7, %c0_156, %c0_157] : memref<24x128x128xbf16, #tpu.memory_space<vmem>>, vector<1x128x128xbf16>
    %230 = vector.shape_cast %229 : vector<1x128x128xbf16> to vector<128x128xbf16>
    %cst_158 = arith.constant dense<0.000000e+00> : vector<1x128xf32>
    %231 = tpu.matmul %228, %230, %cst_158 {dimension_numbers = #tpu.dot_dimension_numbers<[1], [0], [0], [1], [0, 0, 1, 1], [], []>} : vector<1x128xbf16>, vector<128x128xbf16>, vector<1x128xf32> -> vector<1x128xf32>
    %232 = arith.addf %226, %231 : vector<1x128xf32>
    %233 = vector.extract_strided_slice %183 {offsets = [8, 0], sizes = [1, 128], strides = [1, 1]} : vector<24x128xf32> to vector<1x128xf32>
    %234 = arith.truncf %233 : vector<1x128xf32> to vector<1x128xbf16>
    %c8 = arith.constant 8 : index
    %c0_159 = arith.constant 0 : index
    %c0_160 = arith.constant 0 : index
    %235 = vector.load %arg14[%c8, %c0_159, %c0_160] : memref<24x128x128xbf16, #tpu.memory_space<vmem>>, vector<1x128x128xbf16>
    %236 = vector.shape_cast %235 : vector<1x128x128xbf16> to vector<128x128xbf16>
    %cst_161 = arith.constant dense<0.000000e+00> : vector<1x128xf32>
    %237 = tpu.matmul %234, %236, %cst_161 {dimension_numbers = #tpu.dot_dimension_numbers<[1], [0], [0], [1], [0, 0, 1, 1], [], []>} : vector<1x128xbf16>, vector<128x128xbf16>, vector<1x128xf32> -> vector<1x128xf32>
    %238 = arith.addf %232, %237 : vector<1x128xf32>
    %239 = vector.extract_strided_slice %183 {offsets = [9, 0], sizes = [1, 128], strides = [1, 1]} : vector<24x128xf32> to vector<1x128xf32>
    %240 = arith.truncf %239 : vector<1x128xf32> to vector<1x128xbf16>
    %c9 = arith.constant 9 : index
    %c0_162 = arith.constant 0 : index
    %c0_163 = arith.constant 0 : index
    %241 = vector.load %arg14[%c9, %c0_162, %c0_163] : memref<24x128x128xbf16, #tpu.memory_space<vmem>>, vector<1x128x128xbf16>
    %242 = vector.shape_cast %241 : vector<1x128x128xbf16> to vector<128x128xbf16>
    %cst_164 = arith.constant dense<0.000000e+00> : vector<1x128xf32>
    %243 = tpu.matmul %240, %242, %cst_164 {dimension_numbers = #tpu.dot_dimension_numbers<[1], [0], [0], [1], [0, 0, 1, 1], [], []>} : vector<1x128xbf16>, vector<128x128xbf16>, vector<1x128xf32> -> vector<1x128xf32>
    %244 = arith.addf %238, %243 : vector<1x128xf32>
    %245 = vector.extract_strided_slice %183 {offsets = [10, 0], sizes = [1, 128], strides = [1, 1]} : vector<24x128xf32> to vector<1x128xf32>
    %246 = arith.truncf %245 : vector<1x128xf32> to vector<1x128xbf16>
    %c10 = arith.constant 10 : index
    %c0_165 = arith.constant 0 : index
    %c0_166 = arith.constant 0 : index
    %247 = vector.load %arg14[%c10, %c0_165, %c0_166] : memref<24x128x128xbf16, #tpu.memory_space<vmem>>, vector<1x128x128xbf16>
    %248 = vector.shape_cast %247 : vector<1x128x128xbf16> to vector<128x128xbf16>
    %cst_167 = arith.constant dense<0.000000e+00> : vector<1x128xf32>
    %249 = tpu.matmul %246, %248, %cst_167 {dimension_numbers = #tpu.dot_dimension_numbers<[1], [0], [0], [1], [0, 0, 1, 1], [], []>} : vector<1x128xbf16>, vector<128x128xbf16>, vector<1x128xf32> -> vector<1x128xf32>
    %250 = arith.addf %244, %249 : vector<1x128xf32>
    %251 = vector.extract_strided_slice %183 {offsets = [11, 0], sizes = [1, 128], strides = [1, 1]} : vector<24x128xf32> to vector<1x128xf32>
    %252 = arith.truncf %251 : vector<1x128xf32> to vector<1x128xbf16>
    %c11 = arith.constant 11 : index
    %c0_168 = arith.constant 0 : index
    %c0_169 = arith.constant 0 : index
    %253 = vector.load %arg14[%c11, %c0_168, %c0_169] : memref<24x128x128xbf16, #tpu.memory_space<vmem>>, vector<1x128x128xbf16>
    %254 = vector.shape_cast %253 : vector<1x128x128xbf16> to vector<128x128xbf16>
    %cst_170 = arith.constant dense<0.000000e+00> : vector<1x128xf32>
    %255 = tpu.matmul %252, %254, %cst_170 {dimension_numbers = #tpu.dot_dimension_numbers<[1], [0], [0], [1], [0, 0, 1, 1], [], []>} : vector<1x128xbf16>, vector<128x128xbf16>, vector<1x128xf32> -> vector<1x128xf32>
    %256 = arith.addf %250, %255 : vector<1x128xf32>
    %257 = vector.extract_strided_slice %183 {offsets = [12, 0], sizes = [1, 128], strides = [1, 1]} : vector<24x128xf32> to vector<1x128xf32>
    %258 = arith.truncf %257 : vector<1x128xf32> to vector<1x128xbf16>
    %c12 = arith.constant 12 : index
    %c0_171 = arith.constant 0 : index
    %c0_172 = arith.constant 0 : index
    %259 = vector.load %arg14[%c12, %c0_171, %c0_172] : memref<24x128x128xbf16, #tpu.memory_space<vmem>>, vector<1x128x128xbf16>
    %260 = vector.shape_cast %259 : vector<1x128x128xbf16> to vector<128x128xbf16>
    %cst_173 = arith.constant dense<0.000000e+00> : vector<1x128xf32>
    %261 = tpu.matmul %258, %260, %cst_173 {dimension_numbers = #tpu.dot_dimension_numbers<[1], [0], [0], [1], [0, 0, 1, 1], [], []>} : vector<1x128xbf16>, vector<128x128xbf16>, vector<1x128xf32> -> vector<1x128xf32>
    %262 = arith.addf %256, %261 : vector<1x128xf32>
    %263 = vector.extract_strided_slice %183 {offsets = [13, 0], sizes = [1, 128], strides = [1, 1]} : vector<24x128xf32> to vector<1x128xf32>
    %264 = arith.truncf %263 : vector<1x128xf32> to vector<1x128xbf16>
    %c13 = arith.constant 13 : index
    %c0_174 = arith.constant 0 : index
    %c0_175 = arith.constant 0 : index
    %265 = vector.load %arg14[%c13, %c0_174, %c0_175] : memref<24x128x128xbf16, #tpu.memory_space<vmem>>, vector<1x128x128xbf16>
    %266 = vector.shape_cast %265 : vector<1x128x128xbf16> to vector<128x128xbf16>
    %cst_176 = arith.constant dense<0.000000e+00> : vector<1x128xf32>
    %267 = tpu.matmul %264, %266, %cst_176 {dimension_numbers = #tpu.dot_dimension_numbers<[1], [0], [0], [1], [0, 0, 1, 1], [], []>} : vector<1x128xbf16>, vector<128x128xbf16>, vector<1x128xf32> -> vector<1x128xf32>
    %268 = arith.addf %262, %267 : vector<1x128xf32>
    %269 = vector.extract_strided_slice %183 {offsets = [14, 0], sizes = [1, 128], strides = [1, 1]} : vector<24x128xf32> to vector<1x128xf32>
    %270 = arith.truncf %269 : vector<1x128xf32> to vector<1x128xbf16>
    %c14 = arith.constant 14 : index
    %c0_177 = arith.constant 0 : index
    %c0_178 = arith.constant 0 : index
    %271 = vector.load %arg14[%c14, %c0_177, %c0_178] : memref<24x128x128xbf16, #tpu.memory_space<vmem>>, vector<1x128x128xbf16>
    %272 = vector.shape_cast %271 : vector<1x128x128xbf16> to vector<128x128xbf16>
    %cst_179 = arith.constant dense<0.000000e+00> : vector<1x128xf32>
    %273 = tpu.matmul %270, %272, %cst_179 {dimension_numbers = #tpu.dot_dimension_numbers<[1], [0], [0], [1], [0, 0, 1, 1], [], []>} : vector<1x128xbf16>, vector<128x128xbf16>, vector<1x128xf32> -> vector<1x128xf32>
    %274 = arith.addf %268, %273 : vector<1x128xf32>
    %275 = vector.extract_strided_slice %183 {offsets = [15, 0], sizes = [1, 128], strides = [1, 1]} : vector<24x128xf32> to vector<1x128xf32>
    %276 = arith.truncf %275 : vector<1x128xf32> to vector<1x128xbf16>
    %c15 = arith.constant 15 : index
    %c0_180 = arith.constant 0 : index
    %c0_181 = arith.constant 0 : index
    %277 = vector.load %arg14[%c15, %c0_180, %c0_181] : memref<24x128x128xbf16, #tpu.memory_space<vmem>>, vector<1x128x128xbf16>
    %278 = vector.shape_cast %277 : vector<1x128x128xbf16> to vector<128x128xbf16>
    %cst_182 = arith.constant dense<0.000000e+00> : vector<1x128xf32>
    %279 = tpu.matmul %276, %278, %cst_182 {dimension_numbers = #tpu.dot_dimension_numbers<[1], [0], [0], [1], [0, 0, 1, 1], [], []>} : vector<1x128xbf16>, vector<128x128xbf16>, vector<1x128xf32> -> vector<1x128xf32>
    %280 = arith.addf %274, %279 : vector<1x128xf32>
    %281 = vector.extract_strided_slice %183 {offsets = [16, 0], sizes = [1, 128], strides = [1, 1]} : vector<24x128xf32> to vector<1x128xf32>
    %282 = arith.truncf %281 : vector<1x128xf32> to vector<1x128xbf16>
    %c16 = arith.constant 16 : index
    %c0_183 = arith.constant 0 : index
    %c0_184 = arith.constant 0 : index
    %283 = vector.load %arg14[%c16, %c0_183, %c0_184] : memref<24x128x128xbf16, #tpu.memory_space<vmem>>, vector<1x128x128xbf16>
    %284 = vector.shape_cast %283 : vector<1x128x128xbf16> to vector<128x128xbf16>
    %cst_185 = arith.constant dense<0.000000e+00> : vector<1x128xf32>
    %285 = tpu.matmul %282, %284, %cst_185 {dimension_numbers = #tpu.dot_dimension_numbers<[1], [0], [0], [1], [0, 0, 1, 1], [], []>} : vector<1x128xbf16>, vector<128x128xbf16>, vector<1x128xf32> -> vector<1x128xf32>
    %286 = arith.addf %280, %285 : vector<1x128xf32>
    %287 = vector.extract_strided_slice %183 {offsets = [17, 0], sizes = [1, 128], strides = [1, 1]} : vector<24x128xf32> to vector<1x128xf32>
    %288 = arith.truncf %287 : vector<1x128xf32> to vector<1x128xbf16>
    %c17 = arith.constant 17 : index
    %c0_186 = arith.constant 0 : index
    %c0_187 = arith.constant 0 : index
    %289 = vector.load %arg14[%c17, %c0_186, %c0_187] : memref<24x128x128xbf16, #tpu.memory_space<vmem>>, vector<1x128x128xbf16>
    %290 = vector.shape_cast %289 : vector<1x128x128xbf16> to vector<128x128xbf16>
    %cst_188 = arith.constant dense<0.000000e+00> : vector<1x128xf32>
    %291 = tpu.matmul %288, %290, %cst_188 {dimension_numbers = #tpu.dot_dimension_numbers<[1], [0], [0], [1], [0, 0, 1, 1], [], []>} : vector<1x128xbf16>, vector<128x128xbf16>, vector<1x128xf32> -> vector<1x128xf32>
    %292 = arith.addf %286, %291 : vector<1x128xf32>
    %293 = vector.extract_strided_slice %183 {offsets = [18, 0], sizes = [1, 128], strides = [1, 1]} : vector<24x128xf32> to vector<1x128xf32>
    %294 = arith.truncf %293 : vector<1x128xf32> to vector<1x128xbf16>
    %c18 = arith.constant 18 : index
    %c0_189 = arith.constant 0 : index
    %c0_190 = arith.constant 0 : index
    %295 = vector.load %arg14[%c18, %c0_189, %c0_190] : memref<24x128x128xbf16, #tpu.memory_space<vmem>>, vector<1x128x128xbf16>
    %296 = vector.shape_cast %295 : vector<1x128x128xbf16> to vector<128x128xbf16>
    %cst_191 = arith.constant dense<0.000000e+00> : vector<1x128xf32>
    %297 = tpu.matmul %294, %296, %cst_191 {dimension_numbers = #tpu.dot_dimension_numbers<[1], [0], [0], [1], [0, 0, 1, 1], [], []>} : vector<1x128xbf16>, vector<128x128xbf16>, vector<1x128xf32> -> vector<1x128xf32>
    %298 = arith.addf %292, %297 : vector<1x128xf32>
    %299 = vector.extract_strided_slice %183 {offsets = [19, 0], sizes = [1, 128], strides = [1, 1]} : vector<24x128xf32> to vector<1x128xf32>
    %300 = arith.truncf %299 : vector<1x128xf32> to vector<1x128xbf16>
    %c19 = arith.constant 19 : index
    %c0_192 = arith.constant 0 : index
    %c0_193 = arith.constant 0 : index
    %301 = vector.load %arg14[%c19, %c0_192, %c0_193] : memref<24x128x128xbf16, #tpu.memory_space<vmem>>, vector<1x128x128xbf16>
    %302 = vector.shape_cast %301 : vector<1x128x128xbf16> to vector<128x128xbf16>
    %cst_194 = arith.constant dense<0.000000e+00> : vector<1x128xf32>
    %303 = tpu.matmul %300, %302, %cst_194 {dimension_numbers = #tpu.dot_dimension_numbers<[1], [0], [0], [1], [0, 0, 1, 1], [], []>} : vector<1x128xbf16>, vector<128x128xbf16>, vector<1x128xf32> -> vector<1x128xf32>
    %304 = arith.addf %298, %303 : vector<1x128xf32>
    %305 = vector.extract_strided_slice %183 {offsets = [20, 0], sizes = [1, 128], strides = [1, 1]} : vector<24x128xf32> to vector<1x128xf32>
    %306 = arith.truncf %305 : vector<1x128xf32> to vector<1x128xbf16>
    %c20 = arith.constant 20 : index
    %c0_195 = arith.constant 0 : index
    %c0_196 = arith.constant 0 : index
    %307 = vector.load %arg14[%c20, %c0_195, %c0_196] : memref<24x128x128xbf16, #tpu.memory_space<vmem>>, vector<1x128x128xbf16>
    %308 = vector.shape_cast %307 : vector<1x128x128xbf16> to vector<128x128xbf16>
    %cst_197 = arith.constant dense<0.000000e+00> : vector<1x128xf32>
    %309 = tpu.matmul %306, %308, %cst_197 {dimension_numbers = #tpu.dot_dimension_numbers<[1], [0], [0], [1], [0, 0, 1, 1], [], []>} : vector<1x128xbf16>, vector<128x128xbf16>, vector<1x128xf32> -> vector<1x128xf32>
    %310 = arith.addf %304, %309 : vector<1x128xf32>
    %311 = vector.extract_strided_slice %183 {offsets = [21, 0], sizes = [1, 128], strides = [1, 1]} : vector<24x128xf32> to vector<1x128xf32>
    %312 = arith.truncf %311 : vector<1x128xf32> to vector<1x128xbf16>
    %c21 = arith.constant 21 : index
    %c0_198 = arith.constant 0 : index
    %c0_199 = arith.constant 0 : index
    %313 = vector.load %arg14[%c21, %c0_198, %c0_199] : memref<24x128x128xbf16, #tpu.memory_space<vmem>>, vector<1x128x128xbf16>
    %314 = vector.shape_cast %313 : vector<1x128x128xbf16> to vector<128x128xbf16>
    %cst_200 = arith.constant dense<0.000000e+00> : vector<1x128xf32>
    %315 = tpu.matmul %312, %314, %cst_200 {dimension_numbers = #tpu.dot_dimension_numbers<[1], [0], [0], [1], [0, 0, 1, 1], [], []>} : vector<1x128xbf16>, vector<128x128xbf16>, vector<1x128xf32> -> vector<1x128xf32>
    %316 = arith.addf %310, %315 : vector<1x128xf32>
    %317 = vector.extract_strided_slice %183 {offsets = [22, 0], sizes = [1, 128], strides = [1, 1]} : vector<24x128xf32> to vector<1x128xf32>
    %318 = arith.truncf %317 : vector<1x128xf32> to vector<1x128xbf16>
    %c22 = arith.constant 22 : index
    %c0_201 = arith.constant 0 : index
    %c0_202 = arith.constant 0 : index
    %319 = vector.load %arg14[%c22, %c0_201, %c0_202] : memref<24x128x128xbf16, #tpu.memory_space<vmem>>, vector<1x128x128xbf16>
    %320 = vector.shape_cast %319 : vector<1x128x128xbf16> to vector<128x128xbf16>
    %cst_203 = arith.constant dense<0.000000e+00> : vector<1x128xf32>
    %321 = tpu.matmul %318, %320, %cst_203 {dimension_numbers = #tpu.dot_dimension_numbers<[1], [0], [0], [1], [0, 0, 1, 1], [], []>} : vector<1x128xbf16>, vector<128x128xbf16>, vector<1x128xf32> -> vector<1x128xf32>
    %322 = arith.addf %316, %321 : vector<1x128xf32>
    %323 = vector.extract_strided_slice %183 {offsets = [23, 0], sizes = [1, 128], strides = [1, 1]} : vector<24x128xf32> to vector<1x128xf32>
    %324 = arith.truncf %323 : vector<1x128xf32> to vector<1x128xbf16>
    %c23 = arith.constant 23 : index
    %c0_204 = arith.constant 0 : index
    %c0_205 = arith.constant 0 : index
    %325 = vector.load %arg14[%c23, %c0_204, %c0_205] : memref<24x128x128xbf16, #tpu.memory_space<vmem>>, vector<1x128x128xbf16>
    %326 = vector.shape_cast %325 : vector<1x128x128xbf16> to vector<128x128xbf16>
    %cst_206 = arith.constant dense<0.000000e+00> : vector<1x128xf32>
    %327 = tpu.matmul %324, %326, %cst_206 {dimension_numbers = #tpu.dot_dimension_numbers<[1], [0], [0], [1], [0, 0, 1, 1], [], []>} : vector<1x128xbf16>, vector<128x128xbf16>, vector<1x128xf32> -> vector<1x128xf32>
    %328 = arith.addf %322, %327 : vector<1x128xf32>
    %cst_207 = arith.constant 0.000000e+00 : f32
    %329 = vector.broadcast %cst_207 : f32 to vector<1x128xf32>
    %330 = arith.maximumf %328, %329 : vector<1x128xf32>
    %331 = arith.truncf %330 : vector<1x128xf32> to vector<1x128xbf16>
    %c0_208 = arith.constant 0 : index
    %c0_209 = arith.constant 0 : index
    %332 = vector.load %arg16[%c0_208, %c0_209] : memref<128x128xbf16, #tpu.memory_space<vmem>>, vector<128x128xbf16>
    %cst_210 = arith.constant dense<0.000000e+00> : vector<1x128xf32>
    %333 = tpu.matmul %331, %332, %cst_210 {dimension_numbers = #tpu.dot_dimension_numbers<[1], [0], [0], [1], [0, 0, 1, 1], [], []>} : vector<1x128xbf16>, vector<128x128xbf16>, vector<1x128xf32> -> vector<1x128xf32>
    %c0_211 = arith.constant 0 : index
    %c0_212 = arith.constant 0 : index
    %334 = vector.load %arg17[%c0_211, %c0_212] : memref<1x128xf32, #tpu.memory_space<vmem>>, vector<1x128xf32>
    %335 = arith.addf %333, %334 : vector<1x128xf32>
    %c0_213 = arith.constant 0 : index
    %c0_214 = arith.constant 0 : index
    %c0_215 = arith.constant 0 : index
    %336 = vector.load %arg18[%c0_213, %c0_214, %c0_215] : memref<1x1x128xf32, #tpu.memory_space<vmem>>, vector<1x1x128xf32>
    %337 = vector.shape_cast %336 : vector<1x1x128xf32> to vector<1x128xf32>
    %338 = vector.shape_cast %335 : vector<1x128xf32> to vector<1x1x128xf32>
    tpu.vector_store %arg18[%c0_213, %c0_214, %c0_215], %338 {strides = array<i32>} : memref<1x1x128xf32, #tpu.memory_space<vmem>>, vector<1x1x128xf32>,
    return
  }
  func.func @transform_0(%arg0: i32) -> (i32, i32, i32) {
    %c0_i32 = arith.constant 0 : i32
    %c0_i32_0 = arith.constant 0 : i32
    %c0_i32_1 = arith.constant 0 : i32
    return %arg0, %c0_i32, %c0_i32_0 : i32, i32, i32
  }
  func.func @transform_1(%arg0: i32) -> (i32, i32) {
    %c0_i32 = arith.constant 0 : i32
    %c0_i32_0 = arith.constant 0 : i32
    %c0_i32_1 = arith.constant 0 : i32
    return %c0_i32, %c0_i32_0 : i32, i32
  }
  func.func @transform_2(%arg0: i32) -> (i32, i32) {
    %c0_i32 = arith.constant 0 : i32
    %c0_i32_0 = arith.constant 0 : i32
    %c0_i32_1 = arith.constant 0 : i32
    return %c0_i32, %c0_i32_0 : i32, i32
  }
  func.func @transform_3(%arg0: i32) -> (i32, i32) {
    %c0_i32 = arith.constant 0 : i32
    %c0_i32_0 = arith.constant 0 : i32
    %c0_i32_1 = arith.constant 0 : i32
    return %c0_i32, %c0_i32_0 : i32, i32
  }
  func.func @transform_4(%arg0: i32) -> (i32, i32, i32) {
    %c0_i32 = arith.constant 0 : i32
    %c0_i32_0 = arith.constant 0 : i32
    %c0_i32_1 = arith.constant 0 : i32
    %c0_i32_2 = arith.constant 0 : i32
    return %c0_i32, %c0_i32_0, %c0_i32_1 : i32, i32, i32
  }
  func.func @transform_5(%arg0: i32) -> (i32, i32) {
    %c0_i32 = arith.constant 0 : i32
    %c0_i32_0 = arith.constant 0 : i32
    %c0_i32_1 = arith.constant 0 : i32
    return %c0_i32, %c0_i32_0 : i32, i32
  }
  func.func @transform_6(%arg0: i32) -> (i32, i32) {
    %c0_i32 = arith.constant 0 : i32
    %c0_i32_0 = arith.constant 0 : i32
    %c0_i32_1 = arith.constant 0 : i32
    return %c0_i32, %c0_i32_0 : i32, i32
  }
  func.func @transform_7(%arg0: i32) -> (i32, i32, i32) {
    %c0_i32 = arith.constant 0 : i32
    %c0_i32_0 = arith.constant 0 : i32
    %c0_i32_1 = arith.constant 0 : i32
    %c0_i32_2 = arith.constant 0 : i32
    return %c0_i32, %c0_i32_0, %c0_i32_1 : i32, i32, i32
  }
  func.func @transform_8(%arg0: i32) -> (i32, i32) {
    %c0_i32 = arith.constant 0 : i32
    %c0_i32_0 = arith.constant 0 : i32
    %c0_i32_1 = arith.constant 0 : i32
    return %c0_i32, %c0_i32_0 : i32, i32
  }
  func.func @transform_9(%arg0: i32) -> (i32, i32) {
    %c0_i32 = arith.constant 0 : i32
    %c0_i32_0 = arith.constant 0 : i32
    %c0_i32_1 = arith.constant 0 : i32
    return %c0_i32, %c0_i32_0 : i32, i32
  }
  func.func @transform_10(%arg0: i32) -> (i32, i32, i32) {
    %c0_i32 = arith.constant 0 : i32
    %c0_i32_0 = arith.constant 0 : i32
    %c0_i32_1 = arith.constant 0 : i32
    %c0_i32_2 = arith.constant 0 : i32
    return %c0_i32, %c0_i32_0, %c0_i32_1 : i32, i32, i32
  }
  func.func @transform_11(%arg0: i32) -> (i32, i32) {
    %c0_i32 = arith.constant 0 : i32
    %c0_i32_0 = arith.constant 0 : i32
    %c0_i32_1 = arith.constant 0 : i32
    return %c0_i32, %c0_i32_0 : i32, i32
  }
  func.func @transform_12(%arg0: i32) -> (i32, i32) {
    %c0_i32 = arith.constant 0 : i32
    %c0_i32_0 = arith.constant 0 : i32
    %c0_i32_1 = arith.constant 0 : i32
    return %c0_i32, %c0_i32_0 : i32, i32
  }
  func.func @transform_13(%arg0: i32) -> (i32, i32, i32) {
    %c0_i32 = arith.constant 0 : i32
    %c0_i32_0 = arith.constant 0 : i32
    %c0_i32_1 = arith.constant 0 : i32
    %c0_i32_2 = arith.constant 0 : i32
    return %c0_i32, %c0_i32_0, %c0_i32_1 : i32, i32, i32
  }
  func.func @transform_14(%arg0: i32) -> (i32, i32) {
    %c0_i32 = arith.constant 0 : i32
    %c0_i32_0 = arith.constant 0 : i32
    %c0_i32_1 = arith.constant 0 : i32
    return %c0_i32, %c0_i32_0 : i32, i32
  }
  func.func @transform_15(%arg0: i32) -> (i32, i32) {
    %c0_i32 = arith.constant 0 : i32
    %c0_i32_0 = arith.constant 0 : i32
    %c0_i32_1 = arith.constant 0 : i32
    return %c0_i32, %c0_i32_0 : i32, i32
  }
  func.func @transform_16(%arg0: i32) -> (i32, i32) {
    %c0_i32 = arith.constant 0 : i32
    %c0_i32_0 = arith.constant 0 : i32
    %c0_i32_1 = arith.constant 0 : i32
    return %c0_i32, %c0_i32_0 : i32, i32
  }
  func.func @transform_17(%arg0: i32) -> (i32, i32, i32) {
    %c0_i32 = arith.constant 0 : i32
    %c0_i32_0 = arith.constant 0 : i32
    %c0_i32_1 = arith.constant 0 : i32
    return %arg0, %c0_i32, %c0_i32_0 : i32, i32, i32
  }
}

</mosaic_0001>

<llo_original>
// kernel: bearing_fm_plus_forward.1
$region0: #{bearing_fm_plus_forward.1}
  #allocation0 [shape = 'u32[]', space=smem, size = 0x4, offset = 0x4, fixed_abs, tag = 'smem constant byte address 0x4 - core index']
  #allocation1 [shape = 'u32[144,128]{1,0:T(1,128)}', space=vmem, size = 0x12000, scoped, tag = 'internal scratch']
  #allocation2 [shape = 'f32[192,128]{1,0:T(8,128)}', space=vmem, size = 0x18000, scoped, tag = 'scratch operand']
  %s0 = inlined_call_operand.vmem [shape: f32[2,192,8], index: 0, kind: input, shape index: {}]
  %s1 = inlined_call_operand.vmem [shape: bf16[8,128], index: 1, kind: input, shape index: {}]
  %s2 = inlined_call_operand.vmem [shape: f32[1,128], index: 2, kind: input, shape index: {}]
  %s3 = inlined_call_operand.vmem [shape: f32[1,128], index: 3, kind: input, shape index: {}]
  %s4 = inlined_call_operand.vmem [shape: bf16[7,128,128], index: 4, kind: input, shape index: {}]
  %s5 = inlined_call_operand.vmem [shape: f32[1,128], index: 5, kind: input, shape index: {}]
  %s6 = inlined_call_operand.vmem [shape: f32[1,128], index: 6, kind: input, shape index: {}]
  %s7 = inlined_call_operand.hbm [shape: bf16[7,128,128], index: 7, kind: input, shape index: {}]
  %s8 = inlined_call_operand.vmem [shape: f32[1,128], index: 8, kind: input, shape index: {}]
  %s9 = inlined_call_operand.vmem [shape: f32[1,128], index: 9, kind: input, shape index: {}]
  %s10 = inlined_call_operand.hbm [shape: bf16[7,128,128], index: 10, kind: input, shape index: {}]
  %s11 = inlined_call_operand.vmem [shape: f32[1,128], index: 11, kind: input, shape index: {}]
  %s12 = inlined_call_operand.vmem [shape: f32[1,128], index: 12, kind: input, shape index: {}]
  %s13 = inlined_call_operand.hbm [shape: bf16[24,128,128], index: 13, kind: input, shape index: {}]
  %s14 = inlined_call_operand.vmem [shape: f32[1,128], index: 14, kind: input, shape index: {}]
  %s15 = inlined_call_operand.hbm [shape: bf16[128,128], index: 15, kind: input, shape index: {}]
  %s16 = inlined_call_operand.vmem [shape: f32[1,128], index: 16, kind: input, shape index: {}]
  %s17 = inlined_call_operand.hbm [shape: f32[2,1,128], index: 17, kind: output, shape index: {}]
  %s18 = sld [smem:[#allocation0]]
  $region117: #{bearing_fm_plus_forward.1} parent=0
    _
  %s20 = ssub.s32 1, %s18
  %s21 = scalar_select 0, %s20, %s18
  $region1: #{bearing_fm_plus_forward.1} parent=0
    #allocation3 [shape = 'u8[229376]{0}', space=vmem, size = 0x38000, scoped, tag = 'input window, operand 7, single buffered']
    #allocation4 [shape = 's32[2]{0}', space=sflag, size = 0x8, scoped, tag = 'scoped memory for bearing_fm_plus_forward.1']
    #allocation5 [shape = 's32[2]{0}', space=sflag, size = 0x8, scoped, tag = 'scoped memory for bearing_fm_plus_forward.1']
    #allocation6 [shape = 'u8[229376]{0}', space=vmem, size = 0x38000, scoped, tag = 'input window, operand 10, single buffered']
    #allocation7 [shape = 's32[1]{0}', space=sflag, size = 0x4, scoped, tag = 'scoped memory for bearing_fm_plus_forward.1']
    #allocation8 [shape = 'u8[786432]{0}', space=vmem, size = 0xc0000, scoped, tag = 'input window, operand 13, single buffered']
    #allocation9 [shape = 'u8[32768]{0}', space=vmem, size = 0x8000, scoped, tag = 'input window, operand 15, single buffered']
    #allocation10 [shape = 's32[1]{0}', space=sflag, size = 0x4, scoped, tag = 'scoped memory for bearing_fm_plus_forward.1']
    #allocation11 [shape = 'u8[1024]{0}', space=vmem, size = 0x400, scoped, tag = 'output window, operand 0']
    %22 = vsyncpa [#allocation4], 0
    %23 = vsyncpa [#allocation7], 0
    %24 = vsyncpa [#allocation10], 0
    %25 = vsyncpa [#allocation5], 0
    %s26 = scalar_lea.sflag [#allocation5], 1
    %27 = vsyncpa %s26, 0
    loop: start=0, step=1, limit=4
    $region2: #{bearing_fm_plus_forward.1} parent=1 // loop_pre_header
      _
    $region3: #{bearing_fm_plus_forward.1} parent=1 // loop_header
      %s29 = sphi 0, %s33
      %p30 = scmp.ge.s32.totalorder %s29, 4
      %s39 = sphi 0, %s41
      %s42 = sphi 0, %s39
      %s43 = sphi 0, %s42
      %s59 = sphi 0, %s43
      %s63 = sphi 0, %s63
      %s65 = sphi 0, %s63
      %s66 = sphi 0, %s65
      %s80 = sphi 0, %s66
      %s84 = sphi 0, %s84
      %s86 = sphi 0, %s84
      %s87 = sphi 0, %s86
      %s101 = sphi 0, %s87
      %s105 = sphi 0, %s105
      %s107 = sphi 0, %s105
      %s108 = sphi 0, %s107
      %s122 = sphi 0, %s108
      %s126 = sphi 0, %s126
      %s128 = sphi 0, %s126
      %s129 = sphi 0, %s128
      %s143 = sphi 0, %s129
      %s147 = sphi 0, %s147
      %s149 = sphi 0, %s147
      %s150 = sphi 0, %s149
      %s164 = sphi 0, %s150
      %s168 = sphi 0, %s168
      %s170 = sphi 0, %s168
      %s171 = sphi 0, %s170
      %s185 = sphi 0, %s171
      %s189 = sphi 0, %s189
      %s191 = sphi 0, %s189
      %s192 = sphi 0, %s191
      %s206 = sphi 0, %s192
      %s210 = sphi 0, %s210
      %s212 = sphi 0, %s210
      %s213 = sphi 0, %s212
      %s227 = sphi 0, %s213
      %s231 = sphi 0, %s231
      %s233 = sphi 0, %s231
      %s234 = sphi 0, %s233
      %s248 = sphi 0, %s234
      %s252 = sphi 0, %s252
      %s254 = sphi 0, %s252
      %s255 = sphi 0, %s254
      %s269 = sphi 0, %s255
      %s273 = sphi 0, %s273
      %s275 = sphi 0, %s273
      %s276 = sphi 0, %s275
      %s290 = sphi 0, %s276
      %s294 = sphi 0, %s294
      %s296 = sphi 0, %s294
      %s297 = sphi 0, %s296
      %s311 = sphi 0, %s297
      %s315 = sphi 0, %s315
      %s317 = sphi 0, %s315
      %s318 = sphi 0, %s317
      %s332 = sphi 0, %s318
      %s336 = sphi 0, %s336
      %s338 = sphi 0, %s336
      %s339 = sphi 0, %s338
      %s353 = sphi 0, %s339
      %s357 = sphi 0, %s357
      %s359 = sphi 0, %s357
      %s360 = sphi 0, %s359
      %s374 = sphi 0, %s360
      %s378 = sphi 0, %s378
      %s380 = sphi 0, %s378
      %s381 = sphi 0, %s380
      %s395 = sphi 0, %s381
      %s401 = sphi 0, %s403
      %s404 = sphi 0, %s401
      %s405 = sphi 0, %s404
      %s421 = sphi 0, %s405
    $region4: #{bearing_fm_plus_forward.1} parent=1 // loop_header_branch
      %32 = sbr.rel (%p30) target = $region8
    $region5: #{bearing_fm_plus_forward.1} parent=1 // loop_body
      %s34 = ssub.s32 %s29, 1
      %s35 = ssub.s32 %s29, 2
      %s36 = sadd.s32 %s29, 1
      %s37 = ssub.s32 %s29, %s36
      %p38 = scmp.eq.s32.totalorder %s37, 0
      %s40 = sadd.s32 %s39, 1
      %s41 = scalar_select %p38, %s39, %s40
      %p44 = pneg %p38
      %p45 = scmp.eq.s32.totalorder %s29, 1
      %p46 = por %p44, %p45
      %p47 = scmp.ne.s32.totalorder %s39, %s42
      %p48 = scmp.eq.s32.totalorder %s29, 0
      %p49 = por %p47, %p48
      %p50 = scmp.ne.s32.totalorder %s39, %s42
      %p51 = scmp.eq.s32.totalorder %s34, 1
      %p52 = por %p50, %p51
      %p53 = scmp.ne.s32.totalorder %s42, %s43
      %p54 = scmp.eq.s32.totalorder %s34, 0
      %p55 = por %p53, %p54
      %p56 = scmp.ne.s32.totalorder %s42, %s43
      %p57 = scmp.eq.s32.totalorder %s35, 1
      %p58 = por %p56, %p57
      %p60 = scmp.ne.s32.totalorder %s43, %s59
      %p61 = scmp.eq.s32.totalorder %s35, 0
      %p62 = por %p60, %p61
      %s64 = sadd.s32 %s63, 1
      %p67 = scmp.eq.s32.totalorder %s29, 1
      %p68 = scmp.ne.s32.totalorder %s63, %s65
      %p69 = scmp.eq.s32.totalorder %s29, 0
      %p70 = por %p68, %p69
      %p71 = scmp.ne.s32.totalorder %s63, %s65
      %p72 = scmp.eq.s32.totalorder %s34, 1
      %p73 = por %p71, %p72
      %p74 = scmp.ne.s32.totalorder %s65, %s66
      %p75 = scmp.eq.s32.totalorder %s34, 0
      %p76 = por %p74, %p75
      %p77 = scmp.ne.s32.totalorder %s65, %s66
      %p78 = scmp.eq.s32.totalorder %s35, 1
      %p79 = por %p77, %p78
      %p81 = scmp.ne.s32.totalorder %s66, %s80
      %p82 = scmp.eq.s32.totalorder %s35, 0
      %p83 = por %p81, %p82
      %s85 = sadd.s32 %s84, 1
      %p88 = scmp.eq.s32.totalorder %s29, 1
      %p89 = scmp.ne.s32.totalorder %s84, %s86
      %p90 = scmp.eq.s32.totalorder %s29, 0
      %p91 = por %p89, %p90
      %p92 = scmp.ne.s32.totalorder %s84, %s86
      %p93 = scmp.eq.s32.totalorder %s34, 1
      %p94 = por %p92, %p93
      %p95 = scmp.ne.s32.totalorder %s86, %s87
      %p96 = scmp.eq.s32.totalorder %s34, 0
      %p97 = por %p95, %p96
      %p98 = scmp.ne.s32.totalorder %s86, %s87
      %p99 = scmp.eq.s32.totalorder %s35, 1
      %p100 = por %p98, %p99
      %p102 = scmp.ne.s32.totalorder %s87, %s101
      %p103 = scmp.eq.s32.totalorder %s35, 0
      %p104 = por %p102, %p103
      %s106 = sadd.s32 %s105, 1
      %p109 = scmp.eq.s32.totalorder %s29, 1
      %p110 = scmp.ne.s32.totalorder %s105, %s107
      %p111 = scmp.eq.s32.totalorder %s29, 0
      %p112 = por %p110, %p111
      %p113 = scmp.ne.s32.totalorder %s105, %s107
      %p114 = scmp.eq.s32.totalorder %s34, 1
      %p115 = por %p113, %p114
      %p116 = scmp.ne.s32.totalorder %s107, %s108
      %p117 = scmp.eq.s32.totalorder %s34, 0
      %p118 = por %p116, %p117
      %p119 = scmp.ne.s32.totalorder %s107, %s108
      %p120 = scmp.eq.s32.totalorder %s35, 1
      %p121 = por %p119, %p120
      %p123 = scmp.ne.s32.totalorder %s108, %s122
      %p124 = scmp.eq.s32.totalorder %s35, 0
      %p125 = por %p123, %p124
      %s127 = sadd.s32 %s126, 1
      %p130 = scmp.eq.s32.totalorder %s29, 1
      %p131 = scmp.ne.s32.totalorder %s126, %s128
      %p132 = scmp.eq.s32.totalorder %s29, 0
      %p133 = por %p131, %p132
      %p134 = scmp.ne.s32.totalorder %s126, %s128
      %p135 = scmp.eq.s32.totalorder %s34, 1
      %p136 = por %p134, %p135
      %p137 = scmp.ne.s32.totalorder %s128, %s129
      %p138 = scmp.eq.s32.totalorder %s34, 0
      %p139 = por %p137, %p138
      %p140 = scmp.ne.s32.totalorder %s128, %s129
      %p141 = scmp.eq.s32.totalorder %s35, 1
      %p142 = por %p140, %p141
      %p144 = scmp.ne.s32.totalorder %s129, %s143
      %p145 = scmp.eq.s32.totalorder %s35, 0
      %p146 = por %p144, %p145
      %s148 = sadd.s32 %s147, 1
      %p151 = scmp.eq.s32.totalorder %s29, 1
      %p152 = scmp.ne.s32.totalorder %s147, %s149
      %p153 = scmp.eq.s32.totalorder %s29, 0
      %p154 = por %p152, %p153
      %p155 = scmp.ne.s32.totalorder %s147, %s149
      %p156 = scmp.eq.s32.totalorder %s34, 1
      %p157 = por %p155, %p156
      %p158 = scmp.ne.s32.totalorder %s149, %s150
      %p159 = scmp.eq.s32.totalorder %s34, 0
      %p160 = por %p158, %p159
      %p161 = scmp.ne.s32.totalorder %s149, %s150
      %p162 = scmp.eq.s32.totalorder %s35, 1
      %p163 = por %p161, %p162
      %p165 = scmp.ne.s32.totalorder %s150, %s164
      %p166 = scmp.eq.s32.totalorder %s35, 0
      %p167 = por %p165, %p166
      %s169 = sadd.s32 %s168, 1
      %p172 = scmp.eq.s32.totalorder %s29, 1
      %p173 = scmp.ne.s32.totalorder %s168, %s170
      %p174 = scmp.eq.s32.totalorder %s29, 0
      %p175 = por %p173, %p174
      %p176 = scmp.ne.s32.totalorder %s168, %s170
      %p177 = scmp.eq.s32.totalorder %s34, 1
      %p178 = por %p176, %p177
      %p179 = scmp.ne.s32.totalorder %s170, %s171
      %p180 = scmp.eq.s32.totalorder %s34, 0
      %p181 = por %p179, %p180
      %p182 = scmp.ne.s32.totalorder %s170, %s171
      %p183 = scmp.eq.s32.totalorder %s35, 1
      %p184 = por %p182, %p183
      %p186 = scmp.ne.s32.totalorder %s171, %s185
      %p187 = scmp.eq.s32.totalorder %s35, 0
      %p188 = por %p186, %p187
      %s190 = sadd.s32 %s189, 1
      %p193 = scmp.eq.s32.totalorder %s29, 1
      %p194 = scmp.ne.s32.totalorder %s189, %s191
      %p195 = scmp.eq.s32.totalorder %s29, 0
      %p196 = por %p194, %p195
      %p197 = scmp.ne.s32.totalorder %s189, %s191
      %p198 = scmp.eq.s32.totalorder %s34, 1
      %p199 = por %p197, %p198
      %p200 = scmp.ne.s32.totalorder %s191, %s192
      %p201 = scmp.eq.s32.totalorder %s34, 0
      %p202 = por %p200, %p201
      %p203 = scmp.ne.s32.totalorder %s191, %s192
      %p204 = scmp.eq.s32.totalorder %s35, 1
      %p205 = por %p203, %p204
      %p207 = scmp.ne.s32.totalorder %s192, %s206
      %p208 = scmp.eq.s32.totalorder %s35, 0
      %p209 = por %p207, %p208
      %s211 = sadd.s32 %s210, 1
      %p214 = scmp.eq.s32.totalorder %s29, 1
      %p215 = scmp.ne.s32.totalorder %s210, %s212
      %p216 = scmp.eq.s32.totalorder %s29, 0
      %p217 = por %p215, %p216
      %p218 = scmp.ne.s32.totalorder %s210, %s212
      %p219 = scmp.eq.s32.totalorder %s34, 1
      %p220 = por %p218, %p219
      %p221 = scmp.ne.s32.totalorder %s212, %s213
      %p222 = scmp.eq.s32.totalorder %s34, 0
      %p223 = por %p221, %p222
      %p224 = scmp.ne.s32.totalorder %s212, %s213
      %p225 = scmp.eq.s32.totalorder %s35, 1
      %p226 = por %p224, %p225
      %p228 = scmp.ne.s32.totalorder %s213, %s227
      %p229 = scmp.eq.s32.totalorder %s35, 0
      %p230 = por %p228, %p229
      %s232 = sadd.s32 %s231, 1
      %p235 = scmp.eq.s32.totalorder %s29, 1
      %p236 = scmp.ne.s32.totalorder %s231, %s233
      %p237 = scmp.eq.s32.totalorder %s29, 0
      %p238 = por %p236, %p237
      %p239 = scmp.ne.s32.totalorder %s231, %s233
      %p240 = scmp.eq.s32.totalorder %s34, 1
      %p241 = por %p239, %p240
      %p242 = scmp.ne.s32.totalorder %s233, %s234
      %p243 = scmp.eq.s32.totalorder %s34, 0
      %p244 = por %p242, %p243
      %p245 = scmp.ne.s32.totalorder %s233, %s234
      %p246 = scmp.eq.s32.totalorder %s35, 1
      %p247 = por %p245, %p246
      %p249 = scmp.ne.s32.totalorder %s234, %s248
      %p250 = scmp.eq.s32.totalorder %s35, 0
      %p251 = por %p249, %p250
      %s253 = sadd.s32 %s252, 1
      %p256 = scmp.eq.s32.totalorder %s29, 1
      %p257 = scmp.ne.s32.totalorder %s252, %s254
      %p258 = scmp.eq.s32.totalorder %s29, 0
      %p259 = por %p257, %p258
      %p260 = scmp.ne.s32.totalorder %s252, %s254
      %p261 = scmp.eq.s32.totalorder %s34, 1
      %p262 = por %p260, %p261
      %p263 = scmp.ne.s32.totalorder %s254, %s255
      %p264 = scmp.eq.s32.totalorder %s34, 0
      %p265 = por %p263, %p264
      %p266 = scmp.ne.s32.totalorder %s254, %s255
      %p267 = scmp.eq.s32.totalorder %s35, 1
      %p268 = por %p266, %p267
      %p270 = scmp.ne.s32.totalorder %s255, %s269
      %p271 = scmp.eq.s32.totalorder %s35, 0
      %p272 = por %p270, %p271
      %s274 = sadd.s32 %s273, 1
      %p277 = scmp.eq.s32.totalorder %s29, 1
      %p278 = scmp.ne.s32.totalorder %s273, %s275
      %p279 = scmp.eq.s32.totalorder %s29, 0
      %p280 = por %p278, %p279
      %p281 = scmp.ne.s32.totalorder %s273, %s275
      %p282 = scmp.eq.s32.totalorder %s34, 1
      %p283 = por %p281, %p282
      %p284 = scmp.ne.s32.totalorder %s275, %s276
      %p285 = scmp.eq.s32.totalorder %s34, 0
      %p286 = por %p284, %p285
      %p287 = scmp.ne.s32.totalorder %s275, %s276
      %p288 = scmp.eq.s32.totalorder %s35, 1
      %p289 = por %p287, %p288
      %p291 = scmp.ne.s32.totalorder %s276, %s290
      %p292 = scmp.eq.s32.totalorder %s35, 0
      %p293 = por %p291, %p292
      %s295 = sadd.s32 %s294, 1
      %p298 = scmp.eq.s32.totalorder %s29, 1
      %p299 = scmp.ne.s32.totalorder %s294, %s296
      %p300 = scmp.eq.s32.totalorder %s29, 0
      %p301 = por %p299, %p300
      %p302 = scmp.ne.s32.totalorder %s294, %s296
      %p303 = scmp.eq.s32.totalorder %s34, 1
      %p304 = por %p302, %p303
      %p305 = scmp.ne.s32.totalorder %s296, %s297
      %p306 = scmp.eq.s32.totalorder %s34, 0
      %p307 = por %p305, %p306
      %p308 = scmp.ne.s32.totalorder %s296, %s297
      %p309 = scmp.eq.s32.totalorder %s35, 1
      %p310 = por %p308, %p309
      %p312 = scmp.ne.s32.totalorder %s297, %s311
      %p313 = scmp.eq.s32.totalorder %s35, 0
      %p314 = por %p312, %p313
      %s316 = sadd.s32 %s315, 1
      %p319 = scmp.eq.s32.totalorder %s29, 1
      %p320 = scmp.ne.s32.totalorder %s315, %s317
      %p321 = scmp.eq.s32.totalorder %s29, 0
      %p322 = por %p320, %p321
      %p323 = scmp.ne.s32.totalorder %s315, %s317
      %p324 = scmp.eq.s32.totalorder %s34, 1
      %p325 = por %p323, %p324
      %p326 = scmp.ne.s32.totalorder %s317, %s318
      %p327 = scmp.eq.s32.totalorder %s34, 0
      %p328 = por %p326, %p327
      %p329 = scmp.ne.s32.totalorder %s317, %s318
      %p330 = scmp.eq.s32.totalorder %s35, 1
      %p331 = por %p329, %p330
      %p333 = scmp.ne.s32.totalorder %s318, %s332
      %p334 = scmp.eq.s32.totalorder %s35, 0
      %p335 = por %p333, %p334
      %s337 = sadd.s32 %s336, 1
      %p340 = scmp.eq.s32.totalorder %s29, 1
      %p341 = scmp.ne.s32.totalorder %s336, %s338
      %p342 = scmp.eq.s32.totalorder %s29, 0
      %p343 = por %p341, %p342
      %p344 = scmp.ne.s32.totalorder %s336, %s338
      %p345 = scmp.eq.s32.totalorder %s34, 1
      %p346 = por %p344, %p345
      %p347 = scmp.ne.s32.totalorder %s338, %s339
      %p348 = scmp.eq.s32.totalorder %s34, 0
      %p349 = por %p347, %p348
      %p350 = scmp.ne.s32.totalorder %s338, %s339
      %p351 = scmp.eq.s32.totalorder %s35, 1
      %p352 = por %p350, %p351
      %p354 = scmp.ne.s32.totalorder %s339, %s353
      %p355 = scmp.eq.s32.totalorder %s35, 0
      %p356 = por %p354, %p355
      %s358 = sadd.s32 %s357, 1
      %p361 = scmp.eq.s32.totalorder %s29, 1
      %p362 = scmp.ne.s32.totalorder %s357, %s359
      %p363 = scmp.eq.s32.totalorder %s29, 0
      %p364 = por %p362, %p363
      %p365 = scmp.ne.s32.totalorder %s357, %s359
      %p366 = scmp.eq.s32.totalorder %s34, 1
      %p367 = por %p365, %p366
      %p368 = scmp.ne.s32.totalorder %s359, %s360
      %p369 = scmp.eq.s32.totalorder %s34, 0
      %p370 = por %p368, %p369
      %p371 = scmp.ne.s32.totalorder %s359, %s360
      %p372 = scmp.eq.s32.totalorder %s35, 1
      %p373 = por %p371, %p372
      %p375 = scmp.ne.s32.totalorder %s360, %s374
      %p376 = scmp.eq.s32.totalorder %s35, 0
      %p377 = por %p375, %p376
      %s379 = sadd.s32 %s378, 1
      %p382 = scmp.eq.s32.totalorder %s29, 1
      %p383 = scmp.ne.s32.totalorder %s378, %s380
      %p384 = scmp.eq.s32.totalorder %s29, 0
      %p385 = por %p383, %p384
      %p386 = scmp.ne.s32.totalorder %s378, %s380
      %p387 = scmp.eq.s32.totalorder %s34, 1
      %p388 = por %p386, %p387
      %p389 = scmp.ne.s32.totalorder %s380, %s381
      %p390 = scmp.eq.s32.totalorder %s34, 0
      %p391 = por %p389, %p390
      %p392 = scmp.ne.s32.totalorder %s380, %s381
      %p393 = scmp.eq.s32.totalorder %s35, 1
      %p394 = por %p392, %p393
      %p396 = scmp.ne.s32.totalorder %s381, %s395
      %p397 = scmp.eq.s32.totalorder %s35, 0
      %p398 = por %p396, %p397
      %s399 = ssub.s32 %s29, %s36
      %p400 = scmp.eq.s32.totalorder %s399, 0
      %s402 = sadd.s32 %s401, 1
      %s403 = scalar_select %p400, %s401, %s402
      %p406 = pneg %p400
      %p407 = scmp.eq.s32.totalorder %s29, 1
      %p408 = por %p406, %p407
      %p409 = scmp.ne.s32.totalorder %s401, %s404
      %p410 = scmp.eq.s32.totalorder %s29, 0
      %p411 = por %p409, %p410
      %p412 = scmp.ne.s32.totalorder %s401, %s404
      %p413 = scmp.eq.s32.totalorder %s34, 1
      %p414 = por %p412, %p413
      %p415 = scmp.ne.s32.totalorder %s404, %s405
      %p416 = scmp.eq.s32.totalorder %s34, 0
      %p417 = por %p415, %p416
      %p418 = scmp.ne.s32.totalorder %s404, %s405
      %p419 = scmp.eq.s32.totalorder %s35, 1
      %p420 = por %p418, %p419
      %p422 = scmp.ne.s32.totalorder %s405, %s421
      %p423 = scmp.eq.s32.totalorder %s35, 0
      %p424 = por %p422, %p423
      %p425 = scmp.le.s32.totalorder 1, %s29
      %p426 = scmp.lt.s32.totalorder %s29, 3
      %p427 = pnand %p425, %p426
      %p428 = pneg %p427
      // Predicated region
      $region9: #{bearing_fm_plus_forward.1} parent=5 // pred_check
        _
      $region10: #{bearing_fm_plus_forward.1} parent=5 // pred_check_branch
        %430 = sbr.rel (%p427) target = $region12
      $region11: #{bearing_fm_plus_forward.1} parent=5 // pred_region
        %s431 = ssub.s32 %s29, 1
        // Predicated region
        $region13: #{bearing_fm_plus_forward.1} parent=11 // pred_check
          %p432 = pneg %p76
        $region14: #{bearing_fm_plus_forward.1} parent=11 // pred_check_branch
          %434 = sbr.rel (%p432) target = $region16
        $region15: #{bearing_fm_plus_forward.1} parent=11 // pred_region
          _
        $region16: #{bearing_fm_plus_forward.1} parent=11 // pred_fallthru
          _
        // Predicated region
        $region17: #{bearing_fm_plus_forward.1} parent=11 // pred_check
          %p435 = pneg %p97
        $region18: #{bearing_fm_plus_forward.1} parent=11 // pred_check_branch
          %437 = sbr.rel (%p435) target = $region20
        $region19: #{bearing_fm_plus_forward.1} parent=11 // pred_region
          _
        $region20: #{bearing_fm_plus_forward.1} parent=11 // pred_fallthru
          _
        // Predicated region
        $region21: #{bearing_fm_plus_forward.1} parent=11 // pred_check
          %p438 = pneg %p118
        $region22: #{bearing_fm_plus_forward.1} parent=11 // pred_check_branch
          %440 = sbr.rel (%p438) target = $region24
        $region23: #{bearing_fm_plus_forward.1} parent=11 // pred_region
          _
        $region24: #{bearing_fm_plus_forward.1} parent=11 // pred_fallthru
          _
        // Predicated region
        $region25: #{bearing_fm_plus_forward.1} parent=11 // pred_check
          %p441 = pneg %p139
        $region26: #{bearing_fm_plus_forward.1} parent=11 // pred_check_branch
          %443 = sbr.rel (%p441) target = $region28
        $region27: #{bearing_fm_plus_forward.1} parent=11 // pred_region
          _
        $region28: #{bearing_fm_plus_forward.1} parent=11 // pred_fallthru
          _
        // Predicated region
        $region29: #{bearing_fm_plus_forward.1} parent=11 // pred_check
          %p444 = pneg %p160
        $region30: #{bearing_fm_plus_forward.1} parent=11 // pred_check_branch
          %446 = sbr.rel (%p444) target = $region32
        $region31: #{bearing_fm_plus_forward.1} parent=11 // pred_region
          _
        $region32: #{bearing_fm_plus_forward.1} parent=11 // pred_fallthru
          _
        // Predicated region
        $region33: #{bearing_fm_plus_forward.1} parent=11 // pred_check
          %p447 = pneg %p181
        $region34: #{bearing_fm_plus_forward.1} parent=11 // pred_check_branch
          %449 = sbr.rel (%p447) target = $region36
        $region35: #{bearing_fm_plus_forward.1} parent=11 // pred_region
          _
        $region36: #{bearing_fm_plus_forward.1} parent=11 // pred_fallthru
          _
        // Predicated region
        $region37: #{bearing_fm_plus_forward.1} parent=11 // pred_check
          %p450 = pneg %p202
        $region38: #{bearing_fm_plus_forward.1} parent=11 // pred_check_branch
          %452 = sbr.rel (%p450) target = $region40
        $region39: #{bearing_fm_plus_forward.1} parent=11 // pred_region
          %s454 = ssub.s32 7168, 7168
          %455 = vsyncadd [#allocation4], %s454
          %s456 = sshll.u32 [#allocation3], 4
          %s457 = int_to_ptr.vmem [resolvable:$true] %s456
          %462 = dma.hbm_to_vmem [thread:$0]  %s7, 7168, %s457, [#allocation4], 64, 64, 4
        $region40: #{bearing_fm_plus_forward.1} parent=11 // pred_fallthru
          _
        // Predicated region
        $region41: #{bearing_fm_plus_forward.1} parent=11 // pred_check
          %p463 = pneg %p223
        $region42: #{bearing_fm_plus_forward.1} parent=11 // pred_check_branch
          %465 = sbr.rel (%p463) target = $region44
        $region43: #{bearing_fm_plus_forward.1} parent=11 // pred_region
          _
        $region44: #{bearing_fm_plus_forward.1} parent=11 // pred_fallthru
          _
        // Predicated region
        $region45: #{bearing_fm_plus_forward.1} parent=11 // pred_check
          %p466 = pneg %p244
        $region46: #{bearing_fm_plus_forward.1} parent=11 // pred_check_branch
          %468 = sbr.rel (%p466) target = $region48
        $region47: #{bearing_fm_plus_forward.1} parent=11 // pred_region
          _
        $region48: #{bearing_fm_plus_forward.1} parent=11 // pred_fallthru
          _
        // Predicated region
        $region49: #{bearing_fm_plus_forward.1} parent=11 // pred_check
          %p469 = pneg %p265
        $region50: #{bearing_fm_plus_forward.1} parent=11 // pred_check_branch
          %471 = sbr.rel (%p469) target = $region52
        $region51: #{bearing_fm_plus_forward.1} parent=11 // pred_region
          %s473 = ssub.s32 7168, 7168
          %474 = vsyncadd [#allocation7], %s473
          %s475 = sshll.u32 [#allocation6], 4
          %s476 = int_to_ptr.vmem [resolvable:$true] %s475
          %481 = dma.hbm_to_vmem [thread:$0]  %s10, 7168, %s476, [#allocation7], 64, 64, 4
        $region52: #{bearing_fm_plus_forward.1} parent=11 // pred_fallthru
          _
        // Predicated region
        $region53: #{bearing_fm_plus_forward.1} parent=11 // pred_check
          %p482 = pneg %p286
        $region54: #{bearing_fm_plus_forward.1} parent=11 // pred_check_branch
          %484 = sbr.rel (%p482) target = $region56
        $region55: #{bearing_fm_plus_forward.1} parent=11 // pred_region
          _
        $region56: #{bearing_fm_plus_forward.1} parent=11 // pred_fallthru
          _
        // Predicated region
        $region57: #{bearing_fm_plus_forward.1} parent=11 // pred_check
          %p485 = pneg %p307
        $region58: #{bearing_fm_plus_forward.1} parent=11 // pred_check_branch
          %487 = sbr.rel (%p485) target = $region60
        $region59: #{bearing_fm_plus_forward.1} parent=11 // pred_region
          _
        $region60: #{bearing_fm_plus_forward.1} parent=11 // pred_fallthru
          _
        // Predicated region
        $region61: #{bearing_fm_plus_forward.1} parent=11 // pred_check
          %p488 = pneg %p328
        $region62: #{bearing_fm_plus_forward.1} parent=11 // pred_check_branch
          %490 = sbr.rel (%p488) target = $region64
        $region63: #{bearing_fm_plus_forward.1} parent=11 // pred_region
          %s492 = ssub.s32 24576, 24576
          %493 = vsyncadd [#allocation7], %s492
          %s494 = sshll.u32 [#allocation8], 4
          %s495 = int_to_ptr.vmem [resolvable:$true] %s494
          %500 = dma.hbm_to_vmem [thread:$0]  %s13, 24576, %s495, [#allocation7], 64, 64, 4
        $region64: #{bearing_fm_plus_forward.1} parent=11 // pred_fallthru
          _
        // Predicated region
        $region65: #{bearing_fm_plus_forward.1} parent=11 // pred_check
          %p501 = pneg %p349
        $region66: #{bearing_fm_plus_forward.1} parent=11 // pred_check_branch
          %503 = sbr.rel (%p501) target = $region68
        $region67: #{bearing_fm_plus_forward.1} parent=11 // pred_region
          _
        $region68: #{bearing_fm_plus_forward.1} parent=11 // pred_fallthru
          _
        // Predicated region
        $region69: #{bearing_fm_plus_forward.1} parent=11 // pred_check
          %p504 = pneg %p370
        $region70: #{bearing_fm_plus_forward.1} parent=11 // pred_check_branch
          %506 = sbr.rel (%p504) target = $region72
        $region71: #{bearing_fm_plus_forward.1} parent=11 // pred_region
          %s508 = ssub.s32 1024, 1024
          %509 = vsyncadd [#allocation10], %s508
          %s510 = sshll.u32 [#allocation9], 4
          %s511 = int_to_ptr.vmem [resolvable:$true] %s510
          %516 = dma.hbm_to_vmem [thread:$0]  %s15, 1024, %s511, [#allocation10], 64, 64, 4
        $region72: #{bearing_fm_plus_forward.1} parent=11 // pred_fallthru
          _
        // Predicated region
        $region73: #{bearing_fm_plus_forward.1} parent=11 // pred_check
          %p517 = pneg %p391
        $region74: #{bearing_fm_plus_forward.1} parent=11 // pred_check_branch
          %519 = sbr.rel (%p517) target = $region76
        $region75: #{bearing_fm_plus_forward.1} parent=11 // pred_region
          _
        $region76: #{bearing_fm_plus_forward.1} parent=11 // pred_fallthru
          _
      $region12: #{bearing_fm_plus_forward.1} parent=5 // pred_fallthru
        _
      %p520 = scmp.lt.s32.totalorder %s29, 2
      // Predicated region
      $region77: #{bearing_fm_plus_forward.1} parent=5 // pred_check
        %p521 = pneg %p520
      $region78: #{bearing_fm_plus_forward.1} parent=5 // pred_check_branch
        %523 = sbr.rel (%p521) target = $region80
      $region79: #{bearing_fm_plus_forward.1} parent=5 // pred_region
        // Predicated region
        $region81: #{bearing_fm_plus_forward.1} parent=79 // pred_check
          %p524 = pneg %p49
        $region82: #{bearing_fm_plus_forward.1} parent=79 // pred_check_branch
          %526 = sbr.rel (%p524) target = $region84
        $region83: #{bearing_fm_plus_forward.1} parent=79 // pred_region
          %p527 = scmp.lt.s32.totalorder %s29, 1
          %s528 = scalar_select %p527, %s29, 1
          %s529 = smul.addr %s528, 24
          %s530 = smul.addr %s529, 8
          %s531 = scalar_lea.vmem %s0, %s530
        $region84: #{bearing_fm_plus_forward.1} parent=79 // pred_fallthru
          _
      $region80: #{bearing_fm_plus_forward.1} parent=5 // pred_fallthru
        _
      %p532 = scmp.le.s32.totalorder 1, %s29
      %p533 = scmp.lt.s32.totalorder %s29, 3
      %p534 = pnand %p532, %p533
      %p535 = pneg %p534
      // Predicated region
      $region85: #{bearing_fm_plus_forward.1} parent=5 // pred_check
        _
      $region86: #{bearing_fm_plus_forward.1} parent=5 // pred_check_branch
        %537 = sbr.rel (%p534) target = $region88
      $region87: #{bearing_fm_plus_forward.1} parent=5 // pred_region
        %s538 = ssub.s32 %s29, 1
        // Predicated region
        $region89: #{bearing_fm_plus_forward.1} parent=87 // pred_check
          %p539 = pneg %p202
        $region90: #{bearing_fm_plus_forward.1} parent=87 // pred_check_branch
          %541 = sbr.rel (%p539) target = $region92
        $region91: #{bearing_fm_plus_forward.1} parent=87 // pred_region
          %542 = dma.done [#allocation4], 7168
        $region92: #{bearing_fm_plus_forward.1} parent=87 // pred_fallthru
          _
        // Predicated region
        $region93: #{bearing_fm_plus_forward.1} parent=87 // pred_check
          %p543 = pneg %p265
        $region94: #{bearing_fm_plus_forward.1} parent=87 // pred_check_branch
          %545 = sbr.rel (%p543) target = $region96
        $region95: #{bearing_fm_plus_forward.1} parent=87 // pred_region
          %546 = dma.done [#allocation7], 7168
        $region96: #{bearing_fm_plus_forward.1} parent=87 // pred_fallthru
          _
        // Predicated region
        $region97: #{bearing_fm_plus_forward.1} parent=87 // pred_check
          %p547 = pneg %p328
        $region98: #{bearing_fm_plus_forward.1} parent=87 // pred_check_branch
          %549 = sbr.rel (%p547) target = $region100
        $region99: #{bearing_fm_plus_forward.1} parent=87 // pred_region
          %550 = dma.done [#allocation7], 24576
        $region100: #{bearing_fm_plus_forward.1} parent=87 // pred_fallthru
          _
        // Predicated region
        $region101: #{bearing_fm_plus_forward.1} parent=87 // pred_check
          %p551 = pneg %p370
        $region102: #{bearing_fm_plus_forward.1} parent=87 // pred_check_branch
          %553 = sbr.rel (%p551) target = $region104
        $region103: #{bearing_fm_plus_forward.1} parent=87 // pred_region
          %554 = dma.done [#allocation10], 1024
        $region104: #{bearing_fm_plus_forward.1} parent=87 // pred_fallthru
          _
        %p555 = scmp.lt.s32.totalorder %s34, 1
        %s556 = scalar_select %p555, %s34, 1
        %s557 = smul.addr %s556, 24
        %s558 = smul.addr %s557, 8
        %s559 = scalar_lea.vmem %s0, %s558
        %p560 = pneg %p55
        %p561 = pneg %p52
        %p562 = pneg %p76
        %p563 = pneg %p73
        %p564 = pneg %p97
        %p565 = pneg %p94
        %p566 = pneg %p118
        %p567 = pneg %p115
        %p568 = pneg %p139
        %p569 = pneg %p136
        %p570 = pneg %p160
        %p571 = pneg %p157
        %p572 = pneg %p181
        %p573 = pneg %p178
        %p574 = pneg %p202
        %p575 = pneg %p199
        %p576 = pneg %p223
        %p577 = pneg %p220
        %p578 = pneg %p244
        %p579 = pneg %p241
        %p580 = pneg %p265
        %p581 = pneg %p262
        %p582 = pneg %p286
        %p583 = pneg %p283
        %p584 = pneg %p307
        %p585 = pneg %p304
        %p586 = pneg %p328
        %p587 = pneg %p325
        %p588 = pneg %p349
        %p589 = pneg %p346
        %p590 = pneg %p370
        %p591 = pneg %p367
        %p592 = pneg %p391
        %p593 = pneg %p388
        %p594 = pneg %p417
        %p595 = pneg %p414
        %s596 = sand.u32 %s404, 1
        %s597 = scalar_lea.sflag [#allocation5], %s596
        %s598 = sand.u32 %s404, 1
        %s599 = scalar_lea.vmem [#allocation11], %s598
        %p600 = scmp.lt.s32.totalorder %s34, 1
        %s601 = scalar_select %p600, %s34, 1
        %s602 = smul.addr %s601, 24
        %s603 = smul.addr %s602, 8
        %s604 = scalar_lea.vmem %s0, %s603
        %v606 = vld [vmem:[%s604] sm:$0xff]
        %v607 = vld [vmem:[%s604 + $0x8] sm:$0xff]
        %v608 = vld [vmem:[%s604 + $0x10] sm:$0xff]
        %v609 = vld [vmem:[%s604 + $0x18] sm:$0xff]
        %v610 = vld [vmem:[%s604 + $0x20] sm:$0xff]
        %v611 = vld [vmem:[%s604 + $0x28] sm:$0xff]
        %v612 = vld [vmem:[%s604 + $0x30] sm:$0xff]
        %v613 = vld [vmem:[%s604 + $0x38] sm:$0xff]
        %v614 = vld [vmem:[%s604 + $0x40] sm:$0xff]
        %v615 = vld [vmem:[%s604 + $0x48] sm:$0xff]
        %v616 = vld [vmem:[%s604 + $0x50] sm:$0xff]
        %v617 = vld [vmem:[%s604 + $0x58] sm:$0xff]
        %v618 = vld [vmem:[%s604 + $0x60] sm:$0xff]
        %v619 = vld [vmem:[%s604 + $0x68] sm:$0xff]
        %v620 = vld [vmem:[%s604 + $0x70] sm:$0xff]
        %v621 = vld [vmem:[%s604 + $0x78] sm:$0xff]
        %v622 = vld [vmem:[%s604 + $0x80] sm:$0xff]
        %v623 = vld [vmem:[%s604 + $0x88] sm:$0xff]
        %v624 = vld [vmem:[%s604 + $0x90] sm:$0xff]
        %v625 = vld [vmem:[%s604 + $0x98] sm:$0xff]
        %v626 = vld [vmem:[%s604 + $0xa0] sm:$0xff]
        %v627 = vld [vmem:[%s604 + $0xa8] sm:$0xff]
        %v628 = vld [vmem:[%s604 + $0xb0] sm:$0xff]
        %v629 = vld [vmem:[%s604 + $0xb8] sm:$0xff]
        %v630 = vpack.c.bf16 %v607, %v606
        %v631 = vpack.c.bf16 %v609, %v608
        %v632 = vpack.c.bf16 %v611, %v610
        %v633 = vpack.c.bf16 %v613, %v612
        %v634 = vpack.c.bf16 %v615, %v614
        %v635 = vpack.c.bf16 %v617, %v616
        %v636 = vpack.c.bf16 %v619, %v618
        %v637 = vpack.c.bf16 %v621, %v620
        %v638 = vpack.c.bf16 %v623, %v622
        %v639 = vpack.c.bf16 %v625, %v624
        %v640 = vpack.c.bf16 %v627, %v626
        %v641 = vpack.c.bf16 %v629, %v628
        %v642 = vld [vmem:[%s1] sm:$0xf]
        %vm643 = vcmask 64512
        %v645 = vsel %vm643, %v630, 0
        %v648 = vsel %vm643, %v631, 0
        %v651 = vsel %vm643, %v632, 0
        %v654 = vsel %vm643, %v633, 0
        %v657 = vsel %vm643, %v634, 0
        %v660 = vsel %vm643, %v635, 0
        %v663 = vsel %vm643, %v636, 0
        %v666 = vsel %vm643, %v637, 0
        %v669 = vsel %vm643, %v638, 0
        %v672 = vsel %vm643, %v639, 0
        %v675 = vsel %vm643, %v640, 0
        %v678 = vsel %vm643, %v641, 0
        %vm680 = vcmask 1043456
        %v682 = vsel %vm680, %v642, 0
        %684 = vmatprep.subr.bf16.mxu0 0
        %685 = vmatpush1.bf16.msra.mxu0 0
        %686 = vmatprep.subr.bf16.mxu0 0
        %687 = vmatpush1.bf16.msra.mxu0 0
        %688 = vmatprep.subr.bf16.mxu0 0
        %689 = vmatpush1.bf16.msra.mxu0 0
        %690 = vmatprep.subr.bf16.mxu0 0
        %691 = vmatpush1.bf16.msra.mxu0 0
        %692 = vmatprep.subr.bf16.mxu0 0
        %693 = vmatpush1.bf16.msra.mxu0 0
        %694 = vmatprep.subr.bf16.mxu0 0
        %695 = vmatpush1.bf16.msra.mxu0 0
        %696 = vmatprep.subr.bf16.mxu0 0
        %697 = vmatpush1.bf16.msra.mxu0 0
        %698 = vmatprep.subr.bf16.mxu0 0
        %699 = vmatpush1.bf16.msra.mxu0 %v682
        %700 = vmatprep.subr.bf16.mxu0 0
        %701 = vmatpush2.bf16.msra.mxu0 0
        %702 = vmatprep.subr.bf16.mxu0 0
        %703 = vmatpush2.bf16.msra.mxu0 0
        %704 = vmatprep.subr.bf16.mxu0 0
        %705 = vmatpush2.bf16.msra.mxu0 0
        %706 = vmatprep.subr.bf16.mxu0 0
        %707 = vmatpush2.bf16.msra.mxu0 0
        %708 = vmatprep.subr.bf16.mxu0 0
        %709 = vmatpush2.bf16.msra.mxu0 0
        %710 = vmatprep.subr.bf16.mxu0 0
        %711 = vmatpush2.bf16.msra.mxu0 0
        %712 = vmatprep.subr.bf16.mxu0 0
        %713 = vmatpush2.bf16.msra.mxu0 0
        %714 = vmatprep.subr.bf16.mxu0 0
        %715 = vmatpush2.bf16.msra.mxu0 0
        %716 = vmatprep.mubr.bf16.mxu0 0
        %717 = vmatmul.mubr.bf16.gmra.mxu0 %v645
        %v718 = vpop.f32.mrf.mxu0
        %v719 = vadd.f32 0.0, %v718
        %v720 = vpop.f32.mrf.mxu0
        %v721 = vpop.f32.mrf.mxu0
        %v722 = vadd.f32 0.0, %v721
        %v723 = vpop.f32.mrf.mxu0
        %724 = vmatprep.mubr.bf16.mxu0 0
        %725 = vmatmul.mubr.bf16.gmra.mxu0 %v648
        %v726 = vpop.f32.mrf.mxu0
        %v727 = vadd.f32 0.0, %v726
        %v728 = vpop.f32.mrf.mxu0
        %v729 = vpop.f32.mrf.mxu0
        %v730 = vadd.f32 0.0, %v729
        %v731 = vpop.f32.mrf.mxu0
        %732 = vmatprep.mubr.bf16.mxu0 0
        %733 = vmatmul.mubr.bf16.gmra.mxu0 %v651
        %v734 = vpop.f32.mrf.mxu0
        %v735 = vadd.f32 0.0, %v734
        %v736 = vpop.f32.mrf.mxu0
        %v737 = vpop.f32.mrf.mxu0
        %v738 = vadd.f32 0.0, %v737
        %v739 = vpop.f32.mrf.mxu0
        %740 = vmatprep.mubr.bf16.mxu0 0
        %741 = vmatmul.mubr.bf16.gmra.mxu0 %v654
        %v742 = vpop.f32.mrf.mxu0
        %v743 = vadd.f32 0.0, %v742
        %v744 = vpop.f32.mrf.mxu0
        %v745 = vpop.f32.mrf.mxu0
        %v746 = vadd.f32 0.0, %v745
        %v747 = vpop.f32.mrf.mxu0
        %748 = vmatprep.mubr.bf16.mxu0 0
        %749 = vmatmul.mubr.bf16.gmra.mxu0 %v657
        %v750 = vpop.f32.mrf.mxu0
        %v751 = vadd.f32 0.0, %v750
        %v752 = vpop.f32.mrf.mxu0
        %v753 = vpop.f32.mrf.mxu0
        %v754 = vadd.f32 0.0, %v753
        %v755 = vpop.f32.mrf.mxu0
        %756 = vmatprep.mubr.bf16.mxu0 0
        %757 = vmatmul.mubr.bf16.gmra.mxu0 %v660
        %v758 = vpop.f32.mrf.mxu0
        %v759 = vadd.f32 0.0, %v758
        %v760 = vpop.f32.mrf.mxu0
        %v761 = vpop.f32.mrf.mxu0
        %v762 = vadd.f32 0.0, %v761
        %v763 = vpop.f32.mrf.mxu0
        %764 = vmatprep.mubr.bf16.mxu0 0
        %765 = vmatmul.mubr.bf16.gmra.mxu0 %v663
        %v766 = vpop.f32.mrf.mxu0
        %v767 = vadd.f32 0.0, %v766
        %v768 = vpop.f32.mrf.mxu0
        %v769 = vpop.f32.mrf.mxu0
        %v770 = vadd.f32 0.0, %v769
        %v771 = vpop.f32.mrf.mxu0
        %772 = vmatprep.mubr.bf16.mxu0 0
        %773 = vmatmul.mubr.bf16.gmra.mxu0 %v666
        %v774 = vpop.f32.mrf.mxu0
        %v775 = vadd.f32 0.0, %v774
        %v776 = vpop.f32.mrf.mxu0
        %v777 = vpop.f32.mrf.mxu0
        %v778 = vadd.f32 0.0, %v777
        %v779 = vpop.f32.mrf.mxu0
        %780 = vmatprep.mubr.bf16.mxu0 0
        %781 = vmatmul.mubr.bf16.gmra.mxu0 %v669
        %v782 = vpop.f32.mrf.mxu0
        %v783 = vadd.f32 0.0, %v782
        %v784 = vpop.f32.mrf.mxu0
        %v785 = vpop.f32.mrf.mxu0
        %v786 = vadd.f32 0.0, %v785
        %v787 = vpop.f32.mrf.mxu0
        %788 = vmatprep.mubr.bf16.mxu0 0
        %789 = vmatmul.mubr.bf16.gmra.mxu0 %v672
        %v790 = vpop.f32.mrf.mxu0
        %v791 = vadd.f32 0.0, %v790
        %v792 = vpop.f32.mrf.mxu0
        %v793 = vpop.f32.mrf.mxu0
        %v794 = vadd.f32 0.0, %v793
        %v795 = vpop.f32.mrf.mxu0
        %796 = vmatprep.mubr.bf16.mxu0 0
        %797 = vmatmul.mubr.bf16.gmra.mxu0 %v675
        %v798 = vpop.f32.mrf.mxu0
        %v799 = vadd.f32 0.0, %v798
        %v800 = vpop.f32.mrf.mxu0
        %v801 = vpop.f32.mrf.mxu0
        %v802 = vadd.f32 0.0, %v801
        %v803 = vpop.f32.mrf.mxu0
        %804 = vmatprep.mubr.bf16.mxu0 0
        %805 = vmatmul.mubr.bf16.gmra.mxu0 %v678
        %v806 = vpop.f32.mrf.mxu0
        %v807 = vadd.f32 0.0, %v806
        %v808 = vpop.f32.mrf.mxu0
        %v809 = vpop.f32.mrf.mxu0
        %v810 = vadd.f32 0.0, %v809
        %v811 = vpop.f32.mrf.mxu0
        %812 = vdwg.mxu0
        %v813 = vld [vmem:[%s2] sm:$0x1]
        %v815 = vlaneseq
        %v816 = vshrl.u32 %v815, 7
        %v817 = vsub.s32 0, %v816
        %v818 = vrot.slane %v813, %v817
        %v820 = vmul.f32 %v719, %v818
        %v821 = vmul.f32 %v722, %v818
        %v822 = vmul.f32 %v727, %v818
        %v823 = vmul.f32 %v730, %v818
        %v824 = vmul.f32 %v735, %v818
        %v825 = vmul.f32 %v738, %v818
        %v826 = vmul.f32 %v743, %v818
        %v827 = vmul.f32 %v746, %v818
        %v828 = vmul.f32 %v751, %v818
        %v829 = vmul.f32 %v754, %v818
        %v830 = vmul.f32 %v759, %v818
        %v831 = vmul.f32 %v762, %v818
        %v832 = vmul.f32 %v767, %v818
        %v833 = vmul.f32 %v770, %v818
        %v834 = vmul.f32 %v775, %v818
        %v835 = vmul.f32 %v778, %v818
        %v836 = vmul.f32 %v783, %v818
        %v837 = vmul.f32 %v786, %v818
        %v838 = vmul.f32 %v791, %v818
        %v839 = vmul.f32 %v794, %v818
        %v840 = vmul.f32 %v799, %v818
        %v841 = vmul.f32 %v802, %v818
        %v842 = vmul.f32 %v807, %v818
        %v843 = vmul.f32 %v810, %v818
        %v844 = vld [vmem:[%s3] sm:$0x1]
        %v846 = vlaneseq
        %v847 = vshrl.u32 %v846, 7
        %v848 = vsub.s32 0, %v847
        %v849 = vrot.slane %v844, %v848
        %v851 = vadd.f32 %v820, %v849
        %v852 = vadd.f32 %v821, %v849
        %v853 = vadd.f32 %v822, %v849
        %v854 = vadd.f32 %v823, %v849
        %v855 = vadd.f32 %v824, %v849
        %v856 = vadd.f32 %v825, %v849
        %v857 = vadd.f32 %v826, %v849
        %v858 = vadd.f32 %v827, %v849
        %v859 = vadd.f32 %v828, %v849
        %v860 = vadd.f32 %v829, %v849
        %v861 = vadd.f32 %v830, %v849
        %v862 = vadd.f32 %v831, %v849
        %v863 = vadd.f32 %v832, %v849
        %v864 = vadd.f32 %v833, %v849
        %v865 = vadd.f32 %v834, %v849
        %v866 = vadd.f32 %v835, %v849
        %v867 = vadd.f32 %v836, %v849
        %v868 = vadd.f32 %v837, %v849
        %v869 = vadd.f32 %v838, %v849
        %v870 = vadd.f32 %v839, %v849
        %v871 = vadd.f32 %v840, %v849
        %v872 = vadd.f32 %v841, %v849
        %v873 = vadd.f32 %v842, %v849
        %v874 = vadd.f32 %v843, %v849
        %v875 = vmax.f32 %v851, 0.0
        %v876 = vmax.f32 %v852, 0.0
        %v877 = vmax.f32 %v853, 0.0
        %v878 = vmax.f32 %v854, 0.0
        %v879 = vmax.f32 %v855, 0.0
        %v880 = vmax.f32 %v856, 0.0
        %v881 = vmax.f32 %v857, 0.0
        %v882 = vmax.f32 %v858, 0.0
        %v883 = vmax.f32 %v859, 0.0
        %v884 = vmax.f32 %v860, 0.0
        %v885 = vmax.f32 %v861, 0.0
        %v886 = vmax.f32 %v862, 0.0
        %v887 = vmax.f32 %v863, 0.0
        %v888 = vmax.f32 %v864, 0.0
        %v889 = vmax.f32 %v865, 0.0
        %v890 = vmax.f32 %v866, 0.0
        %v891 = vmax.f32 %v867, 0.0
        %v892 = vmax.f32 %v868, 0.0
        %v893 = vmax.f32 %v869, 0.0
        %v894 = vmax.f32 %v870, 0.0
        %v895 = vmax.f32 %v871, 0.0
        %v896 = vmax.f32 %v872, 0.0
        %v897 = vmax.f32 %v873, 0.0
        %v898 = vmax.f32 %v874, 0.0
        %vm923 = vcmask 1042432
        %v924 = vrot.slane %v875, 5
        %v925 = vrot.slane %v876, 5
        %v926 = vsel %vm923, %v924, %v925
        %v927 = vrot.slane %v877, 5
        %v928 = vsel %vm923, %v925, %v927
        %v929 = vrot.slane %v878, 5
        %v930 = vsel %vm923, %v927, %v929
        %v931 = vrot.slane %v879, 5
        %v932 = vsel %vm923, %v929, %v931
        %v933 = vrot.slane %v880, 5
        %v934 = vsel %vm923, %v931, %v933
        %v935 = vrot.slane %v881, 5
        %v936 = vsel %vm923, %v933, %v935
        %v937 = vrot.slane %v882, 5
        %v938 = vsel %vm923, %v935, %v937
        %v939 = vrot.slane %v883, 5
        %v940 = vsel %vm923, %v937, %v939
        %v941 = vrot.slane %v884, 5
        %v942 = vsel %vm923, %v939, %v941
        %v943 = vrot.slane %v885, 5
        %v944 = vsel %vm923, %v941, %v943
        %v945 = vrot.slane %v886, 5
        %v946 = vsel %vm923, %v943, %v945
        %v947 = vrot.slane %v887, 5
        %v948 = vsel %vm923, %v945, %v947
        %v949 = vrot.slane %v888, 5
        %v950 = vsel %vm923, %v947, %v949
        %v951 = vrot.slane %v889, 5
        %v952 = vsel %vm923, %v949, %v951
        %v953 = vrot.slane %v890, 5
        %v954 = vsel %vm923, %v951, %v953
        %v955 = vrot.slane %v891, 5
        %v956 = vsel %vm923, %v953, %v955
        %v957 = vrot.slane %v892, 5
        %v958 = vsel %vm923, %v955, %v957
        %v959 = vrot.slane %v893, 5
        %v960 = vsel %vm923, %v957, %v959
        %v961 = vrot.slane %v894, 5
        %v962 = vsel %vm923, %v959, %v961
        %v963 = vrot.slane %v895, 5
        %v964 = vsel %vm923, %v961, %v963
        %v965 = vrot.slane %v896, 5
        %v966 = vsel %vm923, %v963, %v965
        %v967 = vrot.slane %v897, 5
        %v968 = vsel %vm923, %v965, %v967
        %v969 = vrot.slane %v898, 5
        %v970 = vsel %vm923, %v967, %v969
        %v996 = vsel %vm923, 0.0, %v924
        %v997 = vsel %vm923, %v969, 0.0
        %v998 = vpack.c.bf16 %v926, %v996
        %v999 = vpack.c.bf16 %v930, %v928
        %v1000 = vpack.c.bf16 %v934, %v932
        %v1001 = vpack.c.bf16 %v938, %v936
        %v1002 = vpack.c.bf16 %v942, %v940
        %v1003 = vpack.c.bf16 %v946, %v944
        %v1004 = vpack.c.bf16 %v950, %v948
        %v1005 = vpack.c.bf16 %v954, %v952
        %v1006 = vpack.c.bf16 %v958, %v956
        %v1007 = vpack.c.bf16 %v962, %v960
        %v1008 = vpack.c.bf16 %v966, %v964
        %v1009 = vpack.c.bf16 %v970, %v968
        %v1010 = vld [vmem:[%s4] sm:$0xf]
        %v1011 = vld [vmem:[%s4 + $0x4] sm:$0xf]
        %v1012 = vld [vmem:[%s4 + $0x8] sm:$0xf]
        %v1013 = vld [vmem:[%s4 + $0xc] sm:$0xf]
        %v1014 = vld [vmem:[%s4 + $0x10] sm:$0xf]
        %v1015 = vld [vmem:[%s4 + $0x14] sm:$0xf]
        %v1016 = vld [vmem:[%s4 + $0x18] sm:$0xf]
        %v1017 = vld [vmem:[%s4 + $0x1c] sm:$0xf]
        %v1018 = vld [vmem:[%s4 + $0x20] sm:$0xf]
        %v1019 = vld [vmem:[%s4 + $0x24] sm:$0xf]
        %v1020 = vld [vmem:[%s4 + $0x28] sm:$0xf]
        %v1021 = vld [vmem:[%s4 + $0x2c] sm:$0xf]
        %v1022 = vld [vmem:[%s4 + $0x30] sm:$0xf]
        %v1023 = vld [vmem:[%s4 + $0x34] sm:$0xf]
        %v1024 = vld [vmem:[%s4 + $0x38] sm:$0xf]
        %v1025 = vld [vmem:[%s4 + $0x3c] sm:$0xf]
        %v1026 = vpack.c.bf16 %v997, %v997
        %s1027 = scalar_lea.vmem %s4, 64
        %v1028 = vld [vmem:[%s1027] sm:$0xf]
        %v1029 = vld [vmem:[%s1027 + $0x4] sm:$0xf]
        %v1030 = vld [vmem:[%s1027 + $0x8] sm:$0xf]
        %v1031 = vld [vmem:[%s1027 + $0xc] sm:$0xf]
        %v1032 = vld [vmem:[%s1027 + $0x10] sm:$0xf]
        %v1033 = vld [vmem:[%s1027 + $0x14] sm:$0xf]
        %v1034 = vld [vmem:[%s1027 + $0x18] sm:$0xf]
        %v1035 = vld [vmem:[%s1027 + $0x1c] sm:$0xf]
        %v1036 = vld [vmem:[%s1027 + $0x20] sm:$0xf]
        %v1037 = vld [vmem:[%s1027 + $0x24] sm:$0xf]
        %v1038 = vld [vmem:[%s1027 + $0x28] sm:$0xf]
        %v1039 = vld [vmem:[%s1027 + $0x2c] sm:$0xf]
        %v1040 = vld [vmem:[%s1027 + $0x30] sm:$0xf]
        %v1041 = vld [vmem:[%s1027 + $0x34] sm:$0xf]
        %v1042 = vld [vmem:[%s1027 + $0x38] sm:$0xf]
        %v1043 = vld [vmem:[%s1027 + $0x3c] sm:$0xf]
        %vm1044 = vsmask.f32 7424
        %v1046 = vshrl.u32 %v998, 16
        %v1048 = vshll.u32 %v998, 16
        %v1050 = vrot.slane %v1048, 1
        %v1051 = vor.u32 %v1046, %v1050
        %v1053 = vshll.u32 %v999, 16
        %v1055 = vrot.slane %v1053, 1
        %v1056 = vsel %vm1044, %v1051, %v1055
        %v1057 = vshrl.u32 %v999, 16
        %v1059 = vor.u32 %v1057, %v1055
        %v1061 = vshll.u32 %v1000, 16
        %v1063 = vrot.slane %v1061, 1
        %v1064 = vsel %vm1044, %v1059, %v1063
        %v1065 = vshrl.u32 %v1000, 16
        %v1067 = vor.u32 %v1065, %v1063
        %v1069 = vshll.u32 %v1001, 16
        %v1071 = vrot.slane %v1069, 1
        %v1072 = vsel %vm1044, %v1067, %v1071
        %v1073 = vshrl.u32 %v1001, 16
        %v1075 = vor.u32 %v1073, %v1071
        %v1077 = vshll.u32 %v1002, 16
        %v1079 = vrot.slane %v1077, 1
        %v1080 = vsel %vm1044, %v1075, %v1079
        %v1081 = vshrl.u32 %v1002, 16
        %v1083 = vor.u32 %v1081, %v1079
        %v1085 = vshll.u32 %v1003, 16
        %v1087 = vrot.slane %v1085, 1
        %v1088 = vsel %vm1044, %v1083, %v1087
        %v1089 = vshrl.u32 %v1003, 16
        %v1091 = vor.u32 %v1089, %v1087
        %v1093 = vshll.u32 %v1004, 16
        %v1095 = vrot.slane %v1093, 1
        %v1096 = vsel %vm1044, %v1091, %v1095
        %v1097 = vshrl.u32 %v1004, 16
        %v1099 = vor.u32 %v1097, %v1095
        %v1101 = vshll.u32 %v1005, 16
        %v1103 = vrot.slane %v1101, 1
        %v1104 = vsel %vm1044, %v1099, %v1103
        %v1105 = vshrl.u32 %v1005, 16
        %v1107 = vor.u32 %v1105, %v1103
        %v1109 = vshll.u32 %v1006, 16
        %v1111 = vrot.slane %v1109, 1
        %v1112 = vsel %vm1044, %v1107, %v1111
        %v1113 = vshrl.u32 %v1006, 16
        %v1115 = vor.u32 %v1113, %v1111
        %v1117 = vshll.u32 %v1007, 16
        %v1119 = vrot.slane %v1117, 1
        %v1120 = vsel %vm1044, %v1115, %v1119
        %v1121 = vshrl.u32 %v1007, 16
        %v1123 = vor.u32 %v1121, %v1119
        %v1125 = vshll.u32 %v1008, 16
        %v1127 = vrot.slane %v1125, 1
        %v1128 = vsel %vm1044, %v1123, %v1127
        %v1129 = vshrl.u32 %v1008, 16
        %v1131 = vor.u32 %v1129, %v1127
        %v1133 = vshll.u32 %v1009, 16
        %v1135 = vrot.slane %v1133, 1
        %v1136 = vsel %vm1044, %v1131, %v1135
        %v1137 = vshrl.u32 %v1009, 16
        %v1139 = vor.u32 %v1137, %v1135
        %v1141 = vshll.u32 %v1026, 16
        %v1143 = vrot.slane %v1141, 1
        %v1144 = vsel %vm1044, %v1139, %v1143
        %v1173 = vunpack.c.l.b16 %v1028
        %v1174 = vunpack.c.l.b16 %v1029
        %v1175 = vunpack.c.l.b16 %v1030
        %v1176 = vunpack.c.l.b16 %v1031
        %v1177 = vunpack.c.l.b16 %v1032
        %v1178 = vunpack.c.l.b16 %v1033
        %v1179 = vunpack.c.l.b16 %v1034
        %v1180 = vunpack.c.l.b16 %v1035
        %v1181 = vunpack.c.l.b16 %v1036
        %v1182 = vunpack.c.l.b16 %v1037
        %v1183 = vunpack.c.l.b16 %v1038
        %v1184 = vunpack.c.l.b16 %v1039
        %v1185 = vunpack.c.l.b16 %v1040
        %v1186 = vunpack.c.l.b16 %v1041
        %v1187 = vunpack.c.l.b16 %v1042
        %v1188 = vunpack.c.l.b16 %v1043
        %v1189 = vpack.c.b16 %v1174, %v1173
        %v1190 = vpack.c.b16 %v1176, %v1175
        %v1191 = vpack.c.b16 %v1178, %v1177
        %v1192 = vpack.c.b16 %v1180, %v1179
        %v1193 = vpack.c.b16 %v1182, %v1181
        %v1194 = vpack.c.b16 %v1184, %v1183
        %v1195 = vpack.c.b16 %v1186, %v1185
        %v1196 = vpack.c.b16 %v1188, %v1187
        %1205 = vmatprep.subr.bf16.mxu0 0
        %1206 = vmatpush1.bf16.msra.mxu0 %v1196
        %1207 = vmatprep.subr.bf16.mxu0 0
        %1208 = vmatpush1.bf16.msra.mxu0 %v1195
        %1209 = vmatprep.subr.bf16.mxu0 0
        %1210 = vmatpush1.bf16.msra.mxu0 %v1194
        %1211 = vmatprep.subr.bf16.mxu0 0
        %1212 = vmatpush1.bf16.msra.mxu0 %v1193
        %1213 = vmatprep.subr.bf16.mxu0 0
        %1214 = vmatpush1.bf16.msra.mxu0 %v1192
        %1215 = vmatprep.subr.bf16.mxu0 0
        %1216 = vmatpush1.bf16.msra.mxu0 %v1191
        %1217 = vmatprep.subr.bf16.mxu0 0
        %1218 = vmatpush1.bf16.msra.mxu0 %v1190
        %1219 = vmatprep.subr.bf16.mxu0 0
        %1220 = vmatpush1.bf16.msra.mxu0 %v1189
        %1221 = vmatprep.subr.bf16.mxu0 0
        %1222 = vmatpush2.bf16.msra.mxu0 0
        %1223 = vmatprep.subr.bf16.mxu0 0
        %1224 = vmatpush2.bf16.msra.mxu0 0
        %1225 = vmatprep.subr.bf16.mxu0 0
        %1226 = vmatpush2.bf16.msra.mxu0 0
        %1227 = vmatprep.subr.bf16.mxu0 0
        %1228 = vmatpush2.bf16.msra.mxu0 0
        %1229 = vmatprep.subr.bf16.mxu0 0
        %1230 = vmatpush2.bf16.msra.mxu0 0
        %1231 = vmatprep.subr.bf16.mxu0 0
        %1232 = vmatpush2.bf16.msra.mxu0 0
        %1233 = vmatprep.subr.bf16.mxu0 0
        %1234 = vmatpush2.bf16.msra.mxu0 0
        %1235 = vmatprep.subr.bf16.mxu0 0
        %1236 = vmatpush2.bf16.msra.mxu0 0
        %1237 = vmatprep.mubr.bf16.mxu0 0
        %1238 = vmatmul.mubr.bf16.gmra.mxu0 %v1056
        %v1239 = vpop.f32.mrf.mxu0
        %v1240 = vadd.f32 0.0, %v1239
        %v1241 = vpop.f32.mrf.mxu0
        %v1242 = vpop.f32.mrf.mxu0
        %v1243 = vadd.f32 0.0, %v1242
        %v1244 = vpop.f32.mrf.mxu0
        %1245 = vmatprep.mubr.bf16.mxu0 0
        %1246 = vmatmul.mubr.bf16.gmra.mxu0 %v1064
        %v1247 = vpop.f32.mrf.mxu0
        %v1248 = vadd.f32 0.0, %v1247
        %v1249 = vpop.f32.mrf.mxu0
        %v1250 = vpop.f32.mrf.mxu0
        %v1251 = vadd.f32 0.0, %v1250
        %v1252 = vpop.f32.mrf.mxu0
        %1253 = vmatprep.mubr.bf16.mxu0 0
        %1254 = vmatmul.mubr.bf16.gmra.mxu0 %v1072
        %v1255 = vpop.f32.mrf.mxu0
        %v1256 = vadd.f32 0.0, %v1255
        %v1257 = vpop.f32.mrf.mxu0
        %v1258 = vpop.f32.mrf.mxu0
        %v1259 = vadd.f32 0.0, %v1258
        %v1260 = vpop.f32.mrf.mxu0
        %1261 = vmatprep.mubr.bf16.mxu0 0
        %1262 = vmatmul.mubr.bf16.gmra.mxu0 %v1080
        %v1263 = vpop.f32.mrf.mxu0
        %v1264 = vadd.f32 0.0, %v1263
        %v1265 = vpop.f32.mrf.mxu0
        %v1266 = vpop.f32.mrf.mxu0
        %v1267 = vadd.f32 0.0, %v1266
        %v1268 = vpop.f32.mrf.mxu0
        %1269 = vmatprep.mubr.bf16.mxu0 0
        %1270 = vmatmul.mubr.bf16.gmra.mxu0 %v1088
        %v1271 = vpop.f32.mrf.mxu0
        %v1272 = vadd.f32 0.0, %v1271
        %v1273 = vpop.f32.mrf.mxu0
        %v1274 = vpop.f32.mrf.mxu0
        %v1275 = vadd.f32 0.0, %v1274
        %v1276 = vpop.f32.mrf.mxu0
        %1277 = vmatprep.mubr.bf16.mxu0 0
        %1278 = vmatmul.mubr.bf16.gmra.mxu0 %v1096
        %v1279 = vpop.f32.mrf.mxu0
        %v1280 = vadd.f32 0.0, %v1279
        %v1281 = vpop.f32.mrf.mxu0
        %v1282 = vpop.f32.mrf.mxu0
        %v1283 = vadd.f32 0.0, %v1282
        %v1284 = vpop.f32.mrf.mxu0
        %1285 = vmatprep.mubr.bf16.mxu0 0
        %1286 = vmatmul.mubr.bf16.gmra.mxu0 %v1104
        %v1287 = vpop.f32.mrf.mxu0
        %v1288 = vadd.f32 0.0, %v1287
        %v1289 = vpop.f32.mrf.mxu0
        %v1290 = vpop.f32.mrf.mxu0
        %v1291 = vadd.f32 0.0, %v1290
        %v1292 = vpop.f32.mrf.mxu0
        %1293 = vmatprep.mubr.bf16.mxu0 0
        %1294 = vmatmul.mubr.bf16.gmra.mxu0 %v1112
        %v1295 = vpop.f32.mrf.mxu0
        %v1296 = vadd.f32 0.0, %v1295
        %v1297 = vpop.f32.mrf.mxu0
        %v1298 = vpop.f32.mrf.mxu0
        %v1299 = vadd.f32 0.0, %v1298
        %v1300 = vpop.f32.mrf.mxu0
        %1301 = vmatprep.mubr.bf16.mxu0 0
        %1302 = vmatmul.mubr.bf16.gmra.mxu0 %v1120
        %v1303 = vpop.f32.mrf.mxu0
        %v1304 = vadd.f32 0.0, %v1303
        %v1305 = vpop.f32.mrf.mxu0
        %v1306 = vpop.f32.mrf.mxu0
        %v1307 = vadd.f32 0.0, %v1306
        %v1308 = vpop.f32.mrf.mxu0
        %1309 = vmatprep.mubr.bf16.mxu0 0
        %1310 = vmatmul.mubr.bf16.gmra.mxu0 %v1128
        %v1311 = vpop.f32.mrf.mxu0
        %v1312 = vadd.f32 0.0, %v1311
        %v1313 = vpop.f32.mrf.mxu0
        %v1314 = vpop.f32.mrf.mxu0
        %v1315 = vadd.f32 0.0, %v1314
        %v1316 = vpop.f32.mrf.mxu0
        %1317 = vmatprep.mubr.bf16.mxu0 0
        %1318 = vmatmul.mubr.bf16.gmra.mxu0 %v1136
        %v1319 = vpop.f32.mrf.mxu0
        %v1320 = vadd.f32 0.0, %v1319
        %v1321 = vpop.f32.mrf.mxu0
        %v1322 = vpop.f32.mrf.mxu0
        %v1323 = vadd.f32 0.0, %v1322
        %v1324 = vpop.f32.mrf.mxu0
        %1325 = vmatprep.mubr.bf16.mxu0 0
        %1326 = vmatmul.mubr.bf16.gmra.mxu0 %v1144
        %v1327 = vpop.f32.mrf.mxu0
        %v1328 = vadd.f32 0.0, %v1327
        %v1329 = vpop.f32.mrf.mxu0
        %v1330 = vpop.f32.mrf.mxu0
        %v1331 = vadd.f32 0.0, %v1330
        %v1332 = vpop.f32.mrf.mxu0
        %1333 = vdwg.mxu0
        %v1350 = vunpack.c.l.b16 %v1010
        %v1351 = vunpack.c.l.b16 %v1011
        %v1352 = vunpack.c.l.b16 %v1012
        %v1353 = vunpack.c.l.b16 %v1013
        %v1354 = vunpack.c.l.b16 %v1014
        %v1355 = vunpack.c.l.b16 %v1015
        %v1356 = vunpack.c.l.b16 %v1016
        %v1357 = vunpack.c.l.b16 %v1017
        %v1358 = vunpack.c.l.b16 %v1018
        %v1359 = vunpack.c.l.b16 %v1019
        %v1360 = vunpack.c.l.b16 %v1020
        %v1361 = vunpack.c.l.b16 %v1021
        %v1362 = vunpack.c.l.b16 %v1022
        %v1363 = vunpack.c.l.b16 %v1023
        %v1364 = vunpack.c.l.b16 %v1024
        %v1365 = vunpack.c.l.b16 %v1025
        %v1366 = vpack.c.b16 %v1351, %v1350
        %v1367 = vpack.c.b16 %v1353, %v1352
        %v1368 = vpack.c.b16 %v1355, %v1354
        %v1369 = vpack.c.b16 %v1357, %v1356
        %v1370 = vpack.c.b16 %v1359, %v1358
        %v1371 = vpack.c.b16 %v1361, %v1360
        %v1372 = vpack.c.b16 %v1363, %v1362
        %v1373 = vpack.c.b16 %v1365, %v1364
        %1382 = vmatprep.subr.bf16.mxu0 0
        %1383 = vmatpush1.bf16.msra.mxu0 %v1373
        %1384 = vmatprep.subr.bf16.mxu0 0
        %1385 = vmatpush1.bf16.msra.mxu0 %v1372
        %1386 = vmatprep.subr.bf16.mxu0 0
        %1387 = vmatpush1.bf16.msra.mxu0 %v1371
        %1388 = vmatprep.subr.bf16.mxu0 0
        %1389 = vmatpush1.bf16.msra.mxu0 %v1370
        %1390 = vmatprep.subr.bf16.mxu0 0
        %1391 = vmatpush1.bf16.msra.mxu0 %v1369
        %1392 = vmatprep.subr.bf16.mxu0 0
        %1393 = vmatpush1.bf16.msra.mxu0 %v1368
        %1394 = vmatprep.subr.bf16.mxu0 0
        %1395 = vmatpush1.bf16.msra.mxu0 %v1367
        %1396 = vmatprep.subr.bf16.mxu0 0
        %1397 = vmatpush1.bf16.msra.mxu0 %v1366
        %1398 = vmatprep.subr.bf16.mxu0 0
        %1399 = vmatpush2.bf16.msra.mxu0 0
        %1400 = vmatprep.subr.bf16.mxu0 0
        %1401 = vmatpush2.bf16.msra.mxu0 0
        %1402 = vmatprep.subr.bf16.mxu0 0
        %1403 = vmatpush2.bf16.msra.mxu0 0
        %1404 = vmatprep.subr.bf16.mxu0 0
        %1405 = vmatpush2.bf16.msra.mxu0 0
        %1406 = vmatprep.subr.bf16.mxu0 0
        %1407 = vmatpush2.bf16.msra.mxu0 0
        %1408 = vmatprep.subr.bf16.mxu0 0
        %1409 = vmatpush2.bf16.msra.mxu0 0
        %1410 = vmatprep.subr.bf16.mxu0 0
        %1411 = vmatpush2.bf16.msra.mxu0 0
        %1412 = vmatprep.subr.bf16.mxu0 0
        %1413 = vmatpush2.bf16.msra.mxu0 0
        %1414 = vmatprep.mubr.bf16.mxu0 0
        %1415 = vmatmul.mubr.bf16.gmra.mxu0 %v998
        %v1416 = vpop.f32.mrf.mxu0
        %v1417 = vadd.f32 %v1240, %v1416
        %v1418 = vpop.f32.mrf.mxu0
        %v1419 = vpop.f32.mrf.mxu0
        %v1420 = vadd.f32 %v1243, %v1419
        %v1421 = vpop.f32.mrf.mxu0
        %1422 = vmatprep.mubr.bf16.mxu0 0
        %1423 = vmatmul.mubr.bf16.gmra.mxu0 %v999
        %v1424 = vpop.f32.mrf.mxu0
        %v1425 = vadd.f32 %v1248, %v1424
        %v1426 = vpop.f32.mrf.mxu0
        %v1427 = vpop.f32.mrf.mxu0
        %v1428 = vadd.f32 %v1251, %v1427
        %v1429 = vpop.f32.mrf.mxu0
        %1430 = vmatprep.mubr.bf16.mxu0 0
        %1431 = vmatmul.mubr.bf16.gmra.mxu0 %v1000
        %v1432 = vpop.f32.mrf.mxu0
        %v1433 = vadd.f32 %v1256, %v1432
        %v1434 = vpop.f32.mrf.mxu0
        %v1435 = vpop.f32.mrf.mxu0
        %v1436 = vadd.f32 %v1259, %v1435
        %v1437 = vpop.f32.mrf.mxu0
        %1438 = vmatprep.mubr.bf16.mxu0 0
        %1439 = vmatmul.mubr.bf16.gmra.mxu0 %v1001
        %v1440 = vpop.f32.mrf.mxu0
        %v1441 = vadd.f32 %v1264, %v1440
        %v1442 = vpop.f32.mrf.mxu0
        %v1443 = vpop.f32.mrf.mxu0
        %v1444 = vadd.f32 %v1267, %v1443
        %v1445 = vpop.f32.mrf.mxu0
        %1446 = vmatprep.mubr.bf16.mxu0 0
        %1447 = vmatmul.mubr.bf16.gmra.mxu0 %v1002
        %v1448 = vpop.f32.mrf.mxu0
        %v1449 = vadd.f32 %v1272, %v1448
        %v1450 = vpop.f32.mrf.mxu0
        %v1451 = vpop.f32.mrf.mxu0
        %v1452 = vadd.f32 %v1275, %v1451
        %v1453 = vpop.f32.mrf.mxu0
        %1454 = vmatprep.mubr.bf16.mxu0 0
        %1455 = vmatmul.mubr.bf16.gmra.mxu0 %v1003
        %v1456 = vpop.f32.mrf.mxu0
        %v1457 = vadd.f32 %v1280, %v1456
        %v1458 = vpop.f32.mrf.mxu0
        %v1459 = vpop.f32.mrf.mxu0
        %v1460 = vadd.f32 %v1283, %v1459
        %v1461 = vpop.f32.mrf.mxu0
        %1462 = vmatprep.mubr.bf16.mxu0 0
        %1463 = vmatmul.mubr.bf16.gmra.mxu0 %v1004
        %v1464 = vpop.f32.mrf.mxu0
        %v1465 = vadd.f32 %v1288, %v1464
        %v1466 = vpop.f32.mrf.mxu0
        %v1467 = vpop.f32.mrf.mxu0
        %v1468 = vadd.f32 %v1291, %v1467
        %v1469 = vpop.f32.mrf.mxu0
        %1470 = vmatprep.mubr.bf16.mxu0 0
        %1471 = vmatmul.mubr.bf16.gmra.mxu0 %v1005
        %v1472 = vpop.f32.mrf.mxu0
        %v1473 = vadd.f32 %v1296, %v1472
        %v1474 = vpop.f32.mrf.mxu0
        %v1475 = vpop.f32.mrf.mxu0
        %v1476 = vadd.f32 %v1299, %v1475
        %v1477 = vpop.f32.mrf.mxu0
        %1478 = vmatprep.mubr.bf16.mxu0 0
        %1479 = vmatmul.mubr.bf16.gmra.mxu0 %v1006
        %v1480 = vpop.f32.mrf.mxu0
        %v1481 = vadd.f32 %v1304, %v1480
        %v1482 = vpop.f32.mrf.mxu0
        %v1483 = vpop.f32.mrf.mxu0
        %v1484 = vadd.f32 %v1307, %v1483
        %v1485 = vpop.f32.mrf.mxu0
        %1486 = vmatprep.mubr.bf16.mxu0 0
        %1487 = vmatmul.mubr.bf16.gmra.mxu0 %v1007
        %v1488 = vpop.f32.mrf.mxu0
        %v1489 = vadd.f32 %v1312, %v1488
        %v1490 = vpop.f32.mrf.mxu0
        %v1491 = vpop.f32.mrf.mxu0
        %v1492 = vadd.f32 %v1315, %v1491
        %v1493 = vpop.f32.mrf.mxu0
        %1494 = vmatprep.mubr.bf16.mxu0 0
        %1495 = vmatmul.mubr.bf16.gmra.mxu0 %v1008
        %v1496 = vpop.f32.mrf.mxu0
        %v1497 = vadd.f32 %v1320, %v1496
        %v1498 = vpop.f32.mrf.mxu0
        %v1499 = vpop.f32.mrf.mxu0
        %v1500 = vadd.f32 %v1323, %v1499
        %v1501 = vpop.f32.mrf.mxu0
        %1502 = vmatprep.mubr.bf16.mxu0 0
        %1503 = vmatmul.mubr.bf16.gmra.mxu0 %v1009
        %v1504 = vpop.f32.mrf.mxu0
        %v1505 = vadd.f32 %v1328, %v1504
        %v1506 = vpop.f32.mrf.mxu0
        %v1507 = vpop.f32.mrf.mxu0
        %v1508 = vadd.f32 %v1331, %v1507
        %v1509 = vpop.f32.mrf.mxu0
        %1510 = vdwg.mxu0
        %s1511 = scalar_lea.vmem %s4, 128
        %v1512 = vld [vmem:[%s1511] sm:$0xf]
        %v1513 = vld [vmem:[%s1511 + $0x4] sm:$0xf]
        %v1514 = vld [vmem:[%s1511 + $0x8] sm:$0xf]
        %v1515 = vld [vmem:[%s1511 + $0xc] sm:$0xf]
        %v1516 = vld [vmem:[%s1511 + $0x10] sm:$0xf]
        %v1517 = vld [vmem:[%s1511 + $0x14] sm:$0xf]
        %v1518 = vld [vmem:[%s1511 + $0x18] sm:$0xf]
        %v1519 = vld [vmem:[%s1511 + $0x1c] sm:$0xf]
        %v1520 = vld [vmem:[%s1511 + $0x20] sm:$0xf]
        %v1521 = vld [vmem:[%s1511 + $0x24] sm:$0xf]
        %v1522 = vld [vmem:[%s1511 + $0x28] sm:$0xf]
        %v1523 = vld [vmem:[%s1511 + $0x2c] sm:$0xf]
        %v1524 = vld [vmem:[%s1511 + $0x30] sm:$0xf]
        %v1525 = vld [vmem:[%s1511 + $0x34] sm:$0xf]
        %v1526 = vld [vmem:[%s1511 + $0x38] sm:$0xf]
        %v1527 = vld [vmem:[%s1511 + $0x3c] sm:$0xf]
        %vm1541 = vcmask 1046528
        %v1542 = vrot.slane %v998, 1
        %v1543 = vrot.slane %v999, 1
        %v1544 = vsel %vm1541, %v1542, %v1543
        %v1545 = vrot.slane %v1000, 1
        %v1546 = vsel %vm1541, %v1543, %v1545
        %v1547 = vrot.slane %v1001, 1
        %v1548 = vsel %vm1541, %v1545, %v1547
        %v1549 = vrot.slane %v1002, 1
        %v1550 = vsel %vm1541, %v1547, %v1549
        %v1551 = vrot.slane %v1003, 1
        %v1552 = vsel %vm1541, %v1549, %v1551
        %v1553 = vrot.slane %v1004, 1
        %v1554 = vsel %vm1541, %v1551, %v1553
        %v1555 = vrot.slane %v1005, 1
        %v1556 = vsel %vm1541, %v1553, %v1555
        %v1557 = vrot.slane %v1006, 1
        %v1558 = vsel %vm1541, %v1555, %v1557
        %v1559 = vrot.slane %v1007, 1
        %v1560 = vsel %vm1541, %v1557, %v1559
        %v1561 = vrot.slane %v1008, 1
        %v1562 = vsel %vm1541, %v1559, %v1561
        %v1563 = vrot.slane %v1009, 1
        %v1564 = vsel %vm1541, %v1561, %v1563
        %v1565 = vrot.slane %v1026, 1
        %v1566 = vsel %vm1541, %v1563, %v1565
        %v1595 = vunpack.c.l.b16 %v1512
        %v1596 = vunpack.c.l.b16 %v1513
        %v1597 = vunpack.c.l.b16 %v1514
        %v1598 = vunpack.c.l.b16 %v1515
        %v1599 = vunpack.c.l.b16 %v1516
        %v1600 = vunpack.c.l.b16 %v1517
        %v1601 = vunpack.c.l.b16 %v1518
        %v1602 = vunpack.c.l.b16 %v1519
        %v1603 = vunpack.c.l.b16 %v1520
        %v1604 = vunpack.c.l.b16 %v1521
        %v1605 = vunpack.c.l.b16 %v1522
        %v1606 = vunpack.c.l.b16 %v1523
        %v1607 = vunpack.c.l.b16 %v1524
        %v1608 = vunpack.c.l.b16 %v1525
        %v1609 = vunpack.c.l.b16 %v1526
        %v1610 = vunpack.c.l.b16 %v1527
        %v1611 = vpack.c.b16 %v1596, %v1595
        %v1612 = vpack.c.b16 %v1598, %v1597
        %v1613 = vpack.c.b16 %v1600, %v1599
        %v1614 = vpack.c.b16 %v1602, %v1601
        %v1615 = vpack.c.b16 %v1604, %v1603
        %v1616 = vpack.c.b16 %v1606, %v1605
        %v1617 = vpack.c.b16 %v1608, %v1607
        %v1618 = vpack.c.b16 %v1610, %v1609
        %1627 = vmatprep.subr.bf16.mxu0 0
        %1628 = vmatpush1.bf16.msra.mxu0 %v1618
        %1629 = vmatprep.subr.bf16.mxu0 0
        %1630 = vmatpush1.bf16.msra.mxu0 %v1617
        %1631 = vmatprep.subr.bf16.mxu0 0
        %1632 = vmatpush1.bf16.msra.mxu0 %v1616
        %1633 = vmatprep.subr.bf16.mxu0 0
        %1634 = vmatpush1.bf16.msra.mxu0 %v1615
        %1635 = vmatprep.subr.bf16.mxu0 0
        %1636 = vmatpush1.bf16.msra.mxu0 %v1614
        %1637 = vmatprep.subr.bf16.mxu0 0
        %1638 = vmatpush1.bf16.msra.mxu0 %v1613
        %1639 = vmatprep.subr.bf16.mxu0 0
        %1640 = vmatpush1.bf16.msra.mxu0 %v1612
        %1641 = vmatprep.subr.bf16.mxu0 0
        %1642 = vmatpush1.bf16.msra.mxu0 %v1611
        %1643 = vmatprep.subr.bf16.mxu0 0
        %1644 = vmatpush2.bf16.msra.mxu0 0
        %1645 = vmatprep.subr.bf16.mxu0 0
        %1646 = vmatpush2.bf16.msra.mxu0 0
        %1647 = vmatprep.subr.bf16.mxu0 0
        %1648 = vmatpush2.bf16.msra.mxu0 0
        %1649 = vmatprep.subr.bf16.mxu0 0
        %1650 = vmatpush2.bf16.msra.mxu0 0
        %1651 = vmatprep.subr.bf16.mxu0 0
        %1652 = vmatpush2.bf16.msra.mxu0 0
        %1653 = vmatprep.subr.bf16.mxu0 0
        %1654 = vmatpush2.bf16.msra.mxu0 0
        %1655 = vmatprep.subr.bf16.mxu0 0
        %1656 = vmatpush2.bf16.msra.mxu0 0
        %1657 = vmatprep.subr.bf16.mxu0 0
        %1658 = vmatpush2.bf16.msra.mxu0 0
        %1659 = vmatprep.mubr.bf16.mxu0 0
        %1660 = vmatmul.mubr.bf16.gmra.mxu0 %v1544
        %v1661 = vpop.f32.mrf.mxu0
        %v1662 = vadd.f32 0.0, %v1661
        %v1663 = vpop.f32.mrf.mxu0
        %v1664 = vpop.f32.mrf.mxu0
        %v1665 = vadd.f32 0.0, %v1664
        %v1666 = vpop.f32.mrf.mxu0
        %1667 = vmatprep.mubr.bf16.mxu0 0
        %1668 = vmatmul.mubr.bf16.gmra.mxu0 %v1546
        %v1669 = vpop.f32.mrf.mxu0
        %v1670 = vadd.f32 0.0, %v1669
        %v1671 = vpop.f32.mrf.mxu0
        %v1672 = vpop.f32.mrf.mxu0
        %v1673 = vadd.f32 0.0, %v1672
        %v1674 = vpop.f32.mrf.mxu0
        %1675 = vmatprep.mubr.bf16.mxu0 0
        %1676 = vmatmul.mubr.bf16.gmra.mxu0 %v1548
        %v1677 = vpop.f32.mrf.mxu0
        %v1678 = vadd.f32 0.0, %v1677
        %v1679 = vpop.f32.mrf.mxu0
        %v1680 = vpop.f32.mrf.mxu0
        %v1681 = vadd.f32 0.0, %v1680
        %v1682 = vpop.f32.mrf.mxu0
        %1683 = vmatprep.mubr.bf16.mxu0 0
        %1684 = vmatmul.mubr.bf16.gmra.mxu0 %v1550
        %v1685 = vpop.f32.mrf.mxu0
        %v1686 = vadd.f32 0.0, %v1685
        %v1687 = vpop.f32.mrf.mxu0
        %v1688 = vpop.f32.mrf.mxu0
        %v1689 = vadd.f32 0.0, %v1688
        %v1690 = vpop.f32.mrf.mxu0
        %1691 = vmatprep.mubr.bf16.mxu0 0
        %1692 = vmatmul.mubr.bf16.gmra.mxu0 %v1552
        %v1693 = vpop.f32.mrf.mxu0
        %v1694 = vadd.f32 0.0, %v1693
        %v1695 = vpop.f32.mrf.mxu0
        %v1696 = vpop.f32.mrf.mxu0
        %v1697 = vadd.f32 0.0, %v1696
        %v1698 = vpop.f32.mrf.mxu0
        %1699 = vmatprep.mubr.bf16.mxu0 0
        %1700 = vmatmul.mubr.bf16.gmra.mxu0 %v1554
        %v1701 = vpop.f32.mrf.mxu0
        %v1702 = vadd.f32 0.0, %v1701
        %v1703 = vpop.f32.mrf.mxu0
        %v1704 = vpop.f32.mrf.mxu0
        %v1705 = vadd.f32 0.0, %v1704
        %v1706 = vpop.f32.mrf.mxu0
        %1707 = vmatprep.mubr.bf16.mxu0 0
        %1708 = vmatmul.mubr.bf16.gmra.mxu0 %v1556
        %v1709 = vpop.f32.mrf.mxu0
        %v1710 = vadd.f32 0.0, %v1709
        %v1711 = vpop.f32.mrf.mxu0
        %v1712 = vpop.f32.mrf.mxu0
        %v1713 = vadd.f32 0.0, %v1712
        %v1714 = vpop.f32.mrf.mxu0
        %1715 = vmatprep.mubr.bf16.mxu0 0
        %1716 = vmatmul.mubr.bf16.gmra.mxu0 %v1558
        %v1717 = vpop.f32.mrf.mxu0
        %v1718 = vadd.f32 0.0, %v1717
        %v1719 = vpop.f32.mrf.mxu0
        %v1720 = vpop.f32.mrf.mxu0
        %v1721 = vadd.f32 0.0, %v1720
        %v1722 = vpop.f32.mrf.mxu0
        %1723 = vmatprep.mubr.bf16.mxu0 0
        %1724 = vmatmul.mubr.bf16.gmra.mxu0 %v1560
        %v1725 = vpop.f32.mrf.mxu0
        %v1726 = vadd.f32 0.0, %v1725
        %v1727 = vpop.f32.mrf.mxu0
        %v1728 = vpop.f32.mrf.mxu0
        %v1729 = vadd.f32 0.0, %v1728
        %v1730 = vpop.f32.mrf.mxu0
        %1731 = vmatprep.mubr.bf16.mxu0 0
        %1732 = vmatmul.mubr.bf16.gmra.mxu0 %v1562
        %v1733 = vpop.f32.mrf.mxu0
        %v1734 = vadd.f32 0.0, %v1733
        %v1735 = vpop.f32.mrf.mxu0
        %v1736 = vpop.f32.mrf.mxu0
        %v1737 = vadd.f32 0.0, %v1736
        %v1738 = vpop.f32.mrf.mxu0
        %1739 = vmatprep.mubr.bf16.mxu0 0
        %1740 = vmatmul.mubr.bf16.gmra.mxu0 %v1564
        %v1741 = vpop.f32.mrf.mxu0
        %v1742 = vadd.f32 0.0, %v1741
        %v1743 = vpop.f32.mrf.mxu0
        %v1744 = vpop.f32.mrf.mxu0
        %v1745 = vadd.f32 0.0, %v1744
        %v1746 = vpop.f32.mrf.mxu0
        %1747 = vmatprep.mubr.bf16.mxu0 0
        %1748 = vmatmul.mubr.bf16.gmra.mxu0 %v1566
        %v1749 = vpop.f32.mrf.mxu0
        %v1750 = vadd.f32 0.0, %v1749
        %v1751 = vpop.f32.mrf.mxu0
        %v1752 = vpop.f32.mrf.mxu0
        %v1753 = vadd.f32 0.0, %v1752
        %v1754 = vpop.f32.mrf.mxu0
        %1755 = vdwg.mxu0
        %v1756 = vadd.f32 %v1417, %v1662
        %v1757 = vadd.f32 %v1420, %v1665
        %v1758 = vadd.f32 %v1425, %v1670
        %v1759 = vadd.f32 %v1428, %v1673
        %v1760 = vadd.f32 %v1433, %v1678
        %v1761 = vadd.f32 %v1436, %v1681
        %v1762 = vadd.f32 %v1441, %v1686
        %v1763 = vadd.f32 %v1444, %v1689
        %v1764 = vadd.f32 %v1449, %v1694
        %v1765 = vadd.f32 %v1452, %v1697
        %v1766 = vadd.f32 %v1457, %v1702
        %v1767 = vadd.f32 %v1460, %v1705
        %v1768 = vadd.f32 %v1465, %v1710
        %v1769 = vadd.f32 %v1468, %v1713
        %v1770 = vadd.f32 %v1473, %v1718
        %v1771 = vadd.f32 %v1476, %v1721
        %v1772 = vadd.f32 %v1481, %v1726
        %v1773 = vadd.f32 %v1484, %v1729
        %v1774 = vadd.f32 %v1489, %v1734
        %v1775 = vadd.f32 %v1492, %v1737
        %v1776 = vadd.f32 %v1497, %v1742
        %v1777 = vadd.f32 %v1500, %v1745
        %v1778 = vadd.f32 %v1505, %v1750
        %v1779 = vadd.f32 %v1508, %v1753
        %s1780 = scalar_lea.vmem %s4, 192
        %v1781 = vld [vmem:[%s1780] sm:$0xf]
        %v1782 = vld [vmem:[%s1780 + $0x4] sm:$0xf]
        %v1783 = vld [vmem:[%s1780 + $0x8] sm:$0xf]
        %v1784 = vld [vmem:[%s1780 + $0xc] sm:$0xf]
        %v1785 = vld [vmem:[%s1780 + $0x10] sm:$0xf]
        %v1786 = vld [vmem:[%s1780 + $0x14] sm:$0xf]
        %v1787 = vld [vmem:[%s1780 + $0x18] sm:$0xf]
        %v1788 = vld [vmem:[%s1780 + $0x1c] sm:$0xf]
        %v1789 = vld [vmem:[%s1780 + $0x20] sm:$0xf]
        %v1790 = vld [vmem:[%s1780 + $0x24] sm:$0xf]
        %v1791 = vld [vmem:[%s1780 + $0x28] sm:$0xf]
        %v1792 = vld [vmem:[%s1780 + $0x2c] sm:$0xf]
        %v1793 = vld [vmem:[%s1780 + $0x30] sm:$0xf]
        %v1794 = vld [vmem:[%s1780 + $0x34] sm:$0xf]
        %v1795 = vld [vmem:[%s1780 + $0x38] sm:$0xf]
        %v1796 = vld [vmem:[%s1780 + $0x3c] sm:$0xf]
        %vm1797 = vsmask.f32 6400
        %v1798 = vrot.slane %v1046, 1
        %v1799 = vrot.slane %v1048, 2
        %v1800 = vor.u32 %v1798, %v1799
        %v1801 = vrot.slane %v1057, 1
        %v1802 = vrot.slane %v1053, 2
        %v1803 = vor.u32 %v1801, %v1802
        %v1804 = vsel %vm1797, %v1800, %v1803
        %v1805 = vrot.slane %v1065, 1
        %v1806 = vrot.slane %v1061, 2
        %v1807 = vor.u32 %v1805, %v1806
        %v1808 = vsel %vm1797, %v1803, %v1807
        %v1809 = vrot.slane %v1073, 1
        %v1810 = vrot.slane %v1069, 2
        %v1811 = vor.u32 %v1809, %v1810
        %v1812 = vsel %vm1797, %v1807, %v1811
        %v1813 = vrot.slane %v1081, 1
        %v1814 = vrot.slane %v1077, 2
        %v1815 = vor.u32 %v1813, %v1814
        %v1816 = vsel %vm1797, %v1811, %v1815
        %v1817 = vrot.slane %v1089, 1
        %v1818 = vrot.slane %v1085, 2
        %v1819 = vor.u32 %v1817, %v1818
        %v1820 = vsel %vm1797, %v1815, %v1819
        %v1821 = vrot.slane %v1097, 1
        %v1822 = vrot.slane %v1093, 2
        %v1823 = vor.u32 %v1821, %v1822
        %v1824 = vsel %vm1797, %v1819, %v1823
        %v1825 = vrot.slane %v1105, 1
        %v1826 = vrot.slane %v1101, 2
        %v1827 = vor.u32 %v1825, %v1826
        %v1828 = vsel %vm1797, %v1823, %v1827
        %v1829 = vrot.slane %v1113, 1
        %v1830 = vrot.slane %v1109, 2
        %v1831 = vor.u32 %v1829, %v1830
        %v1832 = vsel %vm1797, %v1827, %v1831
        %v1833 = vrot.slane %v1121, 1
        %v1834 = vrot.slane %v1117, 2
        %v1835 = vor.u32 %v1833, %v1834
        %v1836 = vsel %vm1797, %v1831, %v1835
        %v1837 = vrot.slane %v1129, 1
        %v1838 = vrot.slane %v1125, 2
        %v1839 = vor.u32 %v1837, %v1838
        %v1840 = vsel %vm1797, %v1835, %v1839
        %v1841 = vrot.slane %v1137, 1
        %v1842 = vrot.slane %v1133, 2
        %v1843 = vor.u32 %v1841, %v1842
        %v1844 = vsel %vm1797, %v1839, %v1843
        %v1845 = vshrl.u32 %v1026, 16
        %v1847 = vrot.slane %v1845, 1
        %v1848 = vrot.slane %v1141, 2
        %v1849 = vor.u32 %v1847, %v1848
        %v1850 = vsel %vm1797, %v1843, %v1849
        %v1879 = vunpack.c.l.b16 %v1781
        %v1880 = vunpack.c.l.b16 %v1782
        %v1881 = vunpack.c.l.b16 %v1783
        %v1882 = vunpack.c.l.b16 %v1784
        %v1883 = vunpack.c.l.b16 %v1785
        %v1884 = vunpack.c.l.b16 %v1786
        %v1885 = vunpack.c.l.b16 %v1787
        %v1886 = vunpack.c.l.b16 %v1788
        %v1887 = vunpack.c.l.b16 %v1789
        %v1888 = vunpack.c.l.b16 %v1790
        %v1889 = vunpack.c.l.b16 %v1791
        %v1890 = vunpack.c.l.b16 %v1792
        %v1891 = vunpack.c.l.b16 %v1793
        %v1892 = vunpack.c.l.b16 %v1794
        %v1893 = vunpack.c.l.b16 %v1795
        %v1894 = vunpack.c.l.b16 %v1796
        %v1895 = vpack.c.b16 %v1880, %v1879
        %v1896 = vpack.c.b16 %v1882, %v1881
        %v1897 = vpack.c.b16 %v1884, %v1883
        %v1898 = vpack.c.b16 %v1886, %v1885
        %v1899 = vpack.c.b16 %v1888, %v1887
        %v1900 = vpack.c.b16 %v1890, %v1889
        %v1901 = vpack.c.b16 %v1892, %v1891
        %v1902 = vpack.c.b16 %v1894, %v1893
        %1911 = vmatprep.subr.bf16.mxu0 0
        %1912 = vmatpush1.bf16.msra.mxu0 %v1902
        %1913 = vmatprep.subr.bf16.mxu0 0
        %1914 = vmatpush1.bf16.msra.mxu0 %v1901
        %1915 = vmatprep.subr.bf16.mxu0 0
        %1916 = vmatpush1.bf16.msra.mxu0 %v1900
        %1917 = vmatprep.subr.bf16.mxu0 0
        %1918 = vmatpush1.bf16.msra.mxu0 %v1899
        %1919 = vmatprep.subr.bf16.mxu0 0
        %1920 = vmatpush1.bf16.msra.mxu0 %v1898
        %1921 = vmatprep.subr.bf16.mxu0 0
        %1922 = vmatpush1.bf16.msra.mxu0 %v1897
        %1923 = vmatprep.subr.bf16.mxu0 0
        %1924 = vmatpush1.bf16.msra.mxu0 %v1896
        %1925 = vmatprep.subr.bf16.mxu0 0
        %1926 = vmatpush1.bf16.msra.mxu0 %v1895
        %1927 = vmatprep.subr.bf16.mxu0 0
        %1928 = vmatpush2.bf16.msra.mxu0 0
        %1929 = vmatprep.subr.bf16.mxu0 0
        %1930 = vmatpush2.bf16.msra.mxu0 0
        %1931 = vmatprep.subr.bf16.mxu0 0
        %1932 = vmatpush2.bf16.msra.mxu0 0
        %1933 = vmatprep.subr.bf16.mxu0 0
        %1934 = vmatpush2.bf16.msra.mxu0 0
        %1935 = vmatprep.subr.bf16.mxu0 0
        %1936 = vmatpush2.bf16.msra.mxu0 0
        %1937 = vmatprep.subr.bf16.mxu0 0
        %1938 = vmatpush2.bf16.msra.mxu0 0
        %1939 = vmatprep.subr.bf16.mxu0 0
        %1940 = vmatpush2.bf16.msra.mxu0 0
        %1941 = vmatprep.subr.bf16.mxu0 0
        %1942 = vmatpush2.bf16.msra.mxu0 0
        %1943 = vmatprep.mubr.bf16.mxu0 0
        %1944 = vmatmul.mubr.bf16.gmra.mxu0 %v1804
        %v1945 = vpop.f32.mrf.mxu0
        %v1946 = vadd.f32 0.0, %v1945
        %v1947 = vpop.f32.mrf.mxu0
        %v1948 = vpop.f32.mrf.mxu0
        %v1949 = vadd.f32 0.0, %v1948
        %v1950 = vpop.f32.mrf.mxu0
        %1951 = vmatprep.mubr.bf16.mxu0 0
        %1952 = vmatmul.mubr.bf16.gmra.mxu0 %v1808
        %v1953 = vpop.f32.mrf.mxu0
        %v1954 = vadd.f32 0.0, %v1953
        %v1955 = vpop.f32.mrf.mxu0
        %v1956 = vpop.f32.mrf.mxu0
        %v1957 = vadd.f32 0.0, %v1956
        %v1958 = vpop.f32.mrf.mxu0
        %1959 = vmatprep.mubr.bf16.mxu0 0
        %1960 = vmatmul.mubr.bf16.gmra.mxu0 %v1812
        %v1961 = vpop.f32.mrf.mxu0
        %v1962 = vadd.f32 0.0, %v1961
        %v1963 = vpop.f32.mrf.mxu0
        %v1964 = vpop.f32.mrf.mxu0
        %v1965 = vadd.f32 0.0, %v1964
        %v1966 = vpop.f32.mrf.mxu0
        %1967 = vmatprep.mubr.bf16.mxu0 0
        %1968 = vmatmul.mubr.bf16.gmra.mxu0 %v1816
        %v1969 = vpop.f32.mrf.mxu0
        %v1970 = vadd.f32 0.0, %v1969
        %v1971 = vpop.f32.mrf.mxu0
        %v1972 = vpop.f32.mrf.mxu0
        %v1973 = vadd.f32 0.0, %v1972
        %v1974 = vpop.f32.mrf.mxu0
        %1975 = vmatprep.mubr.bf16.mxu0 0
        %1976 = vmatmul.mubr.bf16.gmra.mxu0 %v1820
        %v1977 = vpop.f32.mrf.mxu0
        %v1978 = vadd.f32 0.0, %v1977
        %v1979 = vpop.f32.mrf.mxu0
        %v1980 = vpop.f32.mrf.mxu0
        %v1981 = vadd.f32 0.0, %v1980
        %v1982 = vpop.f32.mrf.mxu0
        %1983 = vmatprep.mubr.bf16.mxu0 0
        %1984 = vmatmul.mubr.bf16.gmra.mxu0 %v1824
        %v1985 = vpop.f32.mrf.mxu0
        %v1986 = vadd.f32 0.0, %v1985
        %v1987 = vpop.f32.mrf.mxu0
        %v1988 = vpop.f32.mrf.mxu0
        %v1989 = vadd.f32 0.0, %v1988
        %v1990 = vpop.f32.mrf.mxu0
        %1991 = vmatprep.mubr.bf16.mxu0 0
        %1992 = vmatmul.mubr.bf16.gmra.mxu0 %v1828
        %v1993 = vpop.f32.mrf.mxu0
        %v1994 = vadd.f32 0.0, %v1993
        %v1995 = vpop.f32.mrf.mxu0
        %v1996 = vpop.f32.mrf.mxu0
        %v1997 = vadd.f32 0.0, %v1996
        %v1998 = vpop.f32.mrf.mxu0
        %1999 = vmatprep.mubr.bf16.mxu0 0
        %2000 = vmatmul.mubr.bf16.gmra.mxu0 %v1832
        %v2001 = vpop.f32.mrf.mxu0
        %v2002 = vadd.f32 0.0, %v2001
        %v2003 = vpop.f32.mrf.mxu0
        %v2004 = vpop.f32.mrf.mxu0
        %v2005 = vadd.f32 0.0, %v2004
        %v2006 = vpop.f32.mrf.mxu0
        %2007 = vmatprep.mubr.bf16.mxu0 0
        %2008 = vmatmul.mubr.bf16.gmra.mxu0 %v1836
        %v2009 = vpop.f32.mrf.mxu0
        %v2010 = vadd.f32 0.0, %v2009
        %v2011 = vpop.f32.mrf.mxu0
        %v2012 = vpop.f32.mrf.mxu0
        %v2013 = vadd.f32 0.0, %v2012
        %v2014 = vpop.f32.mrf.mxu0
        %2015 = vmatprep.mubr.bf16.mxu0 0
        %2016 = vmatmul.mubr.bf16.gmra.mxu0 %v1840
        %v2017 = vpop.f32.mrf.mxu0
        %v2018 = vadd.f32 0.0, %v2017
        %v2019 = vpop.f32.mrf.mxu0
        %v2020 = vpop.f32.mrf.mxu0
        %v2021 = vadd.f32 0.0, %v2020
        %v2022 = vpop.f32.mrf.mxu0
        %2023 = vmatprep.mubr.bf16.mxu0 0
        %2024 = vmatmul.mubr.bf16.gmra.mxu0 %v1844
        %v2025 = vpop.f32.mrf.mxu0
        %v2026 = vadd.f32 0.0, %v2025
        %v2027 = vpop.f32.mrf.mxu0
        %v2028 = vpop.f32.mrf.mxu0
        %v2029 = vadd.f32 0.0, %v2028
        %v2030 = vpop.f32.mrf.mxu0
        %2031 = vmatprep.mubr.bf16.mxu0 0
        %2032 = vmatmul.mubr.bf16.gmra.mxu0 %v1850
        %v2033 = vpop.f32.mrf.mxu0
        %v2034 = vadd.f32 0.0, %v2033
        %v2035 = vpop.f32.mrf.mxu0
        %v2036 = vpop.f32.mrf.mxu0
        %v2037 = vadd.f32 0.0, %v2036
        %v2038 = vpop.f32.mrf.mxu0
        %2039 = vdwg.mxu0
        %v2040 = vadd.f32 %v1756, %v1946
        %v2041 = vadd.f32 %v1757, %v1949
        %v2042 = vadd.f32 %v1758, %v1954
        %v2043 = vadd.f32 %v1759, %v1957
        %v2044 = vadd.f32 %v1760, %v1962
        %v2045 = vadd.f32 %v1761, %v1965
        %v2046 = vadd.f32 %v1762, %v1970
        %v2047 = vadd.f32 %v1763, %v1973
        %v2048 = vadd.f32 %v1764, %v1978
        %v2049 = vadd.f32 %v1765, %v1981
        %v2050 = vadd.f32 %v1766, %v1986
        %v2051 = vadd.f32 %v1767, %v1989
        %v2052 = vadd.f32 %v1768, %v1994
        %v2053 = vadd.f32 %v1769, %v1997
        %v2054 = vadd.f32 %v1770, %v2002
        %v2055 = vadd.f32 %v1771, %v2005
        %v2056 = vadd.f32 %v1772, %v2010
        %v2057 = vadd.f32 %v1773, %v2013
        %v2058 = vadd.f32 %v1774, %v2018
        %v2059 = vadd.f32 %v1775, %v2021
        %v2060 = vadd.f32 %v1776, %v2026
        %v2061 = vadd.f32 %v1777, %v2029
        %v2062 = vadd.f32 %v1778, %v2034
        %v2063 = vadd.f32 %v1779, %v2037
        %s2064 = scalar_lea.vmem %s4, 256
        %v2065 = vld [vmem:[%s2064] sm:$0xf]
        %v2066 = vld [vmem:[%s2064 + $0x4] sm:$0xf]
        %v2067 = vld [vmem:[%s2064 + $0x8] sm:$0xf]
        %v2068 = vld [vmem:[%s2064 + $0xc] sm:$0xf]
        %v2069 = vld [vmem:[%s2064 + $0x10] sm:$0xf]
        %v2070 = vld [vmem:[%s2064 + $0x14] sm:$0xf]
        %v2071 = vld [vmem:[%s2064 + $0x18] sm:$0xf]
        %v2072 = vld [vmem:[%s2064 + $0x1c] sm:$0xf]
        %v2073 = vld [vmem:[%s2064 + $0x20] sm:$0xf]
        %v2074 = vld [vmem:[%s2064 + $0x24] sm:$0xf]
        %v2075 = vld [vmem:[%s2064 + $0x28] sm:$0xf]
        %v2076 = vld [vmem:[%s2064 + $0x2c] sm:$0xf]
        %v2077 = vld [vmem:[%s2064 + $0x30] sm:$0xf]
        %v2078 = vld [vmem:[%s2064 + $0x34] sm:$0xf]
        %v2079 = vld [vmem:[%s2064 + $0x38] sm:$0xf]
        %v2080 = vld [vmem:[%s2064 + $0x3c] sm:$0xf]
        %vm2081 = vcmask 1045504
        %v2082 = vrot.slane %v998, 2
        %v2083 = vrot.slane %v999, 2
        %v2084 = vsel %vm2081, %v2082, %v2083
        %v2085 = vrot.slane %v1000, 2
        %v2086 = vsel %vm2081, %v2083, %v2085
        %v2087 = vrot.slane %v1001, 2
        %v2088 = vsel %vm2081, %v2085, %v2087
        %v2089 = vrot.slane %v1002, 2
        %v2090 = vsel %vm2081, %v2087, %v2089
        %v2091 = vrot.slane %v1003, 2
        %v2092 = vsel %vm2081, %v2089, %v2091
        %v2093 = vrot.slane %v1004, 2
        %v2094 = vsel %vm2081, %v2091, %v2093
        %v2095 = vrot.slane %v1005, 2
        %v2096 = vsel %vm2081, %v2093, %v2095
        %v2097 = vrot.slane %v1006, 2
        %v2098 = vsel %vm2081, %v2095, %v2097
        %v2099 = vrot.slane %v1007, 2
        %v2100 = vsel %vm2081, %v2097, %v2099
        %v2101 = vrot.slane %v1008, 2
        %v2102 = vsel %vm2081, %v2099, %v2101
        %v2103 = vrot.slane %v1009, 2
        %v2104 = vsel %vm2081, %v2101, %v2103
        %v2105 = vrot.slane %v1026, 2
        %v2106 = vsel %vm2081, %v2103, %v2105
        %v2135 = vunpack.c.l.b16 %v2065
        %v2136 = vunpack.c.l.b16 %v2066
        %v2137 = vunpack.c.l.b16 %v2067
        %v2138 = vunpack.c.l.b16 %v2068
        %v2139 = vunpack.c.l.b16 %v2069
        %v2140 = vunpack.c.l.b16 %v2070
        %v2141 = vunpack.c.l.b16 %v2071
        %v2142 = vunpack.c.l.b16 %v2072
        %v2143 = vunpack.c.l.b16 %v2073
        %v2144 = vunpack.c.l.b16 %v2074
        %v2145 = vunpack.c.l.b16 %v2075
        %v2146 = vunpack.c.l.b16 %v2076
        %v2147 = vunpack.c.l.b16 %v2077
        %v2148 = vunpack.c.l.b16 %v2078
        %v2149 = vunpack.c.l.b16 %v2079
        %v2150 = vunpack.c.l.b16 %v2080
        %v2151 = vpack.c.b16 %v2136, %v2135
        %v2152 = vpack.c.b16 %v2138, %v2137
        %v2153 = vpack.c.b16 %v2140, %v2139
        %v2154 = vpack.c.b16 %v2142, %v2141
        %v2155 = vpack.c.b16 %v2144, %v2143
        %v2156 = vpack.c.b16 %v2146, %v2145
        %v2157 = vpack.c.b16 %v2148, %v2147
        %v2158 = vpack.c.b16 %v2150, %v2149
        %2167 = vmatprep.subr.bf16.mxu0 0
        %2168 = vmatpush1.bf16.msra.mxu0 %v2158
        %2169 = vmatprep.subr.bf16.mxu0 0
        %2170 = vmatpush1.bf16.msra.mxu0 %v2157
        %2171 = vmatprep.subr.bf16.mxu0 0
        %2172 = vmatpush1.bf16.msra.mxu0 %v2156
        %2173 = vmatprep.subr.bf16.mxu0 0
        %2174 = vmatpush1.bf16.msra.mxu0 %v2155
        %2175 = vmatprep.subr.bf16.mxu0 0
        %2176 = vmatpush1.bf16.msra.mxu0 %v2154
        %2177 = vmatprep.subr.bf16.mxu0 0
        %2178 = vmatpush1.bf16.msra.mxu0 %v2153
        %2179 = vmatprep.subr.bf16.mxu0 0
        %2180 = vmatpush1.bf16.msra.mxu0 %v2152
        %2181 = vmatprep.subr.bf16.mxu0 0
        %2182 = vmatpush1.bf16.msra.mxu0 %v2151
        %2183 = vmatprep.subr.bf16.mxu0 0
        %2184 = vmatpush2.bf16.msra.mxu0 0
        %2185 = vmatprep.subr.bf16.mxu0 0
        %2186 = vmatpush2.bf16.msra.mxu0 0
        %2187 = vmatprep.subr.bf16.mxu0 0
        %2188 = vmatpush2.bf16.msra.mxu0 0
        %2189 = vmatprep.subr.bf16.mxu0 0
        %2190 = vmatpush2.bf16.msra.mxu0 0
        %2191 = vmatprep.subr.bf16.mxu0 0
        %2192 = vmatpush2.bf16.msra.mxu0 0
        %2193 = vmatprep.subr.bf16.mxu0 0
        %2194 = vmatpush2.bf16.msra.mxu0 0
        %2195 = vmatprep.subr.bf16.mxu0 0
        %2196 = vmatpush2.bf16.msra.mxu0 0
        %2197 = vmatprep.subr.bf16.mxu0 0
        %2198 = vmatpush2.bf16.msra.mxu0 0
        %2199 = vmatprep.mubr.bf16.mxu0 0
        %2200 = vmatmul.mubr.bf16.gmra.mxu0 %v2084
        %v2201 = vpop.f32.mrf.mxu0
        %v2202 = vadd.f32 0.0, %v2201
        %v2203 = vpop.f32.mrf.mxu0
        %v2204 = vpop.f32.mrf.mxu0
        %v2205 = vadd.f32 0.0, %v2204
        %v2206 = vpop.f32.mrf.mxu0
        %2207 = vmatprep.mubr.bf16.mxu0 0
        %2208 = vmatmul.mubr.bf16.gmra.mxu0 %v2086
        %v2209 = vpop.f32.mrf.mxu0
        %v2210 = vadd.f32 0.0, %v2209
        %v2211 = vpop.f32.mrf.mxu0
        %v2212 = vpop.f32.mrf.mxu0
        %v2213 = vadd.f32 0.0, %v2212
        %v2214 = vpop.f32.mrf.mxu0
        %2215 = vmatprep.mubr.bf16.mxu0 0
        %2216 = vmatmul.mubr.bf16.gmra.mxu0 %v2088
        %v2217 = vpop.f32.mrf.mxu0
        %v2218 = vadd.f32 0.0, %v2217
        %v2219 = vpop.f32.mrf.mxu0
        %v2220 = vpop.f32.mrf.mxu0
        %v2221 = vadd.f32 0.0, %v2220
        %v2222 = vpop.f32.mrf.mxu0
        %2223 = vmatprep.mubr.bf16.mxu0 0
        %2224 = vmatmul.mubr.bf16.gmra.mxu0 %v2090
        %v2225 = vpop.f32.mrf.mxu0
        %v2226 = vadd.f32 0.0, %v2225
        %v2227 = vpop.f32.mrf.mxu0
        %v2228 = vpop.f32.mrf.mxu0
        %v2229 = vadd.f32 0.0, %v2228
        %v2230 = vpop.f32.mrf.mxu0
        %2231 = vmatprep.mubr.bf16.mxu0 0
        %2232 = vmatmul.mubr.bf16.gmra.mxu0 %v2092
        %v2233 = vpop.f32.mrf.mxu0
        %v2234 = vadd.f32 0.0, %v2233
        %v2235 = vpop.f32.mrf.mxu0
        %v2236 = vpop.f32.mrf.mxu0
        %v2237 = vadd.f32 0.0, %v2236
        %v2238 = vpop.f32.mrf.mxu0
        %2239 = vmatprep.mubr.bf16.mxu0 0
        %2240 = vmatmul.mubr.bf16.gmra.mxu0 %v2094
        %v2241 = vpop.f32.mrf.mxu0
        %v2242 = vadd.f32 0.0, %v2241
        %v2243 = vpop.f32.mrf.mxu0
        %v2244 = vpop.f32.mrf.mxu0
        %v2245 = vadd.f32 0.0, %v2244
        %v2246 = vpop.f32.mrf.mxu0
        %2247 = vmatprep.mubr.bf16.mxu0 0
        %2248 = vmatmul.mubr.bf16.gmra.mxu0 %v2096
        %v2249 = vpop.f32.mrf.mxu0
        %v2250 = vadd.f32 0.0, %v2249
        %v2251 = vpop.f32.mrf.mxu0
        %v2252 = vpop.f32.mrf.mxu0
        %v2253 = vadd.f32 0.0, %v2252
        %v2254 = vpop.f32.mrf.mxu0
        %2255 = vmatprep.mubr.bf16.mxu0 0
        %2256 = vmatmul.mubr.bf16.gmra.mxu0 %v2098
        %v2257 = vpop.f32.mrf.mxu0
        %v2258 = vadd.f32 0.0, %v2257
        %v2259 = vpop.f32.mrf.mxu0
        %v2260 = vpop.f32.mrf.mxu0
        %v2261 = vadd.f32 0.0, %v2260
        %v2262 = vpop.f32.mrf.mxu0
        %2263 = vmatprep.mubr.bf16.mxu0 0
        %2264 = vmatmul.mubr.bf16.gmra.mxu0 %v2100
        %v2265 = vpop.f32.mrf.mxu0
        %v2266 = vadd.f32 0.0, %v2265
        %v2267 = vpop.f32.mrf.mxu0
        %v2268 = vpop.f32.mrf.mxu0
        %v2269 = vadd.f32 0.0, %v2268
        %v2270 = vpop.f32.mrf.mxu0
        %2271 = vmatprep.mubr.bf16.mxu0 0
        %2272 = vmatmul.mubr.bf16.gmra.mxu0 %v2102
        %v2273 = vpop.f32.mrf.mxu0
        %v2274 = vadd.f32 0.0, %v2273
        %v2275 = vpop.f32.mrf.mxu0
        %v2276 = vpop.f32.mrf.mxu0
        %v2277 = vadd.f32 0.0, %v2276
        %v2278 = vpop.f32.mrf.mxu0
        %2279 = vmatprep.mubr.bf16.mxu0 0
        %2280 = vmatmul.mubr.bf16.gmra.mxu0 %v2104
        %v2281 = vpop.f32.mrf.mxu0
        %v2282 = vadd.f32 0.0, %v2281
        %v2283 = vpop.f32.mrf.mxu0
        %v2284 = vpop.f32.mrf.mxu0
        %v2285 = vadd.f32 0.0, %v2284
        %v2286 = vpop.f32.mrf.mxu0
        %2287 = vmatprep.mubr.bf16.mxu0 0
        %2288 = vmatmul.mubr.bf16.gmra.mxu0 %v2106
        %v2289 = vpop.f32.mrf.mxu0
        %v2290 = vadd.f32 0.0, %v2289
        %v2291 = vpop.f32.mrf.mxu0
        %v2292 = vpop.f32.mrf.mxu0
        %v2293 = vadd.f32 0.0, %v2292
        %v2294 = vpop.f32.mrf.mxu0
        %2295 = vdwg.mxu0
        %v2296 = vadd.f32 %v2040, %v2202
        %v2297 = vadd.f32 %v2041, %v2205
        %v2298 = vadd.f32 %v2042, %v2210
        %v2299 = vadd.f32 %v2043, %v2213
        %v2300 = vadd.f32 %v2044, %v2218
        %v2301 = vadd.f32 %v2045, %v2221
        %v2302 = vadd.f32 %v2046, %v2226
        %v2303 = vadd.f32 %v2047, %v2229
        %v2304 = vadd.f32 %v2048, %v2234
        %v2305 = vadd.f32 %v2049, %v2237
        %v2306 = vadd.f32 %v2050, %v2242
        %v2307 = vadd.f32 %v2051, %v2245
        %v2308 = vadd.f32 %v2052, %v2250
        %v2309 = vadd.f32 %v2053, %v2253
        %v2310 = vadd.f32 %v2054, %v2258
        %v2311 = vadd.f32 %v2055, %v2261
        %v2312 = vadd.f32 %v2056, %v2266
        %v2313 = vadd.f32 %v2057, %v2269
        %v2314 = vadd.f32 %v2058, %v2274
        %v2315 = vadd.f32 %v2059, %v2277
        %v2316 = vadd.f32 %v2060, %v2282
        %v2317 = vadd.f32 %v2061, %v2285
        %v2318 = vadd.f32 %v2062, %v2290
        %v2319 = vadd.f32 %v2063, %v2293
        %s2320 = scalar_lea.vmem %s4, 320
        %v2321 = vld [vmem:[%s2320] sm:$0xf]
        %v2322 = vld [vmem:[%s2320 + $0x4] sm:$0xf]
        %v2323 = vld [vmem:[%s2320 + $0x8] sm:$0xf]
        %v2324 = vld [vmem:[%s2320 + $0xc] sm:$0xf]
        %v2325 = vld [vmem:[%s2320 + $0x10] sm:$0xf]
        %v2326 = vld [vmem:[%s2320 + $0x14] sm:$0xf]
        %v2327 = vld [vmem:[%s2320 + $0x18] sm:$0xf]
        %v2328 = vld [vmem:[%s2320 + $0x1c] sm:$0xf]
        %v2329 = vld [vmem:[%s2320 + $0x20] sm:$0xf]
        %v2330 = vld [vmem:[%s2320 + $0x24] sm:$0xf]
        %v2331 = vld [vmem:[%s2320 + $0x28] sm:$0xf]
        %v2332 = vld [vmem:[%s2320 + $0x2c] sm:$0xf]
        %v2333 = vld [vmem:[%s2320 + $0x30] sm:$0xf]
        %v2334 = vld [vmem:[%s2320 + $0x34] sm:$0xf]
        %v2335 = vld [vmem:[%s2320 + $0x38] sm:$0xf]
        %v2336 = vld [vmem:[%s2320 + $0x3c] sm:$0xf]
        %vm2337 = vsmask.f32 5376
        %v2338 = vrot.slane %v1046, 2
        %v2339 = vrot.slane %v1048, 3
        %v2340 = vor.u32 %v2338, %v2339
        %v2341 = vrot.slane %v1057, 2
        %v2342 = vrot.slane %v1053, 3
        %v2343 = vor.u32 %v2341, %v2342
        %v2344 = vsel %vm2337, %v2340, %v2343
        %v2345 = vrot.slane %v1065, 2
        %v2346 = vrot.slane %v1061, 3
        %v2347 = vor.u32 %v2345, %v2346
        %v2348 = vsel %vm2337, %v2343, %v2347
        %v2349 = vrot.slane %v1073, 2
        %v2350 = vrot.slane %v1069, 3
        %v2351 = vor.u32 %v2349, %v2350
        %v2352 = vsel %vm2337, %v2347, %v2351
        %v2353 = vrot.slane %v1081, 2
        %v2354 = vrot.slane %v1077, 3
        %v2355 = vor.u32 %v2353, %v2354
        %v2356 = vsel %vm2337, %v2351, %v2355
        %v2357 = vrot.slane %v1089, 2
        %v2358 = vrot.slane %v1085, 3
        %v2359 = vor.u32 %v2357, %v2358
        %v2360 = vsel %vm2337, %v2355, %v2359
        %v2361 = vrot.slane %v1097, 2
        %v2362 = vrot.slane %v1093, 3
        %v2363 = vor.u32 %v2361, %v2362
        %v2364 = vsel %vm2337, %v2359, %v2363
        %v2365 = vrot.slane %v1105, 2
        %v2366 = vrot.slane %v1101, 3
        %v2367 = vor.u32 %v2365, %v2366
        %v2368 = vsel %vm2337, %v2363, %v2367
        %v2369 = vrot.slane %v1113, 2
        %v2370 = vrot.slane %v1109, 3
        %v2371 = vor.u32 %v2369, %v2370
        %v2372 = vsel %vm2337, %v2367, %v2371
        %v2373 = vrot.slane %v1121, 2
        %v2374 = vrot.slane %v1117, 3
        %v2375 = vor.u32 %v2373, %v2374
        %v2376 = vsel %vm2337, %v2371, %v2375
        %v2377 = vrot.slane %v1129, 2
        %v2378 = vrot.slane %v1125, 3
        %v2379 = vor.u32 %v2377, %v2378
        %v2380 = vsel %vm2337, %v2375, %v2379
        %v2381 = vrot.slane %v1137, 2
        %v2382 = vrot.slane %v1133, 3
        %v2383 = vor.u32 %v2381, %v2382
        %v2384 = vsel %vm2337, %v2379, %v2383
        %v2385 = vrot.slane %v1845, 2
        %v2386 = vrot.slane %v1141, 3
        %v2387 = vor.u32 %v2385, %v2386
        %v2388 = vsel %vm2337, %v2383, %v2387
        %v2417 = vunpack.c.l.b16 %v2321
        %v2418 = vunpack.c.l.b16 %v2322
        %v2419 = vunpack.c.l.b16 %v2323
        %v2420 = vunpack.c.l.b16 %v2324
        %v2421 = vunpack.c.l.b16 %v2325
        %v2422 = vunpack.c.l.b16 %v2326
        %v2423 = vunpack.c.l.b16 %v2327
        %v2424 = vunpack.c.l.b16 %v2328
        %v2425 = vunpack.c.l.b16 %v2329
        %v2426 = vunpack.c.l.b16 %v2330
        %v2427 = vunpack.c.l.b16 %v2331
        %v2428 = vunpack.c.l.b16 %v2332
        %v2429 = vunpack.c.l.b16 %v2333
        %v2430 = vunpack.c.l.b16 %v2334
        %v2431 = vunpack.c.l.b16 %v2335
        %v2432 = vunpack.c.l.b16 %v2336
        %v2433 = vpack.c.b16 %v2418, %v2417
        %v2434 = vpack.c.b16 %v2420, %v2419
        %v2435 = vpack.c.b16 %v2422, %v2421
        %v2436 = vpack.c.b16 %v2424, %v2423
        %v2437 = vpack.c.b16 %v2426, %v2425
        %v2438 = vpack.c.b16 %v2428, %v2427
        %v2439 = vpack.c.b16 %v2430, %v2429
        %v2440 = vpack.c.b16 %v2432, %v2431
        %2449 = vmatprep.subr.bf16.mxu0 0
        %2450 = vmatpush1.bf16.msra.mxu0 %v2440
        %2451 = vmatprep.subr.bf16.mxu0 0
        %2452 = vmatpush1.bf16.msra.mxu0 %v2439
        %2453 = vmatprep.subr.bf16.mxu0 0
        %2454 = vmatpush1.bf16.msra.mxu0 %v2438
        %2455 = vmatprep.subr.bf16.mxu0 0
        %2456 = vmatpush1.bf16.msra.mxu0 %v2437
        %2457 = vmatprep.subr.bf16.mxu0 0
        %2458 = vmatpush1.bf16.msra.mxu0 %v2436
        %2459 = vmatprep.subr.bf16.mxu0 0
        %2460 = vmatpush1.bf16.msra.mxu0 %v2435
        %2461 = vmatprep.subr.bf16.mxu0 0
        %2462 = vmatpush1.bf16.msra.mxu0 %v2434
        %2463 = vmatprep.subr.bf16.mxu0 0
        %2464 = vmatpush1.bf16.msra.mxu0 %v2433
        %2465 = vmatprep.subr.bf16.mxu0 0
        %2466 = vmatpush2.bf16.msra.mxu0 0
        %2467 = vmatprep.subr.bf16.mxu0 0
        %2468 = vmatpush2.bf16.msra.mxu0 0
        %2469 = vmatprep.subr.bf16.mxu0 0
        %2470 = vmatpush2.bf16.msra.mxu0 0
        %2471 = vmatprep.subr.bf16.mxu0 0
        %2472 = vmatpush2.bf16.msra.mxu0 0
        %2473 = vmatprep.subr.bf16.mxu0 0
        %2474 = vmatpush2.bf16.msra.mxu0 0
        %2475 = vmatprep.subr.bf16.mxu0 0
        %2476 = vmatpush2.bf16.msra.mxu0 0
        %2477 = vmatprep.subr.bf16.mxu0 0
        %2478 = vmatpush2.bf16.msra.mxu0 0
        %2479 = vmatprep.subr.bf16.mxu0 0
        %2480 = vmatpush2.bf16.msra.mxu0 0
        %2481 = vmatprep.mubr.bf16.mxu0 0
        %2482 = vmatmul.mubr.bf16.gmra.mxu0 %v2344
        %v2483 = vpop.f32.mrf.mxu0
        %v2484 = vadd.f32 0.0, %v2483
        %v2485 = vpop.f32.mrf.mxu0
        %v2486 = vpop.f32.mrf.mxu0
        %v2487 = vadd.f32 0.0, %v2486
        %v2488 = vpop.f32.mrf.mxu0
        %2489 = vmatprep.mubr.bf16.mxu0 0
        %2490 = vmatmul.mubr.bf16.gmra.mxu0 %v2348
        %v2491 = vpop.f32.mrf.mxu0
        %v2492 = vadd.f32 0.0, %v2491
        %v2493 = vpop.f32.mrf.mxu0
        %v2494 = vpop.f32.mrf.mxu0
        %v2495 = vadd.f32 0.0, %v2494
        %v2496 = vpop.f32.mrf.mxu0
        %2497 = vmatprep.mubr.bf16.mxu0 0
        %2498 = vmatmul.mubr.bf16.gmra.mxu0 %v2352
        %v2499 = vpop.f32.mrf.mxu0
        %v2500 = vadd.f32 0.0, %v2499
        %v2501 = vpop.f32.mrf.mxu0
        %v2502 = vpop.f32.mrf.mxu0
        %v2503 = vadd.f32 0.0, %v2502
        %v2504 = vpop.f32.mrf.mxu0
        %2505 = vmatprep.mubr.bf16.mxu0 0
        %2506 = vmatmul.mubr.bf16.gmra.mxu0 %v2356
        %v2507 = vpop.f32.mrf.mxu0
        %v2508 = vadd.f32 0.0, %v2507
        %v2509 = vpop.f32.mrf.mxu0
        %v2510 = vpop.f32.mrf.mxu0
        %v2511 = vadd.f32 0.0, %v2510
        %v2512 = vpop.f32.mrf.mxu0
        %2513 = vmatprep.mubr.bf16.mxu0 0
        %2514 = vmatmul.mubr.bf16.gmra.mxu0 %v2360
        %v2515 = vpop.f32.mrf.mxu0
        %v2516 = vadd.f32 0.0, %v2515
        %v2517 = vpop.f32.mrf.mxu0
        %v2518 = vpop.f32.mrf.mxu0
        %v2519 = vadd.f32 0.0, %v2518
        %v2520 = vpop.f32.mrf.mxu0
        %2521 = vmatprep.mubr.bf16.mxu0 0
        %2522 = vmatmul.mubr.bf16.gmra.mxu0 %v2364
        %v2523 = vpop.f32.mrf.mxu0
        %v2524 = vadd.f32 0.0, %v2523
        %v2525 = vpop.f32.mrf.mxu0
        %v2526 = vpop.f32.mrf.mxu0
        %v2527 = vadd.f32 0.0, %v2526
        %v2528 = vpop.f32.mrf.mxu0
        %2529 = vmatprep.mubr.bf16.mxu0 0
        %2530 = vmatmul.mubr.bf16.gmra.mxu0 %v2368
        %v2531 = vpop.f32.mrf.mxu0
        %v2532 = vadd.f32 0.0, %v2531
        %v2533 = vpop.f32.mrf.mxu0
        %v2534 = vpop.f32.mrf.mxu0
        %v2535 = vadd.f32 0.0, %v2534
        %v2536 = vpop.f32.mrf.mxu0
        %2537 = vmatprep.mubr.bf16.mxu0 0
        %2538 = vmatmul.mubr.bf16.gmra.mxu0 %v2372
        %v2539 = vpop.f32.mrf.mxu0
        %v2540 = vadd.f32 0.0, %v2539
        %v2541 = vpop.f32.mrf.mxu0
        %v2542 = vpop.f32.mrf.mxu0
        %v2543 = vadd.f32 0.0, %v2542
        %v2544 = vpop.f32.mrf.mxu0
        %2545 = vmatprep.mubr.bf16.mxu0 0
        %2546 = vmatmul.mubr.bf16.gmra.mxu0 %v2376
        %v2547 = vpop.f32.mrf.mxu0
        %v2548 = vadd.f32 0.0, %v2547
        %v2549 = vpop.f32.mrf.mxu0
        %v2550 = vpop.f32.mrf.mxu0
        %v2551 = vadd.f32 0.0, %v2550
        %v2552 = vpop.f32.mrf.mxu0
        %2553 = vmatprep.mubr.bf16.mxu0 0
        %2554 = vmatmul.mubr.bf16.gmra.mxu0 %v2380
        %v2555 = vpop.f32.mrf.mxu0
        %v2556 = vadd.f32 0.0, %v2555
        %v2557 = vpop.f32.mrf.mxu0
        %v2558 = vpop.f32.mrf.mxu0
        %v2559 = vadd.f32 0.0, %v2558
        %v2560 = vpop.f32.mrf.mxu0
        %2561 = vmatprep.mubr.bf16.mxu0 0
        %2562 = vmatmul.mubr.bf16.gmra.mxu0 %v2384
        %v2563 = vpop.f32.mrf.mxu0
        %v2564 = vadd.f32 0.0, %v2563
        %v2565 = vpop.f32.mrf.mxu0
        %v2566 = vpop.f32.mrf.mxu0
        %v2567 = vadd.f32 0.0, %v2566
        %v2568 = vpop.f32.mrf.mxu0
        %2569 = vmatprep.mubr.bf16.mxu0 0
        %2570 = vmatmul.mubr.bf16.gmra.mxu0 %v2388
        %v2571 = vpop.f32.mrf.mxu0
        %v2572 = vadd.f32 0.0, %v2571
        %v2573 = vpop.f32.mrf.mxu0
        %v2574 = vpop.f32.mrf.mxu0
        %v2575 = vadd.f32 0.0, %v2574
        %v2576 = vpop.f32.mrf.mxu0
        %2577 = vdwg.mxu0
        %v2578 = vadd.f32 %v2296, %v2484
        %v2579 = vadd.f32 %v2297, %v2487
        %v2580 = vadd.f32 %v2298, %v2492
        %v2581 = vadd.f32 %v2299, %v2495
        %v2582 = vadd.f32 %v2300, %v2500
        %v2583 = vadd.f32 %v2301, %v2503
        %v2584 = vadd.f32 %v2302, %v2508
        %v2585 = vadd.f32 %v2303, %v2511
        %v2586 = vadd.f32 %v2304, %v2516
        %v2587 = vadd.f32 %v2305, %v2519
        %v2588 = vadd.f32 %v2306, %v2524
        %v2589 = vadd.f32 %v2307, %v2527
        %v2590 = vadd.f32 %v2308, %v2532
        %v2591 = vadd.f32 %v2309, %v2535
        %v2592 = vadd.f32 %v2310, %v2540
        %v2593 = vadd.f32 %v2311, %v2543
        %v2594 = vadd.f32 %v2312, %v2548
        %v2595 = vadd.f32 %v2313, %v2551
        %v2596 = vadd.f32 %v2314, %v2556
        %v2597 = vadd.f32 %v2315, %v2559
        %v2598 = vadd.f32 %v2316, %v2564
        %v2599 = vadd.f32 %v2317, %v2567
        %v2600 = vadd.f32 %v2318, %v2572
        %v2601 = vadd.f32 %v2319, %v2575
        %s2602 = scalar_lea.vmem %s4, 384
        %v2603 = vld [vmem:[%s2602] sm:$0xf]
        %v2604 = vld [vmem:[%s2602 + $0x4] sm:$0xf]
        %v2605 = vld [vmem:[%s2602 + $0x8] sm:$0xf]
        %v2606 = vld [vmem:[%s2602 + $0xc] sm:$0xf]
        %v2607 = vld [vmem:[%s2602 + $0x10] sm:$0xf]
        %v2608 = vld [vmem:[%s2602 + $0x14] sm:$0xf]
        %v2609 = vld [vmem:[%s2602 + $0x18] sm:$0xf]
        %v2610 = vld [vmem:[%s2602 + $0x1c] sm:$0xf]
        %v2611 = vld [vmem:[%s2602 + $0x20] sm:$0xf]
        %v2612 = vld [vmem:[%s2602 + $0x24] sm:$0xf]
        %v2613 = vld [vmem:[%s2602 + $0x28] sm:$0xf]
        %v2614 = vld [vmem:[%s2602 + $0x2c] sm:$0xf]
        %v2615 = vld [vmem:[%s2602 + $0x30] sm:$0xf]
        %v2616 = vld [vmem:[%s2602 + $0x34] sm:$0xf]
        %v2617 = vld [vmem:[%s2602 + $0x38] sm:$0xf]
        %v2618 = vld [vmem:[%s2602 + $0x3c] sm:$0xf]
        %vm2619 = vcmask 1044480
        %v2620 = vrot.slane %v998, 3
        %v2621 = vrot.slane %v999, 3
        %v2622 = vsel %vm2619, %v2620, %v2621
        %v2623 = vrot.slane %v1000, 3
        %v2624 = vsel %vm2619, %v2621, %v2623
        %v2625 = vrot.slane %v1001, 3
        %v2626 = vsel %vm2619, %v2623, %v2625
        %v2627 = vrot.slane %v1002, 3
        %v2628 = vsel %vm2619, %v2625, %v2627
        %v2629 = vrot.slane %v1003, 3
        %v2630 = vsel %vm2619, %v2627, %v2629
        %v2631 = vrot.slane %v1004, 3
        %v2632 = vsel %vm2619, %v2629, %v2631
        %v2633 = vrot.slane %v1005, 3
        %v2634 = vsel %vm2619, %v2631, %v2633
        %v2635 = vrot.slane %v1006, 3
        %v2636 = vsel %vm2619, %v2633, %v2635
        %v2637 = vrot.slane %v1007, 3
        %v2638 = vsel %vm2619, %v2635, %v2637
        %v2639 = vrot.slane %v1008, 3
        %v2640 = vsel %vm2619, %v2637, %v2639
        %v2641 = vrot.slane %v1009, 3
        %v2642 = vsel %vm2619, %v2639, %v2641
        %v2643 = vrot.slane %v1026, 3
        %v2644 = vsel %vm2619, %v2641, %v2643
        %v2673 = vunpack.c.l.b16 %v2603
        %v2674 = vunpack.c.l.b16 %v2604
        %v2675 = vunpack.c.l.b16 %v2605
        %v2676 = vunpack.c.l.b16 %v2606
        %v2677 = vunpack.c.l.b16 %v2607
        %v2678 = vunpack.c.l.b16 %v2608
        %v2679 = vunpack.c.l.b16 %v2609
        %v2680 = vunpack.c.l.b16 %v2610
        %v2681 = vunpack.c.l.b16 %v2611
        %v2682 = vunpack.c.l.b16 %v2612
        %v2683 = vunpack.c.l.b16 %v2613
        %v2684 = vunpack.c.l.b16 %v2614
        %v2685 = vunpack.c.l.b16 %v2615
        %v2686 = vunpack.c.l.b16 %v2616
        %v2687 = vunpack.c.l.b16 %v2617
        %v2688 = vunpack.c.l.b16 %v2618
        %v2689 = vpack.c.b16 %v2674, %v2673
        %v2690 = vpack.c.b16 %v2676, %v2675
        %v2691 = vpack.c.b16 %v2678, %v2677
        %v2692 = vpack.c.b16 %v2680, %v2679
        %v2693 = vpack.c.b16 %v2682, %v2681
        %v2694 = vpack.c.b16 %v2684, %v2683
        %v2695 = vpack.c.b16 %v2686, %v2685
        %v2696 = vpack.c.b16 %v2688, %v2687
        %2705 = vmatprep.subr.bf16.mxu0 0
        %2706 = vmatpush1.bf16.msra.mxu0 %v2696
        %2707 = vmatprep.subr.bf16.mxu0 0
        %2708 = vmatpush1.bf16.msra.mxu0 %v2695
        %2709 = vmatprep.subr.bf16.mxu0 0
        %2710 = vmatpush1.bf16.msra.mxu0 %v2694
        %2711 = vmatprep.subr.bf16.mxu0 0
        %2712 = vmatpush1.bf16.msra.mxu0 %v2693
        %2713 = vmatprep.subr.bf16.mxu0 0
        %2714 = vmatpush1.bf16.msra.mxu0 %v2692
        %2715 = vmatprep.subr.bf16.mxu0 0
        %2716 = vmatpush1.bf16.msra.mxu0 %v2691
        %2717 = vmatprep.subr.bf16.mxu0 0
        %2718 = vmatpush1.bf16.msra.mxu0 %v2690
        %2719 = vmatprep.subr.bf16.mxu0 0
        %2720 = vmatpush1.bf16.msra.mxu0 %v2689
        %2721 = vmatprep.subr.bf16.mxu0 0
        %2722 = vmatpush2.bf16.msra.mxu0 0
        %2723 = vmatprep.subr.bf16.mxu0 0
        %2724 = vmatpush2.bf16.msra.mxu0 0
        %2725 = vmatprep.subr.bf16.mxu0 0
        %2726 = vmatpush2.bf16.msra.mxu0 0
        %2727 = vmatprep.subr.bf16.mxu0 0
        %2728 = vmatpush2.bf16.msra.mxu0 0
        %2729 = vmatprep.subr.bf16.mxu0 0
        %2730 = vmatpush2.bf16.msra.mxu0 0
        %2731 = vmatprep.subr.bf16.mxu0 0
        %2732 = vmatpush2.bf16.msra.mxu0 0
        %2733 = vmatprep.subr.bf16.mxu0 0
        %2734 = vmatpush2.bf16.msra.mxu0 0
        %2735 = vmatprep.subr.bf16.mxu0 0
        %2736 = vmatpush2.bf16.msra.mxu0 0
        %2737 = vmatprep.mubr.bf16.mxu0 0
        %2738 = vmatmul.mubr.bf16.gmra.mxu0 %v2622
        %v2739 = vpop.f32.mrf.mxu0
        %v2740 = vadd.f32 0.0, %v2739
        %v2741 = vpop.f32.mrf.mxu0
        %v2742 = vpop.f32.mrf.mxu0
        %v2743 = vadd.f32 0.0, %v2742
        %v2744 = vpop.f32.mrf.mxu0
        %2745 = vmatprep.mubr.bf16.mxu0 0
        %2746 = vmatmul.mubr.bf16.gmra.mxu0 %v2624
        %v2747 = vpop.f32.mrf.mxu0
        %v2748 = vadd.f32 0.0, %v2747
        %v2749 = vpop.f32.mrf.mxu0
        %v2750 = vpop.f32.mrf.mxu0
        %v2751 = vadd.f32 0.0, %v2750
        %v2752 = vpop.f32.mrf.mxu0
        %2753 = vmatprep.mubr.bf16.mxu0 0
        %2754 = vmatmul.mubr.bf16.gmra.mxu0 %v2626
        %v2755 = vpop.f32.mrf.mxu0
        %v2756 = vadd.f32 0.0, %v2755
        %v2757 = vpop.f32.mrf.mxu0
        %v2758 = vpop.f32.mrf.mxu0
        %v2759 = vadd.f32 0.0, %v2758
        %v2760 = vpop.f32.mrf.mxu0
        %2761 = vmatprep.mubr.bf16.mxu0 0
        %2762 = vmatmul.mubr.bf16.gmra.mxu0 %v2628
        %v2763 = vpop.f32.mrf.mxu0
        %v2764 = vadd.f32 0.0, %v2763
        %v2765 = vpop.f32.mrf.mxu0
        %v2766 = vpop.f32.mrf.mxu0
        %v2767 = vadd.f32 0.0, %v2766
        %v2768 = vpop.f32.mrf.mxu0
        %2769 = vmatprep.mubr.bf16.mxu0 0
        %2770 = vmatmul.mubr.bf16.gmra.mxu0 %v2630
        %v2771 = vpop.f32.mrf.mxu0
        %v2772 = vadd.f32 0.0, %v2771
        %v2773 = vpop.f32.mrf.mxu0
        %v2774 = vpop.f32.mrf.mxu0
        %v2775 = vadd.f32 0.0, %v2774
        %v2776 = vpop.f32.mrf.mxu0
        %2777 = vmatprep.mubr.bf16.mxu0 0
        %2778 = vmatmul.mubr.bf16.gmra.mxu0 %v2632
        %v2779 = vpop.f32.mrf.mxu0
        %v2780 = vadd.f32 0.0, %v2779
        %v2781 = vpop.f32.mrf.mxu0
        %v2782 = vpop.f32.mrf.mxu0
        %v2783 = vadd.f32 0.0, %v2782
        %v2784 = vpop.f32.mrf.mxu0
        %2785 = vmatprep.mubr.bf16.mxu0 0
        %2786 = vmatmul.mubr.bf16.gmra.mxu0 %v2634
        %v2787 = vpop.f32.mrf.mxu0
        %v2788 = vadd.f32 0.0, %v2787
        %v2789 = vpop.f32.mrf.mxu0
        %v2790 = vpop.f32.mrf.mxu0
        %v2791 = vadd.f32 0.0, %v2790
        %v2792 = vpop.f32.mrf.mxu0
        %2793 = vmatprep.mubr.bf16.mxu0 0
        %2794 = vmatmul.mubr.bf16.gmra.mxu0 %v2636
        %v2795 = vpop.f32.mrf.mxu0
        %v2796 = vadd.f32 0.0, %v2795
        %v2797 = vpop.f32.mrf.mxu0
        %v2798 = vpop.f32.mrf.mxu0
        %v2799 = vadd.f32 0.0, %v2798
        %v2800 = vpop.f32.mrf.mxu0
        %2801 = vmatprep.mubr.bf16.mxu0 0
        %2802 = vmatmul.mubr.bf16.gmra.mxu0 %v2638
        %v2803 = vpop.f32.mrf.mxu0
        %v2804 = vadd.f32 0.0, %v2803
        %v2805 = vpop.f32.mrf.mxu0
        %v2806 = vpop.f32.mrf.mxu0
        %v2807 = vadd.f32 0.0, %v2806
        %v2808 = vpop.f32.mrf.mxu0
        %2809 = vmatprep.mubr.bf16.mxu0 0
        %2810 = vmatmul.mubr.bf16.gmra.mxu0 %v2640
        %v2811 = vpop.f32.mrf.mxu0
        %v2812 = vadd.f32 0.0, %v2811
        %v2813 = vpop.f32.mrf.mxu0
        %v2814 = vpop.f32.mrf.mxu0
        %v2815 = vadd.f32 0.0, %v2814
        %v2816 = vpop.f32.mrf.mxu0
        %2817 = vmatprep.mubr.bf16.mxu0 0
        %2818 = vmatmul.mubr.bf16.gmra.mxu0 %v2642
        %v2819 = vpop.f32.mrf.mxu0
        %v2820 = vadd.f32 0.0, %v2819
        %v2821 = vpop.f32.mrf.mxu0
        %v2822 = vpop.f32.mrf.mxu0
        %v2823 = vadd.f32 0.0, %v2822
        %v2824 = vpop.f32.mrf.mxu0
        %2825 = vmatprep.mubr.bf16.mxu0 0
        %2826 = vmatmul.mubr.bf16.gmra.mxu0 %v2644
        %v2827 = vpop.f32.mrf.mxu0
        %v2828 = vadd.f32 0.0, %v2827
        %v2829 = vpop.f32.mrf.mxu0
        %v2830 = vpop.f32.mrf.mxu0
        %v2831 = vadd.f32 0.0, %v2830
        %v2832 = vpop.f32.mrf.mxu0
        %2833 = vdwg.mxu0
        %v2834 = vadd.f32 %v2578, %v2740
        %v2835 = vadd.f32 %v2579, %v2743
        %v2836 = vadd.f32 %v2580, %v2748
        %v2837 = vadd.f32 %v2581, %v2751
        %v2838 = vadd.f32 %v2582, %v2756
        %v2839 = vadd.f32 %v2583, %v2759
        %v2840 = vadd.f32 %v2584, %v2764
        %v2841 = vadd.f32 %v2585, %v2767
        %v2842 = vadd.f32 %v2586, %v2772
        %v2843 = vadd.f32 %v2587, %v2775
        %v2844 = vadd.f32 %v2588, %v2780
        %v2845 = vadd.f32 %v2589, %v2783
        %v2846 = vadd.f32 %v2590, %v2788
        %v2847 = vadd.f32 %v2591, %v2791
        %v2848 = vadd.f32 %v2592, %v2796
        %v2849 = vadd.f32 %v2593, %v2799
        %v2850 = vadd.f32 %v2594, %v2804
        %v2851 = vadd.f32 %v2595, %v2807
        %v2852 = vadd.f32 %v2596, %v2812
        %v2853 = vadd.f32 %v2597, %v2815
        %v2854 = vadd.f32 %v2598, %v2820
        %v2855 = vadd.f32 %v2599, %v2823
        %v2856 = vadd.f32 %v2600, %v2828
        %v2857 = vadd.f32 %v2601, %v2831
        %v2858 = vld [vmem:[%s5] sm:$0x1]
        %v2860 = vlaneseq
        %v2861 = vshrl.u32 %v2860, 7
        %v2862 = vsub.s32 0, %v2861
        %v2863 = vrot.slane %v2858, %v2862
        %v2865 = vmul.f32 %v2834, %v2863
        %v2866 = vmul.f32 %v2835, %v2863
        %v2867 = vmul.f32 %v2836, %v2863
        %v2868 = vmul.f32 %v2837, %v2863
        %v2869 = vmul.f32 %v2838, %v2863
        %v2870 = vmul.f32 %v2839, %v2863
        %v2871 = vmul.f32 %v2840, %v2863
        %v2872 = vmul.f32 %v2841, %v2863
        %v2873 = vmul.f32 %v2842, %v2863
        %v2874 = vmul.f32 %v2843, %v2863
        %v2875 = vmul.f32 %v2844, %v2863
        %v2876 = vmul.f32 %v2845, %v2863
        %v2877 = vmul.f32 %v2846, %v2863
        %v2878 = vmul.f32 %v2847, %v2863
        %v2879 = vmul.f32 %v2848, %v2863
        %v2880 = vmul.f32 %v2849, %v2863
        %v2881 = vmul.f32 %v2850, %v2863
        %v2882 = vmul.f32 %v2851, %v2863
        %v2883 = vmul.f32 %v2852, %v2863
        %v2884 = vmul.f32 %v2853, %v2863
        %v2885 = vmul.f32 %v2854, %v2863
        %v2886 = vmul.f32 %v2855, %v2863
        %v2887 = vmul.f32 %v2856, %v2863
        %v2888 = vmul.f32 %v2857, %v2863
        %v2889 = vld [vmem:[%s6] sm:$0x1]
        %v2891 = vlaneseq
        %v2892 = vshrl.u32 %v2891, 7
        %v2893 = vsub.s32 0, %v2892
        %v2894 = vrot.slane %v2889, %v2893
        %v2896 = vadd.f32 %v2865, %v2894
        %v2897 = vadd.f32 %v2866, %v2894
        %v2898 = vadd.f32 %v2867, %v2894
        %v2899 = vadd.f32 %v2868, %v2894
        %v2900 = vadd.f32 %v2869, %v2894
        %v2901 = vadd.f32 %v2870, %v2894
        %v2902 = vadd.f32 %v2871, %v2894
        %v2903 = vadd.f32 %v2872, %v2894
        %v2904 = vadd.f32 %v2873, %v2894
        %v2905 = vadd.f32 %v2874, %v2894
        %v2906 = vadd.f32 %v2875, %v2894
        %v2907 = vadd.f32 %v2876, %v2894
        %v2908 = vadd.f32 %v2877, %v2894
        %v2909 = vadd.f32 %v2878, %v2894
        %v2910 = vadd.f32 %v2879, %v2894
        %v2911 = vadd.f32 %v2880, %v2894
        %v2912 = vadd.f32 %v2881, %v2894
        %v2913 = vadd.f32 %v2882, %v2894
        %v2914 = vadd.f32 %v2883, %v2894
        %v2915 = vadd.f32 %v2884, %v2894
        %v2916 = vadd.f32 %v2885, %v2894
        %v2917 = vadd.f32 %v2886, %v2894
        %v2918 = vadd.f32 %v2887, %v2894
        %v2919 = vadd.f32 %v2888, %v2894
        %v2920 = vmax.f32 %v2896, 0.0
        %v2921 = vmax.f32 %v2897, 0.0
        %v2922 = vmax.f32 %v2898, 0.0
        %v2923 = vmax.f32 %v2899, 0.0
        %v2924 = vmax.f32 %v2900, 0.0
        %v2925 = vmax.f32 %v2901, 0.0
        %v2926 = vmax.f32 %v2902, 0.0
        %v2927 = vmax.f32 %v2903, 0.0
        %v2928 = vmax.f32 %v2904, 0.0
        %v2929 = vmax.f32 %v2905, 0.0
        %v2930 = vmax.f32 %v2906, 0.0
        %v2931 = vmax.f32 %v2907, 0.0
        %v2932 = vmax.f32 %v2908, 0.0
        %v2933 = vmax.f32 %v2909, 0.0
        %v2934 = vmax.f32 %v2910, 0.0
        %v2935 = vmax.f32 %v2911, 0.0
        %v2936 = vmax.f32 %v2912, 0.0
        %v2937 = vmax.f32 %v2913, 0.0
        %v2938 = vmax.f32 %v2914, 0.0
        %v2939 = vmax.f32 %v2915, 0.0
        %v2940 = vmax.f32 %v2916, 0.0
        %v2941 = vmax.f32 %v2917, 0.0
        %v2942 = vmax.f32 %v2918, 0.0
        %v2943 = vmax.f32 %v2919, 0.0
        %2944 = vst [vmem:[#allocation2] sm:$0xff] %v2920
        %2945 = vst [vmem:[#allocation2 + $0x8] sm:$0xff] %v2921
        %2946 = vst [vmem:[#allocation2 + $0x10] sm:$0xff] %v2922
        %2947 = vst [vmem:[#allocation2 + $0x18] sm:$0xff] %v2923
        %2948 = vst [vmem:[#allocation2 + $0x20] sm:$0xff] %v2924
        %2949 = vst [vmem:[#allocation2 + $0x28] sm:$0xff] %v2925
        %2950 = vst [vmem:[#allocation2 + $0x30] sm:$0xff] %v2926
        %2951 = vst [vmem:[#allocation2 + $0x38] sm:$0xff] %v2927
        %2952 = vst [vmem:[#allocation2 + $0x40] sm:$0xff] %v2928
        %2953 = vst [vmem:[#allocation2 + $0x48] sm:$0xff] %v2929
        %2954 = vst [vmem:[#allocation2 + $0x50] sm:$0xff] %v2930
        %2955 = vst [vmem:[#allocation2 + $0x58] sm:$0xff] %v2931
        %2956 = vst [vmem:[#allocation2 + $0x60] sm:$0xff] %v2932
        %2957 = vst [vmem:[#allocation2 + $0x68] sm:$0xff] %v2933
        %2958 = vst [vmem:[#allocation2 + $0x70] sm:$0xff] %v2934
        %2959 = vst [vmem:[#allocation2 + $0x78] sm:$0xff] %v2935
        %2960 = vst [vmem:[#allocation2 + $0x80] sm:$0xff] %v2936
        %2961 = vst [vmem:[#allocation2 + $0x88] sm:$0xff] %v2937
        %2962 = vst [vmem:[#allocation2 + $0x90] sm:$0xff] %v2938
        %2963 = vst [vmem:[#allocation2 + $0x98] sm:$0xff] %v2939
        %2964 = vst [vmem:[#allocation2 + $0xa0] sm:$0xff] %v2940
        %2965 = vst [vmem:[#allocation2 + $0xa8] sm:$0xff] %v2941
        %2966 = vst [vmem:[#allocation2 + $0xb0] sm:$0xff] %v2942
        %2967 = vst [vmem:[#allocation2 + $0xb8] sm:$0xff] %v2943
        %v2968 = vld [vmem:[#allocation2] ss:$2 sm:$0xff]
        %s2969 = scalar_lea.vmem [#allocation2], 16
        %v2970 = vld [vmem:[%s2969] ss:$2 sm:$0xff]
        %s2971 = scalar_lea.vmem [#allocation2], 32
        %v2972 = vld [vmem:[%s2971] ss:$2 sm:$0xff]
        %s2973 = scalar_lea.vmem [#allocation2], 48
        %v2974 = vld [vmem:[%s2973] ss:$2 sm:$0xff]
        %s2975 = scalar_lea.vmem [#allocation2], 64
        %v2976 = vld [vmem:[%s2975] ss:$2 sm:$0xff]
        %s2977 = scalar_lea.vmem [#allocation2], 80
        %v2978 = vld [vmem:[%s2977] ss:$2 sm:$0xff]
        %s2979 = scalar_lea.vmem [#allocation2], 96
        %v2980 = vld [vmem:[%s2979] ss:$2 sm:$0xff]
        %s2981 = scalar_lea.vmem [#allocation2], 112
        %v2982 = vld [vmem:[%s2981] ss:$2 sm:$0xff]
        %s2983 = scalar_lea.vmem [#allocation2], 128
        %v2984 = vld [vmem:[%s2983] ss:$2 sm:$0xff]
        %s2985 = scalar_lea.vmem [#allocation2], 144
        %v2986 = vld [vmem:[%s2985] ss:$2 sm:$0xff]
        %s2987 = scalar_lea.vmem [#allocation2], 160
        %v2988 = vld [vmem:[%s2987] ss:$2 sm:$0xff]
        %s2989 = scalar_lea.vmem [#allocation2], 176
        %v2990 = vld [vmem:[%s2989] ss:$2 sm:$0xff]
        %s2991 = scalar_lea.vmem [#allocation2], 1
        %v2992 = vld [vmem:[%s2991] ss:$2 sm:$0xff]
        %s2993 = scalar_lea.vmem [#allocation2], 17
        %v2994 = vld [vmem:[%s2993] ss:$2 sm:$0xff]
        %s2995 = scalar_lea.vmem [#allocation2], 33
        %v2996 = vld [vmem:[%s2995] ss:$2 sm:$0xff]
        %s2997 = scalar_lea.vmem [#allocation2], 49
        %v2998 = vld [vmem:[%s2997] ss:$2 sm:$0xff]
        %s2999 = scalar_lea.vmem [#allocation2], 65
        %v3000 = vld [vmem:[%s2999] ss:$2 sm:$0xff]
        %s3001 = scalar_lea.vmem [#allocation2], 81
        %v3002 = vld [vmem:[%s3001] ss:$2 sm:$0xff]
        %s3003 = scalar_lea.vmem [#allocation2], 97
        %v3004 = vld [vmem:[%s3003] ss:$2 sm:$0xff]
        %s3005 = scalar_lea.vmem [#allocation2], 113
        %v3006 = vld [vmem:[%s3005] ss:$2 sm:$0xff]
        %s3007 = scalar_lea.vmem [#allocation2], 129
        %v3008 = vld [vmem:[%s3007] ss:$2 sm:$0xff]
        %s3009 = scalar_lea.vmem [#allocation2], 145
        %v3010 = vld [vmem:[%s3009] ss:$2 sm:$0xff]
        %s3011 = scalar_lea.vmem [#allocation2], 161
        %v3012 = vld [vmem:[%s3011] ss:$2 sm:$0xff]
        %s3013 = scalar_lea.vmem [#allocation2], 177
        %v3014 = vld [vmem:[%s3013] ss:$2 sm:$0xff]
        %v3015 = vmax.f32 %v2968, %v2992
        %v3016 = vmax.f32 %v2970, %v2994
        %v3017 = vmax.f32 %v2972, %v2996
        %v3018 = vmax.f32 %v2974, %v2998
        %v3019 = vmax.f32 %v2976, %v3000
        %v3020 = vmax.f32 %v2978, %v3002
        %v3021 = vmax.f32 %v2980, %v3004
        %v3022 = vmax.f32 %v2982, %v3006
        %v3023 = vmax.f32 %v2984, %v3008
        %v3024 = vmax.f32 %v2986, %v3010
        %v3025 = vmax.f32 %v2988, %v3012
        %v3026 = vmax.f32 %v2990, %v3014
        %v3039 = vrot.slane %v3015, 5
        %v3040 = vrot.slane %v3016, 5
        %v3041 = vsel %vm923, %v3039, %v3040
        %v3042 = vrot.slane %v3017, 5
        %v3043 = vsel %vm923, %v3040, %v3042
        %v3044 = vrot.slane %v3018, 5
        %v3045 = vsel %vm923, %v3042, %v3044
        %v3046 = vrot.slane %v3019, 5
        %v3047 = vsel %vm923, %v3044, %v3046
        %v3048 = vrot.slane %v3020, 5
        %v3049 = vsel %vm923, %v3046, %v3048
        %v3050 = vrot.slane %v3021, 5
        %v3051 = vsel %vm923, %v3048, %v3050
        %v3052 = vrot.slane %v3022, 5
        %v3053 = vsel %vm923, %v3050, %v3052
        %v3054 = vrot.slane %v3023, 5
        %v3055 = vsel %vm923, %v3052, %v3054
        %v3056 = vrot.slane %v3024, 5
        %v3057 = vsel %vm923, %v3054, %v3056
        %v3058 = vrot.slane %v3025, 5
        %v3059 = vsel %vm923, %v3056, %v3058
        %v3060 = vrot.slane %v3026, 5
        %v3061 = vsel %vm923, %v3058, %v3060
        %v3075 = vsel %vm923, 0.0, %v3039
        %v3076 = vsel %vm923, %v3060, 0.0
        %v3077 = vpack.c.bf16 %v3041, %v3075
        %v3078 = vpack.c.bf16 %v3045, %v3043
        %v3079 = vpack.c.bf16 %v3049, %v3047
        %v3080 = vpack.c.bf16 %v3053, %v3051
        %v3081 = vpack.c.bf16 %v3057, %v3055
        %v3082 = vpack.c.bf16 %v3061, %v3059
        %v3083 = vld [vmem:[#allocation3] sm:$0xf]
        %v3084 = vld [vmem:[#allocation3 + $0x4] sm:$0xf]
        %v3085 = vld [vmem:[#allocation3 + $0x8] sm:$0xf]
        %v3086 = vld [vmem:[#allocation3 + $0xc] sm:$0xf]
        %v3087 = vld [vmem:[#allocation3 + $0x10] sm:$0xf]
        %v3088 = vld [vmem:[#allocation3 + $0x14] sm:$0xf]
        %v3089 = vld [vmem:[#allocation3 + $0x18] sm:$0xf]
        %v3090 = vld [vmem:[#allocation3 + $0x1c] sm:$0xf]
        %v3091 = vld [vmem:[#allocation3 + $0x20] sm:$0xf]
        %v3092 = vld [vmem:[#allocation3 + $0x24] sm:$0xf]
        %v3093 = vld [vmem:[#allocation3 + $0x28] sm:$0xf]
        %v3094 = vld [vmem:[#allocation3 + $0x2c] sm:$0xf]
        %v3095 = vld [vmem:[#allocation3 + $0x30] sm:$0xf]
        %v3096 = vld [vmem:[#allocation3 + $0x34] sm:$0xf]
        %v3097 = vld [vmem:[#allocation3 + $0x38] sm:$0xf]
        %v3098 = vld [vmem:[#allocation3 + $0x3c] sm:$0xf]
        %v3099 = vpack.c.bf16 %v3076, %v3076
        %s3100 = scalar_lea.vmem [#allocation3], 64
        %v3101 = vld [vmem:[%s3100] sm:$0xf]
        %v3102 = vld [vmem:[%s3100 + $0x4] sm:$0xf]
        %v3103 = vld [vmem:[%s3100 + $0x8] sm:$0xf]
        %v3104 = vld [vmem:[%s3100 + $0xc] sm:$0xf]
        %v3105 = vld [vmem:[%s3100 + $0x10] sm:$0xf]
        %v3106 = vld [vmem:[%s3100 + $0x14] sm:$0xf]
        %v3107 = vld [vmem:[%s3100 + $0x18] sm:$0xf]
        %v3108 = vld [vmem:[%s3100 + $0x1c] sm:$0xf]
        %v3109 = vld [vmem:[%s3100 + $0x20] sm:$0xf]
        %v3110 = vld [vmem:[%s3100 + $0x24] sm:$0xf]
        %v3111 = vld [vmem:[%s3100 + $0x28] sm:$0xf]
        %v3112 = vld [vmem:[%s3100 + $0x2c] sm:$0xf]
        %v3113 = vld [vmem:[%s3100 + $0x30] sm:$0xf]
        %v3114 = vld [vmem:[%s3100 + $0x34] sm:$0xf]
        %v3115 = vld [vmem:[%s3100 + $0x38] sm:$0xf]
        %v3116 = vld [vmem:[%s3100 + $0x3c] sm:$0xf]
        %v3118 = vshrl.u32 %v3077, 16
        %v3120 = vshll.u32 %v3077, 16
        %v3122 = vrot.slane %v3120, 1
        %v3123 = vor.u32 %v3118, %v3122
        %v3125 = vshll.u32 %v3078, 16
        %v3127 = vrot.slane %v3125, 1
        %v3128 = vsel %vm1044, %v3123, %v3127
        %v3129 = vshrl.u32 %v3078, 16
        %v3131 = vor.u32 %v3129, %v3127
        %v3133 = vshll.u32 %v3079, 16
        %v3135 = vrot.slane %v3133, 1
        %v3136 = vsel %vm1044, %v3131, %v3135
        %v3137 = vshrl.u32 %v3079, 16
        %v3139 = vor.u32 %v3137, %v3135
        %v3141 = vshll.u32 %v3080, 16
        %v3143 = vrot.slane %v3141, 1
        %v3144 = vsel %vm1044, %v3139, %v3143
        %v3145 = vshrl.u32 %v3080, 16
        %v3147 = vor.u32 %v3145, %v3143
        %v3149 = vshll.u32 %v3081, 16
        %v3151 = vrot.slane %v3149, 1
        %v3152 = vsel %vm1044, %v3147, %v3151
        %v3153 = vshrl.u32 %v3081, 16
        %v3155 = vor.u32 %v3153, %v3151
        %v3157 = vshll.u32 %v3082, 16
        %v3159 = vrot.slane %v3157, 1
        %v3160 = vsel %vm1044, %v3155, %v3159
        %v3161 = vshrl.u32 %v3082, 16
        %v3163 = vor.u32 %v3161, %v3159
        %v3165 = vshll.u32 %v3099, 16
        %v3167 = vrot.slane %v3165, 1
        %v3168 = vsel %vm1044, %v3163, %v3167
        %v3191 = vunpack.c.l.b16 %v3101
        %v3192 = vunpack.c.l.b16 %v3102
        %v3193 = vunpack.c.l.b16 %v3103
        %v3194 = vunpack.c.l.b16 %v3104
        %v3195 = vunpack.c.l.b16 %v3105
        %v3196 = vunpack.c.l.b16 %v3106
        %v3197 = vunpack.c.l.b16 %v3107
        %v3198 = vunpack.c.l.b16 %v3108
        %v3199 = vunpack.c.l.b16 %v3109
        %v3200 = vunpack.c.l.b16 %v3110
        %v3201 = vunpack.c.l.b16 %v3111
        %v3202 = vunpack.c.l.b16 %v3112
        %v3203 = vunpack.c.l.b16 %v3113
        %v3204 = vunpack.c.l.b16 %v3114
        %v3205 = vunpack.c.l.b16 %v3115
        %v3206 = vunpack.c.l.b16 %v3116
        %v3207 = vpack.c.b16 %v3192, %v3191
        %v3208 = vpack.c.b16 %v3194, %v3193
        %v3209 = vpack.c.b16 %v3196, %v3195
        %v3210 = vpack.c.b16 %v3198, %v3197
        %v3211 = vpack.c.b16 %v3200, %v3199
        %v3212 = vpack.c.b16 %v3202, %v3201
        %v3213 = vpack.c.b16 %v3204, %v3203
        %v3214 = vpack.c.b16 %v3206, %v3205
        %3223 = vmatprep.subr.bf16.mxu0 0
        %3224 = vmatpush1.bf16.msra.mxu0 %v3214
        %3225 = vmatprep.subr.bf16.mxu0 0
        %3226 = vmatpush1.bf16.msra.mxu0 %v3213
        %3227 = vmatprep.subr.bf16.mxu0 0
        %3228 = vmatpush1.bf16.msra.mxu0 %v3212
        %3229 = vmatprep.subr.bf16.mxu0 0
        %3230 = vmatpush1.bf16.msra.mxu0 %v3211
        %3231 = vmatprep.subr.bf16.mxu0 0
        %3232 = vmatpush1.bf16.msra.mxu0 %v3210
        %3233 = vmatprep.subr.bf16.mxu0 0
        %3234 = vmatpush1.bf16.msra.mxu0 %v3209
        %3235 = vmatprep.subr.bf16.mxu0 0
        %3236 = vmatpush1.bf16.msra.mxu0 %v3208
        %3237 = vmatprep.subr.bf16.mxu0 0
        %3238 = vmatpush1.bf16.msra.mxu0 %v3207
        %3239 = vmatprep.subr.bf16.mxu0 0
        %3240 = vmatpush2.bf16.msra.mxu0 0
        %3241 = vmatprep.subr.bf16.mxu0 0
        %3242 = vmatpush2.bf16.msra.mxu0 0
        %3243 = vmatprep.subr.bf16.mxu0 0
        %3244 = vmatpush2.bf16.msra.mxu0 0
        %3245 = vmatprep.subr.bf16.mxu0 0
        %3246 = vmatpush2.bf16.msra.mxu0 0
        %3247 = vmatprep.subr.bf16.mxu0 0
        %3248 = vmatpush2.bf16.msra.mxu0 0
        %3249 = vmatprep.subr.bf16.mxu0 0
        %3250 = vmatpush2.bf16.msra.mxu0 0
        %3251 = vmatprep.subr.bf16.mxu0 0
        %3252 = vmatpush2.bf16.msra.mxu0 0
        %3253 = vmatprep.subr.bf16.mxu0 0
        %3254 = vmatpush2.bf16.msra.mxu0 0
        %3255 = vmatprep.mubr.bf16.mxu0 0
        %3256 = vmatmul.mubr.bf16.gmra.mxu0 %v3128
        %v3257 = vpop.f32.mrf.mxu0
        %v3258 = vadd.f32 0.0, %v3257
        %v3259 = vpop.f32.mrf.mxu0
        %v3260 = vpop.f32.mrf.mxu0
        %v3261 = vadd.f32 0.0, %v3260
        %v3262 = vpop.f32.mrf.mxu0
        %3263 = vmatprep.mubr.bf16.mxu0 0
        %3264 = vmatmul.mubr.bf16.gmra.mxu0 %v3136
        %v3265 = vpop.f32.mrf.mxu0
        %v3266 = vadd.f32 0.0, %v3265
        %v3267 = vpop.f32.mrf.mxu0
        %v3268 = vpop.f32.mrf.mxu0
        %v3269 = vadd.f32 0.0, %v3268
        %v3270 = vpop.f32.mrf.mxu0
        %3271 = vmatprep.mubr.bf16.mxu0 0
        %3272 = vmatmul.mubr.bf16.gmra.mxu0 %v3144
        %v3273 = vpop.f32.mrf.mxu0
        %v3274 = vadd.f32 0.0, %v3273
        %v3275 = vpop.f32.mrf.mxu0
        %v3276 = vpop.f32.mrf.mxu0
        %v3277 = vadd.f32 0.0, %v3276
        %v3278 = vpop.f32.mrf.mxu0
        %3279 = vmatprep.mubr.bf16.mxu0 0
        %3280 = vmatmul.mubr.bf16.gmra.mxu0 %v3152
        %v3281 = vpop.f32.mrf.mxu0
        %v3282 = vadd.f32 0.0, %v3281
        %v3283 = vpop.f32.mrf.mxu0
        %v3284 = vpop.f32.mrf.mxu0
        %v3285 = vadd.f32 0.0, %v3284
        %v3286 = vpop.f32.mrf.mxu0
        %3287 = vmatprep.mubr.bf16.mxu0 0
        %3288 = vmatmul.mubr.bf16.gmra.mxu0 %v3160
        %v3289 = vpop.f32.mrf.mxu0
        %v3290 = vadd.f32 0.0, %v3289
        %v3291 = vpop.f32.mrf.mxu0
        %v3292 = vpop.f32.mrf.mxu0
        %v3293 = vadd.f32 0.0, %v3292
        %v3294 = vpop.f32.mrf.mxu0
        %3295 = vmatprep.mubr.bf16.mxu0 0
        %3296 = vmatmul.mubr.bf16.gmra.mxu0 %v3168
        %v3297 = vpop.f32.mrf.mxu0
        %v3298 = vadd.f32 0.0, %v3297
        %v3299 = vpop.f32.mrf.mxu0
        %v3300 = vpop.f32.mrf.mxu0
        %v3301 = vadd.f32 0.0, %v3300
        %v3302 = vpop.f32.mrf.mxu0
        %3303 = vdwg.mxu0
        %v3320 = vunpack.c.l.b16 %v3083
        %v3321 = vunpack.c.l.b16 %v3084
        %v3322 = vunpack.c.l.b16 %v3085
        %v3323 = vunpack.c.l.b16 %v3086
        %v3324 = vunpack.c.l.b16 %v3087
        %v3325 = vunpack.c.l.b16 %v3088
        %v3326 = vunpack.c.l.b16 %v3089
        %v3327 = vunpack.c.l.b16 %v3090
        %v3328 = vunpack.c.l.b16 %v3091
        %v3329 = vunpack.c.l.b16 %v3092
        %v3330 = vunpack.c.l.b16 %v3093
        %v3331 = vunpack.c.l.b16 %v3094
        %v3332 = vunpack.c.l.b16 %v3095
        %v3333 = vunpack.c.l.b16 %v3096
        %v3334 = vunpack.c.l.b16 %v3097
        %v3335 = vunpack.c.l.b16 %v3098
        %v3336 = vpack.c.b16 %v3321, %v3320
        %v3337 = vpack.c.b16 %v3323, %v3322
        %v3338 = vpack.c.b16 %v3325, %v3324
        %v3339 = vpack.c.b16 %v3327, %v3326
        %v3340 = vpack.c.b16 %v3329, %v3328
        %v3341 = vpack.c.b16 %v3331, %v3330
        %v3342 = vpack.c.b16 %v3333, %v3332
        %v3343 = vpack.c.b16 %v3335, %v3334
        %3352 = vmatprep.subr.bf16.mxu0 0
        %3353 = vmatpush1.bf16.msra.mxu0 %v3343
        %3354 = vmatprep.subr.bf16.mxu0 0
        %3355 = vmatpush1.bf16.msra.mxu0 %v3342
        %3356 = vmatprep.subr.bf16.mxu0 0
        %3357 = vmatpush1.bf16.msra.mxu0 %v3341
        %3358 = vmatprep.subr.bf16.mxu0 0
        %3359 = vmatpush1.bf16.msra.mxu0 %v3340
        %3360 = vmatprep.subr.bf16.mxu0 0
        %3361 = vmatpush1.bf16.msra.mxu0 %v3339
        %3362 = vmatprep.subr.bf16.mxu0 0
        %3363 = vmatpush1.bf16.msra.mxu0 %v3338
        %3364 = vmatprep.subr.bf16.mxu0 0
        %3365 = vmatpush1.bf16.msra.mxu0 %v3337
        %3366 = vmatprep.subr.bf16.mxu0 0
        %3367 = vmatpush1.bf16.msra.mxu0 %v3336
        %3368 = vmatprep.subr.bf16.mxu0 0
        %3369 = vmatpush2.bf16.msra.mxu0 0
        %3370 = vmatprep.subr.bf16.mxu0 0
        %3371 = vmatpush2.bf16.msra.mxu0 0
        %3372 = vmatprep.subr.bf16.mxu0 0
        %3373 = vmatpush2.bf16.msra.mxu0 0
        %3374 = vmatprep.subr.bf16.mxu0 0
        %3375 = vmatpush2.bf16.msra.mxu0 0
        %3376 = vmatprep.subr.bf16.mxu0 0
        %3377 = vmatpush2.bf16.msra.mxu0 0
        %3378 = vmatprep.subr.bf16.mxu0 0
        %3379 = vmatpush2.bf16.msra.mxu0 0
        %3380 = vmatprep.subr.bf16.mxu0 0
        %3381 = vmatpush2.bf16.msra.mxu0 0
        %3382 = vmatprep.subr.bf16.mxu0 0
        %3383 = vmatpush2.bf16.msra.mxu0 0
        %3384 = vmatprep.mubr.bf16.mxu0 0
        %3385 = vmatmul.mubr.bf16.gmra.mxu0 %v3077
        %v3386 = vpop.f32.mrf.mxu0
        %v3387 = vadd.f32 %v3258, %v3386
        %v3388 = vpop.f32.mrf.mxu0
        %v3389 = vpop.f32.mrf.mxu0
        %v3390 = vadd.f32 %v3261, %v3389
        %v3391 = vpop.f32.mrf.mxu0
        %3392 = vmatprep.mubr.bf16.mxu0 0
        %3393 = vmatmul.mubr.bf16.gmra.mxu0 %v3078
        %v3394 = vpop.f32.mrf.mxu0
        %v3395 = vadd.f32 %v3266, %v3394
        %v3396 = vpop.f32.mrf.mxu0
        %v3397 = vpop.f32.mrf.mxu0
        %v3398 = vadd.f32 %v3269, %v3397
        %v3399 = vpop.f32.mrf.mxu0
        %3400 = vmatprep.mubr.bf16.mxu0 0
        %3401 = vmatmul.mubr.bf16.gmra.mxu0 %v3079
        %v3402 = vpop.f32.mrf.mxu0
        %v3403 = vadd.f32 %v3274, %v3402
        %v3404 = vpop.f32.mrf.mxu0
        %v3405 = vpop.f32.mrf.mxu0
        %v3406 = vadd.f32 %v3277, %v3405
        %v3407 = vpop.f32.mrf.mxu0
        %3408 = vmatprep.mubr.bf16.mxu0 0
        %3409 = vmatmul.mubr.bf16.gmra.mxu0 %v3080
        %v3410 = vpop.f32.mrf.mxu0
        %v3411 = vadd.f32 %v3282, %v3410
        %v3412 = vpop.f32.mrf.mxu0
        %v3413 = vpop.f32.mrf.mxu0
        %v3414 = vadd.f32 %v3285, %v3413
        %v3415 = vpop.f32.mrf.mxu0
        %3416 = vmatprep.mubr.bf16.mxu0 0
        %3417 = vmatmul.mubr.bf16.gmra.mxu0 %v3081
        %v3418 = vpop.f32.mrf.mxu0
        %v3419 = vadd.f32 %v3290, %v3418
        %v3420 = vpop.f32.mrf.mxu0
        %v3421 = vpop.f32.mrf.mxu0
        %v3422 = vadd.f32 %v3293, %v3421
        %v3423 = vpop.f32.mrf.mxu0
        %3424 = vmatprep.mubr.bf16.mxu0 0
        %3425 = vmatmul.mubr.bf16.gmra.mxu0 %v3082
        %v3426 = vpop.f32.mrf.mxu0
        %v3427 = vadd.f32 %v3298, %v3426
        %v3428 = vpop.f32.mrf.mxu0
        %v3429 = vpop.f32.mrf.mxu0
        %v3430 = vadd.f32 %v3301, %v3429
        %v3431 = vpop.f32.mrf.mxu0
        %3432 = vdwg.mxu0
        %s3433 = scalar_lea.vmem [#allocation3], 128
        %v3434 = vld [vmem:[%s3433] sm:$0xf]
        %v3435 = vld [vmem:[%s3433 + $0x4] sm:$0xf]
        %v3436 = vld [vmem:[%s3433 + $0x8] sm:$0xf]
        %v3437 = vld [vmem:[%s3433 + $0xc] sm:$0xf]
        %v3438 = vld [vmem:[%s3433 + $0x10] sm:$0xf]
        %v3439 = vld [vmem:[%s3433 + $0x14] sm:$0xf]
        %v3440 = vld [vmem:[%s3433 + $0x18] sm:$0xf]
        %v3441 = vld [vmem:[%s3433 + $0x1c] sm:$0xf]
        %v3442 = vld [vmem:[%s3433 + $0x20] sm:$0xf]
        %v3443 = vld [vmem:[%s3433 + $0x24] sm:$0xf]
        %v3444 = vld [vmem:[%s3433 + $0x28] sm:$0xf]
        %v3445 = vld [vmem:[%s3433 + $0x2c] sm:$0xf]
        %v3446 = vld [vmem:[%s3433 + $0x30] sm:$0xf]
        %v3447 = vld [vmem:[%s3433 + $0x34] sm:$0xf]
        %v3448 = vld [vmem:[%s3433 + $0x38] sm:$0xf]
        %v3449 = vld [vmem:[%s3433 + $0x3c] sm:$0xf]
        %v3457 = vrot.slane %v3077, 1
        %v3458 = vrot.slane %v3078, 1
        %v3459 = vsel %vm1541, %v3457, %v3458
        %v3460 = vrot.slane %v3079, 1
        %v3461 = vsel %vm1541, %v3458, %v3460
        %v3462 = vrot.slane %v3080, 1
        %v3463 = vsel %vm1541, %v3460, %v3462
        %v3464 = vrot.slane %v3081, 1
        %v3465 = vsel %vm1541, %v3462, %v3464
        %v3466 = vrot.slane %v3082, 1
        %v3467 = vsel %vm1541, %v3464, %v3466
        %v3468 = vrot.slane %v3099, 1
        %v3469 = vsel %vm1541, %v3466, %v3468
        %v3492 = vunpack.c.l.b16 %v3434
        %v3493 = vunpack.c.l.b16 %v3435
        %v3494 = vunpack.c.l.b16 %v3436
        %v3495 = vunpack.c.l.b16 %v3437
        %v3496 = vunpack.c.l.b16 %v3438
        %v3497 = vunpack.c.l.b16 %v3439
        %v3498 = vunpack.c.l.b16 %v3440
        %v3499 = vunpack.c.l.b16 %v3441
        %v3500 = vunpack.c.l.b16 %v3442
        %v3501 = vunpack.c.l.b16 %v3443
        %v3502 = vunpack.c.l.b16 %v3444
        %v3503 = vunpack.c.l.b16 %v3445
        %v3504 = vunpack.c.l.b16 %v3446
        %v3505 = vunpack.c.l.b16 %v3447
        %v3506 = vunpack.c.l.b16 %v3448
        %v3507 = vunpack.c.l.b16 %v3449
        %v3508 = vpack.c.b16 %v3493, %v3492
        %v3509 = vpack.c.b16 %v3495, %v3494
        %v3510 = vpack.c.b16 %v3497, %v3496
        %v3511 = vpack.c.b16 %v3499, %v3498
        %v3512 = vpack.c.b16 %v3501, %v3500
        %v3513 = vpack.c.b16 %v3503, %v3502
        %v3514 = vpack.c.b16 %v3505, %v3504
        %v3515 = vpack.c.b16 %v3507, %v3506
        %3524 = vmatprep.subr.bf16.mxu0 0
        %3525 = vmatpush1.bf16.msra.mxu0 %v3515
        %3526 = vmatprep.subr.bf16.mxu0 0
        %3527 = vmatpush1.bf16.msra.mxu0 %v3514
        %3528 = vmatprep.subr.bf16.mxu0 0
        %3529 = vmatpush1.bf16.msra.mxu0 %v3513
        %3530 = vmatprep.subr.bf16.mxu0 0
        %3531 = vmatpush1.bf16.msra.mxu0 %v3512
        %3532 = vmatprep.subr.bf16.mxu0 0
        %3533 = vmatpush1.bf16.msra.mxu0 %v3511
        %3534 = vmatprep.subr.bf16.mxu0 0
        %3535 = vmatpush1.bf16.msra.mxu0 %v3510
        %3536 = vmatprep.subr.bf16.mxu0 0
        %3537 = vmatpush1.bf16.msra.mxu0 %v3509
        %3538 = vmatprep.subr.bf16.mxu0 0
        %3539 = vmatpush1.bf16.msra.mxu0 %v3508
        %3540 = vmatprep.subr.bf16.mxu0 0
        %3541 = vmatpush2.bf16.msra.mxu0 0
        %3542 = vmatprep.subr.bf16.mxu0 0
        %3543 = vmatpush2.bf16.msra.mxu0 0
        %3544 = vmatprep.subr.bf16.mxu0 0
        %3545 = vmatpush2.bf16.msra.mxu0 0
        %3546 = vmatprep.subr.bf16.mxu0 0
        %3547 = vmatpush2.bf16.msra.mxu0 0
        %3548 = vmatprep.subr.bf16.mxu0 0
        %3549 = vmatpush2.bf16.msra.mxu0 0
        %3550 = vmatprep.subr.bf16.mxu0 0
        %3551 = vmatpush2.bf16.msra.mxu0 0
        %3552 = vmatprep.subr.bf16.mxu0 0
        %3553 = vmatpush2.bf16.msra.mxu0 0
        %3554 = vmatprep.subr.bf16.mxu0 0
        %3555 = vmatpush2.bf16.msra.mxu0 0
        %3556 = vmatprep.mubr.bf16.mxu0 0
        %3557 = vmatmul.mubr.bf16.gmra.mxu0 %v3459
        %v3558 = vpop.f32.mrf.mxu0
        %v3559 = vadd.f32 0.0, %v3558
        %v3560 = vpop.f32.mrf.mxu0
        %v3561 = vpop.f32.mrf.mxu0
        %v3562 = vadd.f32 0.0, %v3561
        %v3563 = vpop.f32.mrf.mxu0
        %3564 = vmatprep.mubr.bf16.mxu0 0
        %3565 = vmatmul.mubr.bf16.gmra.mxu0 %v3461
        %v3566 = vpop.f32.mrf.mxu0
        %v3567 = vadd.f32 0.0, %v3566
        %v3568 = vpop.f32.mrf.mxu0
        %v3569 = vpop.f32.mrf.mxu0
        %v3570 = vadd.f32 0.0, %v3569
        %v3571 = vpop.f32.mrf.mxu0
        %3572 = vmatprep.mubr.bf16.mxu0 0
        %3573 = vmatmul.mubr.bf16.gmra.mxu0 %v3463
        %v3574 = vpop.f32.mrf.mxu0
        %v3575 = vadd.f32 0.0, %v3574
        %v3576 = vpop.f32.mrf.mxu0
        %v3577 = vpop.f32.mrf.mxu0
        %v3578 = vadd.f32 0.0, %v3577
        %v3579 = vpop.f32.mrf.mxu0
        %3580 = vmatprep.mubr.bf16.mxu0 0
        %3581 = vmatmul.mubr.bf16.gmra.mxu0 %v3465
        %v3582 = vpop.f32.mrf.mxu0
        %v3583 = vadd.f32 0.0, %v3582
        %v3584 = vpop.f32.mrf.mxu0
        %v3585 = vpop.f32.mrf.mxu0
        %v3586 = vadd.f32 0.0, %v3585
        %v3587 = vpop.f32.mrf.mxu0
        %3588 = vmatprep.mubr.bf16.mxu0 0
        %3589 = vmatmul.mubr.bf16.gmra.mxu0 %v3467
        %v3590 = vpop.f32.mrf.mxu0
        %v3591 = vadd.f32 0.0, %v3590
        %v3592 = vpop.f32.mrf.mxu0
        %v3593 = vpop.f32.mrf.mxu0
        %v3594 = vadd.f32 0.0, %v3593
        %v3595 = vpop.f32.mrf.mxu0
        %3596 = vmatprep.mubr.bf16.mxu0 0
        %3597 = vmatmul.mubr.bf16.gmra.mxu0 %v3469
        %v3598 = vpop.f32.mrf.mxu0
        %v3599 = vadd.f32 0.0, %v3598
        %v3600 = vpop.f32.mrf.mxu0
        %v3601 = vpop.f32.mrf.mxu0
        %v3602 = vadd.f32 0.0, %v3601
        %v3603 = vpop.f32.mrf.mxu0
        %3604 = vdwg.mxu0
        %v3605 = vadd.f32 %v3387, %v3559
        %v3606 = vadd.f32 %v3390, %v3562
        %v3607 = vadd.f32 %v3395, %v3567
        %v3608 = vadd.f32 %v3398, %v3570
        %v3609 = vadd.f32 %v3403, %v3575
        %v3610 = vadd.f32 %v3406, %v3578
        %v3611 = vadd.f32 %v3411, %v3583
        %v3612 = vadd.f32 %v3414, %v3586
        %v3613 = vadd.f32 %v3419, %v3591
        %v3614 = vadd.f32 %v3422, %v3594
        %v3615 = vadd.f32 %v3427, %v3599
        %v3616 = vadd.f32 %v3430, %v3602
        %s3617 = scalar_lea.vmem [#allocation3], 192
        %v3618 = vld [vmem:[%s3617] sm:$0xf]
        %v3619 = vld [vmem:[%s3617 + $0x4] sm:$0xf]
        %v3620 = vld [vmem:[%s3617 + $0x8] sm:$0xf]
        %v3621 = vld [vmem:[%s3617 + $0xc] sm:$0xf]
        %v3622 = vld [vmem:[%s3617 + $0x10] sm:$0xf]
        %v3623 = vld [vmem:[%s3617 + $0x14] sm:$0xf]
        %v3624 = vld [vmem:[%s3617 + $0x18] sm:$0xf]
        %v3625 = vld [vmem:[%s3617 + $0x1c] sm:$0xf]
        %v3626 = vld [vmem:[%s3617 + $0x20] sm:$0xf]
        %v3627 = vld [vmem:[%s3617 + $0x24] sm:$0xf]
        %v3628 = vld [vmem:[%s3617 + $0x28] sm:$0xf]
        %v3629 = vld [vmem:[%s3617 + $0x2c] sm:$0xf]
        %v3630 = vld [vmem:[%s3617 + $0x30] sm:$0xf]
        %v3631 = vld [vmem:[%s3617 + $0x34] sm:$0xf]
        %v3632 = vld [vmem:[%s3617 + $0x38] sm:$0xf]
        %v3633 = vld [vmem:[%s3617 + $0x3c] sm:$0xf]
        %v3634 = vrot.slane %v3118, 1
        %v3635 = vrot.slane %v3120, 2
        %v3636 = vor.u32 %v3634, %v3635
        %v3637 = vrot.slane %v3129, 1
        %v3638 = vrot.slane %v3125, 2
        %v3639 = vor.u32 %v3637, %v3638
        %v3640 = vsel %vm1797, %v3636, %v3639
        %v3641 = vrot.slane %v3137, 1
        %v3642 = vrot.slane %v3133, 2
        %v3643 = vor.u32 %v3641, %v3642
        %v3644 = vsel %vm1797, %v3639, %v3643
        %v3645 = vrot.slane %v3145, 1
        %v3646 = vrot.slane %v3141, 2
        %v3647 = vor.u32 %v3645, %v3646
        %v3648 = vsel %vm1797, %v3643, %v3647
        %v3649 = vrot.slane %v3153, 1
        %v3650 = vrot.slane %v3149, 2
        %v3651 = vor.u32 %v3649, %v3650
        %v3652 = vsel %vm1797, %v3647, %v3651
        %v3653 = vrot.slane %v3161, 1
        %v3654 = vrot.slane %v3157, 2
        %v3655 = vor.u32 %v3653, %v3654
        %v3656 = vsel %vm1797, %v3651, %v3655
        %v3657 = vshrl.u32 %v3099, 16
        %v3659 = vrot.slane %v3657, 1
        %v3660 = vrot.slane %v3165, 2
        %v3661 = vor.u32 %v3659, %v3660
        %v3662 = vsel %vm1797, %v3655, %v3661
        %v3685 = vunpack.c.l.b16 %v3618
        %v3686 = vunpack.c.l.b16 %v3619
        %v3687 = vunpack.c.l.b16 %v3620
        %v3688 = vunpack.c.l.b16 %v3621
        %v3689 = vunpack.c.l.b16 %v3622
        %v3690 = vunpack.c.l.b16 %v3623
        %v3691 = vunpack.c.l.b16 %v3624
        %v3692 = vunpack.c.l.b16 %v3625
        %v3693 = vunpack.c.l.b16 %v3626
        %v3694 = vunpack.c.l.b16 %v3627
        %v3695 = vunpack.c.l.b16 %v3628
        %v3696 = vunpack.c.l.b16 %v3629
        %v3697 = vunpack.c.l.b16 %v3630
        %v3698 = vunpack.c.l.b16 %v3631
        %v3699 = vunpack.c.l.b16 %v3632
        %v3700 = vunpack.c.l.b16 %v3633
        %v3701 = vpack.c.b16 %v3686, %v3685
        %v3702 = vpack.c.b16 %v3688, %v3687
        %v3703 = vpack.c.b16 %v3690, %v3689
        %v3704 = vpack.c.b16 %v3692, %v3691
        %v3705 = vpack.c.b16 %v3694, %v3693
        %v3706 = vpack.c.b16 %v3696, %v3695
        %v3707 = vpack.c.b16 %v3698, %v3697
        %v3708 = vpack.c.b16 %v3700, %v3699
        %3717 = vmatprep.subr.bf16.mxu0 0
        %3718 = vmatpush1.bf16.msra.mxu0 %v3708
        %3719 = vmatprep.subr.bf16.mxu0 0
        %3720 = vmatpush1.bf16.msra.mxu0 %v3707
        %3721 = vmatprep.subr.bf16.mxu0 0
        %3722 = vmatpush1.bf16.msra.mxu0 %v3706
        %3723 = vmatprep.subr.bf16.mxu0 0
        %3724 = vmatpush1.bf16.msra.mxu0 %v3705
        %3725 = vmatprep.subr.bf16.mxu0 0
        %3726 = vmatpush1.bf16.msra.mxu0 %v3704
        %3727 = vmatprep.subr.bf16.mxu0 0
        %3728 = vmatpush1.bf16.msra.mxu0 %v3703
        %3729 = vmatprep.subr.bf16.mxu0 0
        %3730 = vmatpush1.bf16.msra.mxu0 %v3702
        %3731 = vmatprep.subr.bf16.mxu0 0
        %3732 = vmatpush1.bf16.msra.mxu0 %v3701
        %3733 = vmatprep.subr.bf16.mxu0 0
        %3734 = vmatpush2.bf16.msra.mxu0 0
        %3735 = vmatprep.subr.bf16.mxu0 0
        %3736 = vmatpush2.bf16.msra.mxu0 0
        %3737 = vmatprep.subr.bf16.mxu0 0
        %3738 = vmatpush2.bf16.msra.mxu0 0
        %3739 = vmatprep.subr.bf16.mxu0 0
        %3740 = vmatpush2.bf16.msra.mxu0 0
        %3741 = vmatprep.subr.bf16.mxu0 0
        %3742 = vmatpush2.bf16.msra.mxu0 0
        %3743 = vmatprep.subr.bf16.mxu0 0
        %3744 = vmatpush2.bf16.msra.mxu0 0
        %3745 = vmatprep.subr.bf16.mxu0 0
        %3746 = vmatpush2.bf16.msra.mxu0 0
        %3747 = vmatprep.subr.bf16.mxu0 0
        %3748 = vmatpush2.bf16.msra.mxu0 0
        %3749 = vmatprep.mubr.bf16.mxu0 0
        %3750 = vmatmul.mubr.bf16.gmra.mxu0 %v3640
        %v3751 = vpop.f32.mrf.mxu0
        %v3752 = vadd.f32 0.0, %v3751
        %v3753 = vpop.f32.mrf.mxu0
        %v3754 = vpop.f32.mrf.mxu0
        %v3755 = vadd.f32 0.0, %v3754
        %v3756 = vpop.f32.mrf.mxu0
        %3757 = vmatprep.mubr.bf16.mxu0 0
        %3758 = vmatmul.mubr.bf16.gmra.mxu0 %v3644
        %v3759 = vpop.f32.mrf.mxu0
        %v3760 = vadd.f32 0.0, %v3759
        %v3761 = vpop.f32.mrf.mxu0
        %v3762 = vpop.f32.mrf.mxu0
        %v3763 = vadd.f32 0.0, %v3762
        %v3764 = vpop.f32.mrf.mxu0
        %3765 = vmatprep.mubr.bf16.mxu0 0
        %3766 = vmatmul.mubr.bf16.gmra.mxu0 %v3648
        %v3767 = vpop.f32.mrf.mxu0
        %v3768 = vadd.f32 0.0, %v3767
        %v3769 = vpop.f32.mrf.mxu0
        %v3770 = vpop.f32.mrf.mxu0
        %v3771 = vadd.f32 0.0, %v3770
        %v3772 = vpop.f32.mrf.mxu0
        %3773 = vmatprep.mubr.bf16.mxu0 0
        %3774 = vmatmul.mubr.bf16.gmra.mxu0 %v3652
        %v3775 = vpop.f32.mrf.mxu0
        %v3776 = vadd.f32 0.0, %v3775
        %v3777 = vpop.f32.mrf.mxu0
        %v3778 = vpop.f32.mrf.mxu0
        %v3779 = vadd.f32 0.0, %v3778
        %v3780 = vpop.f32.mrf.mxu0
        %3781 = vmatprep.mubr.bf16.mxu0 0
        %3782 = vmatmul.mubr.bf16.gmra.mxu0 %v3656
        %v3783 = vpop.f32.mrf.mxu0
        %v3784 = vadd.f32 0.0, %v3783
        %v3785 = vpop.f32.mrf.mxu0
        %v3786 = vpop.f32.mrf.mxu0
        %v3787 = vadd.f32 0.0, %v3786
        %v3788 = vpop.f32.mrf.mxu0
        %3789 = vmatprep.mubr.bf16.mxu0 0
        %3790 = vmatmul.mubr.bf16.gmra.mxu0 %v3662
        %v3791 = vpop.f32.mrf.mxu0
        %v3792 = vadd.f32 0.0, %v3791
        %v3793 = vpop.f32.mrf.mxu0
        %v3794 = vpop.f32.mrf.mxu0
        %v3795 = vadd.f32 0.0, %v3794
        %v3796 = vpop.f32.mrf.mxu0
        %3797 = vdwg.mxu0
        %v3798 = vadd.f32 %v3605, %v3752
        %v3799 = vadd.f32 %v3606, %v3755
        %v3800 = vadd.f32 %v3607, %v3760
        %v3801 = vadd.f32 %v3608, %v3763
        %v3802 = vadd.f32 %v3609, %v3768
        %v3803 = vadd.f32 %v3610, %v3771
        %v3804 = vadd.f32 %v3611, %v3776
        %v3805 = vadd.f32 %v3612, %v3779
        %v3806 = vadd.f32 %v3613, %v3784
        %v3807 = vadd.f32 %v3614, %v3787
        %v3808 = vadd.f32 %v3615, %v3792
        %v3809 = vadd.f32 %v3616, %v3795
        %s3810 = scalar_lea.vmem [#allocation3], 256
        %v3811 = vld [vmem:[%s3810] sm:$0xf]
        %v3812 = vld [vmem:[%s3810 + $0x4] sm:$0xf]
        %v3813 = vld [vmem:[%s3810 + $0x8] sm:$0xf]
        %v3814 = vld [vmem:[%s3810 + $0xc] sm:$0xf]
        %v3815 = vld [vmem:[%s3810 + $0x10] sm:$0xf]
        %v3816 = vld [vmem:[%s3810 + $0x14] sm:$0xf]
        %v3817 = vld [vmem:[%s3810 + $0x18] sm:$0xf]
        %v3818 = vld [vmem:[%s3810 + $0x1c] sm:$0xf]
        %v3819 = vld [vmem:[%s3810 + $0x20] sm:$0xf]
        %v3820 = vld [vmem:[%s3810 + $0x24] sm:$0xf]
        %v3821 = vld [vmem:[%s3810 + $0x28] sm:$0xf]
        %v3822 = vld [vmem:[%s3810 + $0x2c] sm:$0xf]
        %v3823 = vld [vmem:[%s3810 + $0x30] sm:$0xf]
        %v3824 = vld [vmem:[%s3810 + $0x34] sm:$0xf]
        %v3825 = vld [vmem:[%s3810 + $0x38] sm:$0xf]
        %v3826 = vld [vmem:[%s3810 + $0x3c] sm:$0xf]
        %v3827 = vrot.slane %v3077, 2
        %v3828 = vrot.slane %v3078, 2
        %v3829 = vsel %vm2081, %v3827, %v3828
        %v3830 = vrot.slane %v3079, 2
        %v3831 = vsel %vm2081, %v3828, %v3830
        %v3832 = vrot.slane %v3080, 2
        %v3833 = vsel %vm2081, %v3830, %v3832
        %v3834 = vrot.slane %v3081, 2
        %v3835 = vsel %vm2081, %v3832, %v3834
        %v3836 = vrot.slane %v3082, 2
        %v3837 = vsel %vm2081, %v3834, %v3836
        %v3838 = vrot.slane %v3099, 2
        %v3839 = vsel %vm2081, %v3836, %v3838
        %v3862 = vunpack.c.l.b16 %v3811
        %v3863 = vunpack.c.l.b16 %v3812
        %v3864 = vunpack.c.l.b16 %v3813
        %v3865 = vunpack.c.l.b16 %v3814
        %v3866 = vunpack.c.l.b16 %v3815
        %v3867 = vunpack.c.l.b16 %v3816
        %v3868 = vunpack.c.l.b16 %v3817
        %v3869 = vunpack.c.l.b16 %v3818
        %v3870 = vunpack.c.l.b16 %v3819
        %v3871 = vunpack.c.l.b16 %v3820
        %v3872 = vunpack.c.l.b16 %v3821
        %v3873 = vunpack.c.l.b16 %v3822
        %v3874 = vunpack.c.l.b16 %v3823
        %v3875 = vunpack.c.l.b16 %v3824
        %v3876 = vunpack.c.l.b16 %v3825
        %v3877 = vunpack.c.l.b16 %v3826
        %v3878 = vpack.c.b16 %v3863, %v3862
        %v3879 = vpack.c.b16 %v3865, %v3864
        %v3880 = vpack.c.b16 %v3867, %v3866
        %v3881 = vpack.c.b16 %v3869, %v3868
        %v3882 = vpack.c.b16 %v3871, %v3870
        %v3883 = vpack.c.b16 %v3873, %v3872
        %v3884 = vpack.c.b16 %v3875, %v3874
        %v3885 = vpack.c.b16 %v3877, %v3876
        %3894 = vmatprep.subr.bf16.mxu0 0
        %3895 = vmatpush1.bf16.msra.mxu0 %v3885
        %3896 = vmatprep.subr.bf16.mxu0 0
        %3897 = vmatpush1.bf16.msra.mxu0 %v3884
        %3898 = vmatprep.subr.bf16.mxu0 0
        %3899 = vmatpush1.bf16.msra.mxu0 %v3883
        %3900 = vmatprep.subr.bf16.mxu0 0
        %3901 = vmatpush1.bf16.msra.mxu0 %v3882
        %3902 = vmatprep.subr.bf16.mxu0 0
        %3903 = vmatpush1.bf16.msra.mxu0 %v3881
        %3904 = vmatprep.subr.bf16.mxu0 0
        %3905 = vmatpush1.bf16.msra.mxu0 %v3880
        %3906 = vmatprep.subr.bf16.mxu0 0
        %3907 = vmatpush1.bf16.msra.mxu0 %v3879
        %3908 = vmatprep.subr.bf16.mxu0 0
        %3909 = vmatpush1.bf16.msra.mxu0 %v3878
        %3910 = vmatprep.subr.bf16.mxu0 0
        %3911 = vmatpush2.bf16.msra.mxu0 0
        %3912 = vmatprep.subr.bf16.mxu0 0
        %3913 = vmatpush2.bf16.msra.mxu0 0
        %3914 = vmatprep.subr.bf16.mxu0 0
        %3915 = vmatpush2.bf16.msra.mxu0 0
        %3916 = vmatprep.subr.bf16.mxu0 0
        %3917 = vmatpush2.bf16.msra.mxu0 0
        %3918 = vmatprep.subr.bf16.mxu0 0
        %3919 = vmatpush2.bf16.msra.mxu0 0
        %3920 = vmatprep.subr.bf16.mxu0 0
        %3921 = vmatpush2.bf16.msra.mxu0 0
        %3922 = vmatprep.subr.bf16.mxu0 0
        %3923 = vmatpush2.bf16.msra.mxu0 0
        %3924 = vmatprep.subr.bf16.mxu0 0
        %3925 = vmatpush2.bf16.msra.mxu0 0
        %3926 = vmatprep.mubr.bf16.mxu0 0
        %3927 = vmatmul.mubr.bf16.gmra.mxu0 %v3829
        %v3928 = vpop.f32.mrf.mxu0
        %v3929 = vadd.f32 0.0, %v3928
        %v3930 = vpop.f32.mrf.mxu0
        %v3931 = vpop.f32.mrf.mxu0
        %v3932 = vadd.f32 0.0, %v3931
        %v3933 = vpop.f32.mrf.mxu0
        %3934 = vmatprep.mubr.bf16.mxu0 0
        %3935 = vmatmul.mubr.bf16.gmra.mxu0 %v3831
        %v3936 = vpop.f32.mrf.mxu0
        %v3937 = vadd.f32 0.0, %v3936
        %v3938 = vpop.f32.mrf.mxu0
        %v3939 = vpop.f32.mrf.mxu0
        %v3940 = vadd.f32 0.0, %v3939
        %v3941 = vpop.f32.mrf.mxu0
        %3942 = vmatprep.mubr.bf16.mxu0 0
        %3943 = vmatmul.mubr.bf16.gmra.mxu0 %v3833
        %v3944 = vpop.f32.mrf.mxu0
        %v3945 = vadd.f32 0.0, %v3944
        %v3946 = vpop.f32.mrf.mxu0
        %v3947 = vpop.f32.mrf.mxu0
        %v3948 = vadd.f32 0.0, %v3947
        %v3949 = vpop.f32.mrf.mxu0
        %3950 = vmatprep.mubr.bf16.mxu0 0
        %3951 = vmatmul.mubr.bf16.gmra.mxu0 %v3835
        %v3952 = vpop.f32.mrf.mxu0
        %v3953 = vadd.f32 0.0, %v3952
        %v3954 = vpop.f32.mrf.mxu0
        %v3955 = vpop.f32.mrf.mxu0
        %v3956 = vadd.f32 0.0, %v3955
        %v3957 = vpop.f32.mrf.mxu0
        %3958 = vmatprep.mubr.bf16.mxu0 0
        %3959 = vmatmul.mubr.bf16.gmra.mxu0 %v3837
        %v3960 = vpop.f32.mrf.mxu0
        %v3961 = vadd.f32 0.0, %v3960
        %v3962 = vpop.f32.mrf.mxu0
        %v3963 = vpop.f32.mrf.mxu0
        %v3964 = vadd.f32 0.0, %v3963
        %v3965 = vpop.f32.mrf.mxu0
        %3966 = vmatprep.mubr.bf16.mxu0 0
        %3967 = vmatmul.mubr.bf16.gmra.mxu0 %v3839
        %v3968 = vpop.f32.mrf.mxu0
        %v3969 = vadd.f32 0.0, %v3968
        %v3970 = vpop.f32.mrf.mxu0
        %v3971 = vpop.f32.mrf.mxu0
        %v3972 = vadd.f32 0.0, %v3971
        %v3973 = vpop.f32.mrf.mxu0
        %3974 = vdwg.mxu0
        %v3975 = vadd.f32 %v3798, %v3929
        %v3976 = vadd.f32 %v3799, %v3932
        %v3977 = vadd.f32 %v3800, %v3937
        %v3978 = vadd.f32 %v3801, %v3940
        %v3979 = vadd.f32 %v3802, %v3945
        %v3980 = vadd.f32 %v3803, %v3948
        %v3981 = vadd.f32 %v3804, %v3953
        %v3982 = vadd.f32 %v3805, %v3956
        %v3983 = vadd.f32 %v3806, %v3961
        %v3984 = vadd.f32 %v3807, %v3964
        %v3985 = vadd.f32 %v3808, %v3969
        %v3986 = vadd.f32 %v3809, %v3972
        %s3987 = scalar_lea.vmem [#allocation3], 320
        %v3988 = vld [vmem:[%s3987] sm:$0xf]
        %v3989 = vld [vmem:[%s3987 + $0x4] sm:$0xf]
        %v3990 = vld [vmem:[%s3987 + $0x8] sm:$0xf]
        %v3991 = vld [vmem:[%s3987 + $0xc] sm:$0xf]
        %v3992 = vld [vmem:[%s3987 + $0x10] sm:$0xf]
        %v3993 = vld [vmem:[%s3987 + $0x14] sm:$0xf]
        %v3994 = vld [vmem:[%s3987 + $0x18] sm:$0xf]
        %v3995 = vld [vmem:[%s3987 + $0x1c] sm:$0xf]
        %v3996 = vld [vmem:[%s3987 + $0x20] sm:$0xf]
        %v3997 = vld [vmem:[%s3987 + $0x24] sm:$0xf]
        %v3998 = vld [vmem:[%s3987 + $0x28] sm:$0xf]
        %v3999 = vld [vmem:[%s3987 + $0x2c] sm:$0xf]
        %v4000 = vld [vmem:[%s3987 + $0x30] sm:$0xf]
        %v4001 = vld [vmem:[%s3987 + $0x34] sm:$0xf]
        %v4002 = vld [vmem:[%s3987 + $0x38] sm:$0xf]
        %v4003 = vld [vmem:[%s3987 + $0x3c] sm:$0xf]
        %v4004 = vrot.slane %v3118, 2
        %v4005 = vrot.slane %v3120, 3
        %v4006 = vor.u32 %v4004, %v4005
        %v4007 = vrot.slane %v3129, 2
        %v4008 = vrot.slane %v3125, 3
        %v4009 = vor.u32 %v4007, %v4008
        %v4010 = vsel %vm2337, %v4006, %v4009
        %v4011 = vrot.slane %v3137, 2
        %v4012 = vrot.slane %v3133, 3
        %v4013 = vor.u32 %v4011, %v4012
        %v4014 = vsel %vm2337, %v4009, %v4013
        %v4015 = vrot.slane %v3145, 2
        %v4016 = vrot.slane %v3141, 3
        %v4017 = vor.u32 %v4015, %v4016
        %v4018 = vsel %vm2337, %v4013, %v4017
        %v4019 = vrot.slane %v3153, 2
        %v4020 = vrot.slane %v3149, 3
        %v4021 = vor.u32 %v4019, %v4020
        %v4022 = vsel %vm2337, %v4017, %v4021
        %v4023 = vrot.slane %v3161, 2
        %v4024 = vrot.slane %v3157, 3
        %v4025 = vor.u32 %v4023, %v4024
        %v4026 = vsel %vm2337, %v4021, %v4025
        %v4027 = vrot.slane %v3657, 2
        %v4028 = vrot.slane %v3165, 3
        %v4029 = vor.u32 %v4027, %v4028
        %v4030 = vsel %vm2337, %v4025, %v4029
        %v4053 = vunpack.c.l.b16 %v3988
        %v4054 = vunpack.c.l.b16 %v3989
        %v4055 = vunpack.c.l.b16 %v3990
        %v4056 = vunpack.c.l.b16 %v3991
        %v4057 = vunpack.c.l.b16 %v3992
        %v4058 = vunpack.c.l.b16 %v3993
        %v4059 = vunpack.c.l.b16 %v3994
        %v4060 = vunpack.c.l.b16 %v3995
        %v4061 = vunpack.c.l.b16 %v3996
        %v4062 = vunpack.c.l.b16 %v3997
        %v4063 = vunpack.c.l.b16 %v3998
        %v4064 = vunpack.c.l.b16 %v3999
        %v4065 = vunpack.c.l.b16 %v4000
        %v4066 = vunpack.c.l.b16 %v4001
        %v4067 = vunpack.c.l.b16 %v4002
        %v4068 = vunpack.c.l.b16 %v4003
        %v4069 = vpack.c.b16 %v4054, %v4053
        %v4070 = vpack.c.b16 %v4056, %v4055
        %v4071 = vpack.c.b16 %v4058, %v4057
        %v4072 = vpack.c.b16 %v4060, %v4059
        %v4073 = vpack.c.b16 %v4062, %v4061
        %v4074 = vpack.c.b16 %v4064, %v4063
        %v4075 = vpack.c.b16 %v4066, %v4065
        %v4076 = vpack.c.b16 %v4068, %v4067
        %4085 = vmatprep.subr.bf16.mxu0 0
        %4086 = vmatpush1.bf16.msra.mxu0 %v4076
        %4087 = vmatprep.subr.bf16.mxu0 0
        %4088 = vmatpush1.bf16.msra.mxu0 %v4075
        %4089 = vmatprep.subr.bf16.mxu0 0
        %4090 = vmatpush1.bf16.msra.mxu0 %v4074
        %4091 = vmatprep.subr.bf16.mxu0 0
        %4092 = vmatpush1.bf16.msra.mxu0 %v4073
        %4093 = vmatprep.subr.bf16.mxu0 0
        %4094 = vmatpush1.bf16.msra.mxu0 %v4072
        %4095 = vmatprep.subr.bf16.mxu0 0
        %4096 = vmatpush1.bf16.msra.mxu0 %v4071
        %4097 = vmatprep.subr.bf16.mxu0 0
        %4098 = vmatpush1.bf16.msra.mxu0 %v4070
        %4099 = vmatprep.subr.bf16.mxu0 0
        %4100 = vmatpush1.bf16.msra.mxu0 %v4069
        %4101 = vmatprep.subr.bf16.mxu0 0
        %4102 = vmatpush2.bf16.msra.mxu0 0
        %4103 = vmatprep.subr.bf16.mxu0 0
        %4104 = vmatpush2.bf16.msra.mxu0 0
        %4105 = vmatprep.subr.bf16.mxu0 0
        %4106 = vmatpush2.bf16.msra.mxu0 0
        %4107 = vmatprep.subr.bf16.mxu0 0
        %4108 = vmatpush2.bf16.msra.mxu0 0
        %4109 = vmatprep.subr.bf16.mxu0 0
        %4110 = vmatpush2.bf16.msra.mxu0 0
        %4111 = vmatprep.subr.bf16.mxu0 0
        %4112 = vmatpush2.bf16.msra.mxu0 0
        %4113 = vmatprep.subr.bf16.mxu0 0
        %4114 = vmatpush2.bf16.msra.mxu0 0
        %4115 = vmatprep.subr.bf16.mxu0 0
        %4116 = vmatpush2.bf16.msra.mxu0 0
        %4117 = vmatprep.mubr.bf16.mxu0 0
        %4118 = vmatmul.mubr.bf16.gmra.mxu0 %v4010
        %v4119 = vpop.f32.mrf.mxu0
        %v4120 = vadd.f32 0.0, %v4119
        %v4121 = vpop.f32.mrf.mxu0
        %v4122 = vpop.f32.mrf.mxu0
        %v4123 = vadd.f32 0.0, %v4122
        %v4124 = vpop.f32.mrf.mxu0
        %4125 = vmatprep.mubr.bf16.mxu0 0
        %4126 = vmatmul.mubr.bf16.gmra.mxu0 %v4014
        %v4127 = vpop.f32.mrf.mxu0
        %v4128 = vadd.f32 0.0, %v4127
        %v4129 = vpop.f32.mrf.mxu0
        %v4130 = vpop.f32.mrf.mxu0
        %v4131 = vadd.f32 0.0, %v4130
        %v4132 = vpop.f32.mrf.mxu0
        %4133 = vmatprep.mubr.bf16.mxu0 0
        %4134 = vmatmul.mubr.bf16.gmra.mxu0 %v4018
        %v4135 = vpop.f32.mrf.mxu0
        %v4136 = vadd.f32 0.0, %v4135
        %v4137 = vpop.f32.mrf.mxu0
        %v4138 = vpop.f32.mrf.mxu0
        %v4139 = vadd.f32 0.0, %v4138
        %v4140 = vpop.f32.mrf.mxu0
        %4141 = vmatprep.mubr.bf16.mxu0 0
        %4142 = vmatmul.mubr.bf16.gmra.mxu0 %v4022
        %v4143 = vpop.f32.mrf.mxu0
        %v4144 = vadd.f32 0.0, %v4143
        %v4145 = vpop.f32.mrf.mxu0
        %v4146 = vpop.f32.mrf.mxu0
        %v4147 = vadd.f32 0.0, %v4146
        %v4148 = vpop.f32.mrf.mxu0
        %4149 = vmatprep.mubr.bf16.mxu0 0
        %4150 = vmatmul.mubr.bf16.gmra.mxu0 %v4026
        %v4151 = vpop.f32.mrf.mxu0
        %v4152 = vadd.f32 0.0, %v4151
        %v4153 = vpop.f32.mrf.mxu0
        %v4154 = vpop.f32.mrf.mxu0
        %v4155 = vadd.f32 0.0, %v4154
        %v4156 = vpop.f32.mrf.mxu0
        %4157 = vmatprep.mubr.bf16.mxu0 0
        %4158 = vmatmul.mubr.bf16.gmra.mxu0 %v4030
        %v4159 = vpop.f32.mrf.mxu0
        %v4160 = vadd.f32 0.0, %v4159
        %v4161 = vpop.f32.mrf.mxu0
        %v4162 = vpop.f32.mrf.mxu0
        %v4163 = vadd.f32 0.0, %v4162
        %v4164 = vpop.f32.mrf.mxu0
        %4165 = vdwg.mxu0
        %v4166 = vadd.f32 %v3975, %v4120
        %v4167 = vadd.f32 %v3976, %v4123
        %v4168 = vadd.f32 %v3977, %v4128
        %v4169 = vadd.f32 %v3978, %v4131
        %v4170 = vadd.f32 %v3979, %v4136
        %v4171 = vadd.f32 %v3980, %v4139
        %v4172 = vadd.f32 %v3981, %v4144
        %v4173 = vadd.f32 %v3982, %v4147
        %v4174 = vadd.f32 %v3983, %v4152
        %v4175 = vadd.f32 %v3984, %v4155
        %v4176 = vadd.f32 %v3985, %v4160
        %v4177 = vadd.f32 %v3986, %v4163
        %s4178 = scalar_lea.vmem [#allocation3], 384
        %v4179 = vld [vmem:[%s4178] sm:$0xf]
        %v4180 = vld [vmem:[%s4178 + $0x4] sm:$0xf]
        %v4181 = vld [vmem:[%s4178 + $0x8] sm:$0xf]
        %v4182 = vld [vmem:[%s4178 + $0xc] sm:$0xf]
        %v4183 = vld [vmem:[%s4178 + $0x10] sm:$0xf]
        %v4184 = vld [vmem:[%s4178 + $0x14] sm:$0xf]
        %v4185 = vld [vmem:[%s4178 + $0x18] sm:$0xf]
        %v4186 = vld [vmem:[%s4178 + $0x1c] sm:$0xf]
        %v4187 = vld [vmem:[%s4178 + $0x20] sm:$0xf]
        %v4188 = vld [vmem:[%s4178 + $0x24] sm:$0xf]
        %v4189 = vld [vmem:[%s4178 + $0x28] sm:$0xf]
        %v4190 = vld [vmem:[%s4178 + $0x2c] sm:$0xf]
        %v4191 = vld [vmem:[%s4178 + $0x30] sm:$0xf]
        %v4192 = vld [vmem:[%s4178 + $0x34] sm:$0xf]
        %v4193 = vld [vmem:[%s4178 + $0x38] sm:$0xf]
        %v4194 = vld [vmem:[%s4178 + $0x3c] sm:$0xf]
        %v4195 = vrot.slane %v3077, 3
        %v4196 = vrot.slane %v3078, 3
        %v4197 = vsel %vm2619, %v4195, %v4196
        %v4198 = vrot.slane %v3079, 3
        %v4199 = vsel %vm2619, %v4196, %v4198
        %v4200 = vrot.slane %v3080, 3
        %v4201 = vsel %vm2619, %v4198, %v4200
        %v4202 = vrot.slane %v3081, 3
        %v4203 = vsel %vm2619, %v4200, %v4202
        %v4204 = vrot.slane %v3082, 3
        %v4205 = vsel %vm2619, %v4202, %v4204
        %v4206 = vrot.slane %v3099, 3
        %v4207 = vsel %vm2619, %v4204, %v4206
        %v4230 = vunpack.c.l.b16 %v4179
        %v4231 = vunpack.c.l.b16 %v4180
        %v4232 = vunpack.c.l.b16 %v4181
        %v4233 = vunpack.c.l.b16 %v4182
        %v4234 = vunpack.c.l.b16 %v4183
        %v4235 = vunpack.c.l.b16 %v4184
        %v4236 = vunpack.c.l.b16 %v4185
        %v4237 = vunpack.c.l.b16 %v4186
        %v4238 = vunpack.c.l.b16 %v4187
        %v4239 = vunpack.c.l.b16 %v4188
        %v4240 = vunpack.c.l.b16 %v4189
        %v4241 = vunpack.c.l.b16 %v4190
        %v4242 = vunpack.c.l.b16 %v4191
        %v4243 = vunpack.c.l.b16 %v4192
        %v4244 = vunpack.c.l.b16 %v4193
        %v4245 = vunpack.c.l.b16 %v4194
        %v4246 = vpack.c.b16 %v4231, %v4230
        %v4247 = vpack.c.b16 %v4233, %v4232
        %v4248 = vpack.c.b16 %v4235, %v4234
        %v4249 = vpack.c.b16 %v4237, %v4236
        %v4250 = vpack.c.b16 %v4239, %v4238
        %v4251 = vpack.c.b16 %v4241, %v4240
        %v4252 = vpack.c.b16 %v4243, %v4242
        %v4253 = vpack.c.b16 %v4245, %v4244
        %4262 = vmatprep.subr.bf16.mxu0 0
        %4263 = vmatpush1.bf16.msra.mxu0 %v4253
        %4264 = vmatprep.subr.bf16.mxu0 0
        %4265 = vmatpush1.bf16.msra.mxu0 %v4252
        %4266 = vmatprep.subr.bf16.mxu0 0
        %4267 = vmatpush1.bf16.msra.mxu0 %v4251
        %4268 = vmatprep.subr.bf16.mxu0 0
        %4269 = vmatpush1.bf16.msra.mxu0 %v4250
        %4270 = vmatprep.subr.bf16.mxu0 0
        %4271 = vmatpush1.bf16.msra.mxu0 %v4249
        %4272 = vmatprep.subr.bf16.mxu0 0
        %4273 = vmatpush1.bf16.msra.mxu0 %v4248
        %4274 = vmatprep.subr.bf16.mxu0 0
        %4275 = vmatpush1.bf16.msra.mxu0 %v4247
        %4276 = vmatprep.subr.bf16.mxu0 0
        %4277 = vmatpush1.bf16.msra.mxu0 %v4246
        %4278 = vmatprep.subr.bf16.mxu0 0
        %4279 = vmatpush2.bf16.msra.mxu0 0
        %4280 = vmatprep.subr.bf16.mxu0 0
        %4281 = vmatpush2.bf16.msra.mxu0 0
        %4282 = vmatprep.subr.bf16.mxu0 0
        %4283 = vmatpush2.bf16.msra.mxu0 0
        %4284 = vmatprep.subr.bf16.mxu0 0
        %4285 = vmatpush2.bf16.msra.mxu0 0
        %4286 = vmatprep.subr.bf16.mxu0 0
        %4287 = vmatpush2.bf16.msra.mxu0 0
        %4288 = vmatprep.subr.bf16.mxu0 0
        %4289 = vmatpush2.bf16.msra.mxu0 0
        %4290 = vmatprep.subr.bf16.mxu0 0
        %4291 = vmatpush2.bf16.msra.mxu0 0
        %4292 = vmatprep.subr.bf16.mxu0 0
        %4293 = vmatpush2.bf16.msra.mxu0 0
        %4294 = vmatprep.mubr.bf16.mxu0 0
        %4295 = vmatmul.mubr.bf16.gmra.mxu0 %v4197
        %v4296 = vpop.f32.mrf.mxu0
        %v4297 = vadd.f32 0.0, %v4296
        %v4298 = vpop.f32.mrf.mxu0
        %v4299 = vpop.f32.mrf.mxu0
        %v4300 = vadd.f32 0.0, %v4299
        %v4301 = vpop.f32.mrf.mxu0
        %4302 = vmatprep.mubr.bf16.mxu0 0
        %4303 = vmatmul.mubr.bf16.gmra.mxu0 %v4199
        %v4304 = vpop.f32.mrf.mxu0
        %v4305 = vadd.f32 0.0, %v4304
        %v4306 = vpop.f32.mrf.mxu0
        %v4307 = vpop.f32.mrf.mxu0
        %v4308 = vadd.f32 0.0, %v4307
        %v4309 = vpop.f32.mrf.mxu0
        %4310 = vmatprep.mubr.bf16.mxu0 0
        %4311 = vmatmul.mubr.bf16.gmra.mxu0 %v4201
        %v4312 = vpop.f32.mrf.mxu0
        %v4313 = vadd.f32 0.0, %v4312
        %v4314 = vpop.f32.mrf.mxu0
        %v4315 = vpop.f32.mrf.mxu0
        %v4316 = vadd.f32 0.0, %v4315
        %v4317 = vpop.f32.mrf.mxu0
        %4318 = vmatprep.mubr.bf16.mxu0 0
        %4319 = vmatmul.mubr.bf16.gmra.mxu0 %v4203
        %v4320 = vpop.f32.mrf.mxu0
        %v4321 = vadd.f32 0.0, %v4320
        %v4322 = vpop.f32.mrf.mxu0
        %v4323 = vpop.f32.mrf.mxu0
        %v4324 = vadd.f32 0.0, %v4323
        %v4325 = vpop.f32.mrf.mxu0
        %4326 = vmatprep.mubr.bf16.mxu0 0
        %4327 = vmatmul.mubr.bf16.gmra.mxu0 %v4205
        %v4328 = vpop.f32.mrf.mxu0
        %v4329 = vadd.f32 0.0, %v4328
        %v4330 = vpop.f32.mrf.mxu0
        %v4331 = vpop.f32.mrf.mxu0
        %v4332 = vadd.f32 0.0, %v4331
        %v4333 = vpop.f32.mrf.mxu0
        %4334 = vmatprep.mubr.bf16.mxu0 0
        %4335 = vmatmul.mubr.bf16.gmra.mxu0 %v4207
        %v4336 = vpop.f32.mrf.mxu0
        %v4337 = vadd.f32 0.0, %v4336
        %v4338 = vpop.f32.mrf.mxu0
        %v4339 = vpop.f32.mrf.mxu0
        %v4340 = vadd.f32 0.0, %v4339
        %v4341 = vpop.f32.mrf.mxu0
        %4342 = vdwg.mxu0
        %v4343 = vadd.f32 %v4166, %v4297
        %v4344 = vadd.f32 %v4167, %v4300
        %v4345 = vadd.f32 %v4168, %v4305
        %v4346 = vadd.f32 %v4169, %v4308
        %v4347 = vadd.f32 %v4170, %v4313
        %v4348 = vadd.f32 %v4171, %v4316
        %v4349 = vadd.f32 %v4172, %v4321
        %v4350 = vadd.f32 %v4173, %v4324
        %v4351 = vadd.f32 %v4174, %v4329
        %v4352 = vadd.f32 %v4175, %v4332
        %v4353 = vadd.f32 %v4176, %v4337
        %v4354 = vadd.f32 %v4177, %v4340
        %v4355 = vld [vmem:[%s8] sm:$0x1]
        %v4357 = vlaneseq
        %v4358 = vshrl.u32 %v4357, 7
        %v4359 = vsub.s32 0, %v4358
        %v4360 = vrot.slane %v4355, %v4359
        %v4362 = vmul.f32 %v4343, %v4360
        %v4363 = vmul.f32 %v4344, %v4360
        %v4364 = vmul.f32 %v4345, %v4360
        %v4365 = vmul.f32 %v4346, %v4360
        %v4366 = vmul.f32 %v4347, %v4360
        %v4367 = vmul.f32 %v4348, %v4360
        %v4368 = vmul.f32 %v4349, %v4360
        %v4369 = vmul.f32 %v4350, %v4360
        %v4370 = vmul.f32 %v4351, %v4360
        %v4371 = vmul.f32 %v4352, %v4360
        %v4372 = vmul.f32 %v4353, %v4360
        %v4373 = vmul.f32 %v4354, %v4360
        %v4374 = vld [vmem:[%s9] sm:$0x1]
        %v4376 = vlaneseq
        %v4377 = vshrl.u32 %v4376, 7
        %v4378 = vsub.s32 0, %v4377
        %v4379 = vrot.slane %v4374, %v4378
        %v4381 = vadd.f32 %v4362, %v4379
        %v4382 = vadd.f32 %v4363, %v4379
        %v4383 = vadd.f32 %v4364, %v4379
        %v4384 = vadd.f32 %v4365, %v4379
        %v4385 = vadd.f32 %v4366, %v4379
        %v4386 = vadd.f32 %v4367, %v4379
        %v4387 = vadd.f32 %v4368, %v4379
        %v4388 = vadd.f32 %v4369, %v4379
        %v4389 = vadd.f32 %v4370, %v4379
        %v4390 = vadd.f32 %v4371, %v4379
        %v4391 = vadd.f32 %v4372, %v4379
        %v4392 = vadd.f32 %v4373, %v4379
        %v4393 = vmax.f32 %v4381, 0.0
        %v4394 = vmax.f32 %v4382, 0.0
        %v4395 = vmax.f32 %v4383, 0.0
        %v4396 = vmax.f32 %v4384, 0.0
        %v4397 = vmax.f32 %v4385, 0.0
        %v4398 = vmax.f32 %v4386, 0.0
        %v4399 = vmax.f32 %v4387, 0.0
        %v4400 = vmax.f32 %v4388, 0.0
        %v4401 = vmax.f32 %v4389, 0.0
        %v4402 = vmax.f32 %v4390, 0.0
        %v4403 = vmax.f32 %v4391, 0.0
        %v4404 = vmax.f32 %v4392, 0.0
        %4405 = vst [vmem:[#allocation2] sm:$0xff] %v4393
        %4406 = vst [vmem:[#allocation2 + $0x8] sm:$0xff] %v4394
        %4407 = vst [vmem:[#allocation2 + $0x10] sm:$0xff] %v4395
        %4408 = vst [vmem:[#allocation2 + $0x18] sm:$0xff] %v4396
        %4409 = vst [vmem:[#allocation2 + $0x20] sm:$0xff] %v4397
        %4410 = vst [vmem:[#allocation2 + $0x28] sm:$0xff] %v4398
        %4411 = vst [vmem:[#allocation2 + $0x30] sm:$0xff] %v4399
        %4412 = vst [vmem:[#allocation2 + $0x38] sm:$0xff] %v4400
        %4413 = vst [vmem:[#allocation2 + $0x40] sm:$0xff] %v4401
        %4414 = vst [vmem:[#allocation2 + $0x48] sm:$0xff] %v4402
        %4415 = vst [vmem:[#allocation2 + $0x50] sm:$0xff] %v4403
        %4416 = vst [vmem:[#allocation2 + $0x58] sm:$0xff] %v4404
        %v4417 = vld [vmem:[#allocation2] ss:$2 sm:$0xff]
        %s4418 = scalar_lea.vmem [#allocation2], 16
        %v4419 = vld [vmem:[%s4418] ss:$2 sm:$0xff]
        %s4420 = scalar_lea.vmem [#allocation2], 32
        %v4421 = vld [vmem:[%s4420] ss:$2 sm:$0xff]
        %s4422 = scalar_lea.vmem [#allocation2], 48
        %v4423 = vld [vmem:[%s4422] ss:$2 sm:$0xff]
        %s4424 = scalar_lea.vmem [#allocation2], 64
        %v4425 = vld [vmem:[%s4424] ss:$2 sm:$0xff]
        %s4426 = scalar_lea.vmem [#allocation2], 80
        %v4427 = vld [vmem:[%s4426] ss:$2 sm:$0xff]
        %v4428 = vld [vmem:[%s2991] ss:$2 sm:$0xff]
        %v4429 = vld [vmem:[%s2993] ss:$2 sm:$0xff]
        %v4430 = vld [vmem:[%s2995] ss:$2 sm:$0xff]
        %v4431 = vld [vmem:[%s2997] ss:$2 sm:$0xff]
        %v4432 = vld [vmem:[%s2999] ss:$2 sm:$0xff]
        %v4433 = vld [vmem:[%s3001] ss:$2 sm:$0xff]
        %v4434 = vmax.f32 %v4417, %v4428
        %v4435 = vmax.f32 %v4419, %v4429
        %v4436 = vmax.f32 %v4421, %v4430
        %v4437 = vmax.f32 %v4423, %v4431
        %v4438 = vmax.f32 %v4425, %v4432
        %v4439 = vmax.f32 %v4427, %v4433
        %v4446 = vrot.slane %v4434, 5
        %v4447 = vrot.slane %v4435, 5
        %v4448 = vsel %vm923, %v4446, %v4447
        %v4449 = vrot.slane %v4436, 5
        %v4450 = vsel %vm923, %v4447, %v4449
        %v4451 = vrot.slane %v4437, 5
        %v4452 = vsel %vm923, %v4449, %v4451
        %v4453 = vrot.slane %v4438, 5
        %v4454 = vsel %vm923, %v4451, %v4453
        %v4455 = vrot.slane %v4439, 5
        %v4456 = vsel %vm923, %v4453, %v4455
        %v4464 = vsel %vm923, 0.0, %v4446
        %v4465 = vsel %vm923, %v4455, 0.0
        %v4466 = vpack.c.bf16 %v4448, %v4464
        %v4467 = vpack.c.bf16 %v4452, %v4450
        %v4468 = vpack.c.bf16 %v4456, %v4454
        %v4469 = vld [vmem:[#allocation6] sm:$0xf]
        %v4470 = vld [vmem:[#allocation6 + $0x4] sm:$0xf]
        %v4471 = vld [vmem:[#allocation6 + $0x8] sm:$0xf]
        %v4472 = vld [vmem:[#allocation6 + $0xc] sm:$0xf]
        %v4473 = vld [vmem:[#allocation6 + $0x10] sm:$0xf]
        %v4474 = vld [vmem:[#allocation6 + $0x14] sm:$0xf]
        %v4475 = vld [vmem:[#allocation6 + $0x18] sm:$0xf]
        %v4476 = vld [vmem:[#allocation6 + $0x1c] sm:$0xf]
        %v4477 = vld [vmem:[#allocation6 + $0x20] sm:$0xf]
        %v4478 = vld [vmem:[#allocation6 + $0x24] sm:$0xf]
        %v4479 = vld [vmem:[#allocation6 + $0x28] sm:$0xf]
        %v4480 = vld [vmem:[#allocation6 + $0x2c] sm:$0xf]
        %v4481 = vld [vmem:[#allocation6 + $0x30] sm:$0xf]
        %v4482 = vld [vmem:[#allocation6 + $0x34] sm:$0xf]
        %v4483 = vld [vmem:[#allocation6 + $0x38] sm:$0xf]
        %v4484 = vld [vmem:[#allocation6 + $0x3c] sm:$0xf]
        %v4485 = vpack.c.bf16 %v4465, %v4465
        %s4486 = scalar_lea.vmem [#allocation6], 64
        %v4487 = vld [vmem:[%s4486] sm:$0xf]
        %v4488 = vld [vmem:[%s4486 + $0x4] sm:$0xf]
        %v4489 = vld [vmem:[%s4486 + $0x8] sm:$0xf]
        %v4490 = vld [vmem:[%s4486 + $0xc] sm:$0xf]
        %v4491 = vld [vmem:[%s4486 + $0x10] sm:$0xf]
        %v4492 = vld [vmem:[%s4486 + $0x14] sm:$0xf]
        %v4493 = vld [vmem:[%s4486 + $0x18] sm:$0xf]
        %v4494 = vld [vmem:[%s4486 + $0x1c] sm:$0xf]
        %v4495 = vld [vmem:[%s4486 + $0x20] sm:$0xf]
        %v4496 = vld [vmem:[%s4486 + $0x24] sm:$0xf]
        %v4497 = vld [vmem:[%s4486 + $0x28] sm:$0xf]
        %v4498 = vld [vmem:[%s4486 + $0x2c] sm:$0xf]
        %v4499 = vld [vmem:[%s4486 + $0x30] sm:$0xf]
        %v4500 = vld [vmem:[%s4486 + $0x34] sm:$0xf]
        %v4501 = vld [vmem:[%s4486 + $0x38] sm:$0xf]
        %v4502 = vld [vmem:[%s4486 + $0x3c] sm:$0xf]
        %v4504 = vshrl.u32 %v4466, 16
        %v4506 = vshll.u32 %v4466, 16
        %v4508 = vrot.slane %v4506, 1
        %v4509 = vor.u32 %v4504, %v4508
        %v4511 = vshll.u32 %v4467, 16
        %v4513 = vrot.slane %v4511, 1
        %v4514 = vsel %vm1044, %v4509, %v4513
        %v4515 = vshrl.u32 %v4467, 16
        %v4517 = vor.u32 %v4515, %v4513
        %v4519 = vshll.u32 %v4468, 16
        %v4521 = vrot.slane %v4519, 1
        %v4522 = vsel %vm1044, %v4517, %v4521
        %v4523 = vshrl.u32 %v4468, 16
        %v4525 = vor.u32 %v4523, %v4521
        %v4527 = vshll.u32 %v4485, 16
        %v4529 = vrot.slane %v4527, 1
        %v4530 = vsel %vm1044, %v4525, %v4529
        %v4550 = vunpack.c.l.b16 %v4487
        %v4551 = vunpack.c.l.b16 %v4488
        %v4552 = vunpack.c.l.b16 %v4489
        %v4553 = vunpack.c.l.b16 %v4490
        %v4554 = vunpack.c.l.b16 %v4491
        %v4555 = vunpack.c.l.b16 %v4492
        %v4556 = vunpack.c.l.b16 %v4493
        %v4557 = vunpack.c.l.b16 %v4494
        %v4558 = vunpack.c.l.b16 %v4495
        %v4559 = vunpack.c.l.b16 %v4496
        %v4560 = vunpack.c.l.b16 %v4497
        %v4561 = vunpack.c.l.b16 %v4498
        %v4562 = vunpack.c.l.b16 %v4499
        %v4563 = vunpack.c.l.b16 %v4500
        %v4564 = vunpack.c.l.b16 %v4501
        %v4565 = vunpack.c.l.b16 %v4502
        %v4566 = vpack.c.b16 %v4551, %v4550
        %v4567 = vpack.c.b16 %v4553, %v4552
        %v4568 = vpack.c.b16 %v4555, %v4554
        %v4569 = vpack.c.b16 %v4557, %v4556
        %v4570 = vpack.c.b16 %v4559, %v4558
        %v4571 = vpack.c.b16 %v4561, %v4560
        %v4572 = vpack.c.b16 %v4563, %v4562
        %v4573 = vpack.c.b16 %v4565, %v4564
        %4582 = vmatprep.subr.bf16.mxu0 0
        %4583 = vmatpush1.bf16.msra.mxu0 %v4573
        %4584 = vmatprep.subr.bf16.mxu0 0
        %4585 = vmatpush1.bf16.msra.mxu0 %v4572
        %4586 = vmatprep.subr.bf16.mxu0 0
        %4587 = vmatpush1.bf16.msra.mxu0 %v4571
        %4588 = vmatprep.subr.bf16.mxu0 0
        %4589 = vmatpush1.bf16.msra.mxu0 %v4570
        %4590 = vmatprep.subr.bf16.mxu0 0
        %4591 = vmatpush1.bf16.msra.mxu0 %v4569
        %4592 = vmatprep.subr.bf16.mxu0 0
        %4593 = vmatpush1.bf16.msra.mxu0 %v4568
        %4594 = vmatprep.subr.bf16.mxu0 0
        %4595 = vmatpush1.bf16.msra.mxu0 %v4567
        %4596 = vmatprep.subr.bf16.mxu0 0
        %4597 = vmatpush1.bf16.msra.mxu0 %v4566
        %4598 = vmatprep.subr.bf16.mxu0 0
        %4599 = vmatpush2.bf16.msra.mxu0 0
        %4600 = vmatprep.subr.bf16.mxu0 0
        %4601 = vmatpush2.bf16.msra.mxu0 0
        %4602 = vmatprep.subr.bf16.mxu0 0
        %4603 = vmatpush2.bf16.msra.mxu0 0
        %4604 = vmatprep.subr.bf16.mxu0 0
        %4605 = vmatpush2.bf16.msra.mxu0 0
        %4606 = vmatprep.subr.bf16.mxu0 0
        %4607 = vmatpush2.bf16.msra.mxu0 0
        %4608 = vmatprep.subr.bf16.mxu0 0
        %4609 = vmatpush2.bf16.msra.mxu0 0
        %4610 = vmatprep.subr.bf16.mxu0 0
        %4611 = vmatpush2.bf16.msra.mxu0 0
        %4612 = vmatprep.subr.bf16.mxu0 0
        %4613 = vmatpush2.bf16.msra.mxu0 0
        %4614 = vmatprep.mubr.bf16.mxu0 0
        %4615 = vmatmul.mubr.bf16.gmra.mxu0 %v4514
        %v4616 = vpop.f32.mrf.mxu0
        %v4617 = vadd.f32 0.0, %v4616
        %v4618 = vpop.f32.mrf.mxu0
        %v4619 = vpop.f32.mrf.mxu0
        %v4620 = vadd.f32 0.0, %v4619
        %v4621 = vpop.f32.mrf.mxu0
        %4622 = vmatprep.mubr.bf16.mxu0 0
        %4623 = vmatmul.mubr.bf16.gmra.mxu0 %v4522
        %v4624 = vpop.f32.mrf.mxu0
        %v4625 = vadd.f32 0.0, %v4624
        %v4626 = vpop.f32.mrf.mxu0
        %v4627 = vpop.f32.mrf.mxu0
        %v4628 = vadd.f32 0.0, %v4627
        %v4629 = vpop.f32.mrf.mxu0
        %4630 = vmatprep.mubr.bf16.mxu0 0
        %4631 = vmatmul.mubr.bf16.gmra.mxu0 %v4530
        %v4632 = vpop.f32.mrf.mxu0
        %v4633 = vadd.f32 0.0, %v4632
        %v4634 = vpop.f32.mrf.mxu0
        %v4635 = vpop.f32.mrf.mxu0
        %v4636 = vadd.f32 0.0, %v4635
        %v4637 = vpop.f32.mrf.mxu0
        %4638 = vdwg.mxu0
        %v4655 = vunpack.c.l.b16 %v4469
        %v4656 = vunpack.c.l.b16 %v4470
        %v4657 = vunpack.c.l.b16 %v4471
        %v4658 = vunpack.c.l.b16 %v4472
        %v4659 = vunpack.c.l.b16 %v4473
        %v4660 = vunpack.c.l.b16 %v4474
        %v4661 = vunpack.c.l.b16 %v4475
        %v4662 = vunpack.c.l.b16 %v4476
        %v4663 = vunpack.c.l.b16 %v4477
        %v4664 = vunpack.c.l.b16 %v4478
        %v4665 = vunpack.c.l.b16 %v4479
        %v4666 = vunpack.c.l.b16 %v4480
        %v4667 = vunpack.c.l.b16 %v4481
        %v4668 = vunpack.c.l.b16 %v4482
        %v4669 = vunpack.c.l.b16 %v4483
        %v4670 = vunpack.c.l.b16 %v4484
        %v4671 = vpack.c.b16 %v4656, %v4655
        %v4672 = vpack.c.b16 %v4658, %v4657
        %v4673 = vpack.c.b16 %v4660, %v4659
        %v4674 = vpack.c.b16 %v4662, %v4661
        %v4675 = vpack.c.b16 %v4664, %v4663
        %v4676 = vpack.c.b16 %v4666, %v4665
        %v4677 = vpack.c.b16 %v4668, %v4667
        %v4678 = vpack.c.b16 %v4670, %v4669
        %4687 = vmatprep.subr.bf16.mxu0 0
        %4688 = vmatpush1.bf16.msra.mxu0 %v4678
        %4689 = vmatprep.subr.bf16.mxu0 0
        %4690 = vmatpush1.bf16.msra.mxu0 %v4677
        %4691 = vmatprep.subr.bf16.mxu0 0
        %4692 = vmatpush1.bf16.msra.mxu0 %v4676
        %4693 = vmatprep.subr.bf16.mxu0 0
        %4694 = vmatpush1.bf16.msra.mxu0 %v4675
        %4695 = vmatprep.subr.bf16.mxu0 0
        %4696 = vmatpush1.bf16.msra.mxu0 %v4674
        %4697 = vmatprep.subr.bf16.mxu0 0
        %4698 = vmatpush1.bf16.msra.mxu0 %v4673
        %4699 = vmatprep.subr.bf16.mxu0 0
        %4700 = vmatpush1.bf16.msra.mxu0 %v4672
        %4701 = vmatprep.subr.bf16.mxu0 0
        %4702 = vmatpush1.bf16.msra.mxu0 %v4671
        %4703 = vmatprep.subr.bf16.mxu0 0
        %4704 = vmatpush2.bf16.msra.mxu0 0
        %4705 = vmatprep.subr.bf16.mxu0 0
        %4706 = vmatpush2.bf16.msra.mxu0 0
        %4707 = vmatprep.subr.bf16.mxu0 0
        %4708 = vmatpush2.bf16.msra.mxu0 0
        %4709 = vmatprep.subr.bf16.mxu0 0
        %4710 = vmatpush2.bf16.msra.mxu0 0
        %4711 = vmatprep.subr.bf16.mxu0 0
        %4712 = vmatpush2.bf16.msra.mxu0 0
        %4713 = vmatprep.subr.bf16.mxu0 0
        %4714 = vmatpush2.bf16.msra.mxu0 0
        %4715 = vmatprep.subr.bf16.mxu0 0
        %4716 = vmatpush2.bf16.msra.mxu0 0
        %4717 = vmatprep.subr.bf16.mxu0 0
        %4718 = vmatpush2.bf16.msra.mxu0 0
        %4719 = vmatprep.mubr.bf16.mxu0 0
        %4720 = vmatmul.mubr.bf16.gmra.mxu0 %v4466
        %v4721 = vpop.f32.mrf.mxu0
        %v4722 = vadd.f32 %v4617, %v4721
        %v4723 = vpop.f32.mrf.mxu0
        %v4724 = vpop.f32.mrf.mxu0
        %v4725 = vadd.f32 %v4620, %v4724
        %v4726 = vpop.f32.mrf.mxu0
        %4727 = vmatprep.mubr.bf16.mxu0 0
        %4728 = vmatmul.mubr.bf16.gmra.mxu0 %v4467
        %v4729 = vpop.f32.mrf.mxu0
        %v4730 = vadd.f32 %v4625, %v4729
        %v4731 = vpop.f32.mrf.mxu0
        %v4732 = vpop.f32.mrf.mxu0
        %v4733 = vadd.f32 %v4628, %v4732
        %v4734 = vpop.f32.mrf.mxu0
        %4735 = vmatprep.mubr.bf16.mxu0 0
        %4736 = vmatmul.mubr.bf16.gmra.mxu0 %v4468
        %v4737 = vpop.f32.mrf.mxu0
        %v4738 = vadd.f32 %v4633, %v4737
        %v4739 = vpop.f32.mrf.mxu0
        %v4740 = vpop.f32.mrf.mxu0
        %v4741 = vadd.f32 %v4636, %v4740
        %v4742 = vpop.f32.mrf.mxu0
        %4743 = vdwg.mxu0
        %s4744 = scalar_lea.vmem [#allocation6], 128
        %v4745 = vld [vmem:[%s4744] sm:$0xf]
        %v4746 = vld [vmem:[%s4744 + $0x4] sm:$0xf]
        %v4747 = vld [vmem:[%s4744 + $0x8] sm:$0xf]
        %v4748 = vld [vmem:[%s4744 + $0xc] sm:$0xf]
        %v4749 = vld [vmem:[%s4744 + $0x10] sm:$0xf]
        %v4750 = vld [vmem:[%s4744 + $0x14] sm:$0xf]
        %v4751 = vld [vmem:[%s4744 + $0x18] sm:$0xf]
        %v4752 = vld [vmem:[%s4744 + $0x1c] sm:$0xf]
        %v4753 = vld [vmem:[%s4744 + $0x20] sm:$0xf]
        %v4754 = vld [vmem:[%s4744 + $0x24] sm:$0xf]
        %v4755 = vld [vmem:[%s4744 + $0x28] sm:$0xf]
        %v4756 = vld [vmem:[%s4744 + $0x2c] sm:$0xf]
        %v4757 = vld [vmem:[%s4744 + $0x30] sm:$0xf]
        %v4758 = vld [vmem:[%s4744 + $0x34] sm:$0xf]
        %v4759 = vld [vmem:[%s4744 + $0x38] sm:$0xf]
        %v4760 = vld [vmem:[%s4744 + $0x3c] sm:$0xf]
        %v4765 = vrot.slane %v4466, 1
        %v4766 = vrot.slane %v4467, 1
        %v4767 = vsel %vm1541, %v4765, %v4766
        %v4768 = vrot.slane %v4468, 1
        %v4769 = vsel %vm1541, %v4766, %v4768
        %v4770 = vrot.slane %v4485, 1
        %v4771 = vsel %vm1541, %v4768, %v4770
        %v4791 = vunpack.c.l.b16 %v4745
        %v4792 = vunpack.c.l.b16 %v4746
        %v4793 = vunpack.c.l.b16 %v4747
        %v4794 = vunpack.c.l.b16 %v4748
        %v4795 = vunpack.c.l.b16 %v4749
        %v4796 = vunpack.c.l.b16 %v4750
        %v4797 = vunpack.c.l.b16 %v4751
        %v4798 = vunpack.c.l.b16 %v4752
        %v4799 = vunpack.c.l.b16 %v4753
        %v4800 = vunpack.c.l.b16 %v4754
        %v4801 = vunpack.c.l.b16 %v4755
        %v4802 = vunpack.c.l.b16 %v4756
        %v4803 = vunpack.c.l.b16 %v4757
        %v4804 = vunpack.c.l.b16 %v4758
        %v4805 = vunpack.c.l.b16 %v4759
        %v4806 = vunpack.c.l.b16 %v4760
        %v4807 = vpack.c.b16 %v4792, %v4791
        %v4808 = vpack.c.b16 %v4794, %v4793
        %v4809 = vpack.c.b16 %v4796, %v4795
        %v4810 = vpack.c.b16 %v4798, %v4797
        %v4811 = vpack.c.b16 %v4800, %v4799
        %v4812 = vpack.c.b16 %v4802, %v4801
        %v4813 = vpack.c.b16 %v4804, %v4803
        %v4814 = vpack.c.b16 %v4806, %v4805
        %4823 = vmatprep.subr.bf16.mxu0 0
        %4824 = vmatpush1.bf16.msra.mxu0 %v4814
        %4825 = vmatprep.subr.bf16.mxu0 0
        %4826 = vmatpush1.bf16.msra.mxu0 %v4813
        %4827 = vmatprep.subr.bf16.mxu0 0
        %4828 = vmatpush1.bf16.msra.mxu0 %v4812
        %4829 = vmatprep.subr.bf16.mxu0 0
        %4830 = vmatpush1.bf16.msra.mxu0 %v4811
        %4831 = vmatprep.subr.bf16.mxu0 0
        %4832 = vmatpush1.bf16.msra.mxu0 %v4810
        %4833 = vmatprep.subr.bf16.mxu0 0
        %4834 = vmatpush1.bf16.msra.mxu0 %v4809
        %4835 = vmatprep.subr.bf16.mxu0 0
        %4836 = vmatpush1.bf16.msra.mxu0 %v4808
        %4837 = vmatprep.subr.bf16.mxu0 0
        %4838 = vmatpush1.bf16.msra.mxu0 %v4807
        %4839 = vmatprep.subr.bf16.mxu0 0
        %4840 = vmatpush2.bf16.msra.mxu0 0
        %4841 = vmatprep.subr.bf16.mxu0 0
        %4842 = vmatpush2.bf16.msra.mxu0 0
        %4843 = vmatprep.subr.bf16.mxu0 0
        %4844 = vmatpush2.bf16.msra.mxu0 0
        %4845 = vmatprep.subr.bf16.mxu0 0
        %4846 = vmatpush2.bf16.msra.mxu0 0
        %4847 = vmatprep.subr.bf16.mxu0 0
        %4848 = vmatpush2.bf16.msra.mxu0 0
        %4849 = vmatprep.subr.bf16.mxu0 0
        %4850 = vmatpush2.bf16.msra.mxu0 0
        %4851 = vmatprep.subr.bf16.mxu0 0
        %4852 = vmatpush2.bf16.msra.mxu0 0
        %4853 = vmatprep.subr.bf16.mxu0 0
        %4854 = vmatpush2.bf16.msra.mxu0 0
        %4855 = vmatprep.mubr.bf16.mxu0 0
        %4856 = vmatmul.mubr.bf16.gmra.mxu0 %v4767
        %v4857 = vpop.f32.mrf.mxu0
        %v4858 = vadd.f32 0.0, %v4857
        %v4859 = vpop.f32.mrf.mxu0
        %v4860 = vpop.f32.mrf.mxu0
        %v4861 = vadd.f32 0.0, %v4860
        %v4862 = vpop.f32.mrf.mxu0
        %4863 = vmatprep.mubr.bf16.mxu0 0
        %4864 = vmatmul.mubr.bf16.gmra.mxu0 %v4769
        %v4865 = vpop.f32.mrf.mxu0
        %v4866 = vadd.f32 0.0, %v4865
        %v4867 = vpop.f32.mrf.mxu0
        %v4868 = vpop.f32.mrf.mxu0
        %v4869 = vadd.f32 0.0, %v4868
        %v4870 = vpop.f32.mrf.mxu0
        %4871 = vmatprep.mubr.bf16.mxu0 0
        %4872 = vmatmul.mubr.bf16.gmra.mxu0 %v4771
        %v4873 = vpop.f32.mrf.mxu0
        %v4874 = vadd.f32 0.0, %v4873
        %v4875 = vpop.f32.mrf.mxu0
        %v4876 = vpop.f32.mrf.mxu0
        %v4877 = vadd.f32 0.0, %v4876
        %v4878 = vpop.f32.mrf.mxu0
        %4879 = vdwg.mxu0
        %v4880 = vadd.f32 %v4722, %v4858
        %v4881 = vadd.f32 %v4725, %v4861
        %v4882 = vadd.f32 %v4730, %v4866
        %v4883 = vadd.f32 %v4733, %v4869
        %v4884 = vadd.f32 %v4738, %v4874
        %v4885 = vadd.f32 %v4741, %v4877
        %s4886 = scalar_lea.vmem [#allocation6], 192
        %v4887 = vld [vmem:[%s4886] sm:$0xf]
        %v4888 = vld [vmem:[%s4886 + $0x4] sm:$0xf]
        %v4889 = vld [vmem:[%s4886 + $0x8] sm:$0xf]
        %v4890 = vld [vmem:[%s4886 + $0xc] sm:$0xf]
        %v4891 = vld [vmem:[%s4886 + $0x10] sm:$0xf]
        %v4892 = vld [vmem:[%s4886 + $0x14] sm:$0xf]
        %v4893 = vld [vmem:[%s4886 + $0x18] sm:$0xf]
        %v4894 = vld [vmem:[%s4886 + $0x1c] sm:$0xf]
        %v4895 = vld [vmem:[%s4886 + $0x20] sm:$0xf]
        %v4896 = vld [vmem:[%s4886 + $0x24] sm:$0xf]
        %v4897 = vld [vmem:[%s4886 + $0x28] sm:$0xf]
        %v4898 = vld [vmem:[%s4886 + $0x2c] sm:$0xf]
        %v4899 = vld [vmem:[%s4886 + $0x30] sm:$0xf]
        %v4900 = vld [vmem:[%s4886 + $0x34] sm:$0xf]
        %v4901 = vld [vmem:[%s4886 + $0x38] sm:$0xf]
        %v4902 = vld [vmem:[%s4886 + $0x3c] sm:$0xf]
        %v4903 = vrot.slane %v4504, 1
        %v4904 = vrot.slane %v4506, 2
        %v4905 = vor.u32 %v4903, %v4904
        %v4906 = vrot.slane %v4515, 1
        %v4907 = vrot.slane %v4511, 2
        %v4908 = vor.u32 %v4906, %v4907
        %v4909 = vsel %vm1797, %v4905, %v4908
        %v4910 = vrot.slane %v4523, 1
        %v4911 = vrot.slane %v4519, 2
        %v4912 = vor.u32 %v4910, %v4911
        %v4913 = vsel %vm1797, %v4908, %v4912
        %v4914 = vshrl.u32 %v4485, 16
        %v4916 = vrot.slane %v4914, 1
        %v4917 = vrot.slane %v4527, 2
        %v4918 = vor.u32 %v4916, %v4917
        %v4919 = vsel %vm1797, %v4912, %v4918
        %v4939 = vunpack.c.l.b16 %v4887
        %v4940 = vunpack.c.l.b16 %v4888
        %v4941 = vunpack.c.l.b16 %v4889
        %v4942 = vunpack.c.l.b16 %v4890
        %v4943 = vunpack.c.l.b16 %v4891
        %v4944 = vunpack.c.l.b16 %v4892
        %v4945 = vunpack.c.l.b16 %v4893
        %v4946 = vunpack.c.l.b16 %v4894
        %v4947 = vunpack.c.l.b16 %v4895
        %v4948 = vunpack.c.l.b16 %v4896
        %v4949 = vunpack.c.l.b16 %v4897
        %v4950 = vunpack.c.l.b16 %v4898
        %v4951 = vunpack.c.l.b16 %v4899
        %v4952 = vunpack.c.l.b16 %v4900
        %v4953 = vunpack.c.l.b16 %v4901
        %v4954 = vunpack.c.l.b16 %v4902
        %v4955 = vpack.c.b16 %v4940, %v4939
        %v4956 = vpack.c.b16 %v4942, %v4941
        %v4957 = vpack.c.b16 %v4944, %v4943
        %v4958 = vpack.c.b16 %v4946, %v4945
        %v4959 = vpack.c.b16 %v4948, %v4947
        %v4960 = vpack.c.b16 %v4950, %v4949
        %v4961 = vpack.c.b16 %v4952, %v4951
        %v4962 = vpack.c.b16 %v4954, %v4953
        %4971 = vmatprep.subr.bf16.mxu0 0
        %4972 = vmatpush1.bf16.msra.mxu0 %v4962
        %4973 = vmatprep.subr.bf16.mxu0 0
        %4974 = vmatpush1.bf16.msra.mxu0 %v4961
        %4975 = vmatprep.subr.bf16.mxu0 0
        %4976 = vmatpush1.bf16.msra.mxu0 %v4960
        %4977 = vmatprep.subr.bf16.mxu0 0
        %4978 = vmatpush1.bf16.msra.mxu0 %v4959
        %4979 = vmatprep.subr.bf16.mxu0 0
        %4980 = vmatpush1.bf16.msra.mxu0 %v4958
        %4981 = vmatprep.subr.bf16.mxu0 0
        %4982 = vmatpush1.bf16.msra.mxu0 %v4957
        %4983 = vmatprep.subr.bf16.mxu0 0
        %4984 = vmatpush1.bf16.msra.mxu0 %v4956
        %4985 = vmatprep.subr.bf16.mxu0 0
        %4986 = vmatpush1.bf16.msra.mxu0 %v4955
        %4987 = vmatprep.subr.bf16.mxu0 0
        %4988 = vmatpush2.bf16.msra.mxu0 0
        %4989 = vmatprep.subr.bf16.mxu0 0
        %4990 = vmatpush2.bf16.msra.mxu0 0
        %4991 = vmatprep.subr.bf16.mxu0 0
        %4992 = vmatpush2.bf16.msra.mxu0 0
        %4993 = vmatprep.subr.bf16.mxu0 0
        %4994 = vmatpush2.bf16.msra.mxu0 0
        %4995 = vmatprep.subr.bf16.mxu0 0
        %4996 = vmatpush2.bf16.msra.mxu0 0
        %4997 = vmatprep.subr.bf16.mxu0 0
        %4998 = vmatpush2.bf16.msra.mxu0 0
        %4999 = vmatprep.subr.bf16.mxu0 0
        %5000 = vmatpush2.bf16.msra.mxu0 0
        %5001 = vmatprep.subr.bf16.mxu0 0
        %5002 = vmatpush2.bf16.msra.mxu0 0
        %5003 = vmatprep.mubr.bf16.mxu0 0
        %5004 = vmatmul.mubr.bf16.gmra.mxu0 %v4909
        %v5005 = vpop.f32.mrf.mxu0
        %v5006 = vadd.f32 0.0, %v5005
        %v5007 = vpop.f32.mrf.mxu0
        %v5008 = vpop.f32.mrf.mxu0
        %v5009 = vadd.f32 0.0, %v5008
        %v5010 = vpop.f32.mrf.mxu0
        %5011 = vmatprep.mubr.bf16.mxu0 0
        %5012 = vmatmul.mubr.bf16.gmra.mxu0 %v4913
        %v5013 = vpop.f32.mrf.mxu0
        %v5014 = vadd.f32 0.0, %v5013
        %v5015 = vpop.f32.mrf.mxu0
        %v5016 = vpop.f32.mrf.mxu0
        %v5017 = vadd.f32 0.0, %v5016
        %v5018 = vpop.f32.mrf.mxu0
        %5019 = vmatprep.mubr.bf16.mxu0 0
        %5020 = vmatmul.mubr.bf16.gmra.mxu0 %v4919
        %v5021 = vpop.f32.mrf.mxu0
        %v5022 = vadd.f32 0.0, %v5021
        %v5023 = vpop.f32.mrf.mxu0
        %v5024 = vpop.f32.mrf.mxu0
        %v5025 = vadd.f32 0.0, %v5024
        %v5026 = vpop.f32.mrf.mxu0
        %5027 = vdwg.mxu0
        %v5028 = vadd.f32 %v4880, %v5006
        %v5029 = vadd.f32 %v4881, %v5009
        %v5030 = vadd.f32 %v4882, %v5014
        %v5031 = vadd.f32 %v4883, %v5017
        %v5032 = vadd.f32 %v4884, %v5022
        %v5033 = vadd.f32 %v4885, %v5025
        %s5034 = scalar_lea.vmem [#allocation6], 256
        %v5035 = vld [vmem:[%s5034] sm:$0xf]
        %v5036 = vld [vmem:[%s5034 + $0x4] sm:$0xf]
        %v5037 = vld [vmem:[%s5034 + $0x8] sm:$0xf]
        %v5038 = vld [vmem:[%s5034 + $0xc] sm:$0xf]
        %v5039 = vld [vmem:[%s5034 + $0x10] sm:$0xf]
        %v5040 = vld [vmem:[%s5034 + $0x14] sm:$0xf]
        %v5041 = vld [vmem:[%s5034 + $0x18] sm:$0xf]
        %v5042 = vld [vmem:[%s5034 + $0x1c] sm:$0xf]
        %v5043 = vld [vmem:[%s5034 + $0x20] sm:$0xf]
        %v5044 = vld [vmem:[%s5034 + $0x24] sm:$0xf]
        %v5045 = vld [vmem:[%s5034 + $0x28] sm:$0xf]
        %v5046 = vld [vmem:[%s5034 + $0x2c] sm:$0xf]
        %v5047 = vld [vmem:[%s5034 + $0x30] sm:$0xf]
        %v5048 = vld [vmem:[%s5034 + $0x34] sm:$0xf]
        %v5049 = vld [vmem:[%s5034 + $0x38] sm:$0xf]
        %v5050 = vld [vmem:[%s5034 + $0x3c] sm:$0xf]
        %v5051 = vrot.slane %v4466, 2
        %v5052 = vrot.slane %v4467, 2
        %v5053 = vsel %vm2081, %v5051, %v5052
        %v5054 = vrot.slane %v4468, 2
        %v5055 = vsel %vm2081, %v5052, %v5054
        %v5056 = vrot.slane %v4485, 2
        %v5057 = vsel %vm2081, %v5054, %v5056
        %v5077 = vunpack.c.l.b16 %v5035
        %v5078 = vunpack.c.l.b16 %v5036
        %v5079 = vunpack.c.l.b16 %v5037
        %v5080 = vunpack.c.l.b16 %v5038
        %v5081 = vunpack.c.l.b16 %v5039
        %v5082 = vunpack.c.l.b16 %v5040
        %v5083 = vunpack.c.l.b16 %v5041
        %v5084 = vunpack.c.l.b16 %v5042
        %v5085 = vunpack.c.l.b16 %v5043
        %v5086 = vunpack.c.l.b16 %v5044
        %v5087 = vunpack.c.l.b16 %v5045
        %v5088 = vunpack.c.l.b16 %v5046
        %v5089 = vunpack.c.l.b16 %v5047
        %v5090 = vunpack.c.l.b16 %v5048
        %v5091 = vunpack.c.l.b16 %v5049
        %v5092 = vunpack.c.l.b16 %v5050
        %v5093 = vpack.c.b16 %v5078, %v5077
        %v5094 = vpack.c.b16 %v5080, %v5079
        %v5095 = vpack.c.b16 %v5082, %v5081
        %v5096 = vpack.c.b16 %v5084, %v5083
        %v5097 = vpack.c.b16 %v5086, %v5085
        %v5098 = vpack.c.b16 %v5088, %v5087
        %v5099 = vpack.c.b16 %v5090, %v5089
        %v5100 = vpack.c.b16 %v5092, %v5091
        %5109 = vmatprep.subr.bf16.mxu0 0
        %5110 = vmatpush1.bf16.msra.mxu0 %v5100
        %5111 = vmatprep.subr.bf16.mxu0 0
        %5112 = vmatpush1.bf16.msra.mxu0 %v5099
        %5113 = vmatprep.subr.bf16.mxu0 0
        %5114 = vmatpush1.bf16.msra.mxu0 %v5098
        %5115 = vmatprep.subr.bf16.mxu0 0
        %5116 = vmatpush1.bf16.msra.mxu0 %v5097
        %5117 = vmatprep.subr.bf16.mxu0 0
        %5118 = vmatpush1.bf16.msra.mxu0 %v5096
        %5119 = vmatprep.subr.bf16.mxu0 0
        %5120 = vmatpush1.bf16.msra.mxu0 %v5095
        %5121 = vmatprep.subr.bf16.mxu0 0
        %5122 = vmatpush1.bf16.msra.mxu0 %v5094
        %5123 = vmatprep.subr.bf16.mxu0 0
        %5124 = vmatpush1.bf16.msra.mxu0 %v5093
        %5125 = vmatprep.subr.bf16.mxu0 0
        %5126 = vmatpush2.bf16.msra.mxu0 0
        %5127 = vmatprep.subr.bf16.mxu0 0
        %5128 = vmatpush2.bf16.msra.mxu0 0
        %5129 = vmatprep.subr.bf16.mxu0 0
        %5130 = vmatpush2.bf16.msra.mxu0 0
        %5131 = vmatprep.subr.bf16.mxu0 0
        %5132 = vmatpush2.bf16.msra.mxu0 0
        %5133 = vmatprep.subr.bf16.mxu0 0
        %5134 = vmatpush2.bf16.msra.mxu0 0
        %5135 = vmatprep.subr.bf16.mxu0 0
        %5136 = vmatpush2.bf16.msra.mxu0 0
        %5137 = vmatprep.subr.bf16.mxu0 0
        %5138 = vmatpush2.bf16.msra.mxu0 0
        %5139 = vmatprep.subr.bf16.mxu0 0
        %5140 = vmatpush2.bf16.msra.mxu0 0
        %5141 = vmatprep.mubr.bf16.mxu0 0
        %5142 = vmatmul.mubr.bf16.gmra.mxu0 %v5053
        %v5143 = vpop.f32.mrf.mxu0
        %v5144 = vadd.f32 0.0, %v5143
        %v5145 = vpop.f32.mrf.mxu0
        %v5146 = vpop.f32.mrf.mxu0
        %v5147 = vadd.f32 0.0, %v5146
        %v5148 = vpop.f32.mrf.mxu0
        %5149 = vmatprep.mubr.bf16.mxu0 0
        %5150 = vmatmul.mubr.bf16.gmra.mxu0 %v5055
        %v5151 = vpop.f32.mrf.mxu0
        %v5152 = vadd.f32 0.0, %v5151
        %v5153 = vpop.f32.mrf.mxu0
        %v5154 = vpop.f32.mrf.mxu0
        %v5155 = vadd.f32 0.0, %v5154
        %v5156 = vpop.f32.mrf.mxu0
        %5157 = vmatprep.mubr.bf16.mxu0 0
        %5158 = vmatmul.mubr.bf16.gmra.mxu0 %v5057
        %v5159 = vpop.f32.mrf.mxu0
        %v5160 = vadd.f32 0.0, %v5159
        %v5161 = vpop.f32.mrf.mxu0
        %v5162 = vpop.f32.mrf.mxu0
        %v5163 = vadd.f32 0.0, %v5162
        %v5164 = vpop.f32.mrf.mxu0
        %5165 = vdwg.mxu0
        %v5166 = vadd.f32 %v5028, %v5144
        %v5167 = vadd.f32 %v5029, %v5147
        %v5168 = vadd.f32 %v5030, %v5152
        %v5169 = vadd.f32 %v5031, %v5155
        %v5170 = vadd.f32 %v5032, %v5160
        %v5171 = vadd.f32 %v5033, %v5163
        %s5172 = scalar_lea.vmem [#allocation6], 320
        %v5173 = vld [vmem:[%s5172] sm:$0xf]
        %v5174 = vld [vmem:[%s5172 + $0x4] sm:$0xf]
        %v5175 = vld [vmem:[%s5172 + $0x8] sm:$0xf]
        %v5176 = vld [vmem:[%s5172 + $0xc] sm:$0xf]
        %v5177 = vld [vmem:[%s5172 + $0x10] sm:$0xf]
        %v5178 = vld [vmem:[%s5172 + $0x14] sm:$0xf]
        %v5179 = vld [vmem:[%s5172 + $0x18] sm:$0xf]
        %v5180 = vld [vmem:[%s5172 + $0x1c] sm:$0xf]
        %v5181 = vld [vmem:[%s5172 + $0x20] sm:$0xf]
        %v5182 = vld [vmem:[%s5172 + $0x24] sm:$0xf]
        %v5183 = vld [vmem:[%s5172 + $0x28] sm:$0xf]
        %v5184 = vld [vmem:[%s5172 + $0x2c] sm:$0xf]
        %v5185 = vld [vmem:[%s5172 + $0x30] sm:$0xf]
        %v5186 = vld [vmem:[%s5172 + $0x34] sm:$0xf]
        %v5187 = vld [vmem:[%s5172 + $0x38] sm:$0xf]
        %v5188 = vld [vmem:[%s5172 + $0x3c] sm:$0xf]
        %v5189 = vrot.slane %v4504, 2
        %v5190 = vrot.slane %v4506, 3
        %v5191 = vor.u32 %v5189, %v5190
        %v5192 = vrot.slane %v4515, 2
        %v5193 = vrot.slane %v4511, 3
        %v5194 = vor.u32 %v5192, %v5193
        %v5195 = vsel %vm2337, %v5191, %v5194
        %v5196 = vrot.slane %v4523, 2
        %v5197 = vrot.slane %v4519, 3
        %v5198 = vor.u32 %v5196, %v5197
        %v5199 = vsel %vm2337, %v5194, %v5198
        %v5200 = vrot.slane %v4914, 2
        %v5201 = vrot.slane %v4527, 3
        %v5202 = vor.u32 %v5200, %v5201
        %v5203 = vsel %vm2337, %v5198, %v5202
        %v5223 = vunpack.c.l.b16 %v5173
        %v5224 = vunpack.c.l.b16 %v5174
        %v5225 = vunpack.c.l.b16 %v5175
        %v5226 = vunpack.c.l.b16 %v5176
        %v5227 = vunpack.c.l.b16 %v5177
        %v5228 = vunpack.c.l.b16 %v5178
        %v5229 = vunpack.c.l.b16 %v5179
        %v5230 = vunpack.c.l.b16 %v5180
        %v5231 = vunpack.c.l.b16 %v5181
        %v5232 = vunpack.c.l.b16 %v5182
        %v5233 = vunpack.c.l.b16 %v5183
        %v5234 = vunpack.c.l.b16 %v5184
        %v5235 = vunpack.c.l.b16 %v5185
        %v5236 = vunpack.c.l.b16 %v5186
        %v5237 = vunpack.c.l.b16 %v5187
        %v5238 = vunpack.c.l.b16 %v5188
        %v5239 = vpack.c.b16 %v5224, %v5223
        %v5240 = vpack.c.b16 %v5226, %v5225
        %v5241 = vpack.c.b16 %v5228, %v5227
        %v5242 = vpack.c.b16 %v5230, %v5229
        %v5243 = vpack.c.b16 %v5232, %v5231
        %v5244 = vpack.c.b16 %v5234, %v5233
        %v5245 = vpack.c.b16 %v5236, %v5235
        %v5246 = vpack.c.b16 %v5238, %v5237
        %5255 = vmatprep.subr.bf16.mxu0 0
        %5256 = vmatpush1.bf16.msra.mxu0 %v5246
        %5257 = vmatprep.subr.bf16.mxu0 0
        %5258 = vmatpush1.bf16.msra.mxu0 %v5245
        %5259 = vmatprep.subr.bf16.mxu0 0
        %5260 = vmatpush1.bf16.msra.mxu0 %v5244
        %5261 = vmatprep.subr.bf16.mxu0 0
        %5262 = vmatpush1.bf16.msra.mxu0 %v5243
        %5263 = vmatprep.subr.bf16.mxu0 0
        %5264 = vmatpush1.bf16.msra.mxu0 %v5242
        %5265 = vmatprep.subr.bf16.mxu0 0
        %5266 = vmatpush1.bf16.msra.mxu0 %v5241
        %5267 = vmatprep.subr.bf16.mxu0 0
        %5268 = vmatpush1.bf16.msra.mxu0 %v5240
        %5269 = vmatprep.subr.bf16.mxu0 0
        %5270 = vmatpush1.bf16.msra.mxu0 %v5239
        %5271 = vmatprep.subr.bf16.mxu0 0
        %5272 = vmatpush2.bf16.msra.mxu0 0
        %5273 = vmatprep.subr.bf16.mxu0 0
        %5274 = vmatpush2.bf16.msra.mxu0 0
        %5275 = vmatprep.subr.bf16.mxu0 0
        %5276 = vmatpush2.bf16.msra.mxu0 0
        %5277 = vmatprep.subr.bf16.mxu0 0
        %5278 = vmatpush2.bf16.msra.mxu0 0
        %5279 = vmatprep.subr.bf16.mxu0 0
        %5280 = vmatpush2.bf16.msra.mxu0 0
        %5281 = vmatprep.subr.bf16.mxu0 0
        %5282 = vmatpush2.bf16.msra.mxu0 0
        %5283 = vmatprep.subr.bf16.mxu0 0
        %5284 = vmatpush2.bf16.msra.mxu0 0
        %5285 = vmatprep.subr.bf16.mxu0 0
        %5286 = vmatpush2.bf16.msra.mxu0 0
        %5287 = vmatprep.mubr.bf16.mxu0 0
        %5288 = vmatmul.mubr.bf16.gmra.mxu0 %v5195
        %v5289 = vpop.f32.mrf.mxu0
        %v5290 = vadd.f32 0.0, %v5289
        %v5291 = vpop.f32.mrf.mxu0
        %v5292 = vpop.f32.mrf.mxu0
        %v5293 = vadd.f32 0.0, %v5292
        %v5294 = vpop.f32.mrf.mxu0
        %5295 = vmatprep.mubr.bf16.mxu0 0
        %5296 = vmatmul.mubr.bf16.gmra.mxu0 %v5199
        %v5297 = vpop.f32.mrf.mxu0
        %v5298 = vadd.f32 0.0, %v5297
        %v5299 = vpop.f32.mrf.mxu0
        %v5300 = vpop.f32.mrf.mxu0
        %v5301 = vadd.f32 0.0, %v5300
        %v5302 = vpop.f32.mrf.mxu0
        %5303 = vmatprep.mubr.bf16.mxu0 0
        %5304 = vmatmul.mubr.bf16.gmra.mxu0 %v5203
        %v5305 = vpop.f32.mrf.mxu0
        %v5306 = vadd.f32 0.0, %v5305
        %v5307 = vpop.f32.mrf.mxu0
        %v5308 = vpop.f32.mrf.mxu0
        %v5309 = vadd.f32 0.0, %v5308
        %v5310 = vpop.f32.mrf.mxu0
        %5311 = vdwg.mxu0
        %v5312 = vadd.f32 %v5166, %v5290
        %v5313 = vadd.f32 %v5167, %v5293
        %v5314 = vadd.f32 %v5168, %v5298
        %v5315 = vadd.f32 %v5169, %v5301
        %v5316 = vadd.f32 %v5170, %v5306
        %v5317 = vadd.f32 %v5171, %v5309
        %s5318 = scalar_lea.vmem [#allocation6], 384
        %v5319 = vld [vmem:[%s5318] sm:$0xf]
        %v5320 = vld [vmem:[%s5318 + $0x4] sm:$0xf]
        %v5321 = vld [vmem:[%s5318 + $0x8] sm:$0xf]
        %v5322 = vld [vmem:[%s5318 + $0xc] sm:$0xf]
        %v5323 = vld [vmem:[%s5318 + $0x10] sm:$0xf]
        %v5324 = vld [vmem:[%s5318 + $0x14] sm:$0xf]
        %v5325 = vld [vmem:[%s5318 + $0x18] sm:$0xf]
        %v5326 = vld [vmem:[%s5318 + $0x1c] sm:$0xf]
        %v5327 = vld [vmem:[%s5318 + $0x20] sm:$0xf]
        %v5328 = vld [vmem:[%s5318 + $0x24] sm:$0xf]
        %v5329 = vld [vmem:[%s5318 + $0x28] sm:$0xf]
        %v5330 = vld [vmem:[%s5318 + $0x2c] sm:$0xf]
        %v5331 = vld [vmem:[%s5318 + $0x30] sm:$0xf]
        %v5332 = vld [vmem:[%s5318 + $0x34] sm:$0xf]
        %v5333 = vld [vmem:[%s5318 + $0x38] sm:$0xf]
        %v5334 = vld [vmem:[%s5318 + $0x3c] sm:$0xf]
        %v5335 = vrot.slane %v4466, 3
        %v5336 = vrot.slane %v4467, 3
        %v5337 = vsel %vm2619, %v5335, %v5336
        %v5338 = vrot.slane %v4468, 3
        %v5339 = vsel %vm2619, %v5336, %v5338
        %v5340 = vrot.slane %v4485, 3
        %v5341 = vsel %vm2619, %v5338, %v5340
        %v5361 = vunpack.c.l.b16 %v5319
        %v5362 = vunpack.c.l.b16 %v5320
        %v5363 = vunpack.c.l.b16 %v5321
        %v5364 = vunpack.c.l.b16 %v5322
        %v5365 = vunpack.c.l.b16 %v5323
        %v5366 = vunpack.c.l.b16 %v5324
        %v5367 = vunpack.c.l.b16 %v5325
        %v5368 = vunpack.c.l.b16 %v5326
        %v5369 = vunpack.c.l.b16 %v5327
        %v5370 = vunpack.c.l.b16 %v5328
        %v5371 = vunpack.c.l.b16 %v5329
        %v5372 = vunpack.c.l.b16 %v5330
        %v5373 = vunpack.c.l.b16 %v5331
        %v5374 = vunpack.c.l.b16 %v5332
        %v5375 = vunpack.c.l.b16 %v5333
        %v5376 = vunpack.c.l.b16 %v5334
        %v5377 = vpack.c.b16 %v5362, %v5361
        %v5378 = vpack.c.b16 %v5364, %v5363
        %v5379 = vpack.c.b16 %v5366, %v5365
        %v5380 = vpack.c.b16 %v5368, %v5367
        %v5381 = vpack.c.b16 %v5370, %v5369
        %v5382 = vpack.c.b16 %v5372, %v5371
        %v5383 = vpack.c.b16 %v5374, %v5373
        %v5384 = vpack.c.b16 %v5376, %v5375
        %5393 = vmatprep.subr.bf16.mxu0 0
        %5394 = vmatpush1.bf16.msra.mxu0 %v5384
        %5395 = vmatprep.subr.bf16.mxu0 0
        %5396 = vmatpush1.bf16.msra.mxu0 %v5383
        %5397 = vmatprep.subr.bf16.mxu0 0
        %5398 = vmatpush1.bf16.msra.mxu0 %v5382
        %5399 = vmatprep.subr.bf16.mxu0 0
        %5400 = vmatpush1.bf16.msra.mxu0 %v5381
        %5401 = vmatprep.subr.bf16.mxu0 0
        %5402 = vmatpush1.bf16.msra.mxu0 %v5380
        %5403 = vmatprep.subr.bf16.mxu0 0
        %5404 = vmatpush1.bf16.msra.mxu0 %v5379
        %5405 = vmatprep.subr.bf16.mxu0 0
        %5406 = vmatpush1.bf16.msra.mxu0 %v5378
        %5407 = vmatprep.subr.bf16.mxu0 0
        %5408 = vmatpush1.bf16.msra.mxu0 %v5377
        %5409 = vmatprep.subr.bf16.mxu0 0
        %5410 = vmatpush2.bf16.msra.mxu0 0
        %5411 = vmatprep.subr.bf16.mxu0 0
        %5412 = vmatpush2.bf16.msra.mxu0 0
        %5413 = vmatprep.subr.bf16.mxu0 0
        %5414 = vmatpush2.bf16.msra.mxu0 0
        %5415 = vmatprep.subr.bf16.mxu0 0
        %5416 = vmatpush2.bf16.msra.mxu0 0
        %5417 = vmatprep.subr.bf16.mxu0 0
        %5418 = vmatpush2.bf16.msra.mxu0 0
        %5419 = vmatprep.subr.bf16.mxu0 0
        %5420 = vmatpush2.bf16.msra.mxu0 0
        %5421 = vmatprep.subr.bf16.mxu0 0
        %5422 = vmatpush2.bf16.msra.mxu0 0
        %5423 = vmatprep.subr.bf16.mxu0 0
        %5424 = vmatpush2.bf16.msra.mxu0 0
        %5425 = vmatprep.mubr.bf16.mxu0 0
        %5426 = vmatmul.mubr.bf16.gmra.mxu0 %v5337
        %v5427 = vpop.f32.mrf.mxu0
        %v5428 = vadd.f32 0.0, %v5427
        %v5429 = vpop.f32.mrf.mxu0
        %v5430 = vpop.f32.mrf.mxu0
        %v5431 = vadd.f32 0.0, %v5430
        %v5432 = vpop.f32.mrf.mxu0
        %5433 = vmatprep.mubr.bf16.mxu0 0
        %5434 = vmatmul.mubr.bf16.gmra.mxu0 %v5339
        %v5435 = vpop.f32.mrf.mxu0
        %v5436 = vadd.f32 0.0, %v5435
        %v5437 = vpop.f32.mrf.mxu0
        %v5438 = vpop.f32.mrf.mxu0
        %v5439 = vadd.f32 0.0, %v5438
        %v5440 = vpop.f32.mrf.mxu0
        %5441 = vmatprep.mubr.bf16.mxu0 0
        %5442 = vmatmul.mubr.bf16.gmra.mxu0 %v5341
        %v5443 = vpop.f32.mrf.mxu0
        %v5444 = vadd.f32 0.0, %v5443
        %v5445 = vpop.f32.mrf.mxu0
        %v5446 = vpop.f32.mrf.mxu0
        %v5447 = vadd.f32 0.0, %v5446
        %v5448 = vpop.f32.mrf.mxu0
        %5449 = vdwg.mxu0
        %v5450 = vadd.f32 %v5312, %v5428
        %v5451 = vadd.f32 %v5313, %v5431
        %v5452 = vadd.f32 %v5314, %v5436
        %v5453 = vadd.f32 %v5315, %v5439
        %v5454 = vadd.f32 %v5316, %v5444
        %v5455 = vadd.f32 %v5317, %v5447
        %v5456 = vld [vmem:[%s11] sm:$0x1]
        %v5458 = vlaneseq
        %v5459 = vshrl.u32 %v5458, 7
        %v5460 = vsub.s32 0, %v5459
        %v5461 = vrot.slane %v5456, %v5460
        %v5463 = vmul.f32 %v5450, %v5461
        %v5464 = vmul.f32 %v5451, %v5461
        %v5465 = vmul.f32 %v5452, %v5461
        %v5466 = vmul.f32 %v5453, %v5461
        %v5467 = vmul.f32 %v5454, %v5461
        %v5468 = vmul.f32 %v5455, %v5461
        %v5469 = vld [vmem:[%s12] sm:$0x1]
        %v5471 = vlaneseq
        %v5472 = vshrl.u32 %v5471, 7
        %v5473 = vsub.s32 0, %v5472
        %v5474 = vrot.slane %v5469, %v5473
        %v5476 = vadd.f32 %v5463, %v5474
        %v5477 = vadd.f32 %v5464, %v5474
        %v5478 = vadd.f32 %v5465, %v5474
        %v5479 = vadd.f32 %v5466, %v5474
        %v5480 = vadd.f32 %v5467, %v5474
        %v5481 = vadd.f32 %v5468, %v5474
        %v5482 = vmax.f32 %v5476, 0.0
        %v5483 = vmax.f32 %v5477, 0.0
        %v5484 = vmax.f32 %v5478, 0.0
        %v5485 = vmax.f32 %v5479, 0.0
        %v5486 = vmax.f32 %v5480, 0.0
        %v5487 = vmax.f32 %v5481, 0.0
        %5488 = vst [vmem:[#allocation2] sm:$0xff] %v5482
        %5489 = vst [vmem:[#allocation2 + $0x8] sm:$0xff] %v5483
        %5490 = vst [vmem:[#allocation2 + $0x10] sm:$0xff] %v5484
        %5491 = vst [vmem:[#allocation2 + $0x18] sm:$0xff] %v5485
        %5492 = vst [vmem:[#allocation2 + $0x20] sm:$0xff] %v5486
        %5493 = vst [vmem:[#allocation2 + $0x28] sm:$0xff] %v5487
        %v5494 = vld [vmem:[#allocation2] ss:$2 sm:$0xff]
        %v5495 = vld [vmem:[%s4418] ss:$2 sm:$0xff]
        %v5496 = vld [vmem:[%s4420] ss:$2 sm:$0xff]
        %v5497 = vld [vmem:[%s2991] ss:$2 sm:$0xff]
        %v5498 = vld [vmem:[%s2993] ss:$2 sm:$0xff]
        %v5499 = vld [vmem:[%s2995] ss:$2 sm:$0xff]
        %v5500 = vmax.f32 %v5494, %v5497
        %v5501 = vmax.f32 %v5495, %v5498
        %v5502 = vmax.f32 %v5496, %v5499
        %v5503 = vld [vmem:[%s14] sm:$0x1]
        %v5504 = vpack.c.bf16 %v5500, %v5500
        %v5505 = vld [vmem:[#allocation8] sm:$0xf]
        %v5506 = vld [vmem:[#allocation8 + $0x4] sm:$0xf]
        %v5507 = vld [vmem:[#allocation8 + $0x8] sm:$0xf]
        %v5508 = vld [vmem:[#allocation8 + $0xc] sm:$0xf]
        %v5509 = vld [vmem:[#allocation8 + $0x10] sm:$0xf]
        %v5510 = vld [vmem:[#allocation8 + $0x14] sm:$0xf]
        %v5511 = vld [vmem:[#allocation8 + $0x18] sm:$0xf]
        %v5512 = vld [vmem:[#allocation8 + $0x1c] sm:$0xf]
        %v5513 = vld [vmem:[#allocation8 + $0x20] sm:$0xf]
        %v5514 = vld [vmem:[#allocation8 + $0x24] sm:$0xf]
        %v5515 = vld [vmem:[#allocation8 + $0x28] sm:$0xf]
        %v5516 = vld [vmem:[#allocation8 + $0x2c] sm:$0xf]
        %v5517 = vld [vmem:[#allocation8 + $0x30] sm:$0xf]
        %v5518 = vld [vmem:[#allocation8 + $0x34] sm:$0xf]
        %v5519 = vld [vmem:[#allocation8 + $0x38] sm:$0xf]
        %v5520 = vld [vmem:[#allocation8 + $0x3c] sm:$0xf]
        %v5537 = vunpack.c.l.b16 %v5505
        %v5538 = vunpack.c.l.b16 %v5506
        %v5539 = vunpack.c.l.b16 %v5507
        %v5540 = vunpack.c.l.b16 %v5508
        %v5541 = vunpack.c.l.b16 %v5509
        %v5542 = vunpack.c.l.b16 %v5510
        %v5543 = vunpack.c.l.b16 %v5511
        %v5544 = vunpack.c.l.b16 %v5512
        %v5545 = vunpack.c.l.b16 %v5513
        %v5546 = vunpack.c.l.b16 %v5514
        %v5547 = vunpack.c.l.b16 %v5515
        %v5548 = vunpack.c.l.b16 %v5516
        %v5549 = vunpack.c.l.b16 %v5517
        %v5550 = vunpack.c.l.b16 %v5518
        %v5551 = vunpack.c.l.b16 %v5519
        %v5552 = vunpack.c.l.b16 %v5520
        %v5553 = vpack.c.b16 %v5538, %v5537
        %v5554 = vpack.c.b16 %v5540, %v5539
        %v5555 = vpack.c.b16 %v5542, %v5541
        %v5556 = vpack.c.b16 %v5544, %v5543
        %v5557 = vpack.c.b16 %v5546, %v5545
        %v5558 = vpack.c.b16 %v5548, %v5547
        %v5559 = vpack.c.b16 %v5550, %v5549
        %v5560 = vpack.c.b16 %v5552, %v5551
        %5569 = vmatprep.subr.bf16.mxu0 0
        %5570 = vmatpush1.bf16.msra.mxu0 %v5560
        %5571 = vmatprep.subr.bf16.mxu0 0
        %5572 = vmatpush1.bf16.msra.mxu0 %v5559
        %5573 = vmatprep.subr.bf16.mxu0 0
        %5574 = vmatpush1.bf16.msra.mxu0 %v5558
        %5575 = vmatprep.subr.bf16.mxu0 0
        %5576 = vmatpush1.bf16.msra.mxu0 %v5557
        %5577 = vmatprep.subr.bf16.mxu0 0
        %5578 = vmatpush1.bf16.msra.mxu0 %v5556
        %5579 = vmatprep.subr.bf16.mxu0 0
        %5580 = vmatpush1.bf16.msra.mxu0 %v5555
        %5581 = vmatprep.subr.bf16.mxu0 0
        %5582 = vmatpush1.bf16.msra.mxu0 %v5554
        %5583 = vmatprep.subr.bf16.mxu0 0
        %5584 = vmatpush1.bf16.msra.mxu0 %v5553
        %5585 = vmatprep.subr.bf16.mxu0 0
        %5586 = vmatpush2.bf16.msra.mxu0 0
        %5587 = vmatprep.subr.bf16.mxu0 0
        %5588 = vmatpush2.bf16.msra.mxu0 0
        %5589 = vmatprep.subr.bf16.mxu0 0
        %5590 = vmatpush2.bf16.msra.mxu0 0
        %5591 = vmatprep.subr.bf16.mxu0 0
        %5592 = vmatpush2.bf16.msra.mxu0 0
        %5593 = vmatprep.subr.bf16.mxu0 0
        %5594 = vmatpush2.bf16.msra.mxu0 0
        %5595 = vmatprep.subr.bf16.mxu0 0
        %5596 = vmatpush2.bf16.msra.mxu0 0
        %5597 = vmatprep.subr.bf16.mxu0 0
        %5598 = vmatpush2.bf16.msra.mxu0 0
        %5599 = vmatprep.subr.bf16.mxu0 0
        %5600 = vmatpush2.bf16.msra.mxu0 0
        %5601 = vmatprep.mubr.bf16.mxu0 0
        %5602 = vmatmul.mubr.bf16.gmra.mxu0 %v5504
        %v5603 = vpop.f32.mrf.mxu0
        %v5604 = vadd.f32 0.0, %v5603
        %v5605 = vpop.f32.mrf.mxu0
        %v5606 = vpop.f32.mrf.mxu0
        %v5607 = vpop.f32.mrf.mxu0
        %5608 = vdwg.mxu0
        %v5609 = vadd.f32 %v5503, %v5604
        %s5610 = scalar_lea.vmem [#allocation8], 64
        %v5611 = vld [vmem:[%s5610] sm:$0xf]
        %v5612 = vld [vmem:[%s5610 + $0x4] sm:$0xf]
        %v5613 = vld [vmem:[%s5610 + $0x8] sm:$0xf]
        %v5614 = vld [vmem:[%s5610 + $0xc] sm:$0xf]
        %v5615 = vld [vmem:[%s5610 + $0x10] sm:$0xf]
        %v5616 = vld [vmem:[%s5610 + $0x14] sm:$0xf]
        %v5617 = vld [vmem:[%s5610 + $0x18] sm:$0xf]
        %v5618 = vld [vmem:[%s5610 + $0x1c] sm:$0xf]
        %v5619 = vld [vmem:[%s5610 + $0x20] sm:$0xf]
        %v5620 = vld [vmem:[%s5610 + $0x24] sm:$0xf]
        %v5621 = vld [vmem:[%s5610 + $0x28] sm:$0xf]
        %v5622 = vld [vmem:[%s5610 + $0x2c] sm:$0xf]
        %v5623 = vld [vmem:[%s5610 + $0x30] sm:$0xf]
        %v5624 = vld [vmem:[%s5610 + $0x34] sm:$0xf]
        %v5625 = vld [vmem:[%s5610 + $0x38] sm:$0xf]
        %v5626 = vld [vmem:[%s5610 + $0x3c] sm:$0xf]
        %v5628 = vshrl.u32 %v5504, 16
        %v5647 = vunpack.c.l.b16 %v5611
        %v5648 = vunpack.c.l.b16 %v5612
        %v5649 = vunpack.c.l.b16 %v5613
        %v5650 = vunpack.c.l.b16 %v5614
        %v5651 = vunpack.c.l.b16 %v5615
        %v5652 = vunpack.c.l.b16 %v5616
        %v5653 = vunpack.c.l.b16 %v5617
        %v5654 = vunpack.c.l.b16 %v5618
        %v5655 = vunpack.c.l.b16 %v5619
        %v5656 = vunpack.c.l.b16 %v5620
        %v5657 = vunpack.c.l.b16 %v5621
        %v5658 = vunpack.c.l.b16 %v5622
        %v5659 = vunpack.c.l.b16 %v5623
        %v5660 = vunpack.c.l.b16 %v5624
        %v5661 = vunpack.c.l.b16 %v5625
        %v5662 = vunpack.c.l.b16 %v5626
        %v5663 = vpack.c.b16 %v5648, %v5647
        %v5664 = vpack.c.b16 %v5650, %v5649
        %v5665 = vpack.c.b16 %v5652, %v5651
        %v5666 = vpack.c.b16 %v5654, %v5653
        %v5667 = vpack.c.b16 %v5656, %v5655
        %v5668 = vpack.c.b16 %v5658, %v5657
        %v5669 = vpack.c.b16 %v5660, %v5659
        %v5670 = vpack.c.b16 %v5662, %v5661
        %5679 = vmatprep.subr.bf16.mxu0 0
        %5680 = vmatpush1.bf16.msra.mxu0 %v5670
        %5681 = vmatprep.subr.bf16.mxu0 0
        %5682 = vmatpush1.bf16.msra.mxu0 %v5669
        %5683 = vmatprep.subr.bf16.mxu0 0
        %5684 = vmatpush1.bf16.msra.mxu0 %v5668
        %5685 = vmatprep.subr.bf16.mxu0 0
        %5686 = vmatpush1.bf16.msra.mxu0 %v5667
        %5687 = vmatprep.subr.bf16.mxu0 0
        %5688 = vmatpush1.bf16.msra.mxu0 %v5666
        %5689 = vmatprep.subr.bf16.mxu0 0
        %5690 = vmatpush1.bf16.msra.mxu0 %v5665
        %5691 = vmatprep.subr.bf16.mxu0 0
        %5692 = vmatpush1.bf16.msra.mxu0 %v5664
        %5693 = vmatprep.subr.bf16.mxu0 0
        %5694 = vmatpush1.bf16.msra.mxu0 %v5663
        %5695 = vmatprep.subr.bf16.mxu0 0
        %5696 = vmatpush2.bf16.msra.mxu0 0
        %5697 = vmatprep.subr.bf16.mxu0 0
        %5698 = vmatpush2.bf16.msra.mxu0 0
        %5699 = vmatprep.subr.bf16.mxu0 0
        %5700 = vmatpush2.bf16.msra.mxu0 0
        %5701 = vmatprep.subr.bf16.mxu0 0
        %5702 = vmatpush2.bf16.msra.mxu0 0
        %5703 = vmatprep.subr.bf16.mxu0 0
        %5704 = vmatpush2.bf16.msra.mxu0 0
        %5705 = vmatprep.subr.bf16.mxu0 0
        %5706 = vmatpush2.bf16.msra.mxu0 0
        %5707 = vmatprep.subr.bf16.mxu0 0
        %5708 = vmatpush2.bf16.msra.mxu0 0
        %5709 = vmatprep.subr.bf16.mxu0 0
        %5710 = vmatpush2.bf16.msra.mxu0 0
        %5711 = vmatprep.mubr.bf16.mxu0 0
        %5712 = vmatmul.mubr.bf16.gmra.mxu0 %v5628
        %v5713 = vpop.f32.mrf.mxu0
        %v5714 = vadd.f32 0.0, %v5713
        %v5715 = vpop.f32.mrf.mxu0
        %v5716 = vpop.f32.mrf.mxu0
        %v5717 = vpop.f32.mrf.mxu0
        %5718 = vdwg.mxu0
        %v5719 = vadd.f32 %v5609, %v5714
        %s5720 = scalar_lea.vmem [#allocation8], 128
        %v5721 = vld [vmem:[%s5720] sm:$0xf]
        %v5722 = vld [vmem:[%s5720 + $0x4] sm:$0xf]
        %v5723 = vld [vmem:[%s5720 + $0x8] sm:$0xf]
        %v5724 = vld [vmem:[%s5720 + $0xc] sm:$0xf]
        %v5725 = vld [vmem:[%s5720 + $0x10] sm:$0xf]
        %v5726 = vld [vmem:[%s5720 + $0x14] sm:$0xf]
        %v5727 = vld [vmem:[%s5720 + $0x18] sm:$0xf]
        %v5728 = vld [vmem:[%s5720 + $0x1c] sm:$0xf]
        %v5729 = vld [vmem:[%s5720 + $0x20] sm:$0xf]
        %v5730 = vld [vmem:[%s5720 + $0x24] sm:$0xf]
        %v5731 = vld [vmem:[%s5720 + $0x28] sm:$0xf]
        %v5732 = vld [vmem:[%s5720 + $0x2c] sm:$0xf]
        %v5733 = vld [vmem:[%s5720 + $0x30] sm:$0xf]
        %v5734 = vld [vmem:[%s5720 + $0x34] sm:$0xf]
        %v5735 = vld [vmem:[%s5720 + $0x38] sm:$0xf]
        %v5736 = vld [vmem:[%s5720 + $0x3c] sm:$0xf]
        %v5738 = vrot.slane %v5504, 1
        %v5756 = vunpack.c.l.b16 %v5721
        %v5757 = vunpack.c.l.b16 %v5722
        %v5758 = vunpack.c.l.b16 %v5723
        %v5759 = vunpack.c.l.b16 %v5724
        %v5760 = vunpack.c.l.b16 %v5725
        %v5761 = vunpack.c.l.b16 %v5726
        %v5762 = vunpack.c.l.b16 %v5727
        %v5763 = vunpack.c.l.b16 %v5728
        %v5764 = vunpack.c.l.b16 %v5729
        %v5765 = vunpack.c.l.b16 %v5730
        %v5766 = vunpack.c.l.b16 %v5731
        %v5767 = vunpack.c.l.b16 %v5732
        %v5768 = vunpack.c.l.b16 %v5733
        %v5769 = vunpack.c.l.b16 %v5734
        %v5770 = vunpack.c.l.b16 %v5735
        %v5771 = vunpack.c.l.b16 %v5736
        %v5772 = vpack.c.b16 %v5757, %v5756
        %v5773 = vpack.c.b16 %v5759, %v5758
        %v5774 = vpack.c.b16 %v5761, %v5760
        %v5775 = vpack.c.b16 %v5763, %v5762
        %v5776 = vpack.c.b16 %v5765, %v5764
        %v5777 = vpack.c.b16 %v5767, %v5766
        %v5778 = vpack.c.b16 %v5769, %v5768
        %v5779 = vpack.c.b16 %v5771, %v5770
        %5788 = vmatprep.subr.bf16.mxu0 0
        %5789 = vmatpush1.bf16.msra.mxu0 %v5779
        %5790 = vmatprep.subr.bf16.mxu0 0
        %5791 = vmatpush1.bf16.msra.mxu0 %v5778
        %5792 = vmatprep.subr.bf16.mxu0 0
        %5793 = vmatpush1.bf16.msra.mxu0 %v5777
        %5794 = vmatprep.subr.bf16.mxu0 0
        %5795 = vmatpush1.bf16.msra.mxu0 %v5776
        %5796 = vmatprep.subr.bf16.mxu0 0
        %5797 = vmatpush1.bf16.msra.mxu0 %v5775
        %5798 = vmatprep.subr.bf16.mxu0 0
        %5799 = vmatpush1.bf16.msra.mxu0 %v5774
        %5800 = vmatprep.subr.bf16.mxu0 0
        %5801 = vmatpush1.bf16.msra.mxu0 %v5773
        %5802 = vmatprep.subr.bf16.mxu0 0
        %5803 = vmatpush1.bf16.msra.mxu0 %v5772
        %5804 = vmatprep.subr.bf16.mxu0 0
        %5805 = vmatpush2.bf16.msra.mxu0 0
        %5806 = vmatprep.subr.bf16.mxu0 0
        %5807 = vmatpush2.bf16.msra.mxu0 0
        %5808 = vmatprep.subr.bf16.mxu0 0
        %5809 = vmatpush2.bf16.msra.mxu0 0
        %5810 = vmatprep.subr.bf16.mxu0 0
        %5811 = vmatpush2.bf16.msra.mxu0 0
        %5812 = vmatprep.subr.bf16.mxu0 0
        %5813 = vmatpush2.bf16.msra.mxu0 0
        %5814 = vmatprep.subr.bf16.mxu0 0
        %5815 = vmatpush2.bf16.msra.mxu0 0
        %5816 = vmatprep.subr.bf16.mxu0 0
        %5817 = vmatpush2.bf16.msra.mxu0 0
        %5818 = vmatprep.subr.bf16.mxu0 0
        %5819 = vmatpush2.bf16.msra.mxu0 0
        %5820 = vmatprep.mubr.bf16.mxu0 0
        %5821 = vmatmul.mubr.bf16.gmra.mxu0 %v5738
        %v5822 = vpop.f32.mrf.mxu0
        %v5823 = vadd.f32 0.0, %v5822
        %v5824 = vpop.f32.mrf.mxu0
        %v5825 = vpop.f32.mrf.mxu0
        %v5826 = vpop.f32.mrf.mxu0
        %5827 = vdwg.mxu0
        %v5828 = vadd.f32 %v5719, %v5823
        %s5829 = scalar_lea.vmem [#allocation8], 192
        %v5830 = vld [vmem:[%s5829] sm:$0xf]
        %v5831 = vld [vmem:[%s5829 + $0x4] sm:$0xf]
        %v5832 = vld [vmem:[%s5829 + $0x8] sm:$0xf]
        %v5833 = vld [vmem:[%s5829 + $0xc] sm:$0xf]
        %v5834 = vld [vmem:[%s5829 + $0x10] sm:$0xf]
        %v5835 = vld [vmem:[%s5829 + $0x14] sm:$0xf]
        %v5836 = vld [vmem:[%s5829 + $0x18] sm:$0xf]
        %v5837 = vld [vmem:[%s5829 + $0x1c] sm:$0xf]
        %v5838 = vld [vmem:[%s5829 + $0x20] sm:$0xf]
        %v5839 = vld [vmem:[%s5829 + $0x24] sm:$0xf]
        %v5840 = vld [vmem:[%s5829 + $0x28] sm:$0xf]
        %v5841 = vld [vmem:[%s5829 + $0x2c] sm:$0xf]
        %v5842 = vld [vmem:[%s5829 + $0x30] sm:$0xf]
        %v5843 = vld [vmem:[%s5829 + $0x34] sm:$0xf]
        %v5844 = vld [vmem:[%s5829 + $0x38] sm:$0xf]
        %v5845 = vld [vmem:[%s5829 + $0x3c] sm:$0xf]
        %v5846 = vrot.slane %v5628, 1
        %v5864 = vunpack.c.l.b16 %v5830
        %v5865 = vunpack.c.l.b16 %v5831
        %v5866 = vunpack.c.l.b16 %v5832
        %v5867 = vunpack.c.l.b16 %v5833
        %v5868 = vunpack.c.l.b16 %v5834
        %v5869 = vunpack.c.l.b16 %v5835
        %v5870 = vunpack.c.l.b16 %v5836
        %v5871 = vunpack.c.l.b16 %v5837
        %v5872 = vunpack.c.l.b16 %v5838
        %v5873 = vunpack.c.l.b16 %v5839
        %v5874 = vunpack.c.l.b16 %v5840
        %v5875 = vunpack.c.l.b16 %v5841
        %v5876 = vunpack.c.l.b16 %v5842
        %v5877 = vunpack.c.l.b16 %v5843
        %v5878 = vunpack.c.l.b16 %v5844
        %v5879 = vunpack.c.l.b16 %v5845
        %v5880 = vpack.c.b16 %v5865, %v5864
        %v5881 = vpack.c.b16 %v5867, %v5866
        %v5882 = vpack.c.b16 %v5869, %v5868
        %v5883 = vpack.c.b16 %v5871, %v5870
        %v5884 = vpack.c.b16 %v5873, %v5872
        %v5885 = vpack.c.b16 %v5875, %v5874
        %v5886 = vpack.c.b16 %v5877, %v5876
        %v5887 = vpack.c.b16 %v5879, %v5878
        %5896 = vmatprep.subr.bf16.mxu0 0
        %5897 = vmatpush1.bf16.msra.mxu0 %v5887
        %5898 = vmatprep.subr.bf16.mxu0 0
        %5899 = vmatpush1.bf16.msra.mxu0 %v5886
        %5900 = vmatprep.subr.bf16.mxu0 0
        %5901 = vmatpush1.bf16.msra.mxu0 %v5885
        %5902 = vmatprep.subr.bf16.mxu0 0
        %5903 = vmatpush1.bf16.msra.mxu0 %v5884
        %5904 = vmatprep.subr.bf16.mxu0 0
        %5905 = vmatpush1.bf16.msra.mxu0 %v5883
        %5906 = vmatprep.subr.bf16.mxu0 0
        %5907 = vmatpush1.bf16.msra.mxu0 %v5882
        %5908 = vmatprep.subr.bf16.mxu0 0
        %5909 = vmatpush1.bf16.msra.mxu0 %v5881
        %5910 = vmatprep.subr.bf16.mxu0 0
        %5911 = vmatpush1.bf16.msra.mxu0 %v5880
        %5912 = vmatprep.subr.bf16.mxu0 0
        %5913 = vmatpush2.bf16.msra.mxu0 0
        %5914 = vmatprep.subr.bf16.mxu0 0
        %5915 = vmatpush2.bf16.msra.mxu0 0
        %5916 = vmatprep.subr.bf16.mxu0 0
        %5917 = vmatpush2.bf16.msra.mxu0 0
        %5918 = vmatprep.subr.bf16.mxu0 0
        %5919 = vmatpush2.bf16.msra.mxu0 0
        %5920 = vmatprep.subr.bf16.mxu0 0
        %5921 = vmatpush2.bf16.msra.mxu0 0
        %5922 = vmatprep.subr.bf16.mxu0 0
        %5923 = vmatpush2.bf16.msra.mxu0 0
        %5924 = vmatprep.subr.bf16.mxu0 0
        %5925 = vmatpush2.bf16.msra.mxu0 0
        %5926 = vmatprep.subr.bf16.mxu0 0
        %5927 = vmatpush2.bf16.msra.mxu0 0
        %5928 = vmatprep.mubr.bf16.mxu0 0
        %5929 = vmatmul.mubr.bf16.gmra.mxu0 %v5846
        %v5930 = vpop.f32.mrf.mxu0
        %v5931 = vadd.f32 0.0, %v5930
        %v5932 = vpop.f32.mrf.mxu0
        %v5933 = vpop.f32.mrf.mxu0
        %v5934 = vpop.f32.mrf.mxu0
        %5935 = vdwg.mxu0
        %v5936 = vadd.f32 %v5828, %v5931
        %s5937 = scalar_lea.vmem [#allocation8], 256
        %v5938 = vld [vmem:[%s5937] sm:$0xf]
        %v5939 = vld [vmem:[%s5937 + $0x4] sm:$0xf]
        %v5940 = vld [vmem:[%s5937 + $0x8] sm:$0xf]
        %v5941 = vld [vmem:[%s5937 + $0xc] sm:$0xf]
        %v5942 = vld [vmem:[%s5937 + $0x10] sm:$0xf]
        %v5943 = vld [vmem:[%s5937 + $0x14] sm:$0xf]
        %v5944 = vld [vmem:[%s5937 + $0x18] sm:$0xf]
        %v5945 = vld [vmem:[%s5937 + $0x1c] sm:$0xf]
        %v5946 = vld [vmem:[%s5937 + $0x20] sm:$0xf]
        %v5947 = vld [vmem:[%s5937 + $0x24] sm:$0xf]
        %v5948 = vld [vmem:[%s5937 + $0x28] sm:$0xf]
        %v5949 = vld [vmem:[%s5937 + $0x2c] sm:$0xf]
        %v5950 = vld [vmem:[%s5937 + $0x30] sm:$0xf]
        %v5951 = vld [vmem:[%s5937 + $0x34] sm:$0xf]
        %v5952 = vld [vmem:[%s5937 + $0x38] sm:$0xf]
        %v5953 = vld [vmem:[%s5937 + $0x3c] sm:$0xf]
        %v5954 = vrot.slane %v5504, 2
        %v5972 = vunpack.c.l.b16 %v5938
        %v5973 = vunpack.c.l.b16 %v5939
        %v5974 = vunpack.c.l.b16 %v5940
        %v5975 = vunpack.c.l.b16 %v5941
        %v5976 = vunpack.c.l.b16 %v5942
        %v5977 = vunpack.c.l.b16 %v5943
        %v5978 = vunpack.c.l.b16 %v5944
        %v5979 = vunpack.c.l.b16 %v5945
        %v5980 = vunpack.c.l.b16 %v5946
        %v5981 = vunpack.c.l.b16 %v5947
        %v5982 = vunpack.c.l.b16 %v5948
        %v5983 = vunpack.c.l.b16 %v5949
        %v5984 = vunpack.c.l.b16 %v5950
        %v5985 = vunpack.c.l.b16 %v5951
        %v5986 = vunpack.c.l.b16 %v5952
        %v5987 = vunpack.c.l.b16 %v5953
        %v5988 = vpack.c.b16 %v5973, %v5972
        %v5989 = vpack.c.b16 %v5975, %v5974
        %v5990 = vpack.c.b16 %v5977, %v5976
        %v5991 = vpack.c.b16 %v5979, %v5978
        %v5992 = vpack.c.b16 %v5981, %v5980
        %v5993 = vpack.c.b16 %v5983, %v5982
        %v5994 = vpack.c.b16 %v5985, %v5984
        %v5995 = vpack.c.b16 %v5987, %v5986
        %6004 = vmatprep.subr.bf16.mxu0 0
        %6005 = vmatpush1.bf16.msra.mxu0 %v5995
        %6006 = vmatprep.subr.bf16.mxu0 0
        %6007 = vmatpush1.bf16.msra.mxu0 %v5994
        %6008 = vmatprep.subr.bf16.mxu0 0
        %6009 = vmatpush1.bf16.msra.mxu0 %v5993
        %6010 = vmatprep.subr.bf16.mxu0 0
        %6011 = vmatpush1.bf16.msra.mxu0 %v5992
        %6012 = vmatprep.subr.bf16.mxu0 0
        %6013 = vmatpush1.bf16.msra.mxu0 %v5991
        %6014 = vmatprep.subr.bf16.mxu0 0
        %6015 = vmatpush1.bf16.msra.mxu0 %v5990
        %6016 = vmatprep.subr.bf16.mxu0 0
        %6017 = vmatpush1.bf16.msra.mxu0 %v5989
        %6018 = vmatprep.subr.bf16.mxu0 0
        %6019 = vmatpush1.bf16.msra.mxu0 %v5988
        %6020 = vmatprep.subr.bf16.mxu0 0
        %6021 = vmatpush2.bf16.msra.mxu0 0
        %6022 = vmatprep.subr.bf16.mxu0 0
        %6023 = vmatpush2.bf16.msra.mxu0 0
        %6024 = vmatprep.subr.bf16.mxu0 0
        %6025 = vmatpush2.bf16.msra.mxu0 0
        %6026 = vmatprep.subr.bf16.mxu0 0
        %6027 = vmatpush2.bf16.msra.mxu0 0
        %6028 = vmatprep.subr.bf16.mxu0 0
        %6029 = vmatpush2.bf16.msra.mxu0 0
        %6030 = vmatprep.subr.bf16.mxu0 0
        %6031 = vmatpush2.bf16.msra.mxu0 0
        %6032 = vmatprep.subr.bf16.mxu0 0
        %6033 = vmatpush2.bf16.msra.mxu0 0
        %6034 = vmatprep.subr.bf16.mxu0 0
        %6035 = vmatpush2.bf16.msra.mxu0 0
        %6036 = vmatprep.mubr.bf16.mxu0 0
        %6037 = vmatmul.mubr.bf16.gmra.mxu0 %v5954
        %v6038 = vpop.f32.mrf.mxu0
        %v6039 = vadd.f32 0.0, %v6038
        %v6040 = vpop.f32.mrf.mxu0
        %v6041 = vpop.f32.mrf.mxu0
        %v6042 = vpop.f32.mrf.mxu0
        %6043 = vdwg.mxu0
        %v6044 = vadd.f32 %v5936, %v6039
        %s6045 = scalar_lea.vmem [#allocation8], 320
        %v6046 = vld [vmem:[%s6045] sm:$0xf]
        %v6047 = vld [vmem:[%s6045 + $0x4] sm:$0xf]
        %v6048 = vld [vmem:[%s6045 + $0x8] sm:$0xf]
        %v6049 = vld [vmem:[%s6045 + $0xc] sm:$0xf]
        %v6050 = vld [vmem:[%s6045 + $0x10] sm:$0xf]
        %v6051 = vld [vmem:[%s6045 + $0x14] sm:$0xf]
        %v6052 = vld [vmem:[%s6045 + $0x18] sm:$0xf]
        %v6053 = vld [vmem:[%s6045 + $0x1c] sm:$0xf]
        %v6054 = vld [vmem:[%s6045 + $0x20] sm:$0xf]
        %v6055 = vld [vmem:[%s6045 + $0x24] sm:$0xf]
        %v6056 = vld [vmem:[%s6045 + $0x28] sm:$0xf]
        %v6057 = vld [vmem:[%s6045 + $0x2c] sm:$0xf]
        %v6058 = vld [vmem:[%s6045 + $0x30] sm:$0xf]
        %v6059 = vld [vmem:[%s6045 + $0x34] sm:$0xf]
        %v6060 = vld [vmem:[%s6045 + $0x38] sm:$0xf]
        %v6061 = vld [vmem:[%s6045 + $0x3c] sm:$0xf]
        %v6062 = vrot.slane %v5628, 2
        %v6080 = vunpack.c.l.b16 %v6046
        %v6081 = vunpack.c.l.b16 %v6047
        %v6082 = vunpack.c.l.b16 %v6048
        %v6083 = vunpack.c.l.b16 %v6049
        %v6084 = vunpack.c.l.b16 %v6050
        %v6085 = vunpack.c.l.b16 %v6051
        %v6086 = vunpack.c.l.b16 %v6052
        %v6087 = vunpack.c.l.b16 %v6053
        %v6088 = vunpack.c.l.b16 %v6054
        %v6089 = vunpack.c.l.b16 %v6055
        %v6090 = vunpack.c.l.b16 %v6056
        %v6091 = vunpack.c.l.b16 %v6057
        %v6092 = vunpack.c.l.b16 %v6058
        %v6093 = vunpack.c.l.b16 %v6059
        %v6094 = vunpack.c.l.b16 %v6060
        %v6095 = vunpack.c.l.b16 %v6061
        %v6096 = vpack.c.b16 %v6081, %v6080
        %v6097 = vpack.c.b16 %v6083, %v6082
        %v6098 = vpack.c.b16 %v6085, %v6084
        %v6099 = vpack.c.b16 %v6087, %v6086
        %v6100 = vpack.c.b16 %v6089, %v6088
        %v6101 = vpack.c.b16 %v6091, %v6090
        %v6102 = vpack.c.b16 %v6093, %v6092
        %v6103 = vpack.c.b16 %v6095, %v6094
        %6112 = vmatprep.subr.bf16.mxu0 0
        %6113 = vmatpush1.bf16.msra.mxu0 %v6103
        %6114 = vmatprep.subr.bf16.mxu0 0
        %6115 = vmatpush1.bf16.msra.mxu0 %v6102
        %6116 = vmatprep.subr.bf16.mxu0 0
        %6117 = vmatpush1.bf16.msra.mxu0 %v6101
        %6118 = vmatprep.subr.bf16.mxu0 0
        %6119 = vmatpush1.bf16.msra.mxu0 %v6100
        %6120 = vmatprep.subr.bf16.mxu0 0
        %6121 = vmatpush1.bf16.msra.mxu0 %v6099
        %6122 = vmatprep.subr.bf16.mxu0 0
        %6123 = vmatpush1.bf16.msra.mxu0 %v6098
        %6124 = vmatprep.subr.bf16.mxu0 0
        %6125 = vmatpush1.bf16.msra.mxu0 %v6097
        %6126 = vmatprep.subr.bf16.mxu0 0
        %6127 = vmatpush1.bf16.msra.mxu0 %v6096
        %6128 = vmatprep.subr.bf16.mxu0 0
        %6129 = vmatpush2.bf16.msra.mxu0 0
        %6130 = vmatprep.subr.bf16.mxu0 0
        %6131 = vmatpush2.bf16.msra.mxu0 0
        %6132 = vmatprep.subr.bf16.mxu0 0
        %6133 = vmatpush2.bf16.msra.mxu0 0
        %6134 = vmatprep.subr.bf16.mxu0 0
        %6135 = vmatpush2.bf16.msra.mxu0 0
        %6136 = vmatprep.subr.bf16.mxu0 0
        %6137 = vmatpush2.bf16.msra.mxu0 0
        %6138 = vmatprep.subr.bf16.mxu0 0
        %6139 = vmatpush2.bf16.msra.mxu0 0
        %6140 = vmatprep.subr.bf16.mxu0 0
        %6141 = vmatpush2.bf16.msra.mxu0 0
        %6142 = vmatprep.subr.bf16.mxu0 0
        %6143 = vmatpush2.bf16.msra.mxu0 0
        %6144 = vmatprep.mubr.bf16.mxu0 0
        %6145 = vmatmul.mubr.bf16.gmra.mxu0 %v6062
        %v6146 = vpop.f32.mrf.mxu0
        %v6147 = vadd.f32 0.0, %v6146
        %v6148 = vpop.f32.mrf.mxu0
        %v6149 = vpop.f32.mrf.mxu0
        %v6150 = vpop.f32.mrf.mxu0
        %6151 = vdwg.mxu0
        %v6152 = vadd.f32 %v6044, %v6147
        %s6153 = scalar_lea.vmem [#allocation8], 384
        %v6154 = vld [vmem:[%s6153] sm:$0xf]
        %v6155 = vld [vmem:[%s6153 + $0x4] sm:$0xf]
        %v6156 = vld [vmem:[%s6153 + $0x8] sm:$0xf]
        %v6157 = vld [vmem:[%s6153 + $0xc] sm:$0xf]
        %v6158 = vld [vmem:[%s6153 + $0x10] sm:$0xf]
        %v6159 = vld [vmem:[%s6153 + $0x14] sm:$0xf]
        %v6160 = vld [vmem:[%s6153 + $0x18] sm:$0xf]
        %v6161 = vld [vmem:[%s6153 + $0x1c] sm:$0xf]
        %v6162 = vld [vmem:[%s6153 + $0x20] sm:$0xf]
        %v6163 = vld [vmem:[%s6153 + $0x24] sm:$0xf]
        %v6164 = vld [vmem:[%s6153 + $0x28] sm:$0xf]
        %v6165 = vld [vmem:[%s6153 + $0x2c] sm:$0xf]
        %v6166 = vld [vmem:[%s6153 + $0x30] sm:$0xf]
        %v6167 = vld [vmem:[%s6153 + $0x34] sm:$0xf]
        %v6168 = vld [vmem:[%s6153 + $0x38] sm:$0xf]
        %v6169 = vld [vmem:[%s6153 + $0x3c] sm:$0xf]
        %v6170 = vrot.slane %v5504, 3
        %v6188 = vunpack.c.l.b16 %v6154
        %v6189 = vunpack.c.l.b16 %v6155
        %v6190 = vunpack.c.l.b16 %v6156
        %v6191 = vunpack.c.l.b16 %v6157
        %v6192 = vunpack.c.l.b16 %v6158
        %v6193 = vunpack.c.l.b16 %v6159
        %v6194 = vunpack.c.l.b16 %v6160
        %v6195 = vunpack.c.l.b16 %v6161
        %v6196 = vunpack.c.l.b16 %v6162
        %v6197 = vunpack.c.l.b16 %v6163
        %v6198 = vunpack.c.l.b16 %v6164
        %v6199 = vunpack.c.l.b16 %v6165
        %v6200 = vunpack.c.l.b16 %v6166
        %v6201 = vunpack.c.l.b16 %v6167
        %v6202 = vunpack.c.l.b16 %v6168
        %v6203 = vunpack.c.l.b16 %v6169
        %v6204 = vpack.c.b16 %v6189, %v6188
        %v6205 = vpack.c.b16 %v6191, %v6190
        %v6206 = vpack.c.b16 %v6193, %v6192
        %v6207 = vpack.c.b16 %v6195, %v6194
        %v6208 = vpack.c.b16 %v6197, %v6196
        %v6209 = vpack.c.b16 %v6199, %v6198
        %v6210 = vpack.c.b16 %v6201, %v6200
        %v6211 = vpack.c.b16 %v6203, %v6202
        %6220 = vmatprep.subr.bf16.mxu0 0
        %6221 = vmatpush1.bf16.msra.mxu0 %v6211
        %6222 = vmatprep.subr.bf16.mxu0 0
        %6223 = vmatpush1.bf16.msra.mxu0 %v6210
        %6224 = vmatprep.subr.bf16.mxu0 0
        %6225 = vmatpush1.bf16.msra.mxu0 %v6209
        %6226 = vmatprep.subr.bf16.mxu0 0
        %6227 = vmatpush1.bf16.msra.mxu0 %v6208
        %6228 = vmatprep.subr.bf16.mxu0 0
        %6229 = vmatpush1.bf16.msra.mxu0 %v6207
        %6230 = vmatprep.subr.bf16.mxu0 0
        %6231 = vmatpush1.bf16.msra.mxu0 %v6206
        %6232 = vmatprep.subr.bf16.mxu0 0
        %6233 = vmatpush1.bf16.msra.mxu0 %v6205
        %6234 = vmatprep.subr.bf16.mxu0 0
        %6235 = vmatpush1.bf16.msra.mxu0 %v6204
        %6236 = vmatprep.subr.bf16.mxu0 0
        %6237 = vmatpush2.bf16.msra.mxu0 0
        %6238 = vmatprep.subr.bf16.mxu0 0
        %6239 = vmatpush2.bf16.msra.mxu0 0
        %6240 = vmatprep.subr.bf16.mxu0 0
        %6241 = vmatpush2.bf16.msra.mxu0 0
        %6242 = vmatprep.subr.bf16.mxu0 0
        %6243 = vmatpush2.bf16.msra.mxu0 0
        %6244 = vmatprep.subr.bf16.mxu0 0
        %6245 = vmatpush2.bf16.msra.mxu0 0
        %6246 = vmatprep.subr.bf16.mxu0 0
        %6247 = vmatpush2.bf16.msra.mxu0 0
        %6248 = vmatprep.subr.bf16.mxu0 0
        %6249 = vmatpush2.bf16.msra.mxu0 0
        %6250 = vmatprep.subr.bf16.mxu0 0
        %6251 = vmatpush2.bf16.msra.mxu0 0
        %6252 = vmatprep.mubr.bf16.mxu0 0
        %6253 = vmatmul.mubr.bf16.gmra.mxu0 %v6170
        %v6254 = vpop.f32.mrf.mxu0
        %v6255 = vadd.f32 0.0, %v6254
        %v6256 = vpop.f32.mrf.mxu0
        %v6257 = vpop.f32.mrf.mxu0
        %v6258 = vpop.f32.mrf.mxu0
        %6259 = vdwg.mxu0
        %v6260 = vadd.f32 %v6152, %v6255
        %s6261 = scalar_lea.vmem [#allocation8], 448
        %v6262 = vld [vmem:[%s6261] sm:$0xf]
        %v6263 = vld [vmem:[%s6261 + $0x4] sm:$0xf]
        %v6264 = vld [vmem:[%s6261 + $0x8] sm:$0xf]
        %v6265 = vld [vmem:[%s6261 + $0xc] sm:$0xf]
        %v6266 = vld [vmem:[%s6261 + $0x10] sm:$0xf]
        %v6267 = vld [vmem:[%s6261 + $0x14] sm:$0xf]
        %v6268 = vld [vmem:[%s6261 + $0x18] sm:$0xf]
        %v6269 = vld [vmem:[%s6261 + $0x1c] sm:$0xf]
        %v6270 = vld [vmem:[%s6261 + $0x20] sm:$0xf]
        %v6271 = vld [vmem:[%s6261 + $0x24] sm:$0xf]
        %v6272 = vld [vmem:[%s6261 + $0x28] sm:$0xf]
        %v6273 = vld [vmem:[%s6261 + $0x2c] sm:$0xf]
        %v6274 = vld [vmem:[%s6261 + $0x30] sm:$0xf]
        %v6275 = vld [vmem:[%s6261 + $0x34] sm:$0xf]
        %v6276 = vld [vmem:[%s6261 + $0x38] sm:$0xf]
        %v6277 = vld [vmem:[%s6261 + $0x3c] sm:$0xf]
        %v6278 = vrot.slane %v5628, 3
        %v6296 = vunpack.c.l.b16 %v6262
        %v6297 = vunpack.c.l.b16 %v6263
        %v6298 = vunpack.c.l.b16 %v6264
        %v6299 = vunpack.c.l.b16 %v6265
        %v6300 = vunpack.c.l.b16 %v6266
        %v6301 = vunpack.c.l.b16 %v6267
        %v6302 = vunpack.c.l.b16 %v6268
        %v6303 = vunpack.c.l.b16 %v6269
        %v6304 = vunpack.c.l.b16 %v6270
        %v6305 = vunpack.c.l.b16 %v6271
        %v6306 = vunpack.c.l.b16 %v6272
        %v6307 = vunpack.c.l.b16 %v6273
        %v6308 = vunpack.c.l.b16 %v6274
        %v6309 = vunpack.c.l.b16 %v6275
        %v6310 = vunpack.c.l.b16 %v6276
        %v6311 = vunpack.c.l.b16 %v6277
        %v6312 = vpack.c.b16 %v6297, %v6296
        %v6313 = vpack.c.b16 %v6299, %v6298
        %v6314 = vpack.c.b16 %v6301, %v6300
        %v6315 = vpack.c.b16 %v6303, %v6302
        %v6316 = vpack.c.b16 %v6305, %v6304
        %v6317 = vpack.c.b16 %v6307, %v6306
        %v6318 = vpack.c.b16 %v6309, %v6308
        %v6319 = vpack.c.b16 %v6311, %v6310
        %6328 = vmatprep.subr.bf16.mxu0 0
        %6329 = vmatpush1.bf16.msra.mxu0 %v6319
        %6330 = vmatprep.subr.bf16.mxu0 0
        %6331 = vmatpush1.bf16.msra.mxu0 %v6318
        %6332 = vmatprep.subr.bf16.mxu0 0
        %6333 = vmatpush1.bf16.msra.mxu0 %v6317
        %6334 = vmatprep.subr.bf16.mxu0 0
        %6335 = vmatpush1.bf16.msra.mxu0 %v6316
        %6336 = vmatprep.subr.bf16.mxu0 0
        %6337 = vmatpush1.bf16.msra.mxu0 %v6315
        %6338 = vmatprep.subr.bf16.mxu0 0
        %6339 = vmatpush1.bf16.msra.mxu0 %v6314
        %6340 = vmatprep.subr.bf16.mxu0 0
        %6341 = vmatpush1.bf16.msra.mxu0 %v6313
        %6342 = vmatprep.subr.bf16.mxu0 0
        %6343 = vmatpush1.bf16.msra.mxu0 %v6312
        %6344 = vmatprep.subr.bf16.mxu0 0
        %6345 = vmatpush2.bf16.msra.mxu0 0
        %6346 = vmatprep.subr.bf16.mxu0 0
        %6347 = vmatpush2.bf16.msra.mxu0 0
        %6348 = vmatprep.subr.bf16.mxu0 0
        %6349 = vmatpush2.bf16.msra.mxu0 0
        %6350 = vmatprep.subr.bf16.mxu0 0
        %6351 = vmatpush2.bf16.msra.mxu0 0
        %6352 = vmatprep.subr.bf16.mxu0 0
        %6353 = vmatpush2.bf16.msra.mxu0 0
        %6354 = vmatprep.subr.bf16.mxu0 0
        %6355 = vmatpush2.bf16.msra.mxu0 0
        %6356 = vmatprep.subr.bf16.mxu0 0
        %6357 = vmatpush2.bf16.msra.mxu0 0
        %6358 = vmatprep.subr.bf16.mxu0 0
        %6359 = vmatpush2.bf16.msra.mxu0 0
        %6360 = vmatprep.mubr.bf16.mxu0 0
        %6361 = vmatmul.mubr.bf16.gmra.mxu0 %v6278
        %v6362 = vpop.f32.mrf.mxu0
        %v6363 = vadd.f32 0.0, %v6362
        %v6364 = vpop.f32.mrf.mxu0
        %v6365 = vpop.f32.mrf.mxu0
        %v6366 = vpop.f32.mrf.mxu0
        %6367 = vdwg.mxu0
        %v6368 = vadd.f32 %v6260, %v6363
        %v6369 = vpack.c.bf16 %v5501, %v5501
        %s6370 = scalar_lea.vmem [#allocation8], 512
        %v6371 = vld [vmem:[%s6370] sm:$0xf]
        %v6372 = vld [vmem:[%s6370 + $0x4] sm:$0xf]
        %v6373 = vld [vmem:[%s6370 + $0x8] sm:$0xf]
        %v6374 = vld [vmem:[%s6370 + $0xc] sm:$0xf]
        %v6375 = vld [vmem:[%s6370 + $0x10] sm:$0xf]
        %v6376 = vld [vmem:[%s6370 + $0x14] sm:$0xf]
        %v6377 = vld [vmem:[%s6370 + $0x18] sm:$0xf]
        %v6378 = vld [vmem:[%s6370 + $0x1c] sm:$0xf]
        %v6379 = vld [vmem:[%s6370 + $0x20] sm:$0xf]
        %v6380 = vld [vmem:[%s6370 + $0x24] sm:$0xf]
        %v6381 = vld [vmem:[%s6370 + $0x28] sm:$0xf]
        %v6382 = vld [vmem:[%s6370 + $0x2c] sm:$0xf]
        %v6383 = vld [vmem:[%s6370 + $0x30] sm:$0xf]
        %v6384 = vld [vmem:[%s6370 + $0x34] sm:$0xf]
        %v6385 = vld [vmem:[%s6370 + $0x38] sm:$0xf]
        %v6386 = vld [vmem:[%s6370 + $0x3c] sm:$0xf]
        %v6403 = vunpack.c.l.b16 %v6371
        %v6404 = vunpack.c.l.b16 %v6372
        %v6405 = vunpack.c.l.b16 %v6373
        %v6406 = vunpack.c.l.b16 %v6374
        %v6407 = vunpack.c.l.b16 %v6375
        %v6408 = vunpack.c.l.b16 %v6376
        %v6409 = vunpack.c.l.b16 %v6377
        %v6410 = vunpack.c.l.b16 %v6378
        %v6411 = vunpack.c.l.b16 %v6379
        %v6412 = vunpack.c.l.b16 %v6380
        %v6413 = vunpack.c.l.b16 %v6381
        %v6414 = vunpack.c.l.b16 %v6382
        %v6415 = vunpack.c.l.b16 %v6383
        %v6416 = vunpack.c.l.b16 %v6384
        %v6417 = vunpack.c.l.b16 %v6385
        %v6418 = vunpack.c.l.b16 %v6386
        %v6419 = vpack.c.b16 %v6404, %v6403
        %v6420 = vpack.c.b16 %v6406, %v6405
        %v6421 = vpack.c.b16 %v6408, %v6407
        %v6422 = vpack.c.b16 %v6410, %v6409
        %v6423 = vpack.c.b16 %v6412, %v6411
        %v6424 = vpack.c.b16 %v6414, %v6413
        %v6425 = vpack.c.b16 %v6416, %v6415
        %v6426 = vpack.c.b16 %v6418, %v6417
        %6435 = vmatprep.subr.bf16.mxu0 0
        %6436 = vmatpush1.bf16.msra.mxu0 %v6426
        %6437 = vmatprep.subr.bf16.mxu0 0
        %6438 = vmatpush1.bf16.msra.mxu0 %v6425
        %6439 = vmatprep.subr.bf16.mxu0 0
        %6440 = vmatpush1.bf16.msra.mxu0 %v6424
        %6441 = vmatprep.subr.bf16.mxu0 0
        %6442 = vmatpush1.bf16.msra.mxu0 %v6423
        %6443 = vmatprep.subr.bf16.mxu0 0
        %6444 = vmatpush1.bf16.msra.mxu0 %v6422
        %6445 = vmatprep.subr.bf16.mxu0 0
        %6446 = vmatpush1.bf16.msra.mxu0 %v6421
        %6447 = vmatprep.subr.bf16.mxu0 0
        %6448 = vmatpush1.bf16.msra.mxu0 %v6420
        %6449 = vmatprep.subr.bf16.mxu0 0
        %6450 = vmatpush1.bf16.msra.mxu0 %v6419
        %6451 = vmatprep.subr.bf16.mxu0 0
        %6452 = vmatpush2.bf16.msra.mxu0 0
        %6453 = vmatprep.subr.bf16.mxu0 0
        %6454 = vmatpush2.bf16.msra.mxu0 0
        %6455 = vmatprep.subr.bf16.mxu0 0
        %6456 = vmatpush2.bf16.msra.mxu0 0
        %6457 = vmatprep.subr.bf16.mxu0 0
        %6458 = vmatpush2.bf16.msra.mxu0 0
        %6459 = vmatprep.subr.bf16.mxu0 0
        %6460 = vmatpush2.bf16.msra.mxu0 0
        %6461 = vmatprep.subr.bf16.mxu0 0
        %6462 = vmatpush2.bf16.msra.mxu0 0
        %6463 = vmatprep.subr.bf16.mxu0 0
        %6464 = vmatpush2.bf16.msra.mxu0 0
        %6465 = vmatprep.subr.bf16.mxu0 0
        %6466 = vmatpush2.bf16.msra.mxu0 0
        %6467 = vmatprep.mubr.bf16.mxu0 0
        %6468 = vmatmul.mubr.bf16.gmra.mxu0 %v6369
        %v6469 = vpop.f32.mrf.mxu0
        %v6470 = vadd.f32 0.0, %v6469
        %v6471 = vpop.f32.mrf.mxu0
        %v6472 = vpop.f32.mrf.mxu0
        %v6473 = vpop.f32.mrf.mxu0
        %6474 = vdwg.mxu0
        %v6475 = vadd.f32 %v6368, %v6470
        %s6476 = scalar_lea.vmem [#allocation8], 576
        %v6477 = vld [vmem:[%s6476] sm:$0xf]
        %v6478 = vld [vmem:[%s6476 + $0x4] sm:$0xf]
        %v6479 = vld [vmem:[%s6476 + $0x8] sm:$0xf]
        %v6480 = vld [vmem:[%s6476 + $0xc] sm:$0xf]
        %v6481 = vld [vmem:[%s6476 + $0x10] sm:$0xf]
        %v6482 = vld [vmem:[%s6476 + $0x14] sm:$0xf]
        %v6483 = vld [vmem:[%s6476 + $0x18] sm:$0xf]
        %v6484 = vld [vmem:[%s6476 + $0x1c] sm:$0xf]
        %v6485 = vld [vmem:[%s6476 + $0x20] sm:$0xf]
        %v6486 = vld [vmem:[%s6476 + $0x24] sm:$0xf]
        %v6487 = vld [vmem:[%s6476 + $0x28] sm:$0xf]
        %v6488 = vld [vmem:[%s6476 + $0x2c] sm:$0xf]
        %v6489 = vld [vmem:[%s6476 + $0x30] sm:$0xf]
        %v6490 = vld [vmem:[%s6476 + $0x34] sm:$0xf]
        %v6491 = vld [vmem:[%s6476 + $0x38] sm:$0xf]
        %v6492 = vld [vmem:[%s6476 + $0x3c] sm:$0xf]
        %v6494 = vshrl.u32 %v6369, 16
        %v6513 = vunpack.c.l.b16 %v6477
        %v6514 = vunpack.c.l.b16 %v6478
        %v6515 = vunpack.c.l.b16 %v6479
        %v6516 = vunpack.c.l.b16 %v6480
        %v6517 = vunpack.c.l.b16 %v6481
        %v6518 = vunpack.c.l.b16 %v6482
        %v6519 = vunpack.c.l.b16 %v6483
        %v6520 = vunpack.c.l.b16 %v6484
        %v6521 = vunpack.c.l.b16 %v6485
        %v6522 = vunpack.c.l.b16 %v6486
        %v6523 = vunpack.c.l.b16 %v6487
        %v6524 = vunpack.c.l.b16 %v6488
        %v6525 = vunpack.c.l.b16 %v6489
        %v6526 = vunpack.c.l.b16 %v6490
        %v6527 = vunpack.c.l.b16 %v6491
        %v6528 = vunpack.c.l.b16 %v6492
        %v6529 = vpack.c.b16 %v6514, %v6513
        %v6530 = vpack.c.b16 %v6516, %v6515
        %v6531 = vpack.c.b16 %v6518, %v6517
        %v6532 = vpack.c.b16 %v6520, %v6519
        %v6533 = vpack.c.b16 %v6522, %v6521
        %v6534 = vpack.c.b16 %v6524, %v6523
        %v6535 = vpack.c.b16 %v6526, %v6525
        %v6536 = vpack.c.b16 %v6528, %v6527
        %6545 = vmatprep.subr.bf16.mxu0 0
        %6546 = vmatpush1.bf16.msra.mxu0 %v6536
        %6547 = vmatprep.subr.bf16.mxu0 0
        %6548 = vmatpush1.bf16.msra.mxu0 %v6535
        %6549 = vmatprep.subr.bf16.mxu0 0
        %6550 = vmatpush1.bf16.msra.mxu0 %v6534
        %6551 = vmatprep.subr.bf16.mxu0 0
        %6552 = vmatpush1.bf16.msra.mxu0 %v6533
        %6553 = vmatprep.subr.bf16.mxu0 0
        %6554 = vmatpush1.bf16.msra.mxu0 %v6532
        %6555 = vmatprep.subr.bf16.mxu0 0
        %6556 = vmatpush1.bf16.msra.mxu0 %v6531
        %6557 = vmatprep.subr.bf16.mxu0 0
        %6558 = vmatpush1.bf16.msra.mxu0 %v6530
        %6559 = vmatprep.subr.bf16.mxu0 0
        %6560 = vmatpush1.bf16.msra.mxu0 %v6529
        %6561 = vmatprep.subr.bf16.mxu0 0
        %6562 = vmatpush2.bf16.msra.mxu0 0
        %6563 = vmatprep.subr.bf16.mxu0 0
        %6564 = vmatpush2.bf16.msra.mxu0 0
        %6565 = vmatprep.subr.bf16.mxu0 0
        %6566 = vmatpush2.bf16.msra.mxu0 0
        %6567 = vmatprep.subr.bf16.mxu0 0
        %6568 = vmatpush2.bf16.msra.mxu0 0
        %6569 = vmatprep.subr.bf16.mxu0 0
        %6570 = vmatpush2.bf16.msra.mxu0 0
        %6571 = vmatprep.subr.bf16.mxu0 0
        %6572 = vmatpush2.bf16.msra.mxu0 0
        %6573 = vmatprep.subr.bf16.mxu0 0
        %6574 = vmatpush2.bf16.msra.mxu0 0
        %6575 = vmatprep.subr.bf16.mxu0 0
        %6576 = vmatpush2.bf16.msra.mxu0 0
        %6577 = vmatprep.mubr.bf16.mxu0 0
        %6578 = vmatmul.mubr.bf16.gmra.mxu0 %v6494
        %v6579 = vpop.f32.mrf.mxu0
        %v6580 = vadd.f32 0.0, %v6579
        %v6581 = vpop.f32.mrf.mxu0
        %v6582 = vpop.f32.mrf.mxu0
        %v6583 = vpop.f32.mrf.mxu0
        %6584 = vdwg.mxu0
        %v6585 = vadd.f32 %v6475, %v6580
        %s6586 = scalar_lea.vmem [#allocation8], 640
        %v6587 = vld [vmem:[%s6586] sm:$0xf]
        %v6588 = vld [vmem:[%s6586 + $0x4] sm:$0xf]
        %v6589 = vld [vmem:[%s6586 + $0x8] sm:$0xf]
        %v6590 = vld [vmem:[%s6586 + $0xc] sm:$0xf]
        %v6591 = vld [vmem:[%s6586 + $0x10] sm:$0xf]
        %v6592 = vld [vmem:[%s6586 + $0x14] sm:$0xf]
        %v6593 = vld [vmem:[%s6586 + $0x18] sm:$0xf]
        %v6594 = vld [vmem:[%s6586 + $0x1c] sm:$0xf]
        %v6595 = vld [vmem:[%s6586 + $0x20] sm:$0xf]
        %v6596 = vld [vmem:[%s6586 + $0x24] sm:$0xf]
        %v6597 = vld [vmem:[%s6586 + $0x28] sm:$0xf]
        %v6598 = vld [vmem:[%s6586 + $0x2c] sm:$0xf]
        %v6599 = vld [vmem:[%s6586 + $0x30] sm:$0xf]
        %v6600 = vld [vmem:[%s6586 + $0x34] sm:$0xf]
        %v6601 = vld [vmem:[%s6586 + $0x38] sm:$0xf]
        %v6602 = vld [vmem:[%s6586 + $0x3c] sm:$0xf]
        %v6604 = vrot.slane %v6369, 1
        %v6622 = vunpack.c.l.b16 %v6587
        %v6623 = vunpack.c.l.b16 %v6588
        %v6624 = vunpack.c.l.b16 %v6589
        %v6625 = vunpack.c.l.b16 %v6590
        %v6626 = vunpack.c.l.b16 %v6591
        %v6627 = vunpack.c.l.b16 %v6592
        %v6628 = vunpack.c.l.b16 %v6593
        %v6629 = vunpack.c.l.b16 %v6594
        %v6630 = vunpack.c.l.b16 %v6595
        %v6631 = vunpack.c.l.b16 %v6596
        %v6632 = vunpack.c.l.b16 %v6597
        %v6633 = vunpack.c.l.b16 %v6598
        %v6634 = vunpack.c.l.b16 %v6599
        %v6635 = vunpack.c.l.b16 %v6600
        %v6636 = vunpack.c.l.b16 %v6601
        %v6637 = vunpack.c.l.b16 %v6602
        %v6638 = vpack.c.b16 %v6623, %v6622
        %v6639 = vpack.c.b16 %v6625, %v6624
        %v6640 = vpack.c.b16 %v6627, %v6626
        %v6641 = vpack.c.b16 %v6629, %v6628
        %v6642 = vpack.c.b16 %v6631, %v6630
        %v6643 = vpack.c.b16 %v6633, %v6632
        %v6644 = vpack.c.b16 %v6635, %v6634
        %v6645 = vpack.c.b16 %v6637, %v6636
        %6654 = vmatprep.subr.bf16.mxu0 0
        %6655 = vmatpush1.bf16.msra.mxu0 %v6645
        %6656 = vmatprep.subr.bf16.mxu0 0
        %6657 = vmatpush1.bf16.msra.mxu0 %v6644
        %6658 = vmatprep.subr.bf16.mxu0 0
        %6659 = vmatpush1.bf16.msra.mxu0 %v6643
        %6660 = vmatprep.subr.bf16.mxu0 0
        %6661 = vmatpush1.bf16.msra.mxu0 %v6642
        %6662 = vmatprep.subr.bf16.mxu0 0
        %6663 = vmatpush1.bf16.msra.mxu0 %v6641
        %6664 = vmatprep.subr.bf16.mxu0 0
        %6665 = vmatpush1.bf16.msra.mxu0 %v6640
        %6666 = vmatprep.subr.bf16.mxu0 0
        %6667 = vmatpush1.bf16.msra.mxu0 %v6639
        %6668 = vmatprep.subr.bf16.mxu0 0
        %6669 = vmatpush1.bf16.msra.mxu0 %v6638
        %6670 = vmatprep.subr.bf16.mxu0 0
        %6671 = vmatpush2.bf16.msra.mxu0 0
        %6672 = vmatprep.subr.bf16.mxu0 0
        %6673 = vmatpush2.bf16.msra.mxu0 0
        %6674 = vmatprep.subr.bf16.mxu0 0
        %6675 = vmatpush2.bf16.msra.mxu0 0
        %6676 = vmatprep.subr.bf16.mxu0 0
        %6677 = vmatpush2.bf16.msra.mxu0 0
        %6678 = vmatprep.subr.bf16.mxu0 0
        %6679 = vmatpush2.bf16.msra.mxu0 0
        %6680 = vmatprep.subr.bf16.mxu0 0
        %6681 = vmatpush2.bf16.msra.mxu0 0
        %6682 = vmatprep.subr.bf16.mxu0 0
        %6683 = vmatpush2.bf16.msra.mxu0 0
        %6684 = vmatprep.subr.bf16.mxu0 0
        %6685 = vmatpush2.bf16.msra.mxu0 0
        %6686 = vmatprep.mubr.bf16.mxu0 0
        %6687 = vmatmul.mubr.bf16.gmra.mxu0 %v6604
        %v6688 = vpop.f32.mrf.mxu0
        %v6689 = vadd.f32 0.0, %v6688
        %v6690 = vpop.f32.mrf.mxu0
        %v6691 = vpop.f32.mrf.mxu0
        %v6692 = vpop.f32.mrf.mxu0
        %6693 = vdwg.mxu0
        %v6694 = vadd.f32 %v6585, %v6689
        %s6695 = scalar_lea.vmem [#allocation8], 704
        %v6696 = vld [vmem:[%s6695] sm:$0xf]
        %v6697 = vld [vmem:[%s6695 + $0x4] sm:$0xf]
        %v6698 = vld [vmem:[%s6695 + $0x8] sm:$0xf]
        %v6699 = vld [vmem:[%s6695 + $0xc] sm:$0xf]
        %v6700 = vld [vmem:[%s6695 + $0x10] sm:$0xf]
        %v6701 = vld [vmem:[%s6695 + $0x14] sm:$0xf]
        %v6702 = vld [vmem:[%s6695 + $0x18] sm:$0xf]
        %v6703 = vld [vmem:[%s6695 + $0x1c] sm:$0xf]
        %v6704 = vld [vmem:[%s6695 + $0x20] sm:$0xf]
        %v6705 = vld [vmem:[%s6695 + $0x24] sm:$0xf]
        %v6706 = vld [vmem:[%s6695 + $0x28] sm:$0xf]
        %v6707 = vld [vmem:[%s6695 + $0x2c] sm:$0xf]
        %v6708 = vld [vmem:[%s6695 + $0x30] sm:$0xf]
        %v6709 = vld [vmem:[%s6695 + $0x34] sm:$0xf]
        %v6710 = vld [vmem:[%s6695 + $0x38] sm:$0xf]
        %v6711 = vld [vmem:[%s6695 + $0x3c] sm:$0xf]
        %v6712 = vrot.slane %v6494, 1
        %v6730 = vunpack.c.l.b16 %v6696
        %v6731 = vunpack.c.l.b16 %v6697
        %v6732 = vunpack.c.l.b16 %v6698
        %v6733 = vunpack.c.l.b16 %v6699
        %v6734 = vunpack.c.l.b16 %v6700
        %v6735 = vunpack.c.l.b16 %v6701
        %v6736 = vunpack.c.l.b16 %v6702
        %v6737 = vunpack.c.l.b16 %v6703
        %v6738 = vunpack.c.l.b16 %v6704
        %v6739 = vunpack.c.l.b16 %v6705
        %v6740 = vunpack.c.l.b16 %v6706
        %v6741 = vunpack.c.l.b16 %v6707
        %v6742 = vunpack.c.l.b16 %v6708
        %v6743 = vunpack.c.l.b16 %v6709
        %v6744 = vunpack.c.l.b16 %v6710
        %v6745 = vunpack.c.l.b16 %v6711
        %v6746 = vpack.c.b16 %v6731, %v6730
        %v6747 = vpack.c.b16 %v6733, %v6732
        %v6748 = vpack.c.b16 %v6735, %v6734
        %v6749 = vpack.c.b16 %v6737, %v6736
        %v6750 = vpack.c.b16 %v6739, %v6738
        %v6751 = vpack.c.b16 %v6741, %v6740
        %v6752 = vpack.c.b16 %v6743, %v6742
        %v6753 = vpack.c.b16 %v6745, %v6744
        %6762 = vmatprep.subr.bf16.mxu0 0
        %6763 = vmatpush1.bf16.msra.mxu0 %v6753
        %6764 = vmatprep.subr.bf16.mxu0 0
        %6765 = vmatpush1.bf16.msra.mxu0 %v6752
        %6766 = vmatprep.subr.bf16.mxu0 0
        %6767 = vmatpush1.bf16.msra.mxu0 %v6751
        %6768 = vmatprep.subr.bf16.mxu0 0
        %6769 = vmatpush1.bf16.msra.mxu0 %v6750
        %6770 = vmatprep.subr.bf16.mxu0 0
        %6771 = vmatpush1.bf16.msra.mxu0 %v6749
        %6772 = vmatprep.subr.bf16.mxu0 0
        %6773 = vmatpush1.bf16.msra.mxu0 %v6748
        %6774 = vmatprep.subr.bf16.mxu0 0
        %6775 = vmatpush1.bf16.msra.mxu0 %v6747
        %6776 = vmatprep.subr.bf16.mxu0 0
        %6777 = vmatpush1.bf16.msra.mxu0 %v6746
        %6778 = vmatprep.subr.bf16.mxu0 0
        %6779 = vmatpush2.bf16.msra.mxu0 0
        %6780 = vmatprep.subr.bf16.mxu0 0
        %6781 = vmatpush2.bf16.msra.mxu0 0
        %6782 = vmatprep.subr.bf16.mxu0 0
        %6783 = vmatpush2.bf16.msra.mxu0 0
        %6784 = vmatprep.subr.bf16.mxu0 0
        %6785 = vmatpush2.bf16.msra.mxu0 0
        %6786 = vmatprep.subr.bf16.mxu0 0
        %6787 = vmatpush2.bf16.msra.mxu0 0
        %6788 = vmatprep.subr.bf16.mxu0 0
        %6789 = vmatpush2.bf16.msra.mxu0 0
        %6790 = vmatprep.subr.bf16.mxu0 0
        %6791 = vmatpush2.bf16.msra.mxu0 0
        %6792 = vmatprep.subr.bf16.mxu0 0
        %6793 = vmatpush2.bf16.msra.mxu0 0
        %6794 = vmatprep.mubr.bf16.mxu0 0
        %6795 = vmatmul.mubr.bf16.gmra.mxu0 %v6712
        %v6796 = vpop.f32.mrf.mxu0
        %v6797 = vadd.f32 0.0, %v6796
        %v6798 = vpop.f32.mrf.mxu0
        %v6799 = vpop.f32.mrf.mxu0
        %v6800 = vpop.f32.mrf.mxu0
        %6801 = vdwg.mxu0
        %v6802 = vadd.f32 %v6694, %v6797
        %s6803 = scalar_lea.vmem [#allocation8], 768
        %v6804 = vld [vmem:[%s6803] sm:$0xf]
        %v6805 = vld [vmem:[%s6803 + $0x4] sm:$0xf]
        %v6806 = vld [vmem:[%s6803 + $0x8] sm:$0xf]
        %v6807 = vld [vmem:[%s6803 + $0xc] sm:$0xf]
        %v6808 = vld [vmem:[%s6803 + $0x10] sm:$0xf]
        %v6809 = vld [vmem:[%s6803 + $0x14] sm:$0xf]
        %v6810 = vld [vmem:[%s6803 + $0x18] sm:$0xf]
        %v6811 = vld [vmem:[%s6803 + $0x1c] sm:$0xf]
        %v6812 = vld [vmem:[%s6803 + $0x20] sm:$0xf]
        %v6813 = vld [vmem:[%s6803 + $0x24] sm:$0xf]
        %v6814 = vld [vmem:[%s6803 + $0x28] sm:$0xf]
        %v6815 = vld [vmem:[%s6803 + $0x2c] sm:$0xf]
        %v6816 = vld [vmem:[%s6803 + $0x30] sm:$0xf]
        %v6817 = vld [vmem:[%s6803 + $0x34] sm:$0xf]
        %v6818 = vld [vmem:[%s6803 + $0x38] sm:$0xf]
        %v6819 = vld [vmem:[%s6803 + $0x3c] sm:$0xf]
        %v6820 = vrot.slane %v6369, 2
        %v6838 = vunpack.c.l.b16 %v6804
        %v6839 = vunpack.c.l.b16 %v6805
        %v6840 = vunpack.c.l.b16 %v6806
        %v6841 = vunpack.c.l.b16 %v6807
        %v6842 = vunpack.c.l.b16 %v6808
        %v6843 = vunpack.c.l.b16 %v6809
        %v6844 = vunpack.c.l.b16 %v6810
        %v6845 = vunpack.c.l.b16 %v6811
        %v6846 = vunpack.c.l.b16 %v6812
        %v6847 = vunpack.c.l.b16 %v6813
        %v6848 = vunpack.c.l.b16 %v6814
        %v6849 = vunpack.c.l.b16 %v6815
        %v6850 = vunpack.c.l.b16 %v6816
        %v6851 = vunpack.c.l.b16 %v6817
        %v6852 = vunpack.c.l.b16 %v6818
        %v6853 = vunpack.c.l.b16 %v6819
        %v6854 = vpack.c.b16 %v6839, %v6838
        %v6855 = vpack.c.b16 %v6841, %v6840
        %v6856 = vpack.c.b16 %v6843, %v6842
        %v6857 = vpack.c.b16 %v6845, %v6844
        %v6858 = vpack.c.b16 %v6847, %v6846
        %v6859 = vpack.c.b16 %v6849, %v6848
        %v6860 = vpack.c.b16 %v6851, %v6850
        %v6861 = vpack.c.b16 %v6853, %v6852
        %6870 = vmatprep.subr.bf16.mxu0 0
        %6871 = vmatpush1.bf16.msra.mxu0 %v6861
        %6872 = vmatprep.subr.bf16.mxu0 0
        %6873 = vmatpush1.bf16.msra.mxu0 %v6860
        %6874 = vmatprep.subr.bf16.mxu0 0
        %6875 = vmatpush1.bf16.msra.mxu0 %v6859
        %6876 = vmatprep.subr.bf16.mxu0 0
        %6877 = vmatpush1.bf16.msra.mxu0 %v6858
        %6878 = vmatprep.subr.bf16.mxu0 0
        %6879 = vmatpush1.bf16.msra.mxu0 %v6857
        %6880 = vmatprep.subr.bf16.mxu0 0
        %6881 = vmatpush1.bf16.msra.mxu0 %v6856
        %6882 = vmatprep.subr.bf16.mxu0 0
        %6883 = vmatpush1.bf16.msra.mxu0 %v6855
        %6884 = vmatprep.subr.bf16.mxu0 0
        %6885 = vmatpush1.bf16.msra.mxu0 %v6854
        %6886 = vmatprep.subr.bf16.mxu0 0
        %6887 = vmatpush2.bf16.msra.mxu0 0
        %6888 = vmatprep.subr.bf16.mxu0 0
        %6889 = vmatpush2.bf16.msra.mxu0 0
        %6890 = vmatprep.subr.bf16.mxu0 0
        %6891 = vmatpush2.bf16.msra.mxu0 0
        %6892 = vmatprep.subr.bf16.mxu0 0
        %6893 = vmatpush2.bf16.msra.mxu0 0
        %6894 = vmatprep.subr.bf16.mxu0 0
        %6895 = vmatpush2.bf16.msra.mxu0 0
        %6896 = vmatprep.subr.bf16.mxu0 0
        %6897 = vmatpush2.bf16.msra.mxu0 0
        %6898 = vmatprep.subr.bf16.mxu0 0
        %6899 = vmatpush2.bf16.msra.mxu0 0
        %6900 = vmatprep.subr.bf16.mxu0 0
        %6901 = vmatpush2.bf16.msra.mxu0 0
        %6902 = vmatprep.mubr.bf16.mxu0 0
        %6903 = vmatmul.mubr.bf16.gmra.mxu0 %v6820
        %v6904 = vpop.f32.mrf.mxu0
        %v6905 = vadd.f32 0.0, %v6904
        %v6906 = vpop.f32.mrf.mxu0
        %v6907 = vpop.f32.mrf.mxu0
        %v6908 = vpop.f32.mrf.mxu0
        %6909 = vdwg.mxu0
        %v6910 = vadd.f32 %v6802, %v6905
        %s6911 = scalar_lea.vmem [#allocation8], 832
        %v6912 = vld [vmem:[%s6911] sm:$0xf]
        %v6913 = vld [vmem:[%s6911 + $0x4] sm:$0xf]
        %v6914 = vld [vmem:[%s6911 + $0x8] sm:$0xf]
        %v6915 = vld [vmem:[%s6911 + $0xc] sm:$0xf]
        %v6916 = vld [vmem:[%s6911 + $0x10] sm:$0xf]
        %v6917 = vld [vmem:[%s6911 + $0x14] sm:$0xf]
        %v6918 = vld [vmem:[%s6911 + $0x18] sm:$0xf]
        %v6919 = vld [vmem:[%s6911 + $0x1c] sm:$0xf]
        %v6920 = vld [vmem:[%s6911 + $0x20] sm:$0xf]
        %v6921 = vld [vmem:[%s6911 + $0x24] sm:$0xf]
        %v6922 = vld [vmem:[%s6911 + $0x28] sm:$0xf]
        %v6923 = vld [vmem:[%s6911 + $0x2c] sm:$0xf]
        %v6924 = vld [vmem:[%s6911 + $0x30] sm:$0xf]
        %v6925 = vld [vmem:[%s6911 + $0x34] sm:$0xf]
        %v6926 = vld [vmem:[%s6911 + $0x38] sm:$0xf]
        %v6927 = vld [vmem:[%s6911 + $0x3c] sm:$0xf]
        %v6928 = vrot.slane %v6494, 2
        %v6946 = vunpack.c.l.b16 %v6912
        %v6947 = vunpack.c.l.b16 %v6913
        %v6948 = vunpack.c.l.b16 %v6914
        %v6949 = vunpack.c.l.b16 %v6915
        %v6950 = vunpack.c.l.b16 %v6916
        %v6951 = vunpack.c.l.b16 %v6917
        %v6952 = vunpack.c.l.b16 %v6918
        %v6953 = vunpack.c.l.b16 %v6919
        %v6954 = vunpack.c.l.b16 %v6920
        %v6955 = vunpack.c.l.b16 %v6921
        %v6956 = vunpack.c.l.b16 %v6922
        %v6957 = vunpack.c.l.b16 %v6923
        %v6958 = vunpack.c.l.b16 %v6924
        %v6959 = vunpack.c.l.b16 %v6925
        %v6960 = vunpack.c.l.b16 %v6926
        %v6961 = vunpack.c.l.b16 %v6927
        %v6962 = vpack.c.b16 %v6947, %v6946
        %v6963 = vpack.c.b16 %v6949, %v6948
        %v6964 = vpack.c.b16 %v6951, %v6950
        %v6965 = vpack.c.b16 %v6953, %v6952
        %v6966 = vpack.c.b16 %v6955, %v6954
        %v6967 = vpack.c.b16 %v6957, %v6956
        %v6968 = vpack.c.b16 %v6959, %v6958
        %v6969 = vpack.c.b16 %v6961, %v6960
        %6978 = vmatprep.subr.bf16.mxu0 0
        %6979 = vmatpush1.bf16.msra.mxu0 %v6969
        %6980 = vmatprep.subr.bf16.mxu0 0
        %6981 = vmatpush1.bf16.msra.mxu0 %v6968
        %6982 = vmatprep.subr.bf16.mxu0 0
        %6983 = vmatpush1.bf16.msra.mxu0 %v6967
        %6984 = vmatprep.subr.bf16.mxu0 0
        %6985 = vmatpush1.bf16.msra.mxu0 %v6966
        %6986 = vmatprep.subr.bf16.mxu0 0
        %6987 = vmatpush1.bf16.msra.mxu0 %v6965
        %6988 = vmatprep.subr.bf16.mxu0 0
        %6989 = vmatpush1.bf16.msra.mxu0 %v6964
        %6990 = vmatprep.subr.bf16.mxu0 0
        %6991 = vmatpush1.bf16.msra.mxu0 %v6963
        %6992 = vmatprep.subr.bf16.mxu0 0
        %6993 = vmatpush1.bf16.msra.mxu0 %v6962
        %6994 = vmatprep.subr.bf16.mxu0 0
        %6995 = vmatpush2.bf16.msra.mxu0 0
        %6996 = vmatprep.subr.bf16.mxu0 0
        %6997 = vmatpush2.bf16.msra.mxu0 0
        %6998 = vmatprep.subr.bf16.mxu0 0
        %6999 = vmatpush2.bf16.msra.mxu0 0
        %7000 = vmatprep.subr.bf16.mxu0 0
        %7001 = vmatpush2.bf16.msra.mxu0 0
        %7002 = vmatprep.subr.bf16.mxu0 0
        %7003 = vmatpush2.bf16.msra.mxu0 0
        %7004 = vmatprep.subr.bf16.mxu0 0
        %7005 = vmatpush2.bf16.msra.mxu0 0
        %7006 = vmatprep.subr.bf16.mxu0 0
        %7007 = vmatpush2.bf16.msra.mxu0 0
        %7008 = vmatprep.subr.bf16.mxu0 0
        %7009 = vmatpush2.bf16.msra.mxu0 0
        %7010 = vmatprep.mubr.bf16.mxu0 0
        %7011 = vmatmul.mubr.bf16.gmra.mxu0 %v6928
        %v7012 = vpop.f32.mrf.mxu0
        %v7013 = vadd.f32 0.0, %v7012
        %v7014 = vpop.f32.mrf.mxu0
        %v7015 = vpop.f32.mrf.mxu0
        %v7016 = vpop.f32.mrf.mxu0
        %7017 = vdwg.mxu0
        %v7018 = vadd.f32 %v6910, %v7013
        %s7019 = scalar_lea.vmem [#allocation8], 896
        %v7020 = vld [vmem:[%s7019] sm:$0xf]
        %v7021 = vld [vmem:[%s7019 + $0x4] sm:$0xf]
        %v7022 = vld [vmem:[%s7019 + $0x8] sm:$0xf]
        %v7023 = vld [vmem:[%s7019 + $0xc] sm:$0xf]
        %v7024 = vld [vmem:[%s7019 + $0x10] sm:$0xf]
        %v7025 = vld [vmem:[%s7019 + $0x14] sm:$0xf]
        %v7026 = vld [vmem:[%s7019 + $0x18] sm:$0xf]
        %v7027 = vld [vmem:[%s7019 + $0x1c] sm:$0xf]
        %v7028 = vld [vmem:[%s7019 + $0x20] sm:$0xf]
        %v7029 = vld [vmem:[%s7019 + $0x24] sm:$0xf]
        %v7030 = vld [vmem:[%s7019 + $0x28] sm:$0xf]
        %v7031 = vld [vmem:[%s7019 + $0x2c] sm:$0xf]
        %v7032 = vld [vmem:[%s7019 + $0x30] sm:$0xf]
        %v7033 = vld [vmem:[%s7019 + $0x34] sm:$0xf]
        %v7034 = vld [vmem:[%s7019 + $0x38] sm:$0xf]
        %v7035 = vld [vmem:[%s7019 + $0x3c] sm:$0xf]
        %v7036 = vrot.slane %v6369, 3
        %v7054 = vunpack.c.l.b16 %v7020
        %v7055 = vunpack.c.l.b16 %v7021
        %v7056 = vunpack.c.l.b16 %v7022
        %v7057 = vunpack.c.l.b16 %v7023
        %v7058 = vunpack.c.l.b16 %v7024
        %v7059 = vunpack.c.l.b16 %v7025
        %v7060 = vunpack.c.l.b16 %v7026
        %v7061 = vunpack.c.l.b16 %v7027
        %v7062 = vunpack.c.l.b16 %v7028
        %v7063 = vunpack.c.l.b16 %v7029
        %v7064 = vunpack.c.l.b16 %v7030
        %v7065 = vunpack.c.l.b16 %v7031
        %v7066 = vunpack.c.l.b16 %v7032
        %v7067 = vunpack.c.l.b16 %v7033
        %v7068 = vunpack.c.l.b16 %v7034
        %v7069 = vunpack.c.l.b16 %v7035
        %v7070 = vpack.c.b16 %v7055, %v7054
        %v7071 = vpack.c.b16 %v7057, %v7056
        %v7072 = vpack.c.b16 %v7059, %v7058
        %v7073 = vpack.c.b16 %v7061, %v7060
        %v7074 = vpack.c.b16 %v7063, %v7062
        %v7075 = vpack.c.b16 %v7065, %v7064
        %v7076 = vpack.c.b16 %v7067, %v7066
        %v7077 = vpack.c.b16 %v7069, %v7068
        %7086 = vmatprep.subr.bf16.mxu0 0
        %7087 = vmatpush1.bf16.msra.mxu0 %v7077
        %7088 = vmatprep.subr.bf16.mxu0 0
        %7089 = vmatpush1.bf16.msra.mxu0 %v7076
        %7090 = vmatprep.subr.bf16.mxu0 0
        %7091 = vmatpush1.bf16.msra.mxu0 %v7075
        %7092 = vmatprep.subr.bf16.mxu0 0
        %7093 = vmatpush1.bf16.msra.mxu0 %v7074
        %7094 = vmatprep.subr.bf16.mxu0 0
        %7095 = vmatpush1.bf16.msra.mxu0 %v7073
        %7096 = vmatprep.subr.bf16.mxu0 0
        %7097 = vmatpush1.bf16.msra.mxu0 %v7072
        %7098 = vmatprep.subr.bf16.mxu0 0
        %7099 = vmatpush1.bf16.msra.mxu0 %v7071
        %7100 = vmatprep.subr.bf16.mxu0 0
        %7101 = vmatpush1.bf16.msra.mxu0 %v7070
        %7102 = vmatprep.subr.bf16.mxu0 0
        %7103 = vmatpush2.bf16.msra.mxu0 0
        %7104 = vmatprep.subr.bf16.mxu0 0
        %7105 = vmatpush2.bf16.msra.mxu0 0
        %7106 = vmatprep.subr.bf16.mxu0 0
        %7107 = vmatpush2.bf16.msra.mxu0 0
        %7108 = vmatprep.subr.bf16.mxu0 0
        %7109 = vmatpush2.bf16.msra.mxu0 0
        %7110 = vmatprep.subr.bf16.mxu0 0
        %7111 = vmatpush2.bf16.msra.mxu0 0
        %7112 = vmatprep.subr.bf16.mxu0 0
        %7113 = vmatpush2.bf16.msra.mxu0 0
        %7114 = vmatprep.subr.bf16.mxu0 0
        %7115 = vmatpush2.bf16.msra.mxu0 0
        %7116 = vmatprep.subr.bf16.mxu0 0
        %7117 = vmatpush2.bf16.msra.mxu0 0
        %7118 = vmatprep.mubr.bf16.mxu0 0
        %7119 = vmatmul.mubr.bf16.gmra.mxu0 %v7036
        %v7120 = vpop.f32.mrf.mxu0
        %v7121 = vadd.f32 0.0, %v7120
        %v7122 = vpop.f32.mrf.mxu0
        %v7123 = vpop.f32.mrf.mxu0
        %v7124 = vpop.f32.mrf.mxu0
        %7125 = vdwg.mxu0
        %v7126 = vadd.f32 %v7018, %v7121
        %s7127 = scalar_lea.vmem [#allocation8], 960
        %v7128 = vld [vmem:[%s7127] sm:$0xf]
        %v7129 = vld [vmem:[%s7127 + $0x4] sm:$0xf]
        %v7130 = vld [vmem:[%s7127 + $0x8] sm:$0xf]
        %v7131 = vld [vmem:[%s7127 + $0xc] sm:$0xf]
        %v7132 = vld [vmem:[%s7127 + $0x10] sm:$0xf]
        %v7133 = vld [vmem:[%s7127 + $0x14] sm:$0xf]
        %v7134 = vld [vmem:[%s7127 + $0x18] sm:$0xf]
        %v7135 = vld [vmem:[%s7127 + $0x1c] sm:$0xf]
        %v7136 = vld [vmem:[%s7127 + $0x20] sm:$0xf]
        %v7137 = vld [vmem:[%s7127 + $0x24] sm:$0xf]
        %v7138 = vld [vmem:[%s7127 + $0x28] sm:$0xf]
        %v7139 = vld [vmem:[%s7127 + $0x2c] sm:$0xf]
        %v7140 = vld [vmem:[%s7127 + $0x30] sm:$0xf]
        %v7141 = vld [vmem:[%s7127 + $0x34] sm:$0xf]
        %v7142 = vld [vmem:[%s7127 + $0x38] sm:$0xf]
        %v7143 = vld [vmem:[%s7127 + $0x3c] sm:$0xf]
        %v7144 = vrot.slane %v6494, 3
        %v7162 = vunpack.c.l.b16 %v7128
        %v7163 = vunpack.c.l.b16 %v7129
        %v7164 = vunpack.c.l.b16 %v7130
        %v7165 = vunpack.c.l.b16 %v7131
        %v7166 = vunpack.c.l.b16 %v7132
        %v7167 = vunpack.c.l.b16 %v7133
        %v7168 = vunpack.c.l.b16 %v7134
        %v7169 = vunpack.c.l.b16 %v7135
        %v7170 = vunpack.c.l.b16 %v7136
        %v7171 = vunpack.c.l.b16 %v7137
        %v7172 = vunpack.c.l.b16 %v7138
        %v7173 = vunpack.c.l.b16 %v7139
        %v7174 = vunpack.c.l.b16 %v7140
        %v7175 = vunpack.c.l.b16 %v7141
        %v7176 = vunpack.c.l.b16 %v7142
        %v7177 = vunpack.c.l.b16 %v7143
        %v7178 = vpack.c.b16 %v7163, %v7162
        %v7179 = vpack.c.b16 %v7165, %v7164
        %v7180 = vpack.c.b16 %v7167, %v7166
        %v7181 = vpack.c.b16 %v7169, %v7168
        %v7182 = vpack.c.b16 %v7171, %v7170
        %v7183 = vpack.c.b16 %v7173, %v7172
        %v7184 = vpack.c.b16 %v7175, %v7174
        %v7185 = vpack.c.b16 %v7177, %v7176
        %7194 = vmatprep.subr.bf16.mxu0 0
        %7195 = vmatpush1.bf16.msra.mxu0 %v7185
        %7196 = vmatprep.subr.bf16.mxu0 0
        %7197 = vmatpush1.bf16.msra.mxu0 %v7184
        %7198 = vmatprep.subr.bf16.mxu0 0
        %7199 = vmatpush1.bf16.msra.mxu0 %v7183
        %7200 = vmatprep.subr.bf16.mxu0 0
        %7201 = vmatpush1.bf16.msra.mxu0 %v7182
        %7202 = vmatprep.subr.bf16.mxu0 0
        %7203 = vmatpush1.bf16.msra.mxu0 %v7181
        %7204 = vmatprep.subr.bf16.mxu0 0
        %7205 = vmatpush1.bf16.msra.mxu0 %v7180
        %7206 = vmatprep.subr.bf16.mxu0 0
        %7207 = vmatpush1.bf16.msra.mxu0 %v7179
        %7208 = vmatprep.subr.bf16.mxu0 0
        %7209 = vmatpush1.bf16.msra.mxu0 %v7178
        %7210 = vmatprep.subr.bf16.mxu0 0
        %7211 = vmatpush2.bf16.msra.mxu0 0
        %7212 = vmatprep.subr.bf16.mxu0 0
        %7213 = vmatpush2.bf16.msra.mxu0 0
        %7214 = vmatprep.subr.bf16.mxu0 0
        %7215 = vmatpush2.bf16.msra.mxu0 0
        %7216 = vmatprep.subr.bf16.mxu0 0
        %7217 = vmatpush2.bf16.msra.mxu0 0
        %7218 = vmatprep.subr.bf16.mxu0 0
        %7219 = vmatpush2.bf16.msra.mxu0 0
        %7220 = vmatprep.subr.bf16.mxu0 0
        %7221 = vmatpush2.bf16.msra.mxu0 0
        %7222 = vmatprep.subr.bf16.mxu0 0
        %7223 = vmatpush2.bf16.msra.mxu0 0
        %7224 = vmatprep.subr.bf16.mxu0 0
        %7225 = vmatpush2.bf16.msra.mxu0 0
        %7226 = vmatprep.mubr.bf16.mxu0 0
        %7227 = vmatmul.mubr.bf16.gmra.mxu0 %v7144
        %v7228 = vpop.f32.mrf.mxu0
        %v7229 = vadd.f32 0.0, %v7228
        %v7230 = vpop.f32.mrf.mxu0
        %v7231 = vpop.f32.mrf.mxu0
        %v7232 = vpop.f32.mrf.mxu0
        %7233 = vdwg.mxu0
        %v7234 = vadd.f32 %v7126, %v7229
        %v7235 = vpack.c.bf16 %v5502, %v5502
        %s7236 = scalar_lea.vmem [#allocation8], 1024
        %v7237 = vld [vmem:[%s7236] sm:$0xf]
        %v7238 = vld [vmem:[%s7236 + $0x4] sm:$0xf]
        %v7239 = vld [vmem:[%s7236 + $0x8] sm:$0xf]
        %v7240 = vld [vmem:[%s7236 + $0xc] sm:$0xf]
        %v7241 = vld [vmem:[%s7236 + $0x10] sm:$0xf]
        %v7242 = vld [vmem:[%s7236 + $0x14] sm:$0xf]
        %v7243 = vld [vmem:[%s7236 + $0x18] sm:$0xf]
        %v7244 = vld [vmem:[%s7236 + $0x1c] sm:$0xf]
        %v7245 = vld [vmem:[%s7236 + $0x20] sm:$0xf]
        %v7246 = vld [vmem:[%s7236 + $0x24] sm:$0xf]
        %v7247 = vld [vmem:[%s7236 + $0x28] sm:$0xf]
        %v7248 = vld [vmem:[%s7236 + $0x2c] sm:$0xf]
        %v7249 = vld [vmem:[%s7236 + $0x30] sm:$0xf]
        %v7250 = vld [vmem:[%s7236 + $0x34] sm:$0xf]
        %v7251 = vld [vmem:[%s7236 + $0x38] sm:$0xf]
        %v7252 = vld [vmem:[%s7236 + $0x3c] sm:$0xf]
        %v7269 = vunpack.c.l.b16 %v7237
        %v7270 = vunpack.c.l.b16 %v7238
        %v7271 = vunpack.c.l.b16 %v7239
        %v7272 = vunpack.c.l.b16 %v7240
        %v7273 = vunpack.c.l.b16 %v7241
        %v7274 = vunpack.c.l.b16 %v7242
        %v7275 = vunpack.c.l.b16 %v7243
        %v7276 = vunpack.c.l.b16 %v7244
        %v7277 = vunpack.c.l.b16 %v7245
        %v7278 = vunpack.c.l.b16 %v7246
        %v7279 = vunpack.c.l.b16 %v7247
        %v7280 = vunpack.c.l.b16 %v7248
        %v7281 = vunpack.c.l.b16 %v7249
        %v7282 = vunpack.c.l.b16 %v7250
        %v7283 = vunpack.c.l.b16 %v7251
        %v7284 = vunpack.c.l.b16 %v7252
        %v7285 = vpack.c.b16 %v7270, %v7269
        %v7286 = vpack.c.b16 %v7272, %v7271
        %v7287 = vpack.c.b16 %v7274, %v7273
        %v7288 = vpack.c.b16 %v7276, %v7275
        %v7289 = vpack.c.b16 %v7278, %v7277
        %v7290 = vpack.c.b16 %v7280, %v7279
        %v7291 = vpack.c.b16 %v7282, %v7281
        %v7292 = vpack.c.b16 %v7284, %v7283
        %7301 = vmatprep.subr.bf16.mxu0 0
        %7302 = vmatpush1.bf16.msra.mxu0 %v7292
        %7303 = vmatprep.subr.bf16.mxu0 0
        %7304 = vmatpush1.bf16.msra.mxu0 %v7291
        %7305 = vmatprep.subr.bf16.mxu0 0
        %7306 = vmatpush1.bf16.msra.mxu0 %v7290
        %7307 = vmatprep.subr.bf16.mxu0 0
        %7308 = vmatpush1.bf16.msra.mxu0 %v7289
        %7309 = vmatprep.subr.bf16.mxu0 0
        %7310 = vmatpush1.bf16.msra.mxu0 %v7288
        %7311 = vmatprep.subr.bf16.mxu0 0
        %7312 = vmatpush1.bf16.msra.mxu0 %v7287
        %7313 = vmatprep.subr.bf16.mxu0 0
        %7314 = vmatpush1.bf16.msra.mxu0 %v7286
        %7315 = vmatprep.subr.bf16.mxu0 0
        %7316 = vmatpush1.bf16.msra.mxu0 %v7285
        %7317 = vmatprep.subr.bf16.mxu0 0
        %7318 = vmatpush2.bf16.msra.mxu0 0
        %7319 = vmatprep.subr.bf16.mxu0 0
        %7320 = vmatpush2.bf16.msra.mxu0 0
        %7321 = vmatprep.subr.bf16.mxu0 0
        %7322 = vmatpush2.bf16.msra.mxu0 0
        %7323 = vmatprep.subr.bf16.mxu0 0
        %7324 = vmatpush2.bf16.msra.mxu0 0
        %7325 = vmatprep.subr.bf16.mxu0 0
        %7326 = vmatpush2.bf16.msra.mxu0 0
        %7327 = vmatprep.subr.bf16.mxu0 0
        %7328 = vmatpush2.bf16.msra.mxu0 0
        %7329 = vmatprep.subr.bf16.mxu0 0
        %7330 = vmatpush2.bf16.msra.mxu0 0
        %7331 = vmatprep.subr.bf16.mxu0 0
        %7332 = vmatpush2.bf16.msra.mxu0 0
        %7333 = vmatprep.mubr.bf16.mxu0 0
        %7334 = vmatmul.mubr.bf16.gmra.mxu0 %v7235
        %v7335 = vpop.f32.mrf.mxu0
        %v7336 = vadd.f32 0.0, %v7335
        %v7337 = vpop.f32.mrf.mxu0
        %v7338 = vpop.f32.mrf.mxu0
        %v7339 = vpop.f32.mrf.mxu0
        %7340 = vdwg.mxu0
        %v7341 = vadd.f32 %v7234, %v7336
        %s7342 = scalar_lea.vmem [#allocation8], 1088
        %v7343 = vld [vmem:[%s7342] sm:$0xf]
        %v7344 = vld [vmem:[%s7342 + $0x4] sm:$0xf]
        %v7345 = vld [vmem:[%s7342 + $0x8] sm:$0xf]
        %v7346 = vld [vmem:[%s7342 + $0xc] sm:$0xf]
        %v7347 = vld [vmem:[%s7342 + $0x10] sm:$0xf]
        %v7348 = vld [vmem:[%s7342 + $0x14] sm:$0xf]
        %v7349 = vld [vmem:[%s7342 + $0x18] sm:$0xf]
        %v7350 = vld [vmem:[%s7342 + $0x1c] sm:$0xf]
        %v7351 = vld [vmem:[%s7342 + $0x20] sm:$0xf]
        %v7352 = vld [vmem:[%s7342 + $0x24] sm:$0xf]
        %v7353 = vld [vmem:[%s7342 + $0x28] sm:$0xf]
        %v7354 = vld [vmem:[%s7342 + $0x2c] sm:$0xf]
        %v7355 = vld [vmem:[%s7342 + $0x30] sm:$0xf]
        %v7356 = vld [vmem:[%s7342 + $0x34] sm:$0xf]
        %v7357 = vld [vmem:[%s7342 + $0x38] sm:$0xf]
        %v7358 = vld [vmem:[%s7342 + $0x3c] sm:$0xf]
        %v7360 = vshrl.u32 %v7235, 16
        %v7379 = vunpack.c.l.b16 %v7343
        %v7380 = vunpack.c.l.b16 %v7344
        %v7381 = vunpack.c.l.b16 %v7345
        %v7382 = vunpack.c.l.b16 %v7346
        %v7383 = vunpack.c.l.b16 %v7347
        %v7384 = vunpack.c.l.b16 %v7348
        %v7385 = vunpack.c.l.b16 %v7349
        %v7386 = vunpack.c.l.b16 %v7350
        %v7387 = vunpack.c.l.b16 %v7351
        %v7388 = vunpack.c.l.b16 %v7352
        %v7389 = vunpack.c.l.b16 %v7353
        %v7390 = vunpack.c.l.b16 %v7354
        %v7391 = vunpack.c.l.b16 %v7355
        %v7392 = vunpack.c.l.b16 %v7356
        %v7393 = vunpack.c.l.b16 %v7357
        %v7394 = vunpack.c.l.b16 %v7358
        %v7395 = vpack.c.b16 %v7380, %v7379
        %v7396 = vpack.c.b16 %v7382, %v7381
        %v7397 = vpack.c.b16 %v7384, %v7383
        %v7398 = vpack.c.b16 %v7386, %v7385
        %v7399 = vpack.c.b16 %v7388, %v7387
        %v7400 = vpack.c.b16 %v7390, %v7389
        %v7401 = vpack.c.b16 %v7392, %v7391
        %v7402 = vpack.c.b16 %v7394, %v7393
        %7411 = vmatprep.subr.bf16.mxu0 0
        %7412 = vmatpush1.bf16.msra.mxu0 %v7402
        %7413 = vmatprep.subr.bf16.mxu0 0
        %7414 = vmatpush1.bf16.msra.mxu0 %v7401
        %7415 = vmatprep.subr.bf16.mxu0 0
        %7416 = vmatpush1.bf16.msra.mxu0 %v7400
        %7417 = vmatprep.subr.bf16.mxu0 0
        %7418 = vmatpush1.bf16.msra.mxu0 %v7399
        %7419 = vmatprep.subr.bf16.mxu0 0
        %7420 = vmatpush1.bf16.msra.mxu0 %v7398
        %7421 = vmatprep.subr.bf16.mxu0 0
        %7422 = vmatpush1.bf16.msra.mxu0 %v7397
        %7423 = vmatprep.subr.bf16.mxu0 0
        %7424 = vmatpush1.bf16.msra.mxu0 %v7396
        %7425 = vmatprep.subr.bf16.mxu0 0
        %7426 = vmatpush1.bf16.msra.mxu0 %v7395
        %7427 = vmatprep.subr.bf16.mxu0 0
        %7428 = vmatpush2.bf16.msra.mxu0 0
        %7429 = vmatprep.subr.bf16.mxu0 0
        %7430 = vmatpush2.bf16.msra.mxu0 0
        %7431 = vmatprep.subr.bf16.mxu0 0
        %7432 = vmatpush2.bf16.msra.mxu0 0
        %7433 = vmatprep.subr.bf16.mxu0 0
        %7434 = vmatpush2.bf16.msra.mxu0 0
        %7435 = vmatprep.subr.bf16.mxu0 0
        %7436 = vmatpush2.bf16.msra.mxu0 0
        %7437 = vmatprep.subr.bf16.mxu0 0
        %7438 = vmatpush2.bf16.msra.mxu0 0
        %7439 = vmatprep.subr.bf16.mxu0 0
        %7440 = vmatpush2.bf16.msra.mxu0 0
        %7441 = vmatprep.subr.bf16.mxu0 0
        %7442 = vmatpush2.bf16.msra.mxu0 0
        %7443 = vmatprep.mubr.bf16.mxu0 0
        %7444 = vmatmul.mubr.bf16.gmra.mxu0 %v7360
        %v7445 = vpop.f32.mrf.mxu0
        %v7446 = vadd.f32 0.0, %v7445
        %v7447 = vpop.f32.mrf.mxu0
        %v7448 = vpop.f32.mrf.mxu0
        %v7449 = vpop.f32.mrf.mxu0
        %7450 = vdwg.mxu0
        %v7451 = vadd.f32 %v7341, %v7446
        %s7452 = scalar_lea.vmem [#allocation8], 1152
        %v7453 = vld [vmem:[%s7452] sm:$0xf]
        %v7454 = vld [vmem:[%s7452 + $0x4] sm:$0xf]
        %v7455 = vld [vmem:[%s7452 + $0x8] sm:$0xf]
        %v7456 = vld [vmem:[%s7452 + $0xc] sm:$0xf]
        %v7457 = vld [vmem:[%s7452 + $0x10] sm:$0xf]
        %v7458 = vld [vmem:[%s7452 + $0x14] sm:$0xf]
        %v7459 = vld [vmem:[%s7452 + $0x18] sm:$0xf]
        %v7460 = vld [vmem:[%s7452 + $0x1c] sm:$0xf]
        %v7461 = vld [vmem:[%s7452 + $0x20] sm:$0xf]
        %v7462 = vld [vmem:[%s7452 + $0x24] sm:$0xf]
        %v7463 = vld [vmem:[%s7452 + $0x28] sm:$0xf]
        %v7464 = vld [vmem:[%s7452 + $0x2c] sm:$0xf]
        %v7465 = vld [vmem:[%s7452 + $0x30] sm:$0xf]
        %v7466 = vld [vmem:[%s7452 + $0x34] sm:$0xf]
        %v7467 = vld [vmem:[%s7452 + $0x38] sm:$0xf]
        %v7468 = vld [vmem:[%s7452 + $0x3c] sm:$0xf]
        %v7470 = vrot.slane %v7235, 1
        %v7488 = vunpack.c.l.b16 %v7453
        %v7489 = vunpack.c.l.b16 %v7454
        %v7490 = vunpack.c.l.b16 %v7455
        %v7491 = vunpack.c.l.b16 %v7456
        %v7492 = vunpack.c.l.b16 %v7457
        %v7493 = vunpack.c.l.b16 %v7458
        %v7494 = vunpack.c.l.b16 %v7459
        %v7495 = vunpack.c.l.b16 %v7460
        %v7496 = vunpack.c.l.b16 %v7461
        %v7497 = vunpack.c.l.b16 %v7462
        %v7498 = vunpack.c.l.b16 %v7463
        %v7499 = vunpack.c.l.b16 %v7464
        %v7500 = vunpack.c.l.b16 %v7465
        %v7501 = vunpack.c.l.b16 %v7466
        %v7502 = vunpack.c.l.b16 %v7467
        %v7503 = vunpack.c.l.b16 %v7468
        %v7504 = vpack.c.b16 %v7489, %v7488
        %v7505 = vpack.c.b16 %v7491, %v7490
        %v7506 = vpack.c.b16 %v7493, %v7492
        %v7507 = vpack.c.b16 %v7495, %v7494
        %v7508 = vpack.c.b16 %v7497, %v7496
        %v7509 = vpack.c.b16 %v7499, %v7498
        %v7510 = vpack.c.b16 %v7501, %v7500
        %v7511 = vpack.c.b16 %v7503, %v7502
        %7520 = vmatprep.subr.bf16.mxu0 0
        %7521 = vmatpush1.bf16.msra.mxu0 %v7511
        %7522 = vmatprep.subr.bf16.mxu0 0
        %7523 = vmatpush1.bf16.msra.mxu0 %v7510
        %7524 = vmatprep.subr.bf16.mxu0 0
        %7525 = vmatpush1.bf16.msra.mxu0 %v7509
        %7526 = vmatprep.subr.bf16.mxu0 0
        %7527 = vmatpush1.bf16.msra.mxu0 %v7508
        %7528 = vmatprep.subr.bf16.mxu0 0
        %7529 = vmatpush1.bf16.msra.mxu0 %v7507
        %7530 = vmatprep.subr.bf16.mxu0 0
        %7531 = vmatpush1.bf16.msra.mxu0 %v7506
        %7532 = vmatprep.subr.bf16.mxu0 0
        %7533 = vmatpush1.bf16.msra.mxu0 %v7505
        %7534 = vmatprep.subr.bf16.mxu0 0
        %7535 = vmatpush1.bf16.msra.mxu0 %v7504
        %7536 = vmatprep.subr.bf16.mxu0 0
        %7537 = vmatpush2.bf16.msra.mxu0 0
        %7538 = vmatprep.subr.bf16.mxu0 0
        %7539 = vmatpush2.bf16.msra.mxu0 0
        %7540 = vmatprep.subr.bf16.mxu0 0
        %7541 = vmatpush2.bf16.msra.mxu0 0
        %7542 = vmatprep.subr.bf16.mxu0 0
        %7543 = vmatpush2.bf16.msra.mxu0 0
        %7544 = vmatprep.subr.bf16.mxu0 0
        %7545 = vmatpush2.bf16.msra.mxu0 0
        %7546 = vmatprep.subr.bf16.mxu0 0
        %7547 = vmatpush2.bf16.msra.mxu0 0
        %7548 = vmatprep.subr.bf16.mxu0 0
        %7549 = vmatpush2.bf16.msra.mxu0 0
        %7550 = vmatprep.subr.bf16.mxu0 0
        %7551 = vmatpush2.bf16.msra.mxu0 0
        %7552 = vmatprep.mubr.bf16.mxu0 0
        %7553 = vmatmul.mubr.bf16.gmra.mxu0 %v7470
        %v7554 = vpop.f32.mrf.mxu0
        %v7555 = vadd.f32 0.0, %v7554
        %v7556 = vpop.f32.mrf.mxu0
        %v7557 = vpop.f32.mrf.mxu0
        %v7558 = vpop.f32.mrf.mxu0
        %7559 = vdwg.mxu0
        %v7560 = vadd.f32 %v7451, %v7555
        %s7561 = scalar_lea.vmem [#allocation8], 1216
        %v7562 = vld [vmem:[%s7561] sm:$0xf]
        %v7563 = vld [vmem:[%s7561 + $0x4] sm:$0xf]
        %v7564 = vld [vmem:[%s7561 + $0x8] sm:$0xf]
        %v7565 = vld [vmem:[%s7561 + $0xc] sm:$0xf]
        %v7566 = vld [vmem:[%s7561 + $0x10] sm:$0xf]
        %v7567 = vld [vmem:[%s7561 + $0x14] sm:$0xf]
        %v7568 = vld [vmem:[%s7561 + $0x18] sm:$0xf]
        %v7569 = vld [vmem:[%s7561 + $0x1c] sm:$0xf]
        %v7570 = vld [vmem:[%s7561 + $0x20] sm:$0xf]
        %v7571 = vld [vmem:[%s7561 + $0x24] sm:$0xf]
        %v7572 = vld [vmem:[%s7561 + $0x28] sm:$0xf]
        %v7573 = vld [vmem:[%s7561 + $0x2c] sm:$0xf]
        %v7574 = vld [vmem:[%s7561 + $0x30] sm:$0xf]
        %v7575 = vld [vmem:[%s7561 + $0x34] sm:$0xf]
        %v7576 = vld [vmem:[%s7561 + $0x38] sm:$0xf]
        %v7577 = vld [vmem:[%s7561 + $0x3c] sm:$0xf]
        %v7578 = vrot.slane %v7360, 1
        %v7596 = vunpack.c.l.b16 %v7562
        %v7597 = vunpack.c.l.b16 %v7563
        %v7598 = vunpack.c.l.b16 %v7564
        %v7599 = vunpack.c.l.b16 %v7565
        %v7600 = vunpack.c.l.b16 %v7566
        %v7601 = vunpack.c.l.b16 %v7567
        %v7602 = vunpack.c.l.b16 %v7568
        %v7603 = vunpack.c.l.b16 %v7569
        %v7604 = vunpack.c.l.b16 %v7570
        %v7605 = vunpack.c.l.b16 %v7571
        %v7606 = vunpack.c.l.b16 %v7572
        %v7607 = vunpack.c.l.b16 %v7573
        %v7608 = vunpack.c.l.b16 %v7574
        %v7609 = vunpack.c.l.b16 %v7575
        %v7610 = vunpack.c.l.b16 %v7576
        %v7611 = vunpack.c.l.b16 %v7577
        %v7612 = vpack.c.b16 %v7597, %v7596
        %v7613 = vpack.c.b16 %v7599, %v7598
        %v7614 = vpack.c.b16 %v7601, %v7600
        %v7615 = vpack.c.b16 %v7603, %v7602
        %v7616 = vpack.c.b16 %v7605, %v7604
        %v7617 = vpack.c.b16 %v7607, %v7606
        %v7618 = vpack.c.b16 %v7609, %v7608
        %v7619 = vpack.c.b16 %v7611, %v7610
        %7628 = vmatprep.subr.bf16.mxu0 0
        %7629 = vmatpush1.bf16.msra.mxu0 %v7619
        %7630 = vmatprep.subr.bf16.mxu0 0
        %7631 = vmatpush1.bf16.msra.mxu0 %v7618
        %7632 = vmatprep.subr.bf16.mxu0 0
        %7633 = vmatpush1.bf16.msra.mxu0 %v7617
        %7634 = vmatprep.subr.bf16.mxu0 0
        %7635 = vmatpush1.bf16.msra.mxu0 %v7616
        %7636 = vmatprep.subr.bf16.mxu0 0
        %7637 = vmatpush1.bf16.msra.mxu0 %v7615
        %7638 = vmatprep.subr.bf16.mxu0 0
        %7639 = vmatpush1.bf16.msra.mxu0 %v7614
        %7640 = vmatprep.subr.bf16.mxu0 0
        %7641 = vmatpush1.bf16.msra.mxu0 %v7613
        %7642 = vmatprep.subr.bf16.mxu0 0
        %7643 = vmatpush1.bf16.msra.mxu0 %v7612
        %7644 = vmatprep.subr.bf16.mxu0 0
        %7645 = vmatpush2.bf16.msra.mxu0 0
        %7646 = vmatprep.subr.bf16.mxu0 0
        %7647 = vmatpush2.bf16.msra.mxu0 0
        %7648 = vmatprep.subr.bf16.mxu0 0
        %7649 = vmatpush2.bf16.msra.mxu0 0
        %7650 = vmatprep.subr.bf16.mxu0 0
        %7651 = vmatpush2.bf16.msra.mxu0 0
        %7652 = vmatprep.subr.bf16.mxu0 0
        %7653 = vmatpush2.bf16.msra.mxu0 0
        %7654 = vmatprep.subr.bf16.mxu0 0
        %7655 = vmatpush2.bf16.msra.mxu0 0
        %7656 = vmatprep.subr.bf16.mxu0 0
        %7657 = vmatpush2.bf16.msra.mxu0 0
        %7658 = vmatprep.subr.bf16.mxu0 0
        %7659 = vmatpush2.bf16.msra.mxu0 0
        %7660 = vmatprep.mubr.bf16.mxu0 0
        %7661 = vmatmul.mubr.bf16.gmra.mxu0 %v7578
        %v7662 = vpop.f32.mrf.mxu0
        %v7663 = vadd.f32 0.0, %v7662
        %v7664 = vpop.f32.mrf.mxu0
        %v7665 = vpop.f32.mrf.mxu0
        %v7666 = vpop.f32.mrf.mxu0
        %7667 = vdwg.mxu0
        %v7668 = vadd.f32 %v7560, %v7663
        %s7669 = scalar_lea.vmem [#allocation8], 1280
        %v7670 = vld [vmem:[%s7669] sm:$0xf]
        %v7671 = vld [vmem:[%s7669 + $0x4] sm:$0xf]
        %v7672 = vld [vmem:[%s7669 + $0x8] sm:$0xf]
        %v7673 = vld [vmem:[%s7669 + $0xc] sm:$0xf]
        %v7674 = vld [vmem:[%s7669 + $0x10] sm:$0xf]
        %v7675 = vld [vmem:[%s7669 + $0x14] sm:$0xf]
        %v7676 = vld [vmem:[%s7669 + $0x18] sm:$0xf]
        %v7677 = vld [vmem:[%s7669 + $0x1c] sm:$0xf]
        %v7678 = vld [vmem:[%s7669 + $0x20] sm:$0xf]
        %v7679 = vld [vmem:[%s7669 + $0x24] sm:$0xf]
        %v7680 = vld [vmem:[%s7669 + $0x28] sm:$0xf]
        %v7681 = vld [vmem:[%s7669 + $0x2c] sm:$0xf]
        %v7682 = vld [vmem:[%s7669 + $0x30] sm:$0xf]
        %v7683 = vld [vmem:[%s7669 + $0x34] sm:$0xf]
        %v7684 = vld [vmem:[%s7669 + $0x38] sm:$0xf]
        %v7685 = vld [vmem:[%s7669 + $0x3c] sm:$0xf]
        %v7686 = vrot.slane %v7235, 2
        %v7704 = vunpack.c.l.b16 %v7670
        %v7705 = vunpack.c.l.b16 %v7671
        %v7706 = vunpack.c.l.b16 %v7672
        %v7707 = vunpack.c.l.b16 %v7673
        %v7708 = vunpack.c.l.b16 %v7674
        %v7709 = vunpack.c.l.b16 %v7675
        %v7710 = vunpack.c.l.b16 %v7676
        %v7711 = vunpack.c.l.b16 %v7677
        %v7712 = vunpack.c.l.b16 %v7678
        %v7713 = vunpack.c.l.b16 %v7679
        %v7714 = vunpack.c.l.b16 %v7680
        %v7715 = vunpack.c.l.b16 %v7681
        %v7716 = vunpack.c.l.b16 %v7682
        %v7717 = vunpack.c.l.b16 %v7683
        %v7718 = vunpack.c.l.b16 %v7684
        %v7719 = vunpack.c.l.b16 %v7685
        %v7720 = vpack.c.b16 %v7705, %v7704
        %v7721 = vpack.c.b16 %v7707, %v7706
        %v7722 = vpack.c.b16 %v7709, %v7708
        %v7723 = vpack.c.b16 %v7711, %v7710
        %v7724 = vpack.c.b16 %v7713, %v7712
        %v7725 = vpack.c.b16 %v7715, %v7714
        %v7726 = vpack.c.b16 %v7717, %v7716
        %v7727 = vpack.c.b16 %v7719, %v7718
        %7736 = vmatprep.subr.bf16.mxu0 0
        %7737 = vmatpush1.bf16.msra.mxu0 %v7727
        %7738 = vmatprep.subr.bf16.mxu0 0
        %7739 = vmatpush1.bf16.msra.mxu0 %v7726
        %7740 = vmatprep.subr.bf16.mxu0 0
        %7741 = vmatpush1.bf16.msra.mxu0 %v7725
        %7742 = vmatprep.subr.bf16.mxu0 0
        %7743 = vmatpush1.bf16.msra.mxu0 %v7724
        %7744 = vmatprep.subr.bf16.mxu0 0
        %7745 = vmatpush1.bf16.msra.mxu0 %v7723
        %7746 = vmatprep.subr.bf16.mxu0 0
        %7747 = vmatpush1.bf16.msra.mxu0 %v7722
        %7748 = vmatprep.subr.bf16.mxu0 0
        %7749 = vmatpush1.bf16.msra.mxu0 %v7721
        %7750 = vmatprep.subr.bf16.mxu0 0
        %7751 = vmatpush1.bf16.msra.mxu0 %v7720
        %7752 = vmatprep.subr.bf16.mxu0 0
        %7753 = vmatpush2.bf16.msra.mxu0 0
        %7754 = vmatprep.subr.bf16.mxu0 0
        %7755 = vmatpush2.bf16.msra.mxu0 0
        %7756 = vmatprep.subr.bf16.mxu0 0
        %7757 = vmatpush2.bf16.msra.mxu0 0
        %7758 = vmatprep.subr.bf16.mxu0 0
        %7759 = vmatpush2.bf16.msra.mxu0 0
        %7760 = vmatprep.subr.bf16.mxu0 0
        %7761 = vmatpush2.bf16.msra.mxu0 0
        %7762 = vmatprep.subr.bf16.mxu0 0
        %7763 = vmatpush2.bf16.msra.mxu0 0
        %7764 = vmatprep.subr.bf16.mxu0 0
        %7765 = vmatpush2.bf16.msra.mxu0 0
        %7766 = vmatprep.subr.bf16.mxu0 0
        %7767 = vmatpush2.bf16.msra.mxu0 0
        %7768 = vmatprep.mubr.bf16.mxu0 0
        %7769 = vmatmul.mubr.bf16.gmra.mxu0 %v7686
        %v7770 = vpop.f32.mrf.mxu0
        %v7771 = vadd.f32 0.0, %v7770
        %v7772 = vpop.f32.mrf.mxu0
        %v7773 = vpop.f32.mrf.mxu0
        %v7774 = vpop.f32.mrf.mxu0
        %7775 = vdwg.mxu0
        %v7776 = vadd.f32 %v7668, %v7771
        %s7777 = scalar_lea.vmem [#allocation8], 1344
        %v7778 = vld [vmem:[%s7777] sm:$0xf]
        %v7779 = vld [vmem:[%s7777 + $0x4] sm:$0xf]
        %v7780 = vld [vmem:[%s7777 + $0x8] sm:$0xf]
        %v7781 = vld [vmem:[%s7777 + $0xc] sm:$0xf]
        %v7782 = vld [vmem:[%s7777 + $0x10] sm:$0xf]
        %v7783 = vld [vmem:[%s7777 + $0x14] sm:$0xf]
        %v7784 = vld [vmem:[%s7777 + $0x18] sm:$0xf]
        %v7785 = vld [vmem:[%s7777 + $0x1c] sm:$0xf]
        %v7786 = vld [vmem:[%s7777 + $0x20] sm:$0xf]
        %v7787 = vld [vmem:[%s7777 + $0x24] sm:$0xf]
        %v7788 = vld [vmem:[%s7777 + $0x28] sm:$0xf]
        %v7789 = vld [vmem:[%s7777 + $0x2c] sm:$0xf]
        %v7790 = vld [vmem:[%s7777 + $0x30] sm:$0xf]
        %v7791 = vld [vmem:[%s7777 + $0x34] sm:$0xf]
        %v7792 = vld [vmem:[%s7777 + $0x38] sm:$0xf]
        %v7793 = vld [vmem:[%s7777 + $0x3c] sm:$0xf]
        %v7794 = vrot.slane %v7360, 2
        %v7812 = vunpack.c.l.b16 %v7778
        %v7813 = vunpack.c.l.b16 %v7779
        %v7814 = vunpack.c.l.b16 %v7780
        %v7815 = vunpack.c.l.b16 %v7781
        %v7816 = vunpack.c.l.b16 %v7782
        %v7817 = vunpack.c.l.b16 %v7783
        %v7818 = vunpack.c.l.b16 %v7784
        %v7819 = vunpack.c.l.b16 %v7785
        %v7820 = vunpack.c.l.b16 %v7786
        %v7821 = vunpack.c.l.b16 %v7787
        %v7822 = vunpack.c.l.b16 %v7788
        %v7823 = vunpack.c.l.b16 %v7789
        %v7824 = vunpack.c.l.b16 %v7790
        %v7825 = vunpack.c.l.b16 %v7791
        %v7826 = vunpack.c.l.b16 %v7792
        %v7827 = vunpack.c.l.b16 %v7793
        %v7828 = vpack.c.b16 %v7813, %v7812
        %v7829 = vpack.c.b16 %v7815, %v7814
        %v7830 = vpack.c.b16 %v7817, %v7816
        %v7831 = vpack.c.b16 %v7819, %v7818
        %v7832 = vpack.c.b16 %v7821, %v7820
        %v7833 = vpack.c.b16 %v7823, %v7822
        %v7834 = vpack.c.b16 %v7825, %v7824
        %v7835 = vpack.c.b16 %v7827, %v7826
        %7844 = vmatprep.subr.bf16.mxu0 0
        %7845 = vmatpush1.bf16.msra.mxu0 %v7835
        %7846 = vmatprep.subr.bf16.mxu0 0
        %7847 = vmatpush1.bf16.msra.mxu0 %v7834
        %7848 = vmatprep.subr.bf16.mxu0 0
        %7849 = vmatpush1.bf16.msra.mxu0 %v7833
        %7850 = vmatprep.subr.bf16.mxu0 0
        %7851 = vmatpush1.bf16.msra.mxu0 %v7832
        %7852 = vmatprep.subr.bf16.mxu0 0
        %7853 = vmatpush1.bf16.msra.mxu0 %v7831
        %7854 = vmatprep.subr.bf16.mxu0 0
        %7855 = vmatpush1.bf16.msra.mxu0 %v7830
        %7856 = vmatprep.subr.bf16.mxu0 0
        %7857 = vmatpush1.bf16.msra.mxu0 %v7829
        %7858 = vmatprep.subr.bf16.mxu0 0
        %7859 = vmatpush1.bf16.msra.mxu0 %v7828
        %7860 = vmatprep.subr.bf16.mxu0 0
        %7861 = vmatpush2.bf16.msra.mxu0 0
        %7862 = vmatprep.subr.bf16.mxu0 0
        %7863 = vmatpush2.bf16.msra.mxu0 0
        %7864 = vmatprep.subr.bf16.mxu0 0
        %7865 = vmatpush2.bf16.msra.mxu0 0
        %7866 = vmatprep.subr.bf16.mxu0 0
        %7867 = vmatpush2.bf16.msra.mxu0 0
        %7868 = vmatprep.subr.bf16.mxu0 0
        %7869 = vmatpush2.bf16.msra.mxu0 0
        %7870 = vmatprep.subr.bf16.mxu0 0
        %7871 = vmatpush2.bf16.msra.mxu0 0
        %7872 = vmatprep.subr.bf16.mxu0 0
        %7873 = vmatpush2.bf16.msra.mxu0 0
        %7874 = vmatprep.subr.bf16.mxu0 0
        %7875 = vmatpush2.bf16.msra.mxu0 0
        %7876 = vmatprep.mubr.bf16.mxu0 0
        %7877 = vmatmul.mubr.bf16.gmra.mxu0 %v7794
        %v7878 = vpop.f32.mrf.mxu0
        %v7879 = vadd.f32 0.0, %v7878
        %v7880 = vpop.f32.mrf.mxu0
        %v7881 = vpop.f32.mrf.mxu0
        %v7882 = vpop.f32.mrf.mxu0
        %7883 = vdwg.mxu0
        %v7884 = vadd.f32 %v7776, %v7879
        %s7885 = scalar_lea.vmem [#allocation8], 1408
        %v7886 = vld [vmem:[%s7885] sm:$0xf]
        %v7887 = vld [vmem:[%s7885 + $0x4] sm:$0xf]
        %v7888 = vld [vmem:[%s7885 + $0x8] sm:$0xf]
        %v7889 = vld [vmem:[%s7885 + $0xc] sm:$0xf]
        %v7890 = vld [vmem:[%s7885 + $0x10] sm:$0xf]
        %v7891 = vld [vmem:[%s7885 + $0x14] sm:$0xf]
        %v7892 = vld [vmem:[%s7885 + $0x18] sm:$0xf]
        %v7893 = vld [vmem:[%s7885 + $0x1c] sm:$0xf]
        %v7894 = vld [vmem:[%s7885 + $0x20] sm:$0xf]
        %v7895 = vld [vmem:[%s7885 + $0x24] sm:$0xf]
        %v7896 = vld [vmem:[%s7885 + $0x28] sm:$0xf]
        %v7897 = vld [vmem:[%s7885 + $0x2c] sm:$0xf]
        %v7898 = vld [vmem:[%s7885 + $0x30] sm:$0xf]
        %v7899 = vld [vmem:[%s7885 + $0x34] sm:$0xf]
        %v7900 = vld [vmem:[%s7885 + $0x38] sm:$0xf]
        %v7901 = vld [vmem:[%s7885 + $0x3c] sm:$0xf]
        %v7902 = vrot.slane %v7235, 3
        %v7920 = vunpack.c.l.b16 %v7886
        %v7921 = vunpack.c.l.b16 %v7887
        %v7922 = vunpack.c.l.b16 %v7888
        %v7923 = vunpack.c.l.b16 %v7889
        %v7924 = vunpack.c.l.b16 %v7890
        %v7925 = vunpack.c.l.b16 %v7891
        %v7926 = vunpack.c.l.b16 %v7892
        %v7927 = vunpack.c.l.b16 %v7893
        %v7928 = vunpack.c.l.b16 %v7894
        %v7929 = vunpack.c.l.b16 %v7895
        %v7930 = vunpack.c.l.b16 %v7896
        %v7931 = vunpack.c.l.b16 %v7897
        %v7932 = vunpack.c.l.b16 %v7898
        %v7933 = vunpack.c.l.b16 %v7899
        %v7934 = vunpack.c.l.b16 %v7900
        %v7935 = vunpack.c.l.b16 %v7901
        %v7936 = vpack.c.b16 %v7921, %v7920
        %v7937 = vpack.c.b16 %v7923, %v7922
        %v7938 = vpack.c.b16 %v7925, %v7924
        %v7939 = vpack.c.b16 %v7927, %v7926
        %v7940 = vpack.c.b16 %v7929, %v7928
        %v7941 = vpack.c.b16 %v7931, %v7930
        %v7942 = vpack.c.b16 %v7933, %v7932
        %v7943 = vpack.c.b16 %v7935, %v7934
        %7952 = vmatprep.subr.bf16.mxu0 0
        %7953 = vmatpush1.bf16.msra.mxu0 %v7943
        %7954 = vmatprep.subr.bf16.mxu0 0
        %7955 = vmatpush1.bf16.msra.mxu0 %v7942
        %7956 = vmatprep.subr.bf16.mxu0 0
        %7957 = vmatpush1.bf16.msra.mxu0 %v7941
        %7958 = vmatprep.subr.bf16.mxu0 0
        %7959 = vmatpush1.bf16.msra.mxu0 %v7940
        %7960 = vmatprep.subr.bf16.mxu0 0
        %7961 = vmatpush1.bf16.msra.mxu0 %v7939
        %7962 = vmatprep.subr.bf16.mxu0 0
        %7963 = vmatpush1.bf16.msra.mxu0 %v7938
        %7964 = vmatprep.subr.bf16.mxu0 0
        %7965 = vmatpush1.bf16.msra.mxu0 %v7937
        %7966 = vmatprep.subr.bf16.mxu0 0
        %7967 = vmatpush1.bf16.msra.mxu0 %v7936
        %7968 = vmatprep.subr.bf16.mxu0 0
        %7969 = vmatpush2.bf16.msra.mxu0 0
        %7970 = vmatprep.subr.bf16.mxu0 0
        %7971 = vmatpush2.bf16.msra.mxu0 0
        %7972 = vmatprep.subr.bf16.mxu0 0
        %7973 = vmatpush2.bf16.msra.mxu0 0
        %7974 = vmatprep.subr.bf16.mxu0 0
        %7975 = vmatpush2.bf16.msra.mxu0 0
        %7976 = vmatprep.subr.bf16.mxu0 0
        %7977 = vmatpush2.bf16.msra.mxu0 0
        %7978 = vmatprep.subr.bf16.mxu0 0
        %7979 = vmatpush2.bf16.msra.mxu0 0
        %7980 = vmatprep.subr.bf16.mxu0 0
        %7981 = vmatpush2.bf16.msra.mxu0 0
        %7982 = vmatprep.subr.bf16.mxu0 0
        %7983 = vmatpush2.bf16.msra.mxu0 0
        %7984 = vmatprep.mubr.bf16.mxu0 0
        %7985 = vmatmul.mubr.bf16.gmra.mxu0 %v7902
        %v7986 = vpop.f32.mrf.mxu0
        %v7987 = vadd.f32 0.0, %v7986
        %v7988 = vpop.f32.mrf.mxu0
        %v7989 = vpop.f32.mrf.mxu0
        %v7990 = vpop.f32.mrf.mxu0
        %7991 = vdwg.mxu0
        %v7992 = vadd.f32 %v7884, %v7987
        %s7993 = scalar_lea.vmem [#allocation8], 1472
        %v7994 = vld [vmem:[%s7993] sm:$0xf]
        %v7995 = vld [vmem:[%s7993 + $0x4] sm:$0xf]
        %v7996 = vld [vmem:[%s7993 + $0x8] sm:$0xf]
        %v7997 = vld [vmem:[%s7993 + $0xc] sm:$0xf]
        %v7998 = vld [vmem:[%s7993 + $0x10] sm:$0xf]
        %v7999 = vld [vmem:[%s7993 + $0x14] sm:$0xf]
        %v8000 = vld [vmem:[%s7993 + $0x18] sm:$0xf]
        %v8001 = vld [vmem:[%s7993 + $0x1c] sm:$0xf]
        %v8002 = vld [vmem:[%s7993 + $0x20] sm:$0xf]
        %v8003 = vld [vmem:[%s7993 + $0x24] sm:$0xf]
        %v8004 = vld [vmem:[%s7993 + $0x28] sm:$0xf]
        %v8005 = vld [vmem:[%s7993 + $0x2c] sm:$0xf]
        %v8006 = vld [vmem:[%s7993 + $0x30] sm:$0xf]
        %v8007 = vld [vmem:[%s7993 + $0x34] sm:$0xf]
        %v8008 = vld [vmem:[%s7993 + $0x38] sm:$0xf]
        %v8009 = vld [vmem:[%s7993 + $0x3c] sm:$0xf]
        %v8010 = vrot.slane %v7360, 3
        %v8028 = vunpack.c.l.b16 %v7994
        %v8029 = vunpack.c.l.b16 %v7995
        %v8030 = vunpack.c.l.b16 %v7996
        %v8031 = vunpack.c.l.b16 %v7997
        %v8032 = vunpack.c.l.b16 %v7998
        %v8033 = vunpack.c.l.b16 %v7999
        %v8034 = vunpack.c.l.b16 %v8000
        %v8035 = vunpack.c.l.b16 %v8001
        %v8036 = vunpack.c.l.b16 %v8002
        %v8037 = vunpack.c.l.b16 %v8003
        %v8038 = vunpack.c.l.b16 %v8004
        %v8039 = vunpack.c.l.b16 %v8005
        %v8040 = vunpack.c.l.b16 %v8006
        %v8041 = vunpack.c.l.b16 %v8007
        %v8042 = vunpack.c.l.b16 %v8008
        %v8043 = vunpack.c.l.b16 %v8009
        %v8044 = vpack.c.b16 %v8029, %v8028
        %v8045 = vpack.c.b16 %v8031, %v8030
        %v8046 = vpack.c.b16 %v8033, %v8032
        %v8047 = vpack.c.b16 %v8035, %v8034
        %v8048 = vpack.c.b16 %v8037, %v8036
        %v8049 = vpack.c.b16 %v8039, %v8038
        %v8050 = vpack.c.b16 %v8041, %v8040
        %v8051 = vpack.c.b16 %v8043, %v8042
        %8060 = vmatprep.subr.bf16.mxu0 0
        %8061 = vmatpush1.bf16.msra.mxu0 %v8051
        %8062 = vmatprep.subr.bf16.mxu0 0
        %8063 = vmatpush1.bf16.msra.mxu0 %v8050
        %8064 = vmatprep.subr.bf16.mxu0 0
        %8065 = vmatpush1.bf16.msra.mxu0 %v8049
        %8066 = vmatprep.subr.bf16.mxu0 0
        %8067 = vmatpush1.bf16.msra.mxu0 %v8048
        %8068 = vmatprep.subr.bf16.mxu0 0
        %8069 = vmatpush1.bf16.msra.mxu0 %v8047
        %8070 = vmatprep.subr.bf16.mxu0 0
        %8071 = vmatpush1.bf16.msra.mxu0 %v8046
        %8072 = vmatprep.subr.bf16.mxu0 0
        %8073 = vmatpush1.bf16.msra.mxu0 %v8045
        %8074 = vmatprep.subr.bf16.mxu0 0
        %8075 = vmatpush1.bf16.msra.mxu0 %v8044
        %8076 = vmatprep.subr.bf16.mxu0 0
        %8077 = vmatpush2.bf16.msra.mxu0 0
        %8078 = vmatprep.subr.bf16.mxu0 0
        %8079 = vmatpush2.bf16.msra.mxu0 0
        %8080 = vmatprep.subr.bf16.mxu0 0
        %8081 = vmatpush2.bf16.msra.mxu0 0
        %8082 = vmatprep.subr.bf16.mxu0 0
        %8083 = vmatpush2.bf16.msra.mxu0 0
        %8084 = vmatprep.subr.bf16.mxu0 0
        %8085 = vmatpush2.bf16.msra.mxu0 0
        %8086 = vmatprep.subr.bf16.mxu0 0
        %8087 = vmatpush2.bf16.msra.mxu0 0
        %8088 = vmatprep.subr.bf16.mxu0 0
        %8089 = vmatpush2.bf16.msra.mxu0 0
        %8090 = vmatprep.subr.bf16.mxu0 0
        %8091 = vmatpush2.bf16.msra.mxu0 0
        %8092 = vmatprep.mubr.bf16.mxu0 0
        %8093 = vmatmul.mubr.bf16.gmra.mxu0 %v8010
        %v8094 = vpop.f32.mrf.mxu0
        %v8095 = vadd.f32 0.0, %v8094
        %v8096 = vpop.f32.mrf.mxu0
        %v8097 = vpop.f32.mrf.mxu0
        %v8098 = vpop.f32.mrf.mxu0
        %8099 = vdwg.mxu0
        %v8100 = vadd.f32 %v7992, %v8095
        %v8101 = vmax.f32 %v8100, 0.0
        %v8102 = vpack.c.bf16 %v8101, %v8101
        %v8103 = vld [vmem:[#allocation9] sm:$0xf]
        %v8104 = vld [vmem:[#allocation9 + $0x4] sm:$0xf]
        %v8105 = vld [vmem:[#allocation9 + $0x8] sm:$0xf]
        %v8106 = vld [vmem:[#allocation9 + $0xc] sm:$0xf]
        %v8107 = vld [vmem:[#allocation9 + $0x10] sm:$0xf]
        %v8108 = vld [vmem:[#allocation9 + $0x14] sm:$0xf]
        %v8109 = vld [vmem:[#allocation9 + $0x18] sm:$0xf]
        %v8110 = vld [vmem:[#allocation9 + $0x1c] sm:$0xf]
        %v8111 = vld [vmem:[#allocation9 + $0x20] sm:$0xf]
        %v8112 = vld [vmem:[#allocation9 + $0x24] sm:$0xf]
        %v8113 = vld [vmem:[#allocation9 + $0x28] sm:$0xf]
        %v8114 = vld [vmem:[#allocation9 + $0x2c] sm:$0xf]
        %v8115 = vld [vmem:[#allocation9 + $0x30] sm:$0xf]
        %v8116 = vld [vmem:[#allocation9 + $0x34] sm:$0xf]
        %v8117 = vld [vmem:[#allocation9 + $0x38] sm:$0xf]
        %v8118 = vld [vmem:[#allocation9 + $0x3c] sm:$0xf]
        %v8119 = vld [vmem:[%s16] sm:$0x1]
        %v8136 = vunpack.c.l.b16 %v8103
        %v8137 = vunpack.c.l.b16 %v8104
        %v8138 = vunpack.c.l.b16 %v8105
        %v8139 = vunpack.c.l.b16 %v8106
        %v8140 = vunpack.c.l.b16 %v8107
        %v8141 = vunpack.c.l.b16 %v8108
        %v8142 = vunpack.c.l.b16 %v8109
        %v8143 = vunpack.c.l.b16 %v8110
        %v8144 = vunpack.c.l.b16 %v8111
        %v8145 = vunpack.c.l.b16 %v8112
        %v8146 = vunpack.c.l.b16 %v8113
        %v8147 = vunpack.c.l.b16 %v8114
        %v8148 = vunpack.c.l.b16 %v8115
        %v8149 = vunpack.c.l.b16 %v8116
        %v8150 = vunpack.c.l.b16 %v8117
        %v8151 = vunpack.c.l.b16 %v8118
        %v8152 = vpack.c.b16 %v8137, %v8136
        %v8153 = vpack.c.b16 %v8139, %v8138
        %v8154 = vpack.c.b16 %v8141, %v8140
        %v8155 = vpack.c.b16 %v8143, %v8142
        %v8156 = vpack.c.b16 %v8145, %v8144
        %v8157 = vpack.c.b16 %v8147, %v8146
        %v8158 = vpack.c.b16 %v8149, %v8148
        %v8159 = vpack.c.b16 %v8151, %v8150
        %8168 = vmatprep.subr.bf16.mxu0 0
        %8169 = vmatpush1.bf16.msra.mxu0 %v8159
        %8170 = vmatprep.subr.bf16.mxu0 0
        %8171 = vmatpush1.bf16.msra.mxu0 %v8158
        %8172 = vmatprep.subr.bf16.mxu0 0
        %8173 = vmatpush1.bf16.msra.mxu0 %v8157
        %8174 = vmatprep.subr.bf16.mxu0 0
        %8175 = vmatpush1.bf16.msra.mxu0 %v8156
        %8176 = vmatprep.subr.bf16.mxu0 0
        %8177 = vmatpush1.bf16.msra.mxu0 %v8155
        %8178 = vmatprep.subr.bf16.mxu0 0
        %8179 = vmatpush1.bf16.msra.mxu0 %v8154
        %8180 = vmatprep.subr.bf16.mxu0 0
        %8181 = vmatpush1.bf16.msra.mxu0 %v8153
        %8182 = vmatprep.subr.bf16.mxu0 0
        %8183 = vmatpush1.bf16.msra.mxu0 %v8152
        %8184 = vmatprep.subr.bf16.mxu0 0
        %8185 = vmatpush2.bf16.msra.mxu0 0
        %8186 = vmatprep.subr.bf16.mxu0 0
        %8187 = vmatpush2.bf16.msra.mxu0 0
        %8188 = vmatprep.subr.bf16.mxu0 0
        %8189 = vmatpush2.bf16.msra.mxu0 0
        %8190 = vmatprep.subr.bf16.mxu0 0
        %8191 = vmatpush2.bf16.msra.mxu0 0
        %8192 = vmatprep.subr.bf16.mxu0 0
        %8193 = vmatpush2.bf16.msra.mxu0 0
        %8194 = vmatprep.subr.bf16.mxu0 0
        %8195 = vmatpush2.bf16.msra.mxu0 0
        %8196 = vmatprep.subr.bf16.mxu0 0
        %8197 = vmatpush2.bf16.msra.mxu0 0
        %8198 = vmatprep.subr.bf16.mxu0 0
        %8199 = vmatpush2.bf16.msra.mxu0 0
        %8200 = vmatprep.mubr.bf16.mxu0 0
        %8201 = vmatmul.mubr.bf16.gmra.mxu0 %v8102
        %v8202 = vpop.f32.mrf.mxu0
        %v8203 = vadd.f32 %v8119, %v8202
        %v8204 = vpop.f32.mrf.mxu0
        %v8205 = vpop.f32.mrf.mxu0
        %v8206 = vpop.f32.mrf.mxu0
        %8207 = vdwg.mxu0
        %8208 = vst [vmem:[%s599] sm:$0x1] %v8203
        %s8209 = sand.u32 %s404, 1
        %s8210 = scalar_lea.sflag [#allocation5], %s8209
        %s8211 = sand.u32 %s404, 1
        %s8212 = scalar_lea.vmem [#allocation11], %s8211
        // Predicated region
        $region105: #{bearing_fm_plus_forward.1} parent=87 // pred_check
          %p8213 = pneg %p414
        $region106: #{bearing_fm_plus_forward.1} parent=87 // pred_check_branch
          %8215 = sbr.rel (%p8213) target = $region108
        $region107: #{bearing_fm_plus_forward.1} parent=87 // pred_region
          %s8217 = ssub.s32 16, 16
          %8218 = vsyncadd %s8210, %s8217
          %s8219 = smul.addr %s34, 16
          %s8220 = scalar_lea.hbm %s17, %s8219
          %s8222 = sshll.u32 %s8212, 4
          %s8223 = int_to_ptr.vmem [resolvable:$true] %s8222
          %8225 = dma.vmem_to_hbm [thread:$0]  %s8223, 16, %s8220, %s8210
        $region108: #{bearing_fm_plus_forward.1} parent=87 // pred_fallthru
          _
      $region88: #{bearing_fm_plus_forward.1} parent=5 // pred_fallthru
        _
      %p8226 = scmp.le.s32.totalorder 2, %s29
      // Predicated region
      $region109: #{bearing_fm_plus_forward.1} parent=5 // pred_check
        %p8227 = pneg %p8226
      $region110: #{bearing_fm_plus_forward.1} parent=5 // pred_check_branch
        %8229 = sbr.rel (%p8227) target = $region112
      $region111: #{bearing_fm_plus_forward.1} parent=5 // pred_region
        %s8230 = ssub.s32 %s29, 2
        // Predicated region
        $region113: #{bearing_fm_plus_forward.1} parent=111 // pred_check
          %p8231 = pneg %p420
        $region114: #{bearing_fm_plus_forward.1} parent=111 // pred_check_branch
          %8233 = sbr.rel (%p8231) target = $region116
        $region115: #{bearing_fm_plus_forward.1} parent=111 // pred_region
          %s8234 = sand.u32 %s405, 1
          %s8235 = scalar_lea.sflag [#allocation5], %s8234
          %s8236 = sand.u32 %s405, 1
          %s8237 = scalar_lea.vmem [#allocation11], %s8236
          %8238 = dma.done %s8235, 16
        $region116: #{bearing_fm_plus_forward.1} parent=111 // pred_fallthru
          _
      $region112: #{bearing_fm_plus_forward.1} parent=5 // pred_fallthru
        _
    $region6: #{bearing_fm_plus_forward.1} parent=1 // loop_footer
      %s33 = sadd.s32 1, %s29
    $region7: #{bearing_fm_plus_forward.1} parent=1 // loop_footer_branch
      %28 = sbr.rel target = $region3
    $region8: #{bearing_fm_plus_forward.1} parent=1 // loop_exit
      _
    %8239 = vsyncpa [#allocation4], 1
    %s8240 = scalar_lea.sflag [#allocation4], 1
    %8241 = vsyncpa %s8240, 1
    %8242 = vsyncpa [#allocation7], 1
    %8243 = vsyncpa [#allocation10], 1
    %8244 = vsyncpa [#allocation5], 1
    %s8245 = scalar_lea.sflag [#allocation5], 1
    %8246 = vsyncpa %s8245, 1

</llo_original>
